<compile_context>
chip_gen: v7x
topology: tpu7x:2x2x1
jax: 0.10.0
libtpu: 0.0.40
codegen_flags: <defaults>
</compile_context>

<pallas_src>
import jax
import jax.numpy as jnp
from jax.experimental import pallas as pl
from jax.experimental.pallas import tpu as pltpu

LANE = 128


def _round_up(x, m):
    return ((x + m - 1) // m) * m


def _vmem_estimate(block_n, th, wp, cin_p, cout_p):
    """Rough per-step VMEM working set (bytes); pipeline double-buffers I/O."""
    bf, f4 = 2, 4
    in_blk = block_n * 4 * (th + 4) * (wp + 4) * cin_p * bf     # x tile (bf16)
    out_blk = block_n * th * wp * cout_p * f4                   # y tile (f32)
    weights = (9 * cin_p * cout_p + 9 * cout_p * cout_p) * bf + 4 * cout_p * f4
    pad1 = block_n * (th + 4) * (wp + 4) * cin_p * bf
    pad2 = block_n * (th + 2) * (wp + 2) * cout_p * bf
    col1 = block_n * (th + 2) * (wp + 2) * 9 * cin_p * bf
    col2 = block_n * th * wp * 9 * cout_p * bf
    tmp = 2 * block_n * (th + 2) * (wp + 2) * cout_p * f4       # f32 acc / y1
    return 2 * (in_blk + out_blk + weights) + pad1 + pad2 + col1 + col2 + tmp


def _pick_h_tile(n, block_n, hp, wp, cin_p, cout_p, budget):
    divisors = [d for d in range(1, hp + 1) if hp % d == 0]
    fits = [d for d in divisors
            if _vmem_estimate(block_n, d, wp, cin_p, cout_p) <= budget]
    if not fits:
        fits = [1]
    # v7x has 2 TensorCores: keep at least 2 parallel grid steps if possible.
    grid2 = [d for d in fits if (n // block_n) * (hp // d) >= 2]
    cands = grid2 or fits
    # Prefer an MXU-friendly matmul M (multiple of 256 rows) when available.
    mxu = [d for d in cands if (block_n * d * wp) % 256 == 0]
    return max(mxu) if mxu else max(cands)


def _down_kernel(x_ref, w1_ref, s1_ref, b1_ref, w2_ref, s2_ref, b2_ref,
                 o_ref, pad1_ref, pad2_ref, col1_ref, col2_ref):
    nb, th, wp, cout = o_ref.shape
    cin = x_ref.shape[-1]
    j = pl.program_id(1)
    hp_total = pl.num_programs(1) * th          # full pooled image height

    # ---- MaxPool2d(2): max over the 4 window candidates (bf16, monotone) ---
    x = x_ref[...][:, 0]                        # (nb, 4, th+4, wp+4, cin)
    pooled = jnp.maximum(jnp.maximum(x[:, 0], x[:, 1]),
                         jnp.maximum(x[:, 2], x[:, 3]))
    # Halo'd pooled slab; the +-2 row/col zero halo (= conv1 SAME padding) was
    # materialized by the wrapper -> ONE full-slab bf16 store, no border strips.
    pad1_ref[...] = pooled                      # (nb, th+4, wp+4, cin)

    def conv3x3_bn_relu(pad_ref, col_ref, w_ref, s_ref, b_ref, rows, cols, c):
        # im2col: 9 lane-aligned column stores into a bf16 (M, 9*C) scratch,
        # then ONE MXU matmul with f32 accumulation.
        m = nb * rows * cols
        for k in range(9):
            ky, kx = divmod(k, 3)
            col_ref[:, k * c:(k + 1) * c] = (
                pad_ref[:, ky:ky + rows, kx:kx + cols, :].reshape(m, c))
        acc = jnp.dot(col_ref[...], w_ref[...],
                      preferred_element_type=jnp.float32)        # (m, cout)
        # Folded eval-mode BatchNorm + ReLU (f32 epilogue).
        return jnp.maximum(acc * s_ref[...] + b_ref[...], 0.0)

    # ---- conv1 over a (th+2, wp+2) slab: output tile + 1-pixel y1 halo -----
    y1 = conv3x3_bn_relu(pad1_ref, col1_ref, w1_ref, s1_ref, b1_ref,
                         th + 2, wp + 2, cin)
    y1 = y1.reshape(nb, th + 2, wp + 2, cout)
    # y1 halo pixels outside the real image are conv2's zero SAME padding
    # (NOT ReLU(bn_bias)); zero them with one vector select, cast bf16 once.
    gr = (j * th - 1) + jax.lax.broadcasted_iota(jnp.int32, (1, th + 2, 1, 1), 1)
    gc = -1 + jax.lax.broadcasted_iota(jnp.int32, (1, 1, wp + 2, 1), 2)
    keep = (gr >= 0) & (gr < hp_total) & (gc >= 0) & (gc < wp)
    pad2_ref[...] = jnp.where(keep, y1, 0.0).astype(jnp.bfloat16)

    # ---- conv2 over the (th, wp) output tile --------------------------------
    y2 = conv3x3_bn_relu(pad2_ref, col2_ref, w2_ref, s2_ref, b2_ref,
                         th, wp, cout)
    o_ref[...] = y2.reshape(nb, th, wp, cout)


def down_forward(x_nchw, params, *, block_n=1, h_tile=None, nchw_out=True,
                 vmem_budget_bytes=48 << 20):
    """Forward pass of Down(in_channels, out_channels). x: NCHW float32.

    nchw_out=False returns NHWC and skips the final transpose (the next conv
    layer wants NHWC anyway).
    """
    w1, g1, b1 = params["w1"], params["gamma1"], params["beta1"]
    w2, g2, b2 = params["w2"], params["gamma2"], params["beta2"]
    eps = 1e-5

    N, Cin, H, W = x_nchw.shape
    Cout = w1.shape[0]
    assert H % 2 == 0 and W % 2 == 0, "MaxPool2d(2) path assumes even H, W"
    assert N % block_n == 0, "block_n must divide the batch"
    Hp, Wp = H // 2, W // 2
    Cin_p, Cout_p = _round_up(Cin, LANE), _round_up(Cout, LANE)

    if h_tile is None:
        h_tile = _pick_h_tile(N, block_n, Hp, Wp, Cin_p, Cout_p,
                              vmem_budget_bytes)
    assert Hp % h_tile == 0, "h_tile must divide the pooled height"
    th = h_tile
    n_h = Hp // th

    # NCHW -> NHWC, cast to bf16, zero-pad channels to a lane multiple.
    x_nhwc = jnp.transpose(x_nchw, (0, 2, 3, 1)).astype(jnp.bfloat16)
    x_nhwc = jnp.pad(x_nhwc, ((0, 0), (0, 0), (0, 0), (0, Cin_p - Cin)))
    # Pooling-window candidates as a single leading axis of 4: (N,4,Hp,Wp,C).
    x_win = (x_nhwc.reshape(N, Hp, 2, Wp, 2, Cin_p)
             .transpose(0, 2, 4, 1, 3, 5).reshape(N, 4, Hp, Wp, Cin_p))
    # Zero halo (= conv1 SAME padding): 2 pooled rows/cols on every side, then
    # materialize overlapping H-tiles of th+4 pooled rows.
    x_pad = jnp.pad(x_win, ((0, 0), (0, 0), (2, 2), (2, 2), (0, 0)))
    x_tiles = jnp.stack(
        [x_pad[:, :, j * th:j * th + th + 4] for j in range(n_h)],
        axis=1)                                 # (N, n_h, 4, th+4, Wp+4, C)

    # Conv weights: (Cout, Cin, 3, 3) -> bf16 im2col slab (9*Cin_p, Cout_p),
    # tap order k = ky*3 + kx (matches the im2col column order in the kernel).
    def pack_w(w, c_in, c_in_p):
        wt = jnp.transpose(w, (2, 3, 1, 0)).reshape(9, c_in, Cout)
        wt = jnp.pad(wt, ((0, 0), (0, c_in_p - c_in), (0, Cout_p - Cout)))
        return wt.reshape(9 * c_in_p, Cout_p).astype(jnp.bfloat16)

    w1_k = pack_w(w1, Cin, Cin_p)
    w2_k = pack_w(w2, Cout, Cout_p)

    # Fold eval-mode BatchNorm (running_mean=0, running_var=1) into scale/bias.
    def pack_bn(g, b):
        s = jnp.pad(g / jnp.sqrt(1.0 + eps), (0, Cout_p - Cout))
        bb = jnp.pad(b, (0, Cout_p - Cout))
        return (s.reshape(1, Cout_p).astype(jnp.float32),
                bb.reshape(1, Cout_p).astype(jnp.float32))

    s1, bb1 = pack_bn(g1, b1)
    s2, bb2 = pack_bn(g2, b2)

    grid_spec = pltpu.PrefetchScalarGridSpec(
        num_scalar_prefetch=0,
        grid=(N // block_n, n_h),
        in_specs=[
            pl.BlockSpec((block_n, 1, 4, th + 4, Wp + 4, Cin_p),
                         lambda n, j: (n, j, 0, 0, 0, 0)),
            pl.BlockSpec((9 * Cin_p, Cout_p), lambda n, j: (0, 0)),
            pl.BlockSpec((1, Cout_p), lambda n, j: (0, 0)),
            pl.BlockSpec((1, Cout_p), lambda n, j: (0, 0)),
            pl.BlockSpec((9 * Cout_p, Cout_p), lambda n, j: (0, 0)),
            pl.BlockSpec((1, Cout_p), lambda n, j: (0, 0)),
            pl.BlockSpec((1, Cout_p), lambda n, j: (0, 0)),
        ],
        out_specs=pl.BlockSpec((block_n, th, Wp, Cout_p),
                               lambda n, j: (n, j, 0, 0)),
        scratch_shapes=[
            pltpu.VMEM((block_n, th + 4, Wp + 4, Cin_p), jnp.bfloat16),
            pltpu.VMEM((block_n, th + 2, Wp + 2, Cout_p), jnp.bfloat16),
            pltpu.VMEM((block_n * (th + 2) * (Wp + 2), 9 * Cin_p), jnp.bfloat16),
            pltpu.VMEM((block_n * th * Wp, 9 * Cout_p), jnp.bfloat16),
        ],
    )

    vmem_limit = int(min(
        96 << 20,
        max(32 << 20, 2 * _vmem_estimate(block_n, th, Wp, Cin_p, Cout_p))))

    out_nhwc = pl.pallas_call(
        _down_kernel,
        out_shape=jax.ShapeDtypeStruct((N, Hp, Wp, Cout_p), jnp.float32),
        grid_spec=grid_spec,
        compiler_params=pltpu.CompilerParams(
            dimension_semantics=("parallel", "parallel"),
            vmem_limit_bytes=vmem_limit),
    )(x_tiles, w1_k, s1, bb1, w2_k, s2, bb2)

    out_nhwc = out_nhwc[..., :Cout]                 # drop the channel padding
    if nchw_out:
        return jnp.transpose(out_nhwc, (0, 3, 1, 2))
    return out_nhwc


def _ref_forward(x_nchw, params):
    """Pure-JAX reference (same eval-mode BN semantics)."""
    w1, g1, b1 = params["w1"], params["gamma1"], params["beta1"]
    w2, g2, b2 = params["w2"], params["gamma2"], params["beta2"]
    eps = 1e-5
    x = jnp.transpose(x_nchw, (0, 2, 3, 1))
    N, H, W, C = x.shape
    p = x.reshape(N, H // 2, 2, W // 2, 2, C).max(axis=(2, 4))

    def conv(inp, w_oihw):
        w_hwio = jnp.transpose(w_oihw, (2, 3, 1, 0))
        return jax.lax.conv_general_dilated(
            inp, w_hwio, (1, 1), "SAME",
            dimension_numbers=("NHWC", "HWIO", "NHWC"))

    y = conv(p, w1)
    y = jnp.maximum(y * (g1 / jnp.sqrt(1.0 + eps)) + b1, 0.0)
    y = conv(y, w2)
    y = jnp.maximum(y * (g2 / jnp.sqrt(1.0 + eps)) + b2, 0.0)
    return jnp.transpose(y, (0, 3, 1, 2))


if __name__ == "__main__":
    key = jax.random.PRNGKey(0)
    k_x, k_w1, k_g1, k_b1, k_w2, k_g2, k_b2 = jax.random.split(key, 7)

    N, Cin, Cout, H, W = 2, 4, 8, 16, 16
    x = jax.random.normal(k_x, (N, Cin, H, W), jnp.float32)
    params = dict(
        w1=0.1 * jax.random.normal(k_w1, (Cout, Cin, 3, 3), jnp.float32),
        gamma1=1.0 + 0.1 * jax.random.normal(k_g1, (Cout,), jnp.float32),
        beta1=0.1 * jax.random.normal(k_b1, (Cout,), jnp.float32),
        w2=0.1 * jax.random.normal(k_w2, (Cout, Cout, 3, 3), jnp.float32),
        gamma2=1.0 + 0.1 * jax.random.normal(k_g2, (Cout,), jnp.float32),
        beta2=0.1 * jax.random.normal(k_b2, (Cout,), jnp.float32),
    )

    ref = jax.block_until_ready(_ref_forward(x, params))

    # 1) auto-chosen H tile, 2) explicit multi-tile halo path, 3) batch-folded
    # M with the tile chooser keeping the grid >= 2 steps.
    configs = [dict(block_n=1), dict(block_n=1, h_tile=2), dict(block_n=2)]
    for cfg in configs:
        out = jax.block_until_ready(down_forward(x, params, **cfg))
        assert out.shape == (N, Cout, H // 2, W // 2), (cfg, out.shape)
        err = float(jnp.max(jnp.abs(out - ref)))
        assert bool(jnp.allclose(out, ref, atol=2e-2, rtol=2e-2)), (
            "config %r max abs err = %f" % (cfg, err))

    print("KERNEL_OK")
</pallas_src>

<mosaic_0001>
module attributes {stable_mosaic.version = 11 : i64} {
  func.func @_down_kernel(%arg0: i32, %arg1: i32, %arg2: memref<1x1x4x12x12x128xbf16, #tpu.memory_space<vmem>>, %arg3: memref<1152x128xbf16, #tpu.memory_space<vmem>>, %arg4: memref<1x128xf32, #tpu.memory_space<vmem>>, %arg5: memref<1x128xf32, #tpu.memory_space<vmem>>, %arg6: memref<1152x128xbf16, #tpu.memory_space<vmem>>, %arg7: memref<1x128xf32, #tpu.memory_space<vmem>>, %arg8: memref<1x128xf32, #tpu.memory_space<vmem>>, %arg9: memref<1x8x8x128xf32, #tpu.memory_space<vmem>>, %arg10: memref<1x12x12x128xbf16, #tpu.memory_space<vmem>>, %arg11: memref<1x10x10x128xbf16, #tpu.memory_space<vmem>>, %arg12: memref<100x1152xbf16, #tpu.memory_space<vmem>>, %arg13: memref<64x1152xbf16, #tpu.memory_space<vmem>>) attributes {dimension_semantics = [#tpu.dimension_semantics<parallel>, #tpu.dimension_semantics<parallel>], iteration_bounds = array<i64: 2, 1>, scalar_prefetch = 0 : i64, scratch_operands = 4 : i64, tpu.core_type = #tpu.core_type<tc>, window_params = [{transform_indices = @transform_0, window_bounds = array<i64: 1, 1, 4, 12, 12, 128>}, {pipeline_mode = #tpu.pipeline_mode<synchronous>, transform_indices = @transform_1, window_bounds = array<i64: 1152, 128>}, {pipeline_mode = #tpu.pipeline_mode<synchronous>, transform_indices = @transform_2, window_bounds = array<i64: 1, 128>}, {pipeline_mode = #tpu.pipeline_mode<synchronous>, transform_indices = @transform_3, window_bounds = array<i64: 1, 128>}, {pipeline_mode = #tpu.pipeline_mode<synchronous>, transform_indices = @transform_4, window_bounds = array<i64: 1152, 128>}, {pipeline_mode = #tpu.pipeline_mode<synchronous>, transform_indices = @transform_5, window_bounds = array<i64: 1, 128>}, {pipeline_mode = #tpu.pipeline_mode<synchronous>, transform_indices = @transform_6, window_bounds = array<i64: 1, 128>}, {transform_indices = @transform_7, window_bounds = array<i64: 1, 8, 8, 128>}]} {
    %c0 = arith.constant 0 : index
    %c0_0 = arith.constant 0 : index
    %c0_1 = arith.constant 0 : index
    %c0_2 = arith.constant 0 : index
    %c0_3 = arith.constant 0 : index
    %c0_4 = arith.constant 0 : index
    %0 = vector.load %arg2[%c0, %c0_0, %c0_1, %c0_2, %c0_3, %c0_4] : memref<1x1x4x12x12x128xbf16, #tpu.memory_space<vmem>>, vector<1x1x4x12x12x128xbf16>
    %1 = vector.shape_cast %0 : vector<1x1x4x12x12x128xbf16> to vector<1x4x12x12x128xbf16>
    %2 = vector.extract_strided_slice %1 {offsets = [0, 0, 0, 0, 0], sizes = [1, 1, 12, 12, 128], strides = [1, 1, 1, 1, 1]} : vector<1x4x12x12x128xbf16> to vector<1x1x12x12x128xbf16>
    %3 = vector.shape_cast %2 : vector<1x1x12x12x128xbf16> to vector<1x12x12x128xbf16>
    %4 = vector.extract_strided_slice %1 {offsets = [0, 1, 0, 0, 0], sizes = [1, 1, 12, 12, 128], strides = [1, 1, 1, 1, 1]} : vector<1x4x12x12x128xbf16> to vector<1x1x12x12x128xbf16>
    %5 = vector.shape_cast %4 : vector<1x1x12x12x128xbf16> to vector<1x12x12x128xbf16>
    %6 = arith.maximumf %3, %5 : vector<1x12x12x128xbf16>
    %7 = vector.extract_strided_slice %1 {offsets = [0, 2, 0, 0, 0], sizes = [1, 1, 12, 12, 128], strides = [1, 1, 1, 1, 1]} : vector<1x4x12x12x128xbf16> to vector<1x1x12x12x128xbf16>
    %8 = vector.shape_cast %7 : vector<1x1x12x12x128xbf16> to vector<1x12x12x128xbf16>
    %9 = vector.extract_strided_slice %1 {offsets = [0, 3, 0, 0, 0], sizes = [1, 1, 12, 12, 128], strides = [1, 1, 1, 1, 1]} : vector<1x4x12x12x128xbf16> to vector<1x1x12x12x128xbf16>
    %10 = vector.shape_cast %9 : vector<1x1x12x12x128xbf16> to vector<1x12x12x128xbf16>
    %11 = arith.maximumf %8, %10 : vector<1x12x12x128xbf16>
    %12 = arith.maximumf %6, %11 : vector<1x12x12x128xbf16>
    %c0_5 = arith.constant 0 : index
    %c0_6 = arith.constant 0 : index
    %c0_7 = arith.constant 0 : index
    %c0_8 = arith.constant 0 : index
    %13 = vector.load %arg10[%c0_5, %c0_6, %c0_7, %c0_8] : memref<1x12x12x128xbf16, #tpu.memory_space<vmem>>, vector<1x12x12x128xbf16>
    tpu.vector_store %arg10[%c0_5, %c0_6, %c0_7, %c0_8], %12 {strides = array<i32>} : memref<1x12x12x128xbf16, #tpu.memory_space<vmem>>, vector<1x12x12x128xbf16>,
    %c0_9 = arith.constant 0 : index
    %c0_10 = arith.constant 0 : index
    %c0_11 = arith.constant 0 : index
    %c0_12 = arith.constant 0 : index
    %14 = vector.load %arg10[%c0_9, %c0_10, %c0_11, %c0_12] : memref<1x12x12x128xbf16, #tpu.memory_space<vmem>>, vector<1x10x10x128xbf16>
    %15 = vector.shape_cast %14 : vector<1x10x10x128xbf16> to vector<100x128xbf16>
    %c0_13 = arith.constant 0 : index
    %c0_14 = arith.constant 0 : index
    %16 = vector.load %arg12[%c0_13, %c0_14] : memref<100x1152xbf16, #tpu.memory_space<vmem>>, vector<100x128xbf16>
    tpu.vector_store %arg12[%c0_13, %c0_14], %15 {strides = array<i32>} : memref<100x1152xbf16, #tpu.memory_space<vmem>>, vector<100x128xbf16>,
    %c0_15 = arith.constant 0 : index
    %c0_16 = arith.constant 0 : index
    %c1 = arith.constant 1 : index
    %c0_17 = arith.constant 0 : index
    %17 = vector.load %arg10[%c0_15, %c0_16, %c1, %c0_17] : memref<1x12x12x128xbf16, #tpu.memory_space<vmem>>, vector<1x10x10x128xbf16>
    %18 = vector.shape_cast %17 : vector<1x10x10x128xbf16> to vector<100x128xbf16>
    %c0_18 = arith.constant 0 : index
    %c128 = arith.constant 128 : index
    %19 = vector.load %arg12[%c0_18, %c128] : memref<100x1152xbf16, #tpu.memory_space<vmem>>, vector<100x128xbf16>
    tpu.vector_store %arg12[%c0_18, %c128], %18 {strides = array<i32>} : memref<100x1152xbf16, #tpu.memory_space<vmem>>, vector<100x128xbf16>,
    %c0_19 = arith.constant 0 : index
    %c0_20 = arith.constant 0 : index
    %c2 = arith.constant 2 : index
    %c0_21 = arith.constant 0 : index
    %20 = vector.load %arg10[%c0_19, %c0_20, %c2, %c0_21] : memref<1x12x12x128xbf16, #tpu.memory_space<vmem>>, vector<1x10x10x128xbf16>
    %21 = vector.shape_cast %20 : vector<1x10x10x128xbf16> to vector<100x128xbf16>
    %c0_22 = arith.constant 0 : index
    %c256 = arith.constant 256 : index
    %22 = vector.load %arg12[%c0_22, %c256] : memref<100x1152xbf16, #tpu.memory_space<vmem>>, vector<100x128xbf16>
    tpu.vector_store %arg12[%c0_22, %c256], %21 {strides = array<i32>} : memref<100x1152xbf16, #tpu.memory_space<vmem>>, vector<100x128xbf16>,
    %c0_23 = arith.constant 0 : index
    %c1_24 = arith.constant 1 : index
    %c0_25 = arith.constant 0 : index
    %c0_26 = arith.constant 0 : index
    %23 = vector.load %arg10[%c0_23, %c1_24, %c0_25, %c0_26] : memref<1x12x12x128xbf16, #tpu.memory_space<vmem>>, vector<1x10x10x128xbf16>
    %24 = vector.shape_cast %23 : vector<1x10x10x128xbf16> to vector<100x128xbf16>
    %c0_27 = arith.constant 0 : index
    %c384 = arith.constant 384 : index
    %25 = vector.load %arg12[%c0_27, %c384] : memref<100x1152xbf16, #tpu.memory_space<vmem>>, vector<100x128xbf16>
    tpu.vector_store %arg12[%c0_27, %c384], %24 {strides = array<i32>} : memref<100x1152xbf16, #tpu.memory_space<vmem>>, vector<100x128xbf16>,
    %c0_28 = arith.constant 0 : index
    %c1_29 = arith.constant 1 : index
    %c1_30 = arith.constant 1 : index
    %c0_31 = arith.constant 0 : index
    %26 = vector.load %arg10[%c0_28, %c1_29, %c1_30, %c0_31] : memref<1x12x12x128xbf16, #tpu.memory_space<vmem>>, vector<1x10x10x128xbf16>
    %27 = vector.shape_cast %26 : vector<1x10x10x128xbf16> to vector<100x128xbf16>
    %c0_32 = arith.constant 0 : index
    %c512 = arith.constant 512 : index
    %28 = vector.load %arg12[%c0_32, %c512] : memref<100x1152xbf16, #tpu.memory_space<vmem>>, vector<100x128xbf16>
    tpu.vector_store %arg12[%c0_32, %c512], %27 {strides = array<i32>} : memref<100x1152xbf16, #tpu.memory_space<vmem>>, vector<100x128xbf16>,
    %c0_33 = arith.constant 0 : index
    %c1_34 = arith.constant 1 : index
    %c2_35 = arith.constant 2 : index
    %c0_36 = arith.constant 0 : index
    %29 = vector.load %arg10[%c0_33, %c1_34, %c2_35, %c0_36] : memref<1x12x12x128xbf16, #tpu.memory_space<vmem>>, vector<1x10x10x128xbf16>
    %30 = vector.shape_cast %29 : vector<1x10x10x128xbf16> to vector<100x128xbf16>
    %c0_37 = arith.constant 0 : index
    %c640 = arith.constant 640 : index
    %31 = vector.load %arg12[%c0_37, %c640] : memref<100x1152xbf16, #tpu.memory_space<vmem>>, vector<100x128xbf16>
    tpu.vector_store %arg12[%c0_37, %c640], %30 {strides = array<i32>} : memref<100x1152xbf16, #tpu.memory_space<vmem>>, vector<100x128xbf16>,
    %c0_38 = arith.constant 0 : index
    %c2_39 = arith.constant 2 : index
    %c0_40 = arith.constant 0 : index
    %c0_41 = arith.constant 0 : index
    %32 = vector.load %arg10[%c0_38, %c2_39, %c0_40, %c0_41] : memref<1x12x12x128xbf16, #tpu.memory_space<vmem>>, vector<1x10x10x128xbf16>
    %33 = vector.shape_cast %32 : vector<1x10x10x128xbf16> to vector<100x128xbf16>
    %c0_42 = arith.constant 0 : index
    %c768 = arith.constant 768 : index
    %34 = vector.load %arg12[%c0_42, %c768] : memref<100x1152xbf16, #tpu.memory_space<vmem>>, vector<100x128xbf16>
    tpu.vector_store %arg12[%c0_42, %c768], %33 {strides = array<i32>} : memref<100x1152xbf16, #tpu.memory_space<vmem>>, vector<100x128xbf16>,
    %c0_43 = arith.constant 0 : index
    %c2_44 = arith.constant 2 : index
    %c1_45 = arith.constant 1 : index
    %c0_46 = arith.constant 0 : index
    %35 = vector.load %arg10[%c0_43, %c2_44, %c1_45, %c0_46] : memref<1x12x12x128xbf16, #tpu.memory_space<vmem>>, vector<1x10x10x128xbf16>
    %36 = vector.shape_cast %35 : vector<1x10x10x128xbf16> to vector<100x128xbf16>
    %c0_47 = arith.constant 0 : index
    %c896 = arith.constant 896 : index
    %37 = vector.load %arg12[%c0_47, %c896] : memref<100x1152xbf16, #tpu.memory_space<vmem>>, vector<100x128xbf16>
    tpu.vector_store %arg12[%c0_47, %c896], %36 {strides = array<i32>} : memref<100x1152xbf16, #tpu.memory_space<vmem>>, vector<100x128xbf16>,
    %c0_48 = arith.constant 0 : index
    %c2_49 = arith.constant 2 : index
    %c2_50 = arith.constant 2 : index
    %c0_51 = arith.constant 0 : index
    %38 = vector.load %arg10[%c0_48, %c2_49, %c2_50, %c0_51] : memref<1x12x12x128xbf16, #tpu.memory_space<vmem>>, vector<1x10x10x128xbf16>
    %39 = vector.shape_cast %38 : vector<1x10x10x128xbf16> to vector<100x128xbf16>
    %c0_52 = arith.constant 0 : index
    %c1024 = arith.constant 1024 : index
    %40 = vector.load %arg12[%c0_52, %c1024] : memref<100x1152xbf16, #tpu.memory_space<vmem>>, vector<100x128xbf16>
    tpu.vector_store %arg12[%c0_52, %c1024], %39 {strides = array<i32>} : memref<100x1152xbf16, #tpu.memory_space<vmem>>, vector<100x128xbf16>,
    %c0_53 = arith.constant 0 : index
    %c0_54 = arith.constant 0 : index
    %41 = vector.load %arg12[%c0_53, %c0_54] : memref<100x1152xbf16, #tpu.memory_space<vmem>>, vector<100x1152xbf16>
    %c0_55 = arith.constant 0 : index
    %c0_56 = arith.constant 0 : index
    %42 = vector.load %arg3[%c0_55, %c0_56] : memref<1152x128xbf16, #tpu.memory_space<vmem>>, vector<1152x128xbf16>
    %cst = arith.constant dense<0.000000e+00> : vector<100x128xf32>
    %43 = tpu.matmul %41, %42, %cst {dimension_numbers = #tpu.dot_dimension_numbers<[1], [0], [0], [1], [0, 0, 1, 1], [], []>} : vector<100x1152xbf16>, vector<1152x128xbf16>, vector<100x128xf32> -> vector<100x128xf32>
    %c0_57 = arith.constant 0 : index
    %c0_58 = arith.constant 0 : index
    %44 = vector.load %arg4[%c0_57, %c0_58] : memref<1x128xf32, #tpu.memory_space<vmem>>, vector<1x128xf32>
    %45 = vector.broadcast %44 : vector<1x128xf32> to vector<100x128xf32>
    %46 = arith.mulf %43, %45 : vector<100x128xf32>
    %c0_59 = arith.constant 0 : index
    %c0_60 = arith.constant 0 : index
    %47 = vector.load %arg5[%c0_59, %c0_60] : memref<1x128xf32, #tpu.memory_space<vmem>>, vector<1x128xf32>
    %48 = vector.broadcast %47 : vector<1x128xf32> to vector<100x128xf32>
    %49 = arith.addf %46, %48 : vector<100x128xf32>
    %cst_61 = arith.constant 0.000000e+00 : f32
    %50 = vector.broadcast %cst_61 : f32 to vector<100x128xf32>
    %51 = arith.maximumf %49, %50 : vector<100x128xf32>
    %52 = vector.shape_cast %51 : vector<100x128xf32> to vector<1x10x10x128xf32>
    %c8_i32 = arith.constant 8 : i32
    %53 = arith.muli %arg1, %c8_i32 : i32
    %c1_i32 = arith.constant 1 : i32
    %54 = arith.subi %53, %c1_i32 : i32
    %55 = tpu.iota {dimensions = array<i32: 1>} : vector<1x10x1x1xi32>
    %56 = vector.broadcast %54 : i32 to vector<1x10x1x1xi32>
    %57 = arith.addi %56, %55 : vector<1x10x1x1xi32>
    %58 = tpu.iota {dimensions = array<i32: 2>} : vector<1x1x10x1xi32>
    %c-1_i32 = arith.constant -1 : i32
    %59 = vector.broadcast %c-1_i32 : i32 to vector<1x1x10x1xi32>
    %60 = arith.addi %59, %58 : vector<1x1x10x1xi32>
    %c0_i32 = arith.constant 0 : i32
    %61 = vector.broadcast %c0_i32 : i32 to vector<1x10x1x1xi32>
    %62 = arith.cmpi sge, %57, %61 : vector<1x10x1x1xi32>
    %c8_i32_62 = arith.constant 8 : i32
    %63 = vector.broadcast %c8_i32_62 : i32 to vector<1x10x1x1xi32>
    %64 = arith.cmpi slt, %57, %63 : vector<1x10x1x1xi32>
    %65 = arith.andi %62, %64 : vector<1x10x1x1xi1>
    %c0_i32_63 = arith.constant 0 : i32
    %66 = vector.broadcast %c0_i32_63 : i32 to vector<1x1x10x1xi32>
    %67 = arith.cmpi sge, %60, %66 : vector<1x1x10x1xi32>
    %68 = vector.broadcast %65 : vector<1x10x1x1xi1> to vector<1x10x10x1xi1>
    %69 = vector.broadcast %67 : vector<1x1x10x1xi1> to vector<1x10x10x1xi1>
    %70 = arith.andi %68, %69 : vector<1x10x10x1xi1>
    %c8_i32_64 = arith.constant 8 : i32
    %71 = vector.broadcast %c8_i32_64 : i32 to vector<1x1x10x1xi32>
    %72 = arith.cmpi slt, %60, %71 : vector<1x1x10x1xi32>
    %73 = vector.broadcast %72 : vector<1x1x10x1xi1> to vector<1x10x10x1xi1>
    %74 = arith.andi %70, %73 : vector<1x10x10x1xi1>
    %cst_65 = arith.constant 0.000000e+00 : f32
    %75 = vector.shape_cast %74 : vector<1x10x10x1xi1> to vector<1x10x10x1xi1>
    %76 = vector.broadcast %75 : vector<1x10x10x1xi1> to vector<1x10x10x128xi1>
    %77 = vector.broadcast %cst_65 : f32 to vector<1x10x10x128xf32>
    %78 = arith.select %76, %52, %77 : vector<1x10x10x128xi1>, vector<1x10x10x128xf32>
    %79 = arith.truncf %78 : vector<1x10x10x128xf32> to vector<1x10x10x128xbf16>
    %c0_66 = arith.constant 0 : index
    %c0_67 = arith.constant 0 : index
    %c0_68 = arith.constant 0 : index
    %c0_69 = arith.constant 0 : index
    %80 = vector.load %arg11[%c0_66, %c0_67, %c0_68, %c0_69] : memref<1x10x10x128xbf16, #tpu.memory_space<vmem>>, vector<1x10x10x128xbf16>
    tpu.vector_store %arg11[%c0_66, %c0_67, %c0_68, %c0_69], %79 {strides = array<i32>} : memref<1x10x10x128xbf16, #tpu.memory_space<vmem>>, vector<1x10x10x128xbf16>,
    %c0_70 = arith.constant 0 : index
    %c0_71 = arith.constant 0 : index
    %c0_72 = arith.constant 0 : index
    %c0_73 = arith.constant 0 : index
    %81 = vector.load %arg11[%c0_70, %c0_71, %c0_72, %c0_73] : memref<1x10x10x128xbf16, #tpu.memory_space<vmem>>, vector<1x8x8x128xbf16>
    %82 = vector.shape_cast %81 : vector<1x8x8x128xbf16> to vector<64x128xbf16>
    %c0_74 = arith.constant 0 : index
    %c0_75 = arith.constant 0 : index
    %83 = vector.load %arg13[%c0_74, %c0_75] : memref<64x1152xbf16, #tpu.memory_space<vmem>>, vector<64x128xbf16>
    tpu.vector_store %arg13[%c0_74, %c0_75], %82 {strides = array<i32>} : memref<64x1152xbf16, #tpu.memory_space<vmem>>, vector<64x128xbf16>,
    %c0_76 = arith.constant 0 : index
    %c0_77 = arith.constant 0 : index
    %c1_78 = arith.constant 1 : index
    %c0_79 = arith.constant 0 : index
    %84 = vector.load %arg11[%c0_76, %c0_77, %c1_78, %c0_79] : memref<1x10x10x128xbf16, #tpu.memory_space<vmem>>, vector<1x8x8x128xbf16>
    %85 = vector.shape_cast %84 : vector<1x8x8x128xbf16> to vector<64x128xbf16>
    %c0_80 = arith.constant 0 : index
    %c128_81 = arith.constant 128 : index
    %86 = vector.load %arg13[%c0_80, %c128_81] : memref<64x1152xbf16, #tpu.memory_space<vmem>>, vector<64x128xbf16>
    tpu.vector_store %arg13[%c0_80, %c128_81], %85 {strides = array<i32>} : memref<64x1152xbf16, #tpu.memory_space<vmem>>, vector<64x128xbf16>,
    %c0_82 = arith.constant 0 : index
    %c0_83 = arith.constant 0 : index
    %c2_84 = arith.constant 2 : index
    %c0_85 = arith.constant 0 : index
    %87 = vector.load %arg11[%c0_82, %c0_83, %c2_84, %c0_85] : memref<1x10x10x128xbf16, #tpu.memory_space<vmem>>, vector<1x8x8x128xbf16>
    %88 = vector.shape_cast %87 : vector<1x8x8x128xbf16> to vector<64x128xbf16>
    %c0_86 = arith.constant 0 : index
    %c256_87 = arith.constant 256 : index
    %89 = vector.load %arg13[%c0_86, %c256_87] : memref<64x1152xbf16, #tpu.memory_space<vmem>>, vector<64x128xbf16>
    tpu.vector_store %arg13[%c0_86, %c256_87], %88 {strides = array<i32>} : memref<64x1152xbf16, #tpu.memory_space<vmem>>, vector<64x128xbf16>,
    %c0_88 = arith.constant 0 : index
    %c1_89 = arith.constant 1 : index
    %c0_90 = arith.constant 0 : index
    %c0_91 = arith.constant 0 : index
    %90 = vector.load %arg11[%c0_88, %c1_89, %c0_90, %c0_91] : memref<1x10x10x128xbf16, #tpu.memory_space<vmem>>, vector<1x8x8x128xbf16>
    %91 = vector.shape_cast %90 : vector<1x8x8x128xbf16> to vector<64x128xbf16>
    %c0_92 = arith.constant 0 : index
    %c384_93 = arith.constant 384 : index
    %92 = vector.load %arg13[%c0_92, %c384_93] : memref<64x1152xbf16, #tpu.memory_space<vmem>>, vector<64x128xbf16>
    tpu.vector_store %arg13[%c0_92, %c384_93], %91 {strides = array<i32>} : memref<64x1152xbf16, #tpu.memory_space<vmem>>, vector<64x128xbf16>,
    %c0_94 = arith.constant 0 : index
    %c1_95 = arith.constant 1 : index
    %c1_96 = arith.constant 1 : index
    %c0_97 = arith.constant 0 : index
    %93 = vector.load %arg11[%c0_94, %c1_95, %c1_96, %c0_97] : memref<1x10x10x128xbf16, #tpu.memory_space<vmem>>, vector<1x8x8x128xbf16>
    %94 = vector.shape_cast %93 : vector<1x8x8x128xbf16> to vector<64x128xbf16>
    %c0_98 = arith.constant 0 : index
    %c512_99 = arith.constant 512 : index
    %95 = vector.load %arg13[%c0_98, %c512_99] : memref<64x1152xbf16, #tpu.memory_space<vmem>>, vector<64x128xbf16>
    tpu.vector_store %arg13[%c0_98, %c512_99], %94 {strides = array<i32>} : memref<64x1152xbf16, #tpu.memory_space<vmem>>, vector<64x128xbf16>,
    %c0_100 = arith.constant 0 : index
    %c1_101 = arith.constant 1 : index
    %c2_102 = arith.constant 2 : index
    %c0_103 = arith.constant 0 : index
    %96 = vector.load %arg11[%c0_100, %c1_101, %c2_102, %c0_103] : memref<1x10x10x128xbf16, #tpu.memory_space<vmem>>, vector<1x8x8x128xbf16>
    %97 = vector.shape_cast %96 : vector<1x8x8x128xbf16> to vector<64x128xbf16>
    %c0_104 = arith.constant 0 : index
    %c640_105 = arith.constant 640 : index
    %98 = vector.load %arg13[%c0_104, %c640_105] : memref<64x1152xbf16, #tpu.memory_space<vmem>>, vector<64x128xbf16>
    tpu.vector_store %arg13[%c0_104, %c640_105], %97 {strides = array<i32>} : memref<64x1152xbf16, #tpu.memory_space<vmem>>, vector<64x128xbf16>,
    %c0_106 = arith.constant 0 : index
    %c2_107 = arith.constant 2 : index
    %c0_108 = arith.constant 0 : index
    %c0_109 = arith.constant 0 : index
    %99 = vector.load %arg11[%c0_106, %c2_107, %c0_108, %c0_109] : memref<1x10x10x128xbf16, #tpu.memory_space<vmem>>, vector<1x8x8x128xbf16>
    %100 = vector.shape_cast %99 : vector<1x8x8x128xbf16> to vector<64x128xbf16>
    %c0_110 = arith.constant 0 : index
    %c768_111 = arith.constant 768 : index
    %101 = vector.load %arg13[%c0_110, %c768_111] : memref<64x1152xbf16, #tpu.memory_space<vmem>>, vector<64x128xbf16>
    tpu.vector_store %arg13[%c0_110, %c768_111], %100 {strides = array<i32>} : memref<64x1152xbf16, #tpu.memory_space<vmem>>, vector<64x128xbf16>,
    %c0_112 = arith.constant 0 : index
    %c2_113 = arith.constant 2 : index
    %c1_114 = arith.constant 1 : index
    %c0_115 = arith.constant 0 : index
    %102 = vector.load %arg11[%c0_112, %c2_113, %c1_114, %c0_115] : memref<1x10x10x128xbf16, #tpu.memory_space<vmem>>, vector<1x8x8x128xbf16>
    %103 = vector.shape_cast %102 : vector<1x8x8x128xbf16> to vector<64x128xbf16>
    %c0_116 = arith.constant 0 : index
    %c896_117 = arith.constant 896 : index
    %104 = vector.load %arg13[%c0_116, %c896_117] : memref<64x1152xbf16, #tpu.memory_space<vmem>>, vector<64x128xbf16>
    tpu.vector_store %arg13[%c0_116, %c896_117], %103 {strides = array<i32>} : memref<64x1152xbf16, #tpu.memory_space<vmem>>, vector<64x128xbf16>,
    %c0_118 = arith.constant 0 : index
    %c2_119 = arith.constant 2 : index
    %c2_120 = arith.constant 2 : index
    %c0_121 = arith.constant 0 : index
    %105 = vector.load %arg11[%c0_118, %c2_119, %c2_120, %c0_121] : memref<1x10x10x128xbf16, #tpu.memory_space<vmem>>, vector<1x8x8x128xbf16>
    %106 = vector.shape_cast %105 : vector<1x8x8x128xbf16> to vector<64x128xbf16>
    %c0_122 = arith.constant 0 : index
    %c1024_123 = arith.constant 1024 : index
    %107 = vector.load %arg13[%c0_122, %c1024_123] : memref<64x1152xbf16, #tpu.memory_space<vmem>>, vector<64x128xbf16>
    tpu.vector_store %arg13[%c0_122, %c1024_123], %106 {strides = array<i32>} : memref<64x1152xbf16, #tpu.memory_space<vmem>>, vector<64x128xbf16>,
    %c0_124 = arith.constant 0 : index
    %c0_125 = arith.constant 0 : index
    %108 = vector.load %arg13[%c0_124, %c0_125] : memref<64x1152xbf16, #tpu.memory_space<vmem>>, vector<64x1152xbf16>
    %c0_126 = arith.constant 0 : index
    %c0_127 = arith.constant 0 : index
    %109 = vector.load %arg6[%c0_126, %c0_127] : memref<1152x128xbf16, #tpu.memory_space<vmem>>, vector<1152x128xbf16>
    %cst_128 = arith.constant dense<0.000000e+00> : vector<64x128xf32>
    %110 = tpu.matmul %108, %109, %cst_128 {dimension_numbers = #tpu.dot_dimension_numbers<[1], [0], [0], [1], [0, 0, 1, 1], [], []>} : vector<64x1152xbf16>, vector<1152x128xbf16>, vector<64x128xf32> -> vector<64x128xf32>
    %c0_129 = arith.constant 0 : index
    %c0_130 = arith.constant 0 : index
    %111 = vector.load %arg7[%c0_129, %c0_130] : memref<1x128xf32, #tpu.memory_space<vmem>>, vector<1x128xf32>
    %112 = vector.broadcast %111 : vector<1x128xf32> to vector<64x128xf32>
    %113 = arith.mulf %110, %112 : vector<64x128xf32>
    %c0_131 = arith.constant 0 : index
    %c0_132 = arith.constant 0 : index
    %114 = vector.load %arg8[%c0_131, %c0_132] : memref<1x128xf32, #tpu.memory_space<vmem>>, vector<1x128xf32>
    %115 = vector.broadcast %114 : vector<1x128xf32> to vector<64x128xf32>
    %116 = arith.addf %113, %115 : vector<64x128xf32>
    %cst_133 = arith.constant 0.000000e+00 : f32
    %117 = vector.broadcast %cst_133 : f32 to vector<64x128xf32>
    %118 = arith.maximumf %116, %117 : vector<64x128xf32>
    %119 = vector.shape_cast %118 : vector<64x128xf32> to vector<1x8x8x128xf32>
    %c0_134 = arith.constant 0 : index
    %c0_135 = arith.constant 0 : index
    %c0_136 = arith.constant 0 : index
    %c0_137 = arith.constant 0 : index
    %120 = vector.load %arg9[%c0_134, %c0_135, %c0_136, %c0_137] : memref<1x8x8x128xf32, #tpu.memory_space<vmem>>, vector<1x8x8x128xf32>
    tpu.vector_store %arg9[%c0_134, %c0_135, %c0_136, %c0_137], %119 {strides = array<i32>} : memref<1x8x8x128xf32, #tpu.memory_space<vmem>>, vector<1x8x8x128xf32>,
    return
  }
  func.func @transform_0(%arg0: i32, %arg1: i32) -> (i32, i32, i32, i32, i32, i32) {
    %c0_i32 = arith.constant 0 : i32
    %c0_i32_0 = arith.constant 0 : i32
    %c0_i32_1 = arith.constant 0 : i32
    %c0_i32_2 = arith.constant 0 : i32
    %c0_i32_3 = arith.constant 0 : i32
    return %arg0, %arg1, %c0_i32, %c0_i32_0, %c0_i32_1, %c0_i32_2 : i32, i32, i32, i32, i32, i32
  }
  func.func @transform_1(%arg0: i32, %arg1: i32) -> (i32, i32) {
    %c0_i32 = arith.constant 0 : i32
    %c0_i32_0 = arith.constant 0 : i32
    %c0_i32_1 = arith.constant 0 : i32
    return %c0_i32, %c0_i32_0 : i32, i32
  }
  func.func @transform_2(%arg0: i32, %arg1: i32) -> (i32, i32) {
    %c0_i32 = arith.constant 0 : i32
    %c0_i32_0 = arith.constant 0 : i32
    %c0_i32_1 = arith.constant 0 : i32
    return %c0_i32, %c0_i32_0 : i32, i32
  }
  func.func @transform_3(%arg0: i32, %arg1: i32) -> (i32, i32) {
    %c0_i32 = arith.constant 0 : i32
    %c0_i32_0 = arith.constant 0 : i32
    %c0_i32_1 = arith.constant 0 : i32
    return %c0_i32, %c0_i32_0 : i32, i32
  }
  func.func @transform_4(%arg0: i32, %arg1: i32) -> (i32, i32) {
    %c0_i32 = arith.constant 0 : i32
    %c0_i32_0 = arith.constant 0 : i32
    %c0_i32_1 = arith.constant 0 : i32
    return %c0_i32, %c0_i32_0 : i32, i32
  }
  func.func @transform_5(%arg0: i32, %arg1: i32) -> (i32, i32) {
    %c0_i32 = arith.constant 0 : i32
    %c0_i32_0 = arith.constant 0 : i32
    %c0_i32_1 = arith.constant 0 : i32
    return %c0_i32, %c0_i32_0 : i32, i32
  }
  func.func @transform_6(%arg0: i32, %arg1: i32) -> (i32, i32) {
    %c0_i32 = arith.constant 0 : i32
    %c0_i32_0 = arith.constant 0 : i32
    %c0_i32_1 = arith.constant 0 : i32
    return %c0_i32, %c0_i32_0 : i32, i32
  }
  func.func @transform_7(%arg0: i32, %arg1: i32) -> (i32, i32, i32, i32) {
    %c0_i32 = arith.constant 0 : i32
    %c0_i32_0 = arith.constant 0 : i32
    %c0_i32_1 = arith.constant 0 : i32
    return %arg0, %arg1, %c0_i32, %c0_i32_0 : i32, i32, i32, i32
  }
}

</mosaic_0001>

<llo_original>
// kernel: tpu_custom_call.1
$region0: #{tpu_custom_call.1}
  #allocation0 [shape = 'u32[]', space=smem, size = 0x4, offset = 0x4, fixed_abs, tag = 'smem constant byte address 0x4 - core index']
  #allocation1 [shape = 'u32[144,128]{1,0:T(1,128)}', space=vmem, size = 0x12000, scoped, tag = 'internal scratch']
  #allocation2 [shape = 'bf16[1,12,12,128]{3,2,1,0:T(8,128)(2,1)}', space=vmem, size = 0xc000, scoped, tag = 'scratch operand']
  #allocation3 [shape = 'bf16[1,10,10,128]{3,2,1,0:T(8,128)(2,1)}', space=vmem, size = 0xa000, scoped, tag = 'scratch operand']
  #allocation4 [shape = 'bf16[100,1152]{1,0:T(8,128)(2,1)}', space=vmem, size = 0x3a800, scoped, tag = 'scratch operand']
  #allocation5 [shape = 'bf16[64,1152]{1,0:T(16,128)(2,1)}', space=vmem, size = 0x24000, scoped, tag = 'scratch operand']
  %s0 = inlined_call_operand.vmem [shape: bf16[2,1,4,12,12,128], index: 0, kind: input, shape index: {}]
  %s1 = inlined_call_operand.vmem [shape: bf16[1152,128], index: 1, kind: input, shape index: {}]
  %s2 = inlined_call_operand.vmem [shape: f32[1,128], index: 2, kind: input, shape index: {}]
  %s3 = inlined_call_operand.vmem [shape: f32[1,128], index: 3, kind: input, shape index: {}]
  %s4 = inlined_call_operand.vmem [shape: bf16[1152,128], index: 4, kind: input, shape index: {}]
  %s5 = inlined_call_operand.vmem [shape: f32[1,128], index: 5, kind: input, shape index: {}]
  %s6 = inlined_call_operand.vmem [shape: f32[1,128], index: 6, kind: input, shape index: {}]
  %s7 = inlined_call_operand.hbm [shape: f32[2,8,8,128], index: 7, kind: output, shape index: {}]
  %s8 = sld [smem:[#allocation0]]
  $region61: #{tpu_custom_call.1} parent=0
    _
  %s10 = ssub.s32 1, %s8
  %s11 = scalar_select 0, %s10, %s8
  $region1: #{tpu_custom_call.1} parent=0
    #allocation6 [shape = 'u8[65536]{0}', space=vmem, size = 0x10000, scoped, tag = 'output window, operand 0']
    #allocation7 [shape = 's32[2]{0}', space=sflag, size = 0x8, scoped, tag = 'scoped memory for tpu_custom_call.1']
    %12 = vsyncpa [#allocation7], 0
    %s13 = scalar_lea.sflag [#allocation7], 1
    %14 = vsyncpa %s13, 0
    loop: start=0, step=1, limit=4
    $region2: #{tpu_custom_call.1} parent=1 // loop_pre_header
      _
    $region3: #{tpu_custom_call.1} parent=1 // loop_header
      %s16 = sphi 0, %s20
      %p17 = scmp.ge.s32.totalorder %s16, 4
      %s23 = sphi 0, %s35
      %s24 = sphi 0, %s31
      %s25 = sphi 0, %s23
      %s26 = sphi 0, %s24
      %s27 = sphi 0, %s25
      %s28 = sphi 0, %s26
      %s40 = sphi 0, %s42
      %s43 = sphi 0, %s40
      %s44 = sphi 0, %s43
      %s60 = sphi 0, %s44
      %s64 = sphi 0, %s64
      %s66 = sphi 0, %s64
      %s67 = sphi 0, %s66
      %s81 = sphi 0, %s67
      %s85 = sphi 0, %s85
      %s87 = sphi 0, %s85
      %s88 = sphi 0, %s87
      %s102 = sphi 0, %s88
      %s106 = sphi 0, %s106
      %s108 = sphi 0, %s106
      %s109 = sphi 0, %s108
      %s123 = sphi 0, %s109
      %s127 = sphi 0, %s127
      %s129 = sphi 0, %s127
      %s130 = sphi 0, %s129
      %s144 = sphi 0, %s130
      %s148 = sphi 0, %s148
      %s150 = sphi 0, %s148
      %s151 = sphi 0, %s150
      %s165 = sphi 0, %s151
      %s169 = sphi 0, %s169
      %s171 = sphi 0, %s169
      %s172 = sphi 0, %s171
      %s186 = sphi 0, %s172
      %s194 = sphi 0, %s196
      %s197 = sphi 0, %s194
      %s198 = sphi 0, %s197
      %s214 = sphi 0, %s198
    $region4: #{tpu_custom_call.1} parent=1 // loop_header_branch
      %19 = sbr.rel (%p17) target = $region8
    $region5: #{tpu_custom_call.1} parent=1 // loop_body
      %s21 = ssub.s32 %s16, 1
      %s22 = ssub.s32 %s16, 2
      %s29 = sadd.s32 1, %s24
      %p30 = scmp.ge.s32.totalorder %s29, 1
      %s31 = scalar_select %p30, 0, %s29
      %s32 = sadd.s32 1, %s23
      %s33 = scalar_select %p30, %s32, %s23
      %p34 = scmp.ge.s32.totalorder %s33, 2
      %s35 = scalar_select %p34, 0, %s33
      %s36 = ssub.s32 %s23, %s35
      %s37 = ssub.s32 %s24, %s31
      %s38 = sor.u32 %s36, %s37
      %p39 = scmp.eq.s32.totalorder %s38, 0
      %s41 = sadd.s32 %s40, 1
      %s42 = scalar_select %p39, %s40, %s41
      %p45 = pneg %p39
      %p46 = scmp.eq.s32.totalorder %s16, 1
      %p47 = por %p45, %p46
      %p48 = scmp.ne.s32.totalorder %s40, %s43
      %p49 = scmp.eq.s32.totalorder %s16, 0
      %p50 = por %p48, %p49
      %p51 = scmp.ne.s32.totalorder %s40, %s43
      %p52 = scmp.eq.s32.totalorder %s21, 1
      %p53 = por %p51, %p52
      %p54 = scmp.ne.s32.totalorder %s43, %s44
      %p55 = scmp.eq.s32.totalorder %s21, 0
      %p56 = por %p54, %p55
      %p57 = scmp.ne.s32.totalorder %s43, %s44
      %p58 = scmp.eq.s32.totalorder %s22, 1
      %p59 = por %p57, %p58
      %p61 = scmp.ne.s32.totalorder %s44, %s60
      %p62 = scmp.eq.s32.totalorder %s22, 0
      %p63 = por %p61, %p62
      %s65 = sadd.s32 %s64, 1
      %p68 = scmp.eq.s32.totalorder %s16, 1
      %p69 = scmp.ne.s32.totalorder %s64, %s66
      %p70 = scmp.eq.s32.totalorder %s16, 0
      %p71 = por %p69, %p70
      %p72 = scmp.ne.s32.totalorder %s64, %s66
      %p73 = scmp.eq.s32.totalorder %s21, 1
      %p74 = por %p72, %p73
      %p75 = scmp.ne.s32.totalorder %s66, %s67
      %p76 = scmp.eq.s32.totalorder %s21, 0
      %p77 = por %p75, %p76
      %p78 = scmp.ne.s32.totalorder %s66, %s67
      %p79 = scmp.eq.s32.totalorder %s22, 1
      %p80 = por %p78, %p79
      %p82 = scmp.ne.s32.totalorder %s67, %s81
      %p83 = scmp.eq.s32.totalorder %s22, 0
      %p84 = por %p82, %p83
      %s86 = sadd.s32 %s85, 1
      %p89 = scmp.eq.s32.totalorder %s16, 1
      %p90 = scmp.ne.s32.totalorder %s85, %s87
      %p91 = scmp.eq.s32.totalorder %s16, 0
      %p92 = por %p90, %p91
      %p93 = scmp.ne.s32.totalorder %s85, %s87
      %p94 = scmp.eq.s32.totalorder %s21, 1
      %p95 = por %p93, %p94
      %p96 = scmp.ne.s32.totalorder %s87, %s88
      %p97 = scmp.eq.s32.totalorder %s21, 0
      %p98 = por %p96, %p97
      %p99 = scmp.ne.s32.totalorder %s87, %s88
      %p100 = scmp.eq.s32.totalorder %s22, 1
      %p101 = por %p99, %p100
      %p103 = scmp.ne.s32.totalorder %s88, %s102
      %p104 = scmp.eq.s32.totalorder %s22, 0
      %p105 = por %p103, %p104
      %s107 = sadd.s32 %s106, 1
      %p110 = scmp.eq.s32.totalorder %s16, 1
      %p111 = scmp.ne.s32.totalorder %s106, %s108
      %p112 = scmp.eq.s32.totalorder %s16, 0
      %p113 = por %p111, %p112
      %p114 = scmp.ne.s32.totalorder %s106, %s108
      %p115 = scmp.eq.s32.totalorder %s21, 1
      %p116 = por %p114, %p115
      %p117 = scmp.ne.s32.totalorder %s108, %s109
      %p118 = scmp.eq.s32.totalorder %s21, 0
      %p119 = por %p117, %p118
      %p120 = scmp.ne.s32.totalorder %s108, %s109
      %p121 = scmp.eq.s32.totalorder %s22, 1
      %p122 = por %p120, %p121
      %p124 = scmp.ne.s32.totalorder %s109, %s123
      %p125 = scmp.eq.s32.totalorder %s22, 0
      %p126 = por %p124, %p125
      %s128 = sadd.s32 %s127, 1
      %p131 = scmp.eq.s32.totalorder %s16, 1
      %p132 = scmp.ne.s32.totalorder %s127, %s129
      %p133 = scmp.eq.s32.totalorder %s16, 0
      %p134 = por %p132, %p133
      %p135 = scmp.ne.s32.totalorder %s127, %s129
      %p136 = scmp.eq.s32.totalorder %s21, 1
      %p137 = por %p135, %p136
      %p138 = scmp.ne.s32.totalorder %s129, %s130
      %p139 = scmp.eq.s32.totalorder %s21, 0
      %p140 = por %p138, %p139
      %p141 = scmp.ne.s32.totalorder %s129, %s130
      %p142 = scmp.eq.s32.totalorder %s22, 1
      %p143 = por %p141, %p142
      %p145 = scmp.ne.s32.totalorder %s130, %s144
      %p146 = scmp.eq.s32.totalorder %s22, 0
      %p147 = por %p145, %p146
      %s149 = sadd.s32 %s148, 1
      %p152 = scmp.eq.s32.totalorder %s16, 1
      %p153 = scmp.ne.s32.totalorder %s148, %s150
      %p154 = scmp.eq.s32.totalorder %s16, 0
      %p155 = por %p153, %p154
      %p156 = scmp.ne.s32.totalorder %s148, %s150
      %p157 = scmp.eq.s32.totalorder %s21, 1
      %p158 = por %p156, %p157
      %p159 = scmp.ne.s32.totalorder %s150, %s151
      %p160 = scmp.eq.s32.totalorder %s21, 0
      %p161 = por %p159, %p160
      %p162 = scmp.ne.s32.totalorder %s150, %s151
      %p163 = scmp.eq.s32.totalorder %s22, 1
      %p164 = por %p162, %p163
      %p166 = scmp.ne.s32.totalorder %s151, %s165
      %p167 = scmp.eq.s32.totalorder %s22, 0
      %p168 = por %p166, %p167
      %s170 = sadd.s32 %s169, 1
      %p173 = scmp.eq.s32.totalorder %s16, 1
      %p174 = scmp.ne.s32.totalorder %s169, %s171
      %p175 = scmp.eq.s32.totalorder %s16, 0
      %p176 = por %p174, %p175
      %p177 = scmp.ne.s32.totalorder %s169, %s171
      %p178 = scmp.eq.s32.totalorder %s21, 1
      %p179 = por %p177, %p178
      %p180 = scmp.ne.s32.totalorder %s171, %s172
      %p181 = scmp.eq.s32.totalorder %s21, 0
      %p182 = por %p180, %p181
      %p183 = scmp.ne.s32.totalorder %s171, %s172
      %p184 = scmp.eq.s32.totalorder %s22, 1
      %p185 = por %p183, %p184
      %p187 = scmp.ne.s32.totalorder %s172, %s186
      %p188 = scmp.eq.s32.totalorder %s22, 0
      %p189 = por %p187, %p188
      %s190 = ssub.s32 %s23, %s35
      %s191 = ssub.s32 %s24, %s31
      %s192 = sor.u32 %s190, %s191
      %p193 = scmp.eq.s32.totalorder %s192, 0
      %s195 = sadd.s32 %s194, 1
      %s196 = scalar_select %p193, %s194, %s195
      %p199 = pneg %p193
      %p200 = scmp.eq.s32.totalorder %s16, 1
      %p201 = por %p199, %p200
      %p202 = scmp.ne.s32.totalorder %s194, %s197
      %p203 = scmp.eq.s32.totalorder %s16, 0
      %p204 = por %p202, %p203
      %p205 = scmp.ne.s32.totalorder %s194, %s197
      %p206 = scmp.eq.s32.totalorder %s21, 1
      %p207 = por %p205, %p206
      %p208 = scmp.ne.s32.totalorder %s197, %s198
      %p209 = scmp.eq.s32.totalorder %s21, 0
      %p210 = por %p208, %p209
      %p211 = scmp.ne.s32.totalorder %s197, %s198
      %p212 = scmp.eq.s32.totalorder %s22, 1
      %p213 = por %p211, %p212
      %p215 = scmp.ne.s32.totalorder %s198, %s214
      %p216 = scmp.eq.s32.totalorder %s22, 0
      %p217 = por %p215, %p216
      %p218 = scmp.le.s32.totalorder 1, %s16
      %p219 = scmp.lt.s32.totalorder %s16, 3
      %p220 = pnand %p218, %p219
      %p221 = pneg %p220
      // Predicated region
      $region9: #{tpu_custom_call.1} parent=5 // pred_check
        _
      $region10: #{tpu_custom_call.1} parent=5 // pred_check_branch
        %223 = sbr.rel (%p220) target = $region12
      $region11: #{tpu_custom_call.1} parent=5 // pred_region
        %s224 = ssub.s32 %s16, 1
        // Predicated region
        $region13: #{tpu_custom_call.1} parent=11 // pred_check
          %p225 = pneg %p77
        $region14: #{tpu_custom_call.1} parent=11 // pred_check_branch
          %227 = sbr.rel (%p225) target = $region16
        $region15: #{tpu_custom_call.1} parent=11 // pred_region
          _
        $region16: #{tpu_custom_call.1} parent=11 // pred_fallthru
          _
        // Predicated region
        $region17: #{tpu_custom_call.1} parent=11 // pred_check
          %p228 = pneg %p98
        $region18: #{tpu_custom_call.1} parent=11 // pred_check_branch
          %230 = sbr.rel (%p228) target = $region20
        $region19: #{tpu_custom_call.1} parent=11 // pred_region
          _
        $region20: #{tpu_custom_call.1} parent=11 // pred_fallthru
          _
        // Predicated region
        $region21: #{tpu_custom_call.1} parent=11 // pred_check
          %p231 = pneg %p119
        $region22: #{tpu_custom_call.1} parent=11 // pred_check_branch
          %233 = sbr.rel (%p231) target = $region24
        $region23: #{tpu_custom_call.1} parent=11 // pred_region
          _
        $region24: #{tpu_custom_call.1} parent=11 // pred_fallthru
          _
        // Predicated region
        $region25: #{tpu_custom_call.1} parent=11 // pred_check
          %p234 = pneg %p140
        $region26: #{tpu_custom_call.1} parent=11 // pred_check_branch
          %236 = sbr.rel (%p234) target = $region28
        $region27: #{tpu_custom_call.1} parent=11 // pred_region
          _
        $region28: #{tpu_custom_call.1} parent=11 // pred_fallthru
          _
        // Predicated region
        $region29: #{tpu_custom_call.1} parent=11 // pred_check
          %p237 = pneg %p161
        $region30: #{tpu_custom_call.1} parent=11 // pred_check_branch
          %239 = sbr.rel (%p237) target = $region32
        $region31: #{tpu_custom_call.1} parent=11 // pred_region
          _
        $region32: #{tpu_custom_call.1} parent=11 // pred_fallthru
          _
        // Predicated region
        $region33: #{tpu_custom_call.1} parent=11 // pred_check
          %p240 = pneg %p182
        $region34: #{tpu_custom_call.1} parent=11 // pred_check_branch
          %242 = sbr.rel (%p240) target = $region36
        $region35: #{tpu_custom_call.1} parent=11 // pred_region
          _
        $region36: #{tpu_custom_call.1} parent=11 // pred_fallthru
          _
      $region12: #{tpu_custom_call.1} parent=5 // pred_fallthru
        _
      %p243 = scmp.lt.s32.totalorder %s16, 2
      // Predicated region
      $region37: #{tpu_custom_call.1} parent=5 // pred_check
        %p244 = pneg %p243
      $region38: #{tpu_custom_call.1} parent=5 // pred_check_branch
        %246 = sbr.rel (%p244) target = $region40
      $region39: #{tpu_custom_call.1} parent=5 // pred_region
        // Predicated region
        $region41: #{tpu_custom_call.1} parent=39 // pred_check
          %p247 = pneg %p50
        $region42: #{tpu_custom_call.1} parent=39 // pred_check_branch
          %249 = sbr.rel (%p247) target = $region44
        $region43: #{tpu_custom_call.1} parent=39 // pred_region
          %p250 = scmp.lt.s32.totalorder %s23, 1
          %s251 = scalar_select %p250, %s23, 1
          %p252 = scmp.lt.s32.totalorder %s24, 0
          %s253 = scalar_select %p252, %s24, 0
          %s254 = smul.addr %s253, 96
          %s255 = smul.addr %s251, 96
          %s256 = sadd.s32 %s254, %s255
          %s257 = smul.addr %s256, 4
          %s258 = scalar_lea.vmem %s0, %s257
        $region44: #{tpu_custom_call.1} parent=39 // pred_fallthru
          _
      $region40: #{tpu_custom_call.1} parent=5 // pred_fallthru
        _
      %p259 = scmp.le.s32.totalorder 1, %s16
      %p260 = scmp.lt.s32.totalorder %s16, 3
      %p261 = pnand %p259, %p260
      %p262 = pneg %p261
      // Predicated region
      $region45: #{tpu_custom_call.1} parent=5 // pred_check
        _
      $region46: #{tpu_custom_call.1} parent=5 // pred_check_branch
        %264 = sbr.rel (%p261) target = $region48
      $region47: #{tpu_custom_call.1} parent=5 // pred_region
        %s265 = ssub.s32 %s16, 1
        %p266 = scmp.lt.s32.totalorder %s25, 1
        %s267 = scalar_select %p266, %s25, 1
        %p268 = scmp.lt.s32.totalorder %s26, 0
        %s269 = scalar_select %p268, %s26, 0
        %s270 = smul.addr %s269, 96
        %s271 = smul.addr %s267, 96
        %s272 = sadd.s32 %s270, %s271
        %s273 = smul.addr %s272, 4
        %s274 = scalar_lea.vmem %s0, %s273
        %p275 = pneg %p56
        %p276 = pneg %p53
        %p277 = pneg %p77
        %p278 = pneg %p74
        %p279 = pneg %p98
        %p280 = pneg %p95
        %p281 = pneg %p119
        %p282 = pneg %p116
        %p283 = pneg %p140
        %p284 = pneg %p137
        %p285 = pneg %p161
        %p286 = pneg %p158
        %p287 = pneg %p182
        %p288 = pneg %p179
        %p289 = pneg %p210
        %p290 = pneg %p207
        %s291 = sand.u32 %s197, 1
        %s292 = scalar_lea.sflag [#allocation7], %s291
        %s293 = sand.u32 %s197, 1
        %s294 = smul.addr %s293, 64
        %s295 = scalar_lea.vmem [#allocation6], %s294
        %p296 = scmp.lt.s32.totalorder %s25, 1
        %s297 = scalar_select %p296, %s25, 1
        %p298 = scmp.lt.s32.totalorder %s26, 0
        %s299 = scalar_select %p298, %s26, 0
        %s300 = smul.addr %s299, 96
        %s301 = smul.addr %s297, 96
        %s302 = sadd.s32 %s300, %s301
        %s303 = smul.addr %s302, 4
        %s304 = scalar_lea.vmem %s0, %s303
        %s305 = smul.u32 8, %s26
        %v307 = vld [vmem:[%s304] sm:$0xf]
        %v308 = vld [vmem:[%s304 + $0x4] sm:$0x3]
        %v309 = vld [vmem:[%s304 + $0x8] sm:$0xf]
        %v310 = vld [vmem:[%s304 + $0xc] sm:$0x3]
        %v311 = vld [vmem:[%s304 + $0x10] sm:$0xf]
        %v312 = vld [vmem:[%s304 + $0x14] sm:$0x3]
        %v313 = vld [vmem:[%s304 + $0x18] sm:$0xf]
        %v314 = vld [vmem:[%s304 + $0x1c] sm:$0x3]
        %v315 = vld [vmem:[%s304 + $0x20] sm:$0xf]
        %v316 = vld [vmem:[%s304 + $0x24] sm:$0x3]
        %v317 = vld [vmem:[%s304 + $0x28] sm:$0xf]
        %v318 = vld [vmem:[%s304 + $0x2c] sm:$0x3]
        %v319 = vld [vmem:[%s304 + $0x30] sm:$0xf]
        %v320 = vld [vmem:[%s304 + $0x34] sm:$0x3]
        %v321 = vld [vmem:[%s304 + $0x38] sm:$0xf]
        %v322 = vld [vmem:[%s304 + $0x3c] sm:$0x3]
        %v323 = vld [vmem:[%s304 + $0x40] sm:$0xf]
        %v324 = vld [vmem:[%s304 + $0x44] sm:$0x3]
        %v325 = vld [vmem:[%s304 + $0x48] sm:$0xf]
        %v326 = vld [vmem:[%s304 + $0x4c] sm:$0x3]
        %v327 = vld [vmem:[%s304 + $0x50] sm:$0xf]
        %v328 = vld [vmem:[%s304 + $0x54] sm:$0x3]
        %v329 = vld [vmem:[%s304 + $0x58] sm:$0xf]
        %v330 = vld [vmem:[%s304 + $0x5c] sm:$0x3]
        %v331 = vld [vmem:[%s304 + $0x60] sm:$0xf]
        %v332 = vld [vmem:[%s304 + $0x64] sm:$0x3]
        %v333 = vld [vmem:[%s304 + $0x68] sm:$0xf]
        %v334 = vld [vmem:[%s304 + $0x6c] sm:$0x3]
        %v335 = vld [vmem:[%s304 + $0x70] sm:$0xf]
        %v336 = vld [vmem:[%s304 + $0x74] sm:$0x3]
        %v337 = vld [vmem:[%s304 + $0x78] sm:$0xf]
        %v338 = vld [vmem:[%s304 + $0x7c] sm:$0x3]
        %v339 = vld [vmem:[%s304 + $0x80] sm:$0xf]
        %v340 = vld [vmem:[%s304 + $0x84] sm:$0x3]
        %v341 = vld [vmem:[%s304 + $0x88] sm:$0xf]
        %v342 = vld [vmem:[%s304 + $0x8c] sm:$0x3]
        %v343 = vld [vmem:[%s304 + $0x90] sm:$0xf]
        %v344 = vld [vmem:[%s304 + $0x94] sm:$0x3]
        %v345 = vld [vmem:[%s304 + $0x98] sm:$0xf]
        %v346 = vld [vmem:[%s304 + $0x9c] sm:$0x3]
        %v347 = vld [vmem:[%s304 + $0xa0] sm:$0xf]
        %v348 = vld [vmem:[%s304 + $0xa4] sm:$0x3]
        %v349 = vld [vmem:[%s304 + $0xa8] sm:$0xf]
        %v350 = vld [vmem:[%s304 + $0xac] sm:$0x3]
        %v351 = vld [vmem:[%s304 + $0xb0] sm:$0xf]
        %v352 = vld [vmem:[%s304 + $0xb4] sm:$0x3]
        %v353 = vld [vmem:[%s304 + $0xb8] sm:$0xf]
        %v354 = vld [vmem:[%s304 + $0xbc] sm:$0x3]
        %v355 = vld [vmem:[%s304 + $0xc0] sm:$0xf]
        %v356 = vld [vmem:[%s304 + $0xc4] sm:$0x3]
        %v357 = vld [vmem:[%s304 + $0xc8] sm:$0xf]
        %v358 = vld [vmem:[%s304 + $0xcc] sm:$0x3]
        %v359 = vld [vmem:[%s304 + $0xd0] sm:$0xf]
        %v360 = vld [vmem:[%s304 + $0xd4] sm:$0x3]
        %v361 = vld [vmem:[%s304 + $0xd8] sm:$0xf]
        %v362 = vld [vmem:[%s304 + $0xdc] sm:$0x3]
        %v363 = vld [vmem:[%s304 + $0xe0] sm:$0xf]
        %v364 = vld [vmem:[%s304 + $0xe4] sm:$0x3]
        %v365 = vld [vmem:[%s304 + $0xe8] sm:$0xf]
        %v366 = vld [vmem:[%s304 + $0xec] sm:$0x3]
        %v367 = vld [vmem:[%s304 + $0xf0] sm:$0xf]
        %v368 = vld [vmem:[%s304 + $0xf4] sm:$0x3]
        %v369 = vld [vmem:[%s304 + $0xf8] sm:$0xf]
        %v370 = vld [vmem:[%s304 + $0xfc] sm:$0x3]
        %v371 = vld [vmem:[%s304 + $0x100] sm:$0xf]
        %v372 = vld [vmem:[%s304 + $0x104] sm:$0x3]
        %v373 = vld [vmem:[%s304 + $0x108] sm:$0xf]
        %v374 = vld [vmem:[%s304 + $0x10c] sm:$0x3]
        %v375 = vld [vmem:[%s304 + $0x110] sm:$0xf]
        %v376 = vld [vmem:[%s304 + $0x114] sm:$0x3]
        %v377 = vld [vmem:[%s304 + $0x118] sm:$0xf]
        %v378 = vld [vmem:[%s304 + $0x11c] sm:$0x3]
        %v379 = vld [vmem:[%s304 + $0x120] sm:$0xf]
        %v380 = vld [vmem:[%s304 + $0x124] sm:$0x3]
        %v381 = vld [vmem:[%s304 + $0x128] sm:$0xf]
        %v382 = vld [vmem:[%s304 + $0x12c] sm:$0x3]
        %v383 = vld [vmem:[%s304 + $0x130] sm:$0xf]
        %v384 = vld [vmem:[%s304 + $0x134] sm:$0x3]
        %v385 = vld [vmem:[%s304 + $0x138] sm:$0xf]
        %v386 = vld [vmem:[%s304 + $0x13c] sm:$0x3]
        %v387 = vld [vmem:[%s304 + $0x140] sm:$0xf]
        %v388 = vld [vmem:[%s304 + $0x144] sm:$0x3]
        %v389 = vld [vmem:[%s304 + $0x148] sm:$0xf]
        %v390 = vld [vmem:[%s304 + $0x14c] sm:$0x3]
        %v391 = vld [vmem:[%s304 + $0x150] sm:$0xf]
        %v392 = vld [vmem:[%s304 + $0x154] sm:$0x3]
        %v393 = vld [vmem:[%s304 + $0x158] sm:$0xf]
        %v394 = vld [vmem:[%s304 + $0x15c] sm:$0x3]
        %v395 = vld [vmem:[%s304 + $0x160] sm:$0xf]
        %v396 = vld [vmem:[%s304 + $0x164] sm:$0x3]
        %v397 = vld [vmem:[%s304 + $0x168] sm:$0xf]
        %v398 = vld [vmem:[%s304 + $0x16c] sm:$0x3]
        %v399 = vld [vmem:[%s304 + $0x170] sm:$0xf]
        %v400 = vld [vmem:[%s304 + $0x174] sm:$0x3]
        %v401 = vld [vmem:[%s304 + $0x178] sm:$0xf]
        %v402 = vld [vmem:[%s304 + $0x17c] sm:$0x3]
        %v403 = vmax.bf16 %v307, %v331
        %v404 = vmax.bf16 %v308, %v332
        %v405 = vmax.bf16 %v309, %v333
        %v406 = vmax.bf16 %v310, %v334
        %v407 = vmax.bf16 %v311, %v335
        %v408 = vmax.bf16 %v312, %v336
        %v409 = vmax.bf16 %v313, %v337
        %v410 = vmax.bf16 %v314, %v338
        %v411 = vmax.bf16 %v315, %v339
        %v412 = vmax.bf16 %v316, %v340
        %v413 = vmax.bf16 %v317, %v341
        %v414 = vmax.bf16 %v318, %v342
        %v415 = vmax.bf16 %v319, %v343
        %v416 = vmax.bf16 %v320, %v344
        %v417 = vmax.bf16 %v321, %v345
        %v418 = vmax.bf16 %v322, %v346
        %v419 = vmax.bf16 %v323, %v347
        %v420 = vmax.bf16 %v324, %v348
        %v421 = vmax.bf16 %v325, %v349
        %v422 = vmax.bf16 %v326, %v350
        %v423 = vmax.bf16 %v327, %v351
        %v424 = vmax.bf16 %v328, %v352
        %v425 = vmax.bf16 %v329, %v353
        %v426 = vmax.bf16 %v330, %v354
        %v427 = vmax.bf16 %v355, %v379
        %v428 = vmax.bf16 %v356, %v380
        %v429 = vmax.bf16 %v357, %v381
        %v430 = vmax.bf16 %v358, %v382
        %v431 = vmax.bf16 %v359, %v383
        %v432 = vmax.bf16 %v360, %v384
        %v433 = vmax.bf16 %v361, %v385
        %v434 = vmax.bf16 %v362, %v386
        %v435 = vmax.bf16 %v363, %v387
        %v436 = vmax.bf16 %v364, %v388
        %v437 = vmax.bf16 %v365, %v389
        %v438 = vmax.bf16 %v366, %v390
        %v439 = vmax.bf16 %v367, %v391
        %v440 = vmax.bf16 %v368, %v392
        %v441 = vmax.bf16 %v369, %v393
        %v442 = vmax.bf16 %v370, %v394
        %v443 = vmax.bf16 %v371, %v395
        %v444 = vmax.bf16 %v372, %v396
        %v445 = vmax.bf16 %v373, %v397
        %v446 = vmax.bf16 %v374, %v398
        %v447 = vmax.bf16 %v375, %v399
        %v448 = vmax.bf16 %v376, %v400
        %v449 = vmax.bf16 %v377, %v401
        %v450 = vmax.bf16 %v378, %v402
        %v451 = vmax.bf16 %v403, %v427
        %v452 = vmax.bf16 %v404, %v428
        %v453 = vmax.bf16 %v405, %v429
        %v454 = vmax.bf16 %v406, %v430
        %v455 = vmax.bf16 %v407, %v431
        %v456 = vmax.bf16 %v408, %v432
        %v457 = vmax.bf16 %v409, %v433
        %v458 = vmax.bf16 %v410, %v434
        %v459 = vmax.bf16 %v411, %v435
        %v460 = vmax.bf16 %v412, %v436
        %v461 = vmax.bf16 %v413, %v437
        %v462 = vmax.bf16 %v414, %v438
        %v463 = vmax.bf16 %v415, %v439
        %v464 = vmax.bf16 %v416, %v440
        %v465 = vmax.bf16 %v417, %v441
        %v466 = vmax.bf16 %v418, %v442
        %v467 = vmax.bf16 %v419, %v443
        %v468 = vmax.bf16 %v420, %v444
        %v469 = vmax.bf16 %v421, %v445
        %v470 = vmax.bf16 %v422, %v446
        %v471 = vmax.bf16 %v423, %v447
        %v472 = vmax.bf16 %v424, %v448
        %v473 = vmax.bf16 %v425, %v449
        %v474 = vmax.bf16 %v426, %v450
        %475 = vst [vmem:[#allocation2] sm:$0xf] %v451
        %476 = vst [vmem:[#allocation2 + $0x4] sm:$0x3] %v452
        %477 = vst [vmem:[#allocation2 + $0x8] sm:$0xf] %v453
        %478 = vst [vmem:[#allocation2 + $0xc] sm:$0x3] %v454
        %479 = vst [vmem:[#allocation2 + $0x10] sm:$0xf] %v455
        %480 = vst [vmem:[#allocation2 + $0x14] sm:$0x3] %v456
        %481 = vst [vmem:[#allocation2 + $0x18] sm:$0xf] %v457
        %482 = vst [vmem:[#allocation2 + $0x1c] sm:$0x3] %v458
        %483 = vst [vmem:[#allocation2 + $0x20] sm:$0xf] %v459
        %484 = vst [vmem:[#allocation2 + $0x24] sm:$0x3] %v460
        %485 = vst [vmem:[#allocation2 + $0x28] sm:$0xf] %v461
        %486 = vst [vmem:[#allocation2 + $0x2c] sm:$0x3] %v462
        %487 = vst [vmem:[#allocation2 + $0x30] sm:$0xf] %v463
        %488 = vst [vmem:[#allocation2 + $0x34] sm:$0x3] %v464
        %489 = vst [vmem:[#allocation2 + $0x38] sm:$0xf] %v465
        %490 = vst [vmem:[#allocation2 + $0x3c] sm:$0x3] %v466
        %491 = vst [vmem:[#allocation2 + $0x40] sm:$0xf] %v467
        %492 = vst [vmem:[#allocation2 + $0x44] sm:$0x3] %v468
        %493 = vst [vmem:[#allocation2 + $0x48] sm:$0xf] %v469
        %494 = vst [vmem:[#allocation2 + $0x4c] sm:$0x3] %v470
        %495 = vst [vmem:[#allocation2 + $0x50] sm:$0xf] %v471
        %496 = vst [vmem:[#allocation2 + $0x54] sm:$0x3] %v472
        %497 = vst [vmem:[#allocation2 + $0x58] sm:$0xf] %v473
        %498 = vst [vmem:[#allocation2 + $0x5c] sm:$0x3] %v474
        %v499 = vld [vmem:[#allocation2] sm:$0xf]
        %v500 = vld [vmem:[#allocation2 + $0x4] sm:$0x1]
        %v501 = vld [vmem:[#allocation2 + $0x8] sm:$0xf]
        %v502 = vld [vmem:[#allocation2 + $0xc] sm:$0x1]
        %v503 = vld [vmem:[#allocation2 + $0x10] sm:$0xf]
        %v504 = vld [vmem:[#allocation2 + $0x14] sm:$0x1]
        %v505 = vld [vmem:[#allocation2 + $0x18] sm:$0xf]
        %v506 = vld [vmem:[#allocation2 + $0x1c] sm:$0x1]
        %v507 = vld [vmem:[#allocation2 + $0x20] sm:$0xf]
        %v508 = vld [vmem:[#allocation2 + $0x24] sm:$0x1]
        %v509 = vld [vmem:[#allocation2 + $0x28] sm:$0xf]
        %v510 = vld [vmem:[#allocation2 + $0x2c] sm:$0x1]
        %v511 = vld [vmem:[#allocation2 + $0x30] sm:$0xf]
        %v512 = vld [vmem:[#allocation2 + $0x34] sm:$0x1]
        %v513 = vld [vmem:[#allocation2 + $0x38] sm:$0xf]
        %v514 = vld [vmem:[#allocation2 + $0x3c] sm:$0x1]
        %v515 = vld [vmem:[#allocation2 + $0x40] sm:$0xf]
        %v516 = vld [vmem:[#allocation2 + $0x44] sm:$0x1]
        %v517 = vld [vmem:[#allocation2 + $0x48] sm:$0xf]
        %v518 = vld [vmem:[#allocation2 + $0x4c] sm:$0x1]
        %v540 = vunpack.c.l.s4 1966171168
        %v541 = vunpack.c.0.s8 %v540
        %v542 = vlaneseq
        %v543 = vshrl.u32 %v542, 7
        %v544 = vsub.s32 %v541, %v543
        %v545 = vrot.slane %v499, %v544
        %v546 = vcombine.high %v545, %v545
        %v548 = vunpack.c.l.s4 1966171168
        %v549 = vunpack.c.0.s8 %v548
        %v550 = vlaneseq
        %v551 = vshrl.u32 %v550, 7
        %v552 = vsub.s32 %v549, %v551
        %v553 = vrot.slane %v545, %v552
        %v555 = vunpack.c.l.s4 1966171168
        %v556 = vunpack.c.0.s8 %v555
        %v557 = vlaneseq
        %v558 = vshrl.u32 %v557, 7
        %v559 = vsub.s32 %v556, %v558
        %v560 = vrot.slane %v546, %v559
        %v561 = vcombine.high %v553, %v553
        %v562 = vcombine.high %v560, %v560
        %v564 = vunpack.c.l.s4 1966171168
        %v565 = vunpack.c.0.s8 %v564
        %v566 = vlaneseq
        %v567 = vshrl.u32 %v566, 7
        %v568 = vsub.s32 %v565, %v567
        %v569 = vrot.slane %v500, %v568
        %v571 = vunpack.c.l.s4 1966171168
        %v572 = vunpack.c.0.s8 %v571
        %v573 = vlaneseq
        %v574 = vshrl.u32 %v573, 7
        %v575 = vsub.s32 %v572, %v574
        %v576 = vrot.slane %v569, %v575
        %v578 = vunpack.c.l.s4 1966171168
        %v579 = vunpack.c.0.s8 %v578
        %v580 = vlaneseq
        %v581 = vshrl.u32 %v580, 7
        %v582 = vsub.s32 %v579, %v581
        %v583 = vrot.slane %v501, %v582
        %v584 = vcombine.high %v583, %v583
        %v586 = vunpack.c.l.s4 1966171168
        %v587 = vunpack.c.0.s8 %v586
        %v588 = vlaneseq
        %v589 = vshrl.u32 %v588, 7
        %v590 = vsub.s32 %v587, %v589
        %v591 = vrot.slane %v583, %v590
        %v593 = vunpack.c.l.s4 1966171168
        %v594 = vunpack.c.0.s8 %v593
        %v595 = vlaneseq
        %v596 = vshrl.u32 %v595, 7
        %v597 = vsub.s32 %v594, %v596
        %v598 = vrot.slane %v584, %v597
        %v599 = vcombine.high %v591, %v591
        %v600 = vcombine.high %v598, %v598
        %v602 = vunpack.c.l.s4 1966171168
        %v603 = vunpack.c.0.s8 %v602
        %v604 = vlaneseq
        %v605 = vshrl.u32 %v604, 7
        %v606 = vsub.s32 %v603, %v605
        %v607 = vrot.slane %v502, %v606
        %v609 = vunpack.c.l.s4 1966171168
        %v610 = vunpack.c.0.s8 %v609
        %v611 = vlaneseq
        %v612 = vshrl.u32 %v611, 7
        %v613 = vsub.s32 %v610, %v612
        %v614 = vrot.slane %v607, %v613
        %v616 = vunpack.c.l.s4 1966171168
        %v617 = vunpack.c.0.s8 %v616
        %v618 = vlaneseq
        %v619 = vshrl.u32 %v618, 7
        %v620 = vsub.s32 %v617, %v619
        %v621 = vrot.slane %v503, %v620
        %v622 = vcombine.high %v621, %v621
        %v624 = vunpack.c.l.s4 1966171168
        %v625 = vunpack.c.0.s8 %v624
        %v626 = vlaneseq
        %v627 = vshrl.u32 %v626, 7
        %v628 = vsub.s32 %v625, %v627
        %v629 = vrot.slane %v621, %v628
        %v631 = vunpack.c.l.s4 1966171168
        %v632 = vunpack.c.0.s8 %v631
        %v633 = vlaneseq
        %v634 = vshrl.u32 %v633, 7
        %v635 = vsub.s32 %v632, %v634
        %v636 = vrot.slane %v622, %v635
        %v637 = vcombine.high %v629, %v629
        %v638 = vcombine.high %v636, %v636
        %v640 = vunpack.c.l.s4 1966171168
        %v641 = vunpack.c.0.s8 %v640
        %v642 = vlaneseq
        %v643 = vshrl.u32 %v642, 7
        %v644 = vsub.s32 %v641, %v643
        %v645 = vrot.slane %v504, %v644
        %v647 = vunpack.c.l.s4 1966171168
        %v648 = vunpack.c.0.s8 %v647
        %v649 = vlaneseq
        %v650 = vshrl.u32 %v649, 7
        %v651 = vsub.s32 %v648, %v650
        %v652 = vrot.slane %v645, %v651
        %v654 = vunpack.c.l.s4 1966171168
        %v655 = vunpack.c.0.s8 %v654
        %v656 = vlaneseq
        %v657 = vshrl.u32 %v656, 7
        %v658 = vsub.s32 %v655, %v657
        %v659 = vrot.slane %v505, %v658
        %v660 = vcombine.high %v659, %v659
        %v662 = vunpack.c.l.s4 1966171168
        %v663 = vunpack.c.0.s8 %v662
        %v664 = vlaneseq
        %v665 = vshrl.u32 %v664, 7
        %v666 = vsub.s32 %v663, %v665
        %v667 = vrot.slane %v659, %v666
        %v669 = vunpack.c.l.s4 1966171168
        %v670 = vunpack.c.0.s8 %v669
        %v671 = vlaneseq
        %v672 = vshrl.u32 %v671, 7
        %v673 = vsub.s32 %v670, %v672
        %v674 = vrot.slane %v660, %v673
        %v675 = vcombine.high %v667, %v667
        %v676 = vcombine.high %v674, %v674
        %v678 = vunpack.c.l.s4 1966171168
        %v679 = vunpack.c.0.s8 %v678
        %v680 = vlaneseq
        %v681 = vshrl.u32 %v680, 7
        %v682 = vsub.s32 %v679, %v681
        %v683 = vrot.slane %v506, %v682
        %v685 = vunpack.c.l.s4 1966171168
        %v686 = vunpack.c.0.s8 %v685
        %v687 = vlaneseq
        %v688 = vshrl.u32 %v687, 7
        %v689 = vsub.s32 %v686, %v688
        %v690 = vrot.slane %v683, %v689
        %v692 = vunpack.c.l.s4 1966171168
        %v693 = vunpack.c.0.s8 %v692
        %v694 = vlaneseq
        %v695 = vshrl.u32 %v694, 7
        %v696 = vsub.s32 %v693, %v695
        %v697 = vrot.slane %v507, %v696
        %v698 = vcombine.high %v697, %v697
        %v700 = vunpack.c.l.s4 1966171168
        %v701 = vunpack.c.0.s8 %v700
        %v702 = vlaneseq
        %v703 = vshrl.u32 %v702, 7
        %v704 = vsub.s32 %v701, %v703
        %v705 = vrot.slane %v697, %v704
        %v707 = vunpack.c.l.s4 1966171168
        %v708 = vunpack.c.0.s8 %v707
        %v709 = vlaneseq
        %v710 = vshrl.u32 %v709, 7
        %v711 = vsub.s32 %v708, %v710
        %v712 = vrot.slane %v698, %v711
        %v713 = vcombine.high %v705, %v705
        %v714 = vcombine.high %v712, %v712
        %v716 = vunpack.c.l.s4 1966171168
        %v717 = vunpack.c.0.s8 %v716
        %v718 = vlaneseq
        %v719 = vshrl.u32 %v718, 7
        %v720 = vsub.s32 %v717, %v719
        %v721 = vrot.slane %v508, %v720
        %v723 = vunpack.c.l.s4 1966171168
        %v724 = vunpack.c.0.s8 %v723
        %v725 = vlaneseq
        %v726 = vshrl.u32 %v725, 7
        %v727 = vsub.s32 %v724, %v726
        %v728 = vrot.slane %v721, %v727
        %v730 = vunpack.c.l.s4 1966171168
        %v731 = vunpack.c.0.s8 %v730
        %v732 = vlaneseq
        %v733 = vshrl.u32 %v732, 7
        %v734 = vsub.s32 %v731, %v733
        %v735 = vrot.slane %v509, %v734
        %v736 = vcombine.high %v735, %v735
        %v738 = vunpack.c.l.s4 1966171168
        %v739 = vunpack.c.0.s8 %v738
        %v740 = vlaneseq
        %v741 = vshrl.u32 %v740, 7
        %v742 = vsub.s32 %v739, %v741
        %v743 = vrot.slane %v735, %v742
        %v745 = vunpack.c.l.s4 1966171168
        %v746 = vunpack.c.0.s8 %v745
        %v747 = vlaneseq
        %v748 = vshrl.u32 %v747, 7
        %v749 = vsub.s32 %v746, %v748
        %v750 = vrot.slane %v736, %v749
        %v751 = vcombine.high %v743, %v743
        %v752 = vcombine.high %v750, %v750
        %v754 = vunpack.c.l.s4 1966171168
        %v755 = vunpack.c.0.s8 %v754
        %v756 = vlaneseq
        %v757 = vshrl.u32 %v756, 7
        %v758 = vsub.s32 %v755, %v757
        %v759 = vrot.slane %v510, %v758
        %v761 = vunpack.c.l.s4 1966171168
        %v762 = vunpack.c.0.s8 %v761
        %v763 = vlaneseq
        %v764 = vshrl.u32 %v763, 7
        %v765 = vsub.s32 %v762, %v764
        %v766 = vrot.slane %v759, %v765
        %v768 = vunpack.c.l.s4 1966171168
        %v769 = vunpack.c.0.s8 %v768
        %v770 = vlaneseq
        %v771 = vshrl.u32 %v770, 7
        %v772 = vsub.s32 %v769, %v771
        %v773 = vrot.slane %v511, %v772
        %v774 = vcombine.high %v773, %v773
        %v776 = vunpack.c.l.s4 1966171168
        %v777 = vunpack.c.0.s8 %v776
        %v778 = vlaneseq
        %v779 = vshrl.u32 %v778, 7
        %v780 = vsub.s32 %v777, %v779
        %v781 = vrot.slane %v773, %v780
        %v783 = vunpack.c.l.s4 1966171168
        %v784 = vunpack.c.0.s8 %v783
        %v785 = vlaneseq
        %v786 = vshrl.u32 %v785, 7
        %v787 = vsub.s32 %v784, %v786
        %v788 = vrot.slane %v774, %v787
        %v789 = vcombine.high %v781, %v781
        %v790 = vcombine.high %v788, %v788
        %v792 = vunpack.c.l.s4 1966171168
        %v793 = vunpack.c.0.s8 %v792
        %v794 = vlaneseq
        %v795 = vshrl.u32 %v794, 7
        %v796 = vsub.s32 %v793, %v795
        %v797 = vrot.slane %v512, %v796
        %v799 = vunpack.c.l.s4 1966171168
        %v800 = vunpack.c.0.s8 %v799
        %v801 = vlaneseq
        %v802 = vshrl.u32 %v801, 7
        %v803 = vsub.s32 %v800, %v802
        %v804 = vrot.slane %v797, %v803
        %v806 = vunpack.c.l.s4 1966171168
        %v807 = vunpack.c.0.s8 %v806
        %v808 = vlaneseq
        %v809 = vshrl.u32 %v808, 7
        %v810 = vsub.s32 %v807, %v809
        %v811 = vrot.slane %v513, %v810
        %v812 = vcombine.high %v811, %v811
        %v814 = vunpack.c.l.s4 1966171168
        %v815 = vunpack.c.0.s8 %v814
        %v816 = vlaneseq
        %v817 = vshrl.u32 %v816, 7
        %v818 = vsub.s32 %v815, %v817
        %v819 = vrot.slane %v811, %v818
        %v821 = vunpack.c.l.s4 1966171168
        %v822 = vunpack.c.0.s8 %v821
        %v823 = vlaneseq
        %v824 = vshrl.u32 %v823, 7
        %v825 = vsub.s32 %v822, %v824
        %v826 = vrot.slane %v812, %v825
        %v827 = vcombine.high %v819, %v819
        %v828 = vcombine.high %v826, %v826
        %v830 = vunpack.c.l.s4 1966171168
        %v831 = vunpack.c.0.s8 %v830
        %v832 = vlaneseq
        %v833 = vshrl.u32 %v832, 7
        %v834 = vsub.s32 %v831, %v833
        %v835 = vrot.slane %v514, %v834
        %v837 = vunpack.c.l.s4 1966171168
        %v838 = vunpack.c.0.s8 %v837
        %v839 = vlaneseq
        %v840 = vshrl.u32 %v839, 7
        %v841 = vsub.s32 %v838, %v840
        %v842 = vrot.slane %v835, %v841
        %v844 = vunpack.c.l.s4 1966171168
        %v845 = vunpack.c.0.s8 %v844
        %v846 = vlaneseq
        %v847 = vshrl.u32 %v846, 7
        %v848 = vsub.s32 %v845, %v847
        %v849 = vrot.slane %v515, %v848
        %v850 = vcombine.high %v849, %v849
        %v852 = vunpack.c.l.s4 1966171168
        %v853 = vunpack.c.0.s8 %v852
        %v854 = vlaneseq
        %v855 = vshrl.u32 %v854, 7
        %v856 = vsub.s32 %v853, %v855
        %v857 = vrot.slane %v849, %v856
        %v859 = vunpack.c.l.s4 1966171168
        %v860 = vunpack.c.0.s8 %v859
        %v861 = vlaneseq
        %v862 = vshrl.u32 %v861, 7
        %v863 = vsub.s32 %v860, %v862
        %v864 = vrot.slane %v850, %v863
        %v865 = vcombine.high %v857, %v857
        %v866 = vcombine.high %v864, %v864
        %v868 = vunpack.c.l.s4 1966171168
        %v869 = vunpack.c.0.s8 %v868
        %v870 = vlaneseq
        %v871 = vshrl.u32 %v870, 7
        %v872 = vsub.s32 %v869, %v871
        %v873 = vrot.slane %v516, %v872
        %v875 = vunpack.c.l.s4 1966171168
        %v876 = vunpack.c.0.s8 %v875
        %v877 = vlaneseq
        %v878 = vshrl.u32 %v877, 7
        %v879 = vsub.s32 %v876, %v878
        %v880 = vrot.slane %v873, %v879
        %v882 = vunpack.c.l.s4 1966171168
        %v883 = vunpack.c.0.s8 %v882
        %v884 = vlaneseq
        %v885 = vshrl.u32 %v884, 7
        %v886 = vsub.s32 %v883, %v885
        %v887 = vrot.slane %v517, %v886
        %v888 = vcombine.high %v887, %v887
        %v890 = vunpack.c.l.s4 1966171168
        %v891 = vunpack.c.0.s8 %v890
        %v892 = vlaneseq
        %v893 = vshrl.u32 %v892, 7
        %v894 = vsub.s32 %v891, %v893
        %v895 = vrot.slane %v887, %v894
        %v897 = vunpack.c.l.s4 1966171168
        %v898 = vunpack.c.0.s8 %v897
        %v899 = vlaneseq
        %v900 = vshrl.u32 %v899, 7
        %v901 = vsub.s32 %v898, %v900
        %v902 = vrot.slane %v888, %v901
        %v903 = vcombine.high %v895, %v895
        %v904 = vcombine.high %v902, %v902
        %v906 = vunpack.c.l.s4 1966171168
        %v907 = vunpack.c.0.s8 %v906
        %v908 = vlaneseq
        %v909 = vshrl.u32 %v908, 7
        %v910 = vsub.s32 %v907, %v909
        %v911 = vrot.slane %v518, %v910
        %v913 = vunpack.c.l.s4 1966171168
        %v914 = vunpack.c.0.s8 %v913
        %v915 = vlaneseq
        %v916 = vshrl.u32 %v915, 7
        %v917 = vsub.s32 %v914, %v916
        %v918 = vrot.slane %v911, %v917
        %v919 = vcombine.low %v553, %v561
        %v920 = vcombine.low %v560, %v562
        %v922 = vunpack.c.l.s4 1935823168
        %v923 = vunpack.c.0.s8 %v922
        %v924 = vlaneseq
        %v925 = vshrl.u32 %v924, 7
        %v926 = vsub.s32 %v923, %v925
        %v927 = vrot.slane %v919, %v926
        %v929 = vunpack.c.l.s4 1935823168
        %v930 = vunpack.c.0.s8 %v929
        %v931 = vlaneseq
        %v932 = vshrl.u32 %v931, 7
        %v933 = vsub.s32 %v930, %v932
        %v934 = vrot.slane %v920, %v933
        %v935 = vcombine.low %v927, %v934
        %v937 = vunpack.c.l.s4 1935823168
        %v938 = vunpack.c.0.s8 %v937
        %v939 = vlaneseq
        %v940 = vshrl.u32 %v939, 7
        %v941 = vsub.s32 %v938, %v940
        %v942 = vrot.slane %v935, %v941
        %v943 = vcombine.low %v576, %v598
        %v944 = vcombine.low %v591, %v599
        %v946 = vunpack.c.l.s4 1935823168
        %v947 = vunpack.c.0.s8 %v946
        %v948 = vlaneseq
        %v949 = vshrl.u32 %v948, 7
        %v950 = vsub.s32 %v947, %v949
        %v951 = vrot.slane %v943, %v950
        %v953 = vunpack.c.l.s4 1935823168
        %v954 = vunpack.c.0.s8 %v953
        %v955 = vlaneseq
        %v956 = vshrl.u32 %v955, 7
        %v957 = vsub.s32 %v954, %v956
        %v958 = vrot.slane %v944, %v957
        %v959 = vcombine.low %v951, %v958
        %v961 = vunpack.c.l.s4 1935823168
        %v962 = vunpack.c.0.s8 %v961
        %v963 = vlaneseq
        %v964 = vshrl.u32 %v963, 7
        %v965 = vsub.s32 %v962, %v964
        %v966 = vrot.slane %v959, %v965
        %v967 = vcombine.low %v600, %v629
        %v968 = vcombine.low %v614, %v636
        %v970 = vunpack.c.l.s4 1935823168
        %v971 = vunpack.c.0.s8 %v970
        %v972 = vlaneseq
        %v973 = vshrl.u32 %v972, 7
        %v974 = vsub.s32 %v971, %v973
        %v975 = vrot.slane %v967, %v974
        %v977 = vunpack.c.l.s4 1935823168
        %v978 = vunpack.c.0.s8 %v977
        %v979 = vlaneseq
        %v980 = vshrl.u32 %v979, 7
        %v981 = vsub.s32 %v978, %v980
        %v982 = vrot.slane %v968, %v981
        %v983 = vcombine.low %v975, %v982
        %v985 = vunpack.c.l.s4 1935823168
        %v986 = vunpack.c.0.s8 %v985
        %v987 = vlaneseq
        %v988 = vshrl.u32 %v987, 7
        %v989 = vsub.s32 %v986, %v988
        %v990 = vrot.slane %v983, %v989
        %v991 = vcombine.low %v637, %v652
        %v992 = vcombine.low %v638, %v667
        %v994 = vunpack.c.l.s4 1935823168
        %v995 = vunpack.c.0.s8 %v994
        %v996 = vlaneseq
        %v997 = vshrl.u32 %v996, 7
        %v998 = vsub.s32 %v995, %v997
        %v999 = vrot.slane %v991, %v998
        %v1001 = vunpack.c.l.s4 1935823168
        %v1002 = vunpack.c.0.s8 %v1001
        %v1003 = vlaneseq
        %v1004 = vshrl.u32 %v1003, 7
        %v1005 = vsub.s32 %v1002, %v1004
        %v1006 = vrot.slane %v992, %v1005
        %v1007 = vcombine.low %v999, %v1006
        %v1009 = vunpack.c.l.s4 1935823168
        %v1010 = vunpack.c.0.s8 %v1009
        %v1011 = vlaneseq
        %v1012 = vshrl.u32 %v1011, 7
        %v1013 = vsub.s32 %v1010, %v1012
        %v1014 = vrot.slane %v1007, %v1013
        %v1015 = vcombine.low %v674, %v676
        %v1016 = vcombine.low %v675, %v690
        %v1018 = vunpack.c.l.s4 1935823168
        %v1019 = vunpack.c.0.s8 %v1018
        %v1020 = vlaneseq
        %v1021 = vshrl.u32 %v1020, 7
        %v1022 = vsub.s32 %v1019, %v1021
        %v1023 = vrot.slane %v1015, %v1022
        %v1025 = vunpack.c.l.s4 1935823168
        %v1026 = vunpack.c.0.s8 %v1025
        %v1027 = vlaneseq
        %v1028 = vshrl.u32 %v1027, 7
        %v1029 = vsub.s32 %v1026, %v1028
        %v1030 = vrot.slane %v1016, %v1029
        %v1031 = vcombine.low %v1023, %v1030
        %v1033 = vunpack.c.l.s4 1935823168
        %v1034 = vunpack.c.0.s8 %v1033
        %v1035 = vlaneseq
        %v1036 = vshrl.u32 %v1035, 7
        %v1037 = vsub.s32 %v1034, %v1036
        %v1038 = vrot.slane %v1031, %v1037
        %v1039 = vcombine.low %v705, %v713
        %v1040 = vcombine.low %v712, %v714
        %v1042 = vunpack.c.l.s4 1935823168
        %v1043 = vunpack.c.0.s8 %v1042
        %v1044 = vlaneseq
        %v1045 = vshrl.u32 %v1044, 7
        %v1046 = vsub.s32 %v1043, %v1045
        %v1047 = vrot.slane %v1039, %v1046
        %v1049 = vunpack.c.l.s4 1935823168
        %v1050 = vunpack.c.0.s8 %v1049
        %v1051 = vlaneseq
        %v1052 = vshrl.u32 %v1051, 7
        %v1053 = vsub.s32 %v1050, %v1052
        %v1054 = vrot.slane %v1040, %v1053
        %v1055 = vcombine.low %v1047, %v1054
        %v1057 = vunpack.c.l.s4 1935823168
        %v1058 = vunpack.c.0.s8 %v1057
        %v1059 = vlaneseq
        %v1060 = vshrl.u32 %v1059, 7
        %v1061 = vsub.s32 %v1058, %v1060
        %v1062 = vrot.slane %v1055, %v1061
        %v1063 = vcombine.low %v728, %v750
        %v1064 = vcombine.low %v743, %v751
        %v1066 = vunpack.c.l.s4 1935823168
        %v1067 = vunpack.c.0.s8 %v1066
        %v1068 = vlaneseq
        %v1069 = vshrl.u32 %v1068, 7
        %v1070 = vsub.s32 %v1067, %v1069
        %v1071 = vrot.slane %v1063, %v1070
        %v1073 = vunpack.c.l.s4 1935823168
        %v1074 = vunpack.c.0.s8 %v1073
        %v1075 = vlaneseq
        %v1076 = vshrl.u32 %v1075, 7
        %v1077 = vsub.s32 %v1074, %v1076
        %v1078 = vrot.slane %v1064, %v1077
        %v1079 = vcombine.low %v1071, %v1078
        %v1081 = vunpack.c.l.s4 1935823168
        %v1082 = vunpack.c.0.s8 %v1081
        %v1083 = vlaneseq
        %v1084 = vshrl.u32 %v1083, 7
        %v1085 = vsub.s32 %v1082, %v1084
        %v1086 = vrot.slane %v1079, %v1085
        %v1087 = vcombine.low %v752, %v781
        %v1088 = vcombine.low %v766, %v788
        %v1090 = vunpack.c.l.s4 1935823168
        %v1091 = vunpack.c.0.s8 %v1090
        %v1092 = vlaneseq
        %v1093 = vshrl.u32 %v1092, 7
        %v1094 = vsub.s32 %v1091, %v1093
        %v1095 = vrot.slane %v1087, %v1094
        %v1097 = vunpack.c.l.s4 1935823168
        %v1098 = vunpack.c.0.s8 %v1097
        %v1099 = vlaneseq
        %v1100 = vshrl.u32 %v1099, 7
        %v1101 = vsub.s32 %v1098, %v1100
        %v1102 = vrot.slane %v1088, %v1101
        %v1103 = vcombine.low %v1095, %v1102
        %v1105 = vunpack.c.l.s4 1935823168
        %v1106 = vunpack.c.0.s8 %v1105
        %v1107 = vlaneseq
        %v1108 = vshrl.u32 %v1107, 7
        %v1109 = vsub.s32 %v1106, %v1108
        %v1110 = vrot.slane %v1103, %v1109
        %v1111 = vcombine.low %v789, %v804
        %v1112 = vcombine.low %v790, %v819
        %v1114 = vunpack.c.l.s4 1935823168
        %v1115 = vunpack.c.0.s8 %v1114
        %v1116 = vlaneseq
        %v1117 = vshrl.u32 %v1116, 7
        %v1118 = vsub.s32 %v1115, %v1117
        %v1119 = vrot.slane %v1111, %v1118
        %v1121 = vunpack.c.l.s4 1935823168
        %v1122 = vunpack.c.0.s8 %v1121
        %v1123 = vlaneseq
        %v1124 = vshrl.u32 %v1123, 7
        %v1125 = vsub.s32 %v1122, %v1124
        %v1126 = vrot.slane %v1112, %v1125
        %v1127 = vcombine.low %v1119, %v1126
        %v1129 = vunpack.c.l.s4 1935823168
        %v1130 = vunpack.c.0.s8 %v1129
        %v1131 = vlaneseq
        %v1132 = vshrl.u32 %v1131, 7
        %v1133 = vsub.s32 %v1130, %v1132
        %v1134 = vrot.slane %v1127, %v1133
        %v1135 = vcombine.low %v826, %v828
        %v1136 = vcombine.low %v827, %v842
        %v1138 = vunpack.c.l.s4 1935823168
        %v1139 = vunpack.c.0.s8 %v1138
        %v1140 = vlaneseq
        %v1141 = vshrl.u32 %v1140, 7
        %v1142 = vsub.s32 %v1139, %v1141
        %v1143 = vrot.slane %v1135, %v1142
        %v1145 = vunpack.c.l.s4 1935823168
        %v1146 = vunpack.c.0.s8 %v1145
        %v1147 = vlaneseq
        %v1148 = vshrl.u32 %v1147, 7
        %v1149 = vsub.s32 %v1146, %v1148
        %v1150 = vrot.slane %v1136, %v1149
        %v1151 = vcombine.low %v1143, %v1150
        %v1153 = vunpack.c.l.s4 1935823168
        %v1154 = vunpack.c.0.s8 %v1153
        %v1155 = vlaneseq
        %v1156 = vshrl.u32 %v1155, 7
        %v1157 = vsub.s32 %v1154, %v1156
        %v1158 = vrot.slane %v1151, %v1157
        %v1159 = vcombine.low %v857, %v865
        %v1160 = vcombine.low %v864, %v866
        %v1162 = vunpack.c.l.s4 1935823168
        %v1163 = vunpack.c.0.s8 %v1162
        %v1164 = vlaneseq
        %v1165 = vshrl.u32 %v1164, 7
        %v1166 = vsub.s32 %v1163, %v1165
        %v1167 = vrot.slane %v1159, %v1166
        %v1169 = vunpack.c.l.s4 1935823168
        %v1170 = vunpack.c.0.s8 %v1169
        %v1171 = vlaneseq
        %v1172 = vshrl.u32 %v1171, 7
        %v1173 = vsub.s32 %v1170, %v1172
        %v1174 = vrot.slane %v1160, %v1173
        %v1175 = vcombine.low %v1167, %v1174
        %v1177 = vunpack.c.l.s4 1935823168
        %v1178 = vunpack.c.0.s8 %v1177
        %v1179 = vlaneseq
        %v1180 = vshrl.u32 %v1179, 7
        %v1181 = vsub.s32 %v1178, %v1180
        %v1182 = vrot.slane %v1175, %v1181
        %v1183 = vcombine.low %v880, %v902
        %v1184 = vcombine.low %v895, %v903
        %v1186 = vunpack.c.l.s4 1935823168
        %v1187 = vunpack.c.0.s8 %v1186
        %v1188 = vlaneseq
        %v1189 = vshrl.u32 %v1188, 7
        %v1190 = vsub.s32 %v1187, %v1189
        %v1191 = vrot.slane %v1183, %v1190
        %v1193 = vunpack.c.l.s4 1935823168
        %v1194 = vunpack.c.0.s8 %v1193
        %v1195 = vlaneseq
        %v1196 = vshrl.u32 %v1195, 7
        %v1197 = vsub.s32 %v1194, %v1196
        %v1198 = vrot.slane %v1184, %v1197
        %v1199 = vcombine.low %v1191, %v1198
        %v1201 = vunpack.c.l.s4 1935823168
        %v1202 = vunpack.c.0.s8 %v1201
        %v1203 = vlaneseq
        %v1204 = vshrl.u32 %v1203, 7
        %v1205 = vsub.s32 %v1202, %v1204
        %v1206 = vrot.slane %v1199, %v1205
        %v1208 = vunpack.c.l.s4 1935823168
        %v1209 = vunpack.c.0.s8 %v1208
        %v1210 = vlaneseq
        %v1211 = vshrl.u32 %v1210, 7
        %v1212 = vsub.s32 %v1209, %v1211
        %v1213 = vrot.slane %v904, %v1212
        %v1215 = vunpack.c.l.s4 1935823168
        %v1216 = vunpack.c.0.s8 %v1215
        %v1217 = vlaneseq
        %v1218 = vshrl.u32 %v1217, 7
        %v1219 = vsub.s32 %v1216, %v1218
        %v1220 = vrot.slane %v918, %v1219
        %v1221 = vcombine.low %v1213, %v1220
        %v1223 = vunpack.c.l.s4 1935823168
        %v1224 = vunpack.c.0.s8 %v1223
        %v1225 = vlaneseq
        %v1226 = vshrl.u32 %v1225, 7
        %v1227 = vsub.s32 %v1224, %v1226
        %v1228 = vrot.slane %v1221, %v1227
        %1242 = vst [vmem:[#allocation4] sm:$0xf] %v942
        %1243 = vst [vmem:[#allocation4 + $0x24] sm:$0xf] %v966
        %1244 = vst [vmem:[#allocation4 + $0x48] sm:$0xf] %v990
        %1245 = vst [vmem:[#allocation4 + $0x6c] sm:$0xf] %v1014
        %1246 = vst [vmem:[#allocation4 + $0x90] sm:$0xf] %v1038
        %1247 = vst [vmem:[#allocation4 + $0xb4] sm:$0xf] %v1062
        %1248 = vst [vmem:[#allocation4 + $0xd8] sm:$0xf] %v1086
        %1249 = vst [vmem:[#allocation4 + $0xfc] sm:$0xf] %v1110
        %1250 = vst [vmem:[#allocation4 + $0x120] sm:$0xf] %v1134
        %1251 = vst [vmem:[#allocation4 + $0x144] sm:$0xf] %v1158
        %1252 = vst [vmem:[#allocation4 + $0x168] sm:$0xf] %v1182
        %1253 = vst [vmem:[#allocation4 + $0x18c] sm:$0xf] %v1206
        %1254 = vst [vmem:[#allocation4 + $0x1b0] sm:$0x3] %v1228
        %v1255 = vld [vmem:[#allocation2] sm:$0xf]
        %v1256 = vld [vmem:[#allocation2 + $0x4] sm:$0x3]
        %v1257 = vld [vmem:[#allocation2 + $0x8] sm:$0xf]
        %v1258 = vld [vmem:[#allocation2 + $0xc] sm:$0x3]
        %v1259 = vld [vmem:[#allocation2 + $0x10] sm:$0xf]
        %v1260 = vld [vmem:[#allocation2 + $0x14] sm:$0x3]
        %v1261 = vld [vmem:[#allocation2 + $0x18] sm:$0xf]
        %v1262 = vld [vmem:[#allocation2 + $0x1c] sm:$0x3]
        %v1263 = vld [vmem:[#allocation2 + $0x20] sm:$0xf]
        %v1264 = vld [vmem:[#allocation2 + $0x24] sm:$0x3]
        %v1265 = vld [vmem:[#allocation2 + $0x28] sm:$0xf]
        %v1266 = vld [vmem:[#allocation2 + $0x2c] sm:$0x3]
        %v1267 = vld [vmem:[#allocation2 + $0x30] sm:$0xf]
        %v1268 = vld [vmem:[#allocation2 + $0x34] sm:$0x3]
        %v1269 = vld [vmem:[#allocation2 + $0x38] sm:$0xf]
        %v1270 = vld [vmem:[#allocation2 + $0x3c] sm:$0x3]
        %v1271 = vld [vmem:[#allocation2 + $0x40] sm:$0xf]
        %v1272 = vld [vmem:[#allocation2 + $0x44] sm:$0x3]
        %v1273 = vld [vmem:[#allocation2 + $0x48] sm:$0xf]
        %v1274 = vld [vmem:[#allocation2 + $0x4c] sm:$0x3]
        %v1296 = vunpack.c.l.s4 1966171168
        %v1297 = vunpack.c.0.s8 %v1296
        %v1298 = vlaneseq
        %v1299 = vshrl.u32 %v1298, 7
        %v1300 = vsub.s32 %v1297, %v1299
        %v1301 = vrot.slane %v1255, %v1300
        %v1302 = vcombine.high %v1301, %v1301
        %v1304 = vunpack.c.l.s4 1966171168
        %v1305 = vunpack.c.0.s8 %v1304
        %v1306 = vlaneseq
        %v1307 = vshrl.u32 %v1306, 7
        %v1308 = vsub.s32 %v1305, %v1307
        %v1309 = vrot.slane %v1301, %v1308
        %v1311 = vunpack.c.l.s4 1966171168
        %v1312 = vunpack.c.0.s8 %v1311
        %v1313 = vlaneseq
        %v1314 = vshrl.u32 %v1313, 7
        %v1315 = vsub.s32 %v1312, %v1314
        %v1316 = vrot.slane %v1302, %v1315
        %v1317 = vcombine.high %v1309, %v1309
        %v1318 = vcombine.high %v1316, %v1316
        %v1320 = vunpack.c.l.s4 1966171168
        %v1321 = vunpack.c.0.s8 %v1320
        %v1322 = vlaneseq
        %v1323 = vshrl.u32 %v1322, 7
        %v1324 = vsub.s32 %v1321, %v1323
        %v1325 = vrot.slane %v1256, %v1324
        %v1326 = vcombine.high %v1325, %v1325
        %v1328 = vunpack.c.l.s4 1966171168
        %v1329 = vunpack.c.0.s8 %v1328
        %v1330 = vlaneseq
        %v1331 = vshrl.u32 %v1330, 7
        %v1332 = vsub.s32 %v1329, %v1331
        %v1333 = vrot.slane %v1325, %v1332
        %v1335 = vunpack.c.l.s4 1966171168
        %v1336 = vunpack.c.0.s8 %v1335
        %v1337 = vlaneseq
        %v1338 = vshrl.u32 %v1337, 7
        %v1339 = vsub.s32 %v1336, %v1338
        %v1340 = vrot.slane %v1326, %v1339
        %v1342 = vunpack.c.l.s4 1966171168
        %v1343 = vunpack.c.0.s8 %v1342
        %v1344 = vlaneseq
        %v1345 = vshrl.u32 %v1344, 7
        %v1346 = vsub.s32 %v1343, %v1345
        %v1347 = vrot.slane %v1257, %v1346
        %v1348 = vcombine.high %v1347, %v1347
        %v1350 = vunpack.c.l.s4 1966171168
        %v1351 = vunpack.c.0.s8 %v1350
        %v1352 = vlaneseq
        %v1353 = vshrl.u32 %v1352, 7
        %v1354 = vsub.s32 %v1351, %v1353
        %v1355 = vrot.slane %v1347, %v1354
        %v1357 = vunpack.c.l.s4 1966171168
        %v1358 = vunpack.c.0.s8 %v1357
        %v1359 = vlaneseq
        %v1360 = vshrl.u32 %v1359, 7
        %v1361 = vsub.s32 %v1358, %v1360
        %v1362 = vrot.slane %v1348, %v1361
        %v1363 = vcombine.high %v1355, %v1355
        %v1364 = vcombine.high %v1362, %v1362
        %v1366 = vunpack.c.l.s4 1966171168
        %v1367 = vunpack.c.0.s8 %v1366
        %v1368 = vlaneseq
        %v1369 = vshrl.u32 %v1368, 7
        %v1370 = vsub.s32 %v1367, %v1369
        %v1371 = vrot.slane %v1258, %v1370
        %v1372 = vcombine.high %v1371, %v1371
        %v1374 = vunpack.c.l.s4 1966171168
        %v1375 = vunpack.c.0.s8 %v1374
        %v1376 = vlaneseq
        %v1377 = vshrl.u32 %v1376, 7
        %v1378 = vsub.s32 %v1375, %v1377
        %v1379 = vrot.slane %v1371, %v1378
        %v1381 = vunpack.c.l.s4 1966171168
        %v1382 = vunpack.c.0.s8 %v1381
        %v1383 = vlaneseq
        %v1384 = vshrl.u32 %v1383, 7
        %v1385 = vsub.s32 %v1382, %v1384
        %v1386 = vrot.slane %v1372, %v1385
        %v1388 = vunpack.c.l.s4 1966171168
        %v1389 = vunpack.c.0.s8 %v1388
        %v1390 = vlaneseq
        %v1391 = vshrl.u32 %v1390, 7
        %v1392 = vsub.s32 %v1389, %v1391
        %v1393 = vrot.slane %v1259, %v1392
        %v1394 = vcombine.high %v1393, %v1393
        %v1396 = vunpack.c.l.s4 1966171168
        %v1397 = vunpack.c.0.s8 %v1396
        %v1398 = vlaneseq
        %v1399 = vshrl.u32 %v1398, 7
        %v1400 = vsub.s32 %v1397, %v1399
        %v1401 = vrot.slane %v1393, %v1400
        %v1403 = vunpack.c.l.s4 1966171168
        %v1404 = vunpack.c.0.s8 %v1403
        %v1405 = vlaneseq
        %v1406 = vshrl.u32 %v1405, 7
        %v1407 = vsub.s32 %v1404, %v1406
        %v1408 = vrot.slane %v1394, %v1407
        %v1409 = vcombine.high %v1401, %v1401
        %v1410 = vcombine.high %v1408, %v1408
        %v1412 = vunpack.c.l.s4 1966171168
        %v1413 = vunpack.c.0.s8 %v1412
        %v1414 = vlaneseq
        %v1415 = vshrl.u32 %v1414, 7
        %v1416 = vsub.s32 %v1413, %v1415
        %v1417 = vrot.slane %v1260, %v1416
        %v1418 = vcombine.high %v1417, %v1417
        %v1420 = vunpack.c.l.s4 1966171168
        %v1421 = vunpack.c.0.s8 %v1420
        %v1422 = vlaneseq
        %v1423 = vshrl.u32 %v1422, 7
        %v1424 = vsub.s32 %v1421, %v1423
        %v1425 = vrot.slane %v1417, %v1424
        %v1427 = vunpack.c.l.s4 1966171168
        %v1428 = vunpack.c.0.s8 %v1427
        %v1429 = vlaneseq
        %v1430 = vshrl.u32 %v1429, 7
        %v1431 = vsub.s32 %v1428, %v1430
        %v1432 = vrot.slane %v1418, %v1431
        %v1434 = vunpack.c.l.s4 1966171168
        %v1435 = vunpack.c.0.s8 %v1434
        %v1436 = vlaneseq
        %v1437 = vshrl.u32 %v1436, 7
        %v1438 = vsub.s32 %v1435, %v1437
        %v1439 = vrot.slane %v1261, %v1438
        %v1440 = vcombine.high %v1439, %v1439
        %v1442 = vunpack.c.l.s4 1966171168
        %v1443 = vunpack.c.0.s8 %v1442
        %v1444 = vlaneseq
        %v1445 = vshrl.u32 %v1444, 7
        %v1446 = vsub.s32 %v1443, %v1445
        %v1447 = vrot.slane %v1439, %v1446
        %v1449 = vunpack.c.l.s4 1966171168
        %v1450 = vunpack.c.0.s8 %v1449
        %v1451 = vlaneseq
        %v1452 = vshrl.u32 %v1451, 7
        %v1453 = vsub.s32 %v1450, %v1452
        %v1454 = vrot.slane %v1440, %v1453
        %v1455 = vcombine.high %v1447, %v1447
        %v1456 = vcombine.high %v1454, %v1454
        %v1458 = vunpack.c.l.s4 1966171168
        %v1459 = vunpack.c.0.s8 %v1458
        %v1460 = vlaneseq
        %v1461 = vshrl.u32 %v1460, 7
        %v1462 = vsub.s32 %v1459, %v1461
        %v1463 = vrot.slane %v1262, %v1462
        %v1464 = vcombine.high %v1463, %v1463
        %v1466 = vunpack.c.l.s4 1966171168
        %v1467 = vunpack.c.0.s8 %v1466
        %v1468 = vlaneseq
        %v1469 = vshrl.u32 %v1468, 7
        %v1470 = vsub.s32 %v1467, %v1469
        %v1471 = vrot.slane %v1463, %v1470
        %v1473 = vunpack.c.l.s4 1966171168
        %v1474 = vunpack.c.0.s8 %v1473
        %v1475 = vlaneseq
        %v1476 = vshrl.u32 %v1475, 7
        %v1477 = vsub.s32 %v1474, %v1476
        %v1478 = vrot.slane %v1464, %v1477
        %v1480 = vunpack.c.l.s4 1966171168
        %v1481 = vunpack.c.0.s8 %v1480
        %v1482 = vlaneseq
        %v1483 = vshrl.u32 %v1482, 7
        %v1484 = vsub.s32 %v1481, %v1483
        %v1485 = vrot.slane %v1263, %v1484
        %v1486 = vcombine.high %v1485, %v1485
        %v1488 = vunpack.c.l.s4 1966171168
        %v1489 = vunpack.c.0.s8 %v1488
        %v1490 = vlaneseq
        %v1491 = vshrl.u32 %v1490, 7
        %v1492 = vsub.s32 %v1489, %v1491
        %v1493 = vrot.slane %v1485, %v1492
        %v1495 = vunpack.c.l.s4 1966171168
        %v1496 = vunpack.c.0.s8 %v1495
        %v1497 = vlaneseq
        %v1498 = vshrl.u32 %v1497, 7
        %v1499 = vsub.s32 %v1496, %v1498
        %v1500 = vrot.slane %v1486, %v1499
        %v1501 = vcombine.high %v1493, %v1493
        %v1502 = vcombine.high %v1500, %v1500
        %v1504 = vunpack.c.l.s4 1966171168
        %v1505 = vunpack.c.0.s8 %v1504
        %v1506 = vlaneseq
        %v1507 = vshrl.u32 %v1506, 7
        %v1508 = vsub.s32 %v1505, %v1507
        %v1509 = vrot.slane %v1264, %v1508
        %v1510 = vcombine.high %v1509, %v1509
        %v1512 = vunpack.c.l.s4 1966171168
        %v1513 = vunpack.c.0.s8 %v1512
        %v1514 = vlaneseq
        %v1515 = vshrl.u32 %v1514, 7
        %v1516 = vsub.s32 %v1513, %v1515
        %v1517 = vrot.slane %v1509, %v1516
        %v1519 = vunpack.c.l.s4 1966171168
        %v1520 = vunpack.c.0.s8 %v1519
        %v1521 = vlaneseq
        %v1522 = vshrl.u32 %v1521, 7
        %v1523 = vsub.s32 %v1520, %v1522
        %v1524 = vrot.slane %v1510, %v1523
        %v1526 = vunpack.c.l.s4 1966171168
        %v1527 = vunpack.c.0.s8 %v1526
        %v1528 = vlaneseq
        %v1529 = vshrl.u32 %v1528, 7
        %v1530 = vsub.s32 %v1527, %v1529
        %v1531 = vrot.slane %v1265, %v1530
        %v1532 = vcombine.high %v1531, %v1531
        %v1534 = vunpack.c.l.s4 1966171168
        %v1535 = vunpack.c.0.s8 %v1534
        %v1536 = vlaneseq
        %v1537 = vshrl.u32 %v1536, 7
        %v1538 = vsub.s32 %v1535, %v1537
        %v1539 = vrot.slane %v1531, %v1538
        %v1541 = vunpack.c.l.s4 1966171168
        %v1542 = vunpack.c.0.s8 %v1541
        %v1543 = vlaneseq
        %v1544 = vshrl.u32 %v1543, 7
        %v1545 = vsub.s32 %v1542, %v1544
        %v1546 = vrot.slane %v1532, %v1545
        %v1547 = vcombine.high %v1539, %v1539
        %v1548 = vcombine.high %v1546, %v1546
        %v1550 = vunpack.c.l.s4 1966171168
        %v1551 = vunpack.c.0.s8 %v1550
        %v1552 = vlaneseq
        %v1553 = vshrl.u32 %v1552, 7
        %v1554 = vsub.s32 %v1551, %v1553
        %v1555 = vrot.slane %v1266, %v1554
        %v1556 = vcombine.high %v1555, %v1555
        %v1558 = vunpack.c.l.s4 1966171168
        %v1559 = vunpack.c.0.s8 %v1558
        %v1560 = vlaneseq
        %v1561 = vshrl.u32 %v1560, 7
        %v1562 = vsub.s32 %v1559, %v1561
        %v1563 = vrot.slane %v1555, %v1562
        %v1565 = vunpack.c.l.s4 1966171168
        %v1566 = vunpack.c.0.s8 %v1565
        %v1567 = vlaneseq
        %v1568 = vshrl.u32 %v1567, 7
        %v1569 = vsub.s32 %v1566, %v1568
        %v1570 = vrot.slane %v1556, %v1569
        %v1572 = vunpack.c.l.s4 1966171168
        %v1573 = vunpack.c.0.s8 %v1572
        %v1574 = vlaneseq
        %v1575 = vshrl.u32 %v1574, 7
        %v1576 = vsub.s32 %v1573, %v1575
        %v1577 = vrot.slane %v1267, %v1576
        %v1578 = vcombine.high %v1577, %v1577
        %v1580 = vunpack.c.l.s4 1966171168
        %v1581 = vunpack.c.0.s8 %v1580
        %v1582 = vlaneseq
        %v1583 = vshrl.u32 %v1582, 7
        %v1584 = vsub.s32 %v1581, %v1583
        %v1585 = vrot.slane %v1577, %v1584
        %v1587 = vunpack.c.l.s4 1966171168
        %v1588 = vunpack.c.0.s8 %v1587
        %v1589 = vlaneseq
        %v1590 = vshrl.u32 %v1589, 7
        %v1591 = vsub.s32 %v1588, %v1590
        %v1592 = vrot.slane %v1578, %v1591
        %v1593 = vcombine.high %v1585, %v1585
        %v1594 = vcombine.high %v1592, %v1592
        %v1596 = vunpack.c.l.s4 1966171168
        %v1597 = vunpack.c.0.s8 %v1596
        %v1598 = vlaneseq
        %v1599 = vshrl.u32 %v1598, 7
        %v1600 = vsub.s32 %v1597, %v1599
        %v1601 = vrot.slane %v1268, %v1600
        %v1602 = vcombine.high %v1601, %v1601
        %v1604 = vunpack.c.l.s4 1966171168
        %v1605 = vunpack.c.0.s8 %v1604
        %v1606 = vlaneseq
        %v1607 = vshrl.u32 %v1606, 7
        %v1608 = vsub.s32 %v1605, %v1607
        %v1609 = vrot.slane %v1601, %v1608
        %v1611 = vunpack.c.l.s4 1966171168
        %v1612 = vunpack.c.0.s8 %v1611
        %v1613 = vlaneseq
        %v1614 = vshrl.u32 %v1613, 7
        %v1615 = vsub.s32 %v1612, %v1614
        %v1616 = vrot.slane %v1602, %v1615
        %v1618 = vunpack.c.l.s4 1966171168
        %v1619 = vunpack.c.0.s8 %v1618
        %v1620 = vlaneseq
        %v1621 = vshrl.u32 %v1620, 7
        %v1622 = vsub.s32 %v1619, %v1621
        %v1623 = vrot.slane %v1269, %v1622
        %v1624 = vcombine.high %v1623, %v1623
        %v1626 = vunpack.c.l.s4 1966171168
        %v1627 = vunpack.c.0.s8 %v1626
        %v1628 = vlaneseq
        %v1629 = vshrl.u32 %v1628, 7
        %v1630 = vsub.s32 %v1627, %v1629
        %v1631 = vrot.slane %v1623, %v1630
        %v1633 = vunpack.c.l.s4 1966171168
        %v1634 = vunpack.c.0.s8 %v1633
        %v1635 = vlaneseq
        %v1636 = vshrl.u32 %v1635, 7
        %v1637 = vsub.s32 %v1634, %v1636
        %v1638 = vrot.slane %v1624, %v1637
        %v1639 = vcombine.high %v1631, %v1631
        %v1640 = vcombine.high %v1638, %v1638
        %v1642 = vunpack.c.l.s4 1966171168
        %v1643 = vunpack.c.0.s8 %v1642
        %v1644 = vlaneseq
        %v1645 = vshrl.u32 %v1644, 7
        %v1646 = vsub.s32 %v1643, %v1645
        %v1647 = vrot.slane %v1270, %v1646
        %v1648 = vcombine.high %v1647, %v1647
        %v1650 = vunpack.c.l.s4 1966171168
        %v1651 = vunpack.c.0.s8 %v1650
        %v1652 = vlaneseq
        %v1653 = vshrl.u32 %v1652, 7
        %v1654 = vsub.s32 %v1651, %v1653
        %v1655 = vrot.slane %v1647, %v1654
        %v1657 = vunpack.c.l.s4 1966171168
        %v1658 = vunpack.c.0.s8 %v1657
        %v1659 = vlaneseq
        %v1660 = vshrl.u32 %v1659, 7
        %v1661 = vsub.s32 %v1658, %v1660
        %v1662 = vrot.slane %v1648, %v1661
        %v1664 = vunpack.c.l.s4 1966171168
        %v1665 = vunpack.c.0.s8 %v1664
        %v1666 = vlaneseq
        %v1667 = vshrl.u32 %v1666, 7
        %v1668 = vsub.s32 %v1665, %v1667
        %v1669 = vrot.slane %v1271, %v1668
        %v1670 = vcombine.high %v1669, %v1669
        %v1672 = vunpack.c.l.s4 1966171168
        %v1673 = vunpack.c.0.s8 %v1672
        %v1674 = vlaneseq
        %v1675 = vshrl.u32 %v1674, 7
        %v1676 = vsub.s32 %v1673, %v1675
        %v1677 = vrot.slane %v1669, %v1676
        %v1679 = vunpack.c.l.s4 1966171168
        %v1680 = vunpack.c.0.s8 %v1679
        %v1681 = vlaneseq
        %v1682 = vshrl.u32 %v1681, 7
        %v1683 = vsub.s32 %v1680, %v1682
        %v1684 = vrot.slane %v1670, %v1683
        %v1685 = vcombine.high %v1677, %v1677
        %v1686 = vcombine.high %v1684, %v1684
        %v1688 = vunpack.c.l.s4 1966171168
        %v1689 = vunpack.c.0.s8 %v1688
        %v1690 = vlaneseq
        %v1691 = vshrl.u32 %v1690, 7
        %v1692 = vsub.s32 %v1689, %v1691
        %v1693 = vrot.slane %v1272, %v1692
        %v1694 = vcombine.high %v1693, %v1693
        %v1696 = vunpack.c.l.s4 1966171168
        %v1697 = vunpack.c.0.s8 %v1696
        %v1698 = vlaneseq
        %v1699 = vshrl.u32 %v1698, 7
        %v1700 = vsub.s32 %v1697, %v1699
        %v1701 = vrot.slane %v1693, %v1700
        %v1703 = vunpack.c.l.s4 1966171168
        %v1704 = vunpack.c.0.s8 %v1703
        %v1705 = vlaneseq
        %v1706 = vshrl.u32 %v1705, 7
        %v1707 = vsub.s32 %v1704, %v1706
        %v1708 = vrot.slane %v1694, %v1707
        %v1710 = vunpack.c.l.s4 1966171168
        %v1711 = vunpack.c.0.s8 %v1710
        %v1712 = vlaneseq
        %v1713 = vshrl.u32 %v1712, 7
        %v1714 = vsub.s32 %v1711, %v1713
        %v1715 = vrot.slane %v1273, %v1714
        %v1716 = vcombine.high %v1715, %v1715
        %v1718 = vunpack.c.l.s4 1966171168
        %v1719 = vunpack.c.0.s8 %v1718
        %v1720 = vlaneseq
        %v1721 = vshrl.u32 %v1720, 7
        %v1722 = vsub.s32 %v1719, %v1721
        %v1723 = vrot.slane %v1715, %v1722
        %v1725 = vunpack.c.l.s4 1966171168
        %v1726 = vunpack.c.0.s8 %v1725
        %v1727 = vlaneseq
        %v1728 = vshrl.u32 %v1727, 7
        %v1729 = vsub.s32 %v1726, %v1728
        %v1730 = vrot.slane %v1716, %v1729
        %v1731 = vcombine.high %v1723, %v1723
        %v1732 = vcombine.high %v1730, %v1730
        %v1734 = vunpack.c.l.s4 1966171168
        %v1735 = vunpack.c.0.s8 %v1734
        %v1736 = vlaneseq
        %v1737 = vshrl.u32 %v1736, 7
        %v1738 = vsub.s32 %v1735, %v1737
        %v1739 = vrot.slane %v1274, %v1738
        %v1740 = vcombine.high %v1739, %v1739
        %v1742 = vunpack.c.l.s4 1966171168
        %v1743 = vunpack.c.0.s8 %v1742
        %v1744 = vlaneseq
        %v1745 = vshrl.u32 %v1744, 7
        %v1746 = vsub.s32 %v1743, %v1745
        %v1747 = vrot.slane %v1739, %v1746
        %v1749 = vunpack.c.l.s4 1966171168
        %v1750 = vunpack.c.0.s8 %v1749
        %v1751 = vlaneseq
        %v1752 = vshrl.u32 %v1751, 7
        %v1753 = vsub.s32 %v1750, %v1752
        %v1754 = vrot.slane %v1740, %v1753
        %vm1755 = vsmask.f32 256
        %vm1756 = vsmask.f32 1284
        %vm1757 = vmor %vm1755, %vm1756
        %vm1758 = vsmask.f32 2312
        %vm1759 = vmor %vm1757, %vm1758
        %vm1760 = vsmask.f32 3340
        %vm1761 = vmor %vm1759, %vm1760
        %vm1762 = vsmask.f32 4368
        %vm1763 = vmor %vm1761, %vm1762
        %vm1764 = vsmask.f32 5396
        %vm1765 = vmor %vm1763, %vm1764
        %vm1766 = vsmask.f32 6424
        %vm1767 = vmor %vm1765, %vm1766
        %vm1768 = vsmask.f32 7452
        %vm1769 = vmor %vm1767, %vm1768
        %v1771 = vshrl.u32 %v1309, 16
        %v1773 = vrot.slane %v1771, 7
        %v1774 = vrot.slane %v1773, 1
        %v1776 = vshll.u32 %v1316, 16
        %v1778 = vsel %vm1769, %v1774, %v1776
        %v1779 = vshrl.u32 %v1316, 16
        %v1781 = vrot.slane %v1779, 7
        %v1782 = vrot.slane %v1781, 1
        %v1784 = vshll.u32 %v1317, 16
        %v1786 = vsel %vm1769, %v1782, %v1784
        %v1787 = vshrl.u32 %v1317, 16
        %v1789 = vrot.slane %v1787, 7
        %v1790 = vrot.slane %v1789, 1
        %v1792 = vshll.u32 %v1318, 16
        %v1794 = vsel %vm1769, %v1790, %v1792
        %v1795 = vshrl.u32 %v1318, 16
        %v1797 = vrot.slane %v1795, 7
        %v1798 = vrot.slane %v1797, 1
        %v1800 = vshll.u32 %v1333, 16
        %v1802 = vsel %vm1769, %v1798, %v1800
        %v1803 = vshrl.u32 %v1333, 16
        %v1805 = vrot.slane %v1803, 7
        %v1806 = vrot.slane %v1805, 1
        %v1808 = vshll.u32 %v1340, 16
        %v1810 = vsel %vm1769, %v1806, %v1808
        %v1812 = vshrl.u32 %v1355, 16
        %v1814 = vrot.slane %v1812, 7
        %v1815 = vrot.slane %v1814, 1
        %v1817 = vshll.u32 %v1362, 16
        %v1819 = vsel %vm1769, %v1815, %v1817
        %v1820 = vshrl.u32 %v1362, 16
        %v1822 = vrot.slane %v1820, 7
        %v1823 = vrot.slane %v1822, 1
        %v1825 = vshll.u32 %v1363, 16
        %v1827 = vsel %vm1769, %v1823, %v1825
        %v1828 = vshrl.u32 %v1363, 16
        %v1830 = vrot.slane %v1828, 7
        %v1831 = vrot.slane %v1830, 1
        %v1833 = vshll.u32 %v1364, 16
        %v1835 = vsel %vm1769, %v1831, %v1833
        %v1836 = vshrl.u32 %v1364, 16
        %v1838 = vrot.slane %v1836, 7
        %v1839 = vrot.slane %v1838, 1
        %v1841 = vshll.u32 %v1379, 16
        %v1843 = vsel %vm1769, %v1839, %v1841
        %v1844 = vshrl.u32 %v1379, 16
        %v1846 = vrot.slane %v1844, 7
        %v1847 = vrot.slane %v1846, 1
        %v1849 = vshll.u32 %v1386, 16
        %v1851 = vsel %vm1769, %v1847, %v1849
        %v1853 = vshrl.u32 %v1401, 16
        %v1855 = vrot.slane %v1853, 7
        %v1856 = vrot.slane %v1855, 1
        %v1858 = vshll.u32 %v1408, 16
        %v1860 = vsel %vm1769, %v1856, %v1858
        %v1861 = vshrl.u32 %v1408, 16
        %v1863 = vrot.slane %v1861, 7
        %v1864 = vrot.slane %v1863, 1
        %v1866 = vshll.u32 %v1409, 16
        %v1868 = vsel %vm1769, %v1864, %v1866
        %v1869 = vshrl.u32 %v1409, 16
        %v1871 = vrot.slane %v1869, 7
        %v1872 = vrot.slane %v1871, 1
        %v1874 = vshll.u32 %v1410, 16
        %v1876 = vsel %vm1769, %v1872, %v1874
        %v1877 = vshrl.u32 %v1410, 16
        %v1879 = vrot.slane %v1877, 7
        %v1880 = vrot.slane %v1879, 1
        %v1882 = vshll.u32 %v1425, 16
        %v1884 = vsel %vm1769, %v1880, %v1882
        %v1885 = vshrl.u32 %v1425, 16
        %v1887 = vrot.slane %v1885, 7
        %v1888 = vrot.slane %v1887, 1
        %v1890 = vshll.u32 %v1432, 16
        %v1892 = vsel %vm1769, %v1888, %v1890
        %v1894 = vshrl.u32 %v1447, 16
        %v1896 = vrot.slane %v1894, 7
        %v1897 = vrot.slane %v1896, 1
        %v1899 = vshll.u32 %v1454, 16
        %v1901 = vsel %vm1769, %v1897, %v1899
        %v1902 = vshrl.u32 %v1454, 16
        %v1904 = vrot.slane %v1902, 7
        %v1905 = vrot.slane %v1904, 1
        %v1907 = vshll.u32 %v1455, 16
        %v1909 = vsel %vm1769, %v1905, %v1907
        %v1910 = vshrl.u32 %v1455, 16
        %v1912 = vrot.slane %v1910, 7
        %v1913 = vrot.slane %v1912, 1
        %v1915 = vshll.u32 %v1456, 16
        %v1917 = vsel %vm1769, %v1913, %v1915
        %v1918 = vshrl.u32 %v1456, 16
        %v1920 = vrot.slane %v1918, 7
        %v1921 = vrot.slane %v1920, 1
        %v1923 = vshll.u32 %v1471, 16
        %v1925 = vsel %vm1769, %v1921, %v1923
        %v1926 = vshrl.u32 %v1471, 16
        %v1928 = vrot.slane %v1926, 7
        %v1929 = vrot.slane %v1928, 1
        %v1931 = vshll.u32 %v1478, 16
        %v1933 = vsel %vm1769, %v1929, %v1931
        %v1935 = vshrl.u32 %v1493, 16
        %v1937 = vrot.slane %v1935, 7
        %v1938 = vrot.slane %v1937, 1
        %v1940 = vshll.u32 %v1500, 16
        %v1942 = vsel %vm1769, %v1938, %v1940
        %v1943 = vshrl.u32 %v1500, 16
        %v1945 = vrot.slane %v1943, 7
        %v1946 = vrot.slane %v1945, 1
        %v1948 = vshll.u32 %v1501, 16
        %v1950 = vsel %vm1769, %v1946, %v1948
        %v1951 = vshrl.u32 %v1501, 16
        %v1953 = vrot.slane %v1951, 7
        %v1954 = vrot.slane %v1953, 1
        %v1956 = vshll.u32 %v1502, 16
        %v1958 = vsel %vm1769, %v1954, %v1956
        %v1959 = vshrl.u32 %v1502, 16
        %v1961 = vrot.slane %v1959, 7
        %v1962 = vrot.slane %v1961, 1
        %v1964 = vshll.u32 %v1517, 16
        %v1966 = vsel %vm1769, %v1962, %v1964
        %v1967 = vshrl.u32 %v1517, 16
        %v1969 = vrot.slane %v1967, 7
        %v1970 = vrot.slane %v1969, 1
        %v1972 = vshll.u32 %v1524, 16
        %v1974 = vsel %vm1769, %v1970, %v1972
        %v1976 = vshrl.u32 %v1539, 16
        %v1978 = vrot.slane %v1976, 7
        %v1979 = vrot.slane %v1978, 1
        %v1981 = vshll.u32 %v1546, 16
        %v1983 = vsel %vm1769, %v1979, %v1981
        %v1984 = vshrl.u32 %v1546, 16
        %v1986 = vrot.slane %v1984, 7
        %v1987 = vrot.slane %v1986, 1
        %v1989 = vshll.u32 %v1547, 16
        %v1991 = vsel %vm1769, %v1987, %v1989
        %v1992 = vshrl.u32 %v1547, 16
        %v1994 = vrot.slane %v1992, 7
        %v1995 = vrot.slane %v1994, 1
        %v1997 = vshll.u32 %v1548, 16
        %v1999 = vsel %vm1769, %v1995, %v1997
        %v2000 = vshrl.u32 %v1548, 16
        %v2002 = vrot.slane %v2000, 7
        %v2003 = vrot.slane %v2002, 1
        %v2005 = vshll.u32 %v1563, 16
        %v2007 = vsel %vm1769, %v2003, %v2005
        %v2008 = vshrl.u32 %v1563, 16
        %v2010 = vrot.slane %v2008, 7
        %v2011 = vrot.slane %v2010, 1
        %v2013 = vshll.u32 %v1570, 16
        %v2015 = vsel %vm1769, %v2011, %v2013
        %v2017 = vshrl.u32 %v1585, 16
        %v2019 = vrot.slane %v2017, 7
        %v2020 = vrot.slane %v2019, 1
        %v2022 = vshll.u32 %v1592, 16
        %v2024 = vsel %vm1769, %v2020, %v2022
        %v2025 = vshrl.u32 %v1592, 16
        %v2027 = vrot.slane %v2025, 7
        %v2028 = vrot.slane %v2027, 1
        %v2030 = vshll.u32 %v1593, 16
        %v2032 = vsel %vm1769, %v2028, %v2030
        %v2033 = vshrl.u32 %v1593, 16
        %v2035 = vrot.slane %v2033, 7
        %v2036 = vrot.slane %v2035, 1
        %v2038 = vshll.u32 %v1594, 16
        %v2040 = vsel %vm1769, %v2036, %v2038
        %v2041 = vshrl.u32 %v1594, 16
        %v2043 = vrot.slane %v2041, 7
        %v2044 = vrot.slane %v2043, 1
        %v2046 = vshll.u32 %v1609, 16
        %v2048 = vsel %vm1769, %v2044, %v2046
        %v2049 = vshrl.u32 %v1609, 16
        %v2051 = vrot.slane %v2049, 7
        %v2052 = vrot.slane %v2051, 1
        %v2054 = vshll.u32 %v1616, 16
        %v2056 = vsel %vm1769, %v2052, %v2054
        %v2058 = vshrl.u32 %v1631, 16
        %v2060 = vrot.slane %v2058, 7
        %v2061 = vrot.slane %v2060, 1
        %v2063 = vshll.u32 %v1638, 16
        %v2065 = vsel %vm1769, %v2061, %v2063
        %v2066 = vshrl.u32 %v1638, 16
        %v2068 = vrot.slane %v2066, 7
        %v2069 = vrot.slane %v2068, 1
        %v2071 = vshll.u32 %v1639, 16
        %v2073 = vsel %vm1769, %v2069, %v2071
        %v2074 = vshrl.u32 %v1639, 16
        %v2076 = vrot.slane %v2074, 7
        %v2077 = vrot.slane %v2076, 1
        %v2079 = vshll.u32 %v1640, 16
        %v2081 = vsel %vm1769, %v2077, %v2079
        %v2082 = vshrl.u32 %v1640, 16
        %v2084 = vrot.slane %v2082, 7
        %v2085 = vrot.slane %v2084, 1
        %v2087 = vshll.u32 %v1655, 16
        %v2089 = vsel %vm1769, %v2085, %v2087
        %v2090 = vshrl.u32 %v1655, 16
        %v2092 = vrot.slane %v2090, 7
        %v2093 = vrot.slane %v2092, 1
        %v2095 = vshll.u32 %v1662, 16
        %v2097 = vsel %vm1769, %v2093, %v2095
        %v2099 = vshrl.u32 %v1677, 16
        %v2101 = vrot.slane %v2099, 7
        %v2102 = vrot.slane %v2101, 1
        %v2104 = vshll.u32 %v1684, 16
        %v2106 = vsel %vm1769, %v2102, %v2104
        %v2107 = vshrl.u32 %v1684, 16
        %v2109 = vrot.slane %v2107, 7
        %v2110 = vrot.slane %v2109, 1
        %v2112 = vshll.u32 %v1685, 16
        %v2114 = vsel %vm1769, %v2110, %v2112
        %v2115 = vshrl.u32 %v1685, 16
        %v2117 = vrot.slane %v2115, 7
        %v2118 = vrot.slane %v2117, 1
        %v2120 = vshll.u32 %v1686, 16
        %v2122 = vsel %vm1769, %v2118, %v2120
        %v2123 = vshrl.u32 %v1686, 16
        %v2125 = vrot.slane %v2123, 7
        %v2126 = vrot.slane %v2125, 1
        %v2128 = vshll.u32 %v1701, 16
        %v2130 = vsel %vm1769, %v2126, %v2128
        %v2131 = vshrl.u32 %v1701, 16
        %v2133 = vrot.slane %v2131, 7
        %v2134 = vrot.slane %v2133, 1
        %v2136 = vshll.u32 %v1708, 16
        %v2138 = vsel %vm1769, %v2134, %v2136
        %v2140 = vshrl.u32 %v1723, 16
        %v2142 = vrot.slane %v2140, 7
        %v2143 = vrot.slane %v2142, 1
        %v2145 = vshll.u32 %v1730, 16
        %v2147 = vsel %vm1769, %v2143, %v2145
        %v2148 = vshrl.u32 %v1730, 16
        %v2150 = vrot.slane %v2148, 7
        %v2151 = vrot.slane %v2150, 1
        %v2153 = vshll.u32 %v1731, 16
        %v2155 = vsel %vm1769, %v2151, %v2153
        %v2156 = vshrl.u32 %v1731, 16
        %v2158 = vrot.slane %v2156, 7
        %v2159 = vrot.slane %v2158, 1
        %v2161 = vshll.u32 %v1732, 16
        %v2163 = vsel %vm1769, %v2159, %v2161
        %v2164 = vshrl.u32 %v1732, 16
        %v2166 = vrot.slane %v2164, 7
        %v2167 = vrot.slane %v2166, 1
        %v2169 = vshll.u32 %v1747, 16
        %v2171 = vsel %vm1769, %v2167, %v2169
        %v2172 = vshrl.u32 %v1747, 16
        %v2174 = vrot.slane %v2172, 7
        %v2175 = vrot.slane %v2174, 1
        %v2177 = vshll.u32 %v1754, 16
        %v2179 = vsel %vm1769, %v2175, %v2177
        %v2180 = vcombine.low %v1778, %v1794
        %v2181 = vcombine.low %v1786, %v1802
        %v2183 = vunpack.c.l.s4 1935823168
        %v2184 = vunpack.c.0.s8 %v2183
        %v2185 = vlaneseq
        %v2186 = vshrl.u32 %v2185, 7
        %v2187 = vsub.s32 %v2184, %v2186
        %v2188 = vrot.slane %v2180, %v2187
        %v2190 = vunpack.c.l.s4 1935823168
        %v2191 = vunpack.c.0.s8 %v2190
        %v2192 = vlaneseq
        %v2193 = vshrl.u32 %v2192, 7
        %v2194 = vsub.s32 %v2191, %v2193
        %v2195 = vrot.slane %v2181, %v2194
        %v2196 = vcombine.low %v2188, %v2195
        %v2198 = vunpack.c.l.s4 1935823168
        %v2199 = vunpack.c.0.s8 %v2198
        %v2200 = vlaneseq
        %v2201 = vshrl.u32 %v2200, 7
        %v2202 = vsub.s32 %v2199, %v2201
        %v2203 = vrot.slane %v2196, %v2202
        %v2204 = vcombine.low %v1810, %v1827
        %v2205 = vcombine.low %v1819, %v1835
        %v2207 = vunpack.c.l.s4 1935823168
        %v2208 = vunpack.c.0.s8 %v2207
        %v2209 = vlaneseq
        %v2210 = vshrl.u32 %v2209, 7
        %v2211 = vsub.s32 %v2208, %v2210
        %v2212 = vrot.slane %v2204, %v2211
        %v2214 = vunpack.c.l.s4 1935823168
        %v2215 = vunpack.c.0.s8 %v2214
        %v2216 = vlaneseq
        %v2217 = vshrl.u32 %v2216, 7
        %v2218 = vsub.s32 %v2215, %v2217
        %v2219 = vrot.slane %v2205, %v2218
        %v2220 = vcombine.low %v2212, %v2219
        %v2222 = vunpack.c.l.s4 1935823168
        %v2223 = vunpack.c.0.s8 %v2222
        %v2224 = vlaneseq
        %v2225 = vshrl.u32 %v2224, 7
        %v2226 = vsub.s32 %v2223, %v2225
        %v2227 = vrot.slane %v2220, %v2226
        %v2228 = vcombine.low %v1843, %v1860
        %v2229 = vcombine.low %v1851, %v1868
        %v2231 = vunpack.c.l.s4 1935823168
        %v2232 = vunpack.c.0.s8 %v2231
        %v2233 = vlaneseq
        %v2234 = vshrl.u32 %v2233, 7
        %v2235 = vsub.s32 %v2232, %v2234
        %v2236 = vrot.slane %v2228, %v2235
        %v2238 = vunpack.c.l.s4 1935823168
        %v2239 = vunpack.c.0.s8 %v2238
        %v2240 = vlaneseq
        %v2241 = vshrl.u32 %v2240, 7
        %v2242 = vsub.s32 %v2239, %v2241
        %v2243 = vrot.slane %v2229, %v2242
        %v2244 = vcombine.low %v2236, %v2243
        %v2246 = vunpack.c.l.s4 1935823168
        %v2247 = vunpack.c.0.s8 %v2246
        %v2248 = vlaneseq
        %v2249 = vshrl.u32 %v2248, 7
        %v2250 = vsub.s32 %v2247, %v2249
        %v2251 = vrot.slane %v2244, %v2250
        %v2252 = vcombine.low %v1876, %v1892
        %v2253 = vcombine.low %v1884, %v1901
        %v2255 = vunpack.c.l.s4 1935823168
        %v2256 = vunpack.c.0.s8 %v2255
        %v2257 = vlaneseq
        %v2258 = vshrl.u32 %v2257, 7
        %v2259 = vsub.s32 %v2256, %v2258
        %v2260 = vrot.slane %v2252, %v2259
        %v2262 = vunpack.c.l.s4 1935823168
        %v2263 = vunpack.c.0.s8 %v2262
        %v2264 = vlaneseq
        %v2265 = vshrl.u32 %v2264, 7
        %v2266 = vsub.s32 %v2263, %v2265
        %v2267 = vrot.slane %v2253, %v2266
        %v2268 = vcombine.low %v2260, %v2267
        %v2270 = vunpack.c.l.s4 1935823168
        %v2271 = vunpack.c.0.s8 %v2270
        %v2272 = vlaneseq
        %v2273 = vshrl.u32 %v2272, 7
        %v2274 = vsub.s32 %v2271, %v2273
        %v2275 = vrot.slane %v2268, %v2274
        %v2276 = vcombine.low %v1909, %v1925
        %v2277 = vcombine.low %v1917, %v1933
        %v2279 = vunpack.c.l.s4 1935823168
        %v2280 = vunpack.c.0.s8 %v2279
        %v2281 = vlaneseq
        %v2282 = vshrl.u32 %v2281, 7
        %v2283 = vsub.s32 %v2280, %v2282
        %v2284 = vrot.slane %v2276, %v2283
        %v2286 = vunpack.c.l.s4 1935823168
        %v2287 = vunpack.c.0.s8 %v2286
        %v2288 = vlaneseq
        %v2289 = vshrl.u32 %v2288, 7
        %v2290 = vsub.s32 %v2287, %v2289
        %v2291 = vrot.slane %v2277, %v2290
        %v2292 = vcombine.low %v2284, %v2291
        %v2294 = vunpack.c.l.s4 1935823168
        %v2295 = vunpack.c.0.s8 %v2294
        %v2296 = vlaneseq
        %v2297 = vshrl.u32 %v2296, 7
        %v2298 = vsub.s32 %v2295, %v2297
        %v2299 = vrot.slane %v2292, %v2298
        %v2300 = vcombine.low %v1942, %v1958
        %v2301 = vcombine.low %v1950, %v1966
        %v2303 = vunpack.c.l.s4 1935823168
        %v2304 = vunpack.c.0.s8 %v2303
        %v2305 = vlaneseq
        %v2306 = vshrl.u32 %v2305, 7
        %v2307 = vsub.s32 %v2304, %v2306
        %v2308 = vrot.slane %v2300, %v2307
        %v2310 = vunpack.c.l.s4 1935823168
        %v2311 = vunpack.c.0.s8 %v2310
        %v2312 = vlaneseq
        %v2313 = vshrl.u32 %v2312, 7
        %v2314 = vsub.s32 %v2311, %v2313
        %v2315 = vrot.slane %v2301, %v2314
        %v2316 = vcombine.low %v2308, %v2315
        %v2318 = vunpack.c.l.s4 1935823168
        %v2319 = vunpack.c.0.s8 %v2318
        %v2320 = vlaneseq
        %v2321 = vshrl.u32 %v2320, 7
        %v2322 = vsub.s32 %v2319, %v2321
        %v2323 = vrot.slane %v2316, %v2322
        %v2324 = vcombine.low %v1974, %v1991
        %v2325 = vcombine.low %v1983, %v1999
        %v2327 = vunpack.c.l.s4 1935823168
        %v2328 = vunpack.c.0.s8 %v2327
        %v2329 = vlaneseq
        %v2330 = vshrl.u32 %v2329, 7
        %v2331 = vsub.s32 %v2328, %v2330
        %v2332 = vrot.slane %v2324, %v2331
        %v2334 = vunpack.c.l.s4 1935823168
        %v2335 = vunpack.c.0.s8 %v2334
        %v2336 = vlaneseq
        %v2337 = vshrl.u32 %v2336, 7
        %v2338 = vsub.s32 %v2335, %v2337
        %v2339 = vrot.slane %v2325, %v2338
        %v2340 = vcombine.low %v2332, %v2339
        %v2342 = vunpack.c.l.s4 1935823168
        %v2343 = vunpack.c.0.s8 %v2342
        %v2344 = vlaneseq
        %v2345 = vshrl.u32 %v2344, 7
        %v2346 = vsub.s32 %v2343, %v2345
        %v2347 = vrot.slane %v2340, %v2346
        %v2348 = vcombine.low %v2007, %v2024
        %v2349 = vcombine.low %v2015, %v2032
        %v2351 = vunpack.c.l.s4 1935823168
        %v2352 = vunpack.c.0.s8 %v2351
        %v2353 = vlaneseq
        %v2354 = vshrl.u32 %v2353, 7
        %v2355 = vsub.s32 %v2352, %v2354
        %v2356 = vrot.slane %v2348, %v2355
        %v2358 = vunpack.c.l.s4 1935823168
        %v2359 = vunpack.c.0.s8 %v2358
        %v2360 = vlaneseq
        %v2361 = vshrl.u32 %v2360, 7
        %v2362 = vsub.s32 %v2359, %v2361
        %v2363 = vrot.slane %v2349, %v2362
        %v2364 = vcombine.low %v2356, %v2363
        %v2366 = vunpack.c.l.s4 1935823168
        %v2367 = vunpack.c.0.s8 %v2366
        %v2368 = vlaneseq
        %v2369 = vshrl.u32 %v2368, 7
        %v2370 = vsub.s32 %v2367, %v2369
        %v2371 = vrot.slane %v2364, %v2370
        %v2372 = vcombine.low %v2040, %v2056
        %v2373 = vcombine.low %v2048, %v2065
        %v2375 = vunpack.c.l.s4 1935823168
        %v2376 = vunpack.c.0.s8 %v2375
        %v2377 = vlaneseq
        %v2378 = vshrl.u32 %v2377, 7
        %v2379 = vsub.s32 %v2376, %v2378
        %v2380 = vrot.slane %v2372, %v2379
        %v2382 = vunpack.c.l.s4 1935823168
        %v2383 = vunpack.c.0.s8 %v2382
        %v2384 = vlaneseq
        %v2385 = vshrl.u32 %v2384, 7
        %v2386 = vsub.s32 %v2383, %v2385
        %v2387 = vrot.slane %v2373, %v2386
        %v2388 = vcombine.low %v2380, %v2387
        %v2390 = vunpack.c.l.s4 1935823168
        %v2391 = vunpack.c.0.s8 %v2390
        %v2392 = vlaneseq
        %v2393 = vshrl.u32 %v2392, 7
        %v2394 = vsub.s32 %v2391, %v2393
        %v2395 = vrot.slane %v2388, %v2394
        %v2396 = vcombine.low %v2073, %v2089
        %v2397 = vcombine.low %v2081, %v2097
        %v2399 = vunpack.c.l.s4 1935823168
        %v2400 = vunpack.c.0.s8 %v2399
        %v2401 = vlaneseq
        %v2402 = vshrl.u32 %v2401, 7
        %v2403 = vsub.s32 %v2400, %v2402
        %v2404 = vrot.slane %v2396, %v2403
        %v2406 = vunpack.c.l.s4 1935823168
        %v2407 = vunpack.c.0.s8 %v2406
        %v2408 = vlaneseq
        %v2409 = vshrl.u32 %v2408, 7
        %v2410 = vsub.s32 %v2407, %v2409
        %v2411 = vrot.slane %v2397, %v2410
        %v2412 = vcombine.low %v2404, %v2411
        %v2414 = vunpack.c.l.s4 1935823168
        %v2415 = vunpack.c.0.s8 %v2414
        %v2416 = vlaneseq
        %v2417 = vshrl.u32 %v2416, 7
        %v2418 = vsub.s32 %v2415, %v2417
        %v2419 = vrot.slane %v2412, %v2418
        %v2420 = vcombine.low %v2106, %v2122
        %v2421 = vcombine.low %v2114, %v2130
        %v2423 = vunpack.c.l.s4 1935823168
        %v2424 = vunpack.c.0.s8 %v2423
        %v2425 = vlaneseq
        %v2426 = vshrl.u32 %v2425, 7
        %v2427 = vsub.s32 %v2424, %v2426
        %v2428 = vrot.slane %v2420, %v2427
        %v2430 = vunpack.c.l.s4 1935823168
        %v2431 = vunpack.c.0.s8 %v2430
        %v2432 = vlaneseq
        %v2433 = vshrl.u32 %v2432, 7
        %v2434 = vsub.s32 %v2431, %v2433
        %v2435 = vrot.slane %v2421, %v2434
        %v2436 = vcombine.low %v2428, %v2435
        %v2438 = vunpack.c.l.s4 1935823168
        %v2439 = vunpack.c.0.s8 %v2438
        %v2440 = vlaneseq
        %v2441 = vshrl.u32 %v2440, 7
        %v2442 = vsub.s32 %v2439, %v2441
        %v2443 = vrot.slane %v2436, %v2442
        %v2444 = vcombine.low %v2138, %v2155
        %v2445 = vcombine.low %v2147, %v2163
        %v2447 = vunpack.c.l.s4 1935823168
        %v2448 = vunpack.c.0.s8 %v2447
        %v2449 = vlaneseq
        %v2450 = vshrl.u32 %v2449, 7
        %v2451 = vsub.s32 %v2448, %v2450
        %v2452 = vrot.slane %v2444, %v2451
        %v2454 = vunpack.c.l.s4 1935823168
        %v2455 = vunpack.c.0.s8 %v2454
        %v2456 = vlaneseq
        %v2457 = vshrl.u32 %v2456, 7
        %v2458 = vsub.s32 %v2455, %v2457
        %v2459 = vrot.slane %v2445, %v2458
        %v2460 = vcombine.low %v2452, %v2459
        %v2462 = vunpack.c.l.s4 1935823168
        %v2463 = vunpack.c.0.s8 %v2462
        %v2464 = vlaneseq
        %v2465 = vshrl.u32 %v2464, 7
        %v2466 = vsub.s32 %v2463, %v2465
        %v2467 = vrot.slane %v2460, %v2466
        %v2469 = vunpack.c.l.s4 1935823168
        %v2470 = vunpack.c.0.s8 %v2469
        %v2471 = vlaneseq
        %v2472 = vshrl.u32 %v2471, 7
        %v2473 = vsub.s32 %v2470, %v2472
        %v2474 = vrot.slane %v2171, %v2473
        %v2476 = vunpack.c.l.s4 1935823168
        %v2477 = vunpack.c.0.s8 %v2476
        %v2478 = vlaneseq
        %v2479 = vshrl.u32 %v2478, 7
        %v2480 = vsub.s32 %v2477, %v2479
        %v2481 = vrot.slane %v2179, %v2480
        %v2482 = vcombine.low %v2474, %v2481
        %v2484 = vunpack.c.l.s4 1935823168
        %v2485 = vunpack.c.0.s8 %v2484
        %v2486 = vlaneseq
        %v2487 = vshrl.u32 %v2486, 7
        %v2488 = vsub.s32 %v2485, %v2487
        %v2489 = vrot.slane %v2482, %v2488
        %2503 = vst [vmem:[#allocation4 + $0x4] sm:$0xf] %v2203
        %2504 = vst [vmem:[#allocation4 + $0x28] sm:$0xf] %v2227
        %2505 = vst [vmem:[#allocation4 + $0x4c] sm:$0xf] %v2251
        %2506 = vst [vmem:[#allocation4 + $0x70] sm:$0xf] %v2275
        %2507 = vst [vmem:[#allocation4 + $0x94] sm:$0xf] %v2299
        %2508 = vst [vmem:[#allocation4 + $0xb8] sm:$0xf] %v2323
        %2509 = vst [vmem:[#allocation4 + $0xdc] sm:$0xf] %v2347
        %2510 = vst [vmem:[#allocation4 + $0x100] sm:$0xf] %v2371
        %2511 = vst [vmem:[#allocation4 + $0x124] sm:$0xf] %v2395
        %2512 = vst [vmem:[#allocation4 + $0x148] sm:$0xf] %v2419
        %2513 = vst [vmem:[#allocation4 + $0x16c] sm:$0xf] %v2443
        %2514 = vst [vmem:[#allocation4 + $0x190] sm:$0xf] %v2467
        %2515 = vst [vmem:[#allocation4 + $0x1b4] sm:$0x3] %v2489
        %v2516 = vld [vmem:[#allocation2] sm:$0xe]
        %v2517 = vld [vmem:[#allocation2 + $0x4] sm:$0x3]
        %v2518 = vld [vmem:[#allocation2 + $0x8] sm:$0xe]
        %v2519 = vld [vmem:[#allocation2 + $0xc] sm:$0x3]
        %v2520 = vld [vmem:[#allocation2 + $0x10] sm:$0xe]
        %v2521 = vld [vmem:[#allocation2 + $0x14] sm:$0x3]
        %v2522 = vld [vmem:[#allocation2 + $0x18] sm:$0xe]
        %v2523 = vld [vmem:[#allocation2 + $0x1c] sm:$0x3]
        %v2524 = vld [vmem:[#allocation2 + $0x20] sm:$0xe]
        %v2525 = vld [vmem:[#allocation2 + $0x24] sm:$0x3]
        %v2526 = vld [vmem:[#allocation2 + $0x28] sm:$0xe]
        %v2527 = vld [vmem:[#allocation2 + $0x2c] sm:$0x3]
        %v2528 = vld [vmem:[#allocation2 + $0x30] sm:$0xe]
        %v2529 = vld [vmem:[#allocation2 + $0x34] sm:$0x3]
        %v2530 = vld [vmem:[#allocation2 + $0x38] sm:$0xe]
        %v2531 = vld [vmem:[#allocation2 + $0x3c] sm:$0x3]
        %v2532 = vld [vmem:[#allocation2 + $0x40] sm:$0xe]
        %v2533 = vld [vmem:[#allocation2 + $0x44] sm:$0x3]
        %v2534 = vld [vmem:[#allocation2 + $0x48] sm:$0xe]
        %v2535 = vld [vmem:[#allocation2 + $0x4c] sm:$0x3]
        %v2557 = vunpack.c.l.s4 1966171168
        %v2558 = vunpack.c.0.s8 %v2557
        %v2559 = vlaneseq
        %v2560 = vshrl.u32 %v2559, 7
        %v2561 = vsub.s32 %v2558, %v2560
        %v2562 = vrot.slane %v2516, %v2561
        %v2563 = vcombine.high %v2562, %v2562
        %v2565 = vunpack.c.l.s4 1966171168
        %v2566 = vunpack.c.0.s8 %v2565
        %v2567 = vlaneseq
        %v2568 = vshrl.u32 %v2567, 7
        %v2569 = vsub.s32 %v2566, %v2568
        %v2570 = vrot.slane %v2562, %v2569
        %v2572 = vunpack.c.l.s4 1966171168
        %v2573 = vunpack.c.0.s8 %v2572
        %v2574 = vlaneseq
        %v2575 = vshrl.u32 %v2574, 7
        %v2576 = vsub.s32 %v2573, %v2575
        %v2577 = vrot.slane %v2563, %v2576
        %v2578 = vcombine.high %v2570, %v2570
        %v2579 = vcombine.high %v2577, %v2577
        %v2581 = vunpack.c.l.s4 1966171168
        %v2582 = vunpack.c.0.s8 %v2581
        %v2583 = vlaneseq
        %v2584 = vshrl.u32 %v2583, 7
        %v2585 = vsub.s32 %v2582, %v2584
        %v2586 = vrot.slane %v2517, %v2585
        %v2587 = vcombine.high %v2586, %v2586
        %v2589 = vunpack.c.l.s4 1966171168
        %v2590 = vunpack.c.0.s8 %v2589
        %v2591 = vlaneseq
        %v2592 = vshrl.u32 %v2591, 7
        %v2593 = vsub.s32 %v2590, %v2592
        %v2594 = vrot.slane %v2586, %v2593
        %v2596 = vunpack.c.l.s4 1966171168
        %v2597 = vunpack.c.0.s8 %v2596
        %v2598 = vlaneseq
        %v2599 = vshrl.u32 %v2598, 7
        %v2600 = vsub.s32 %v2597, %v2599
        %v2601 = vrot.slane %v2587, %v2600
        %v2603 = vunpack.c.l.s4 1966171168
        %v2604 = vunpack.c.0.s8 %v2603
        %v2605 = vlaneseq
        %v2606 = vshrl.u32 %v2605, 7
        %v2607 = vsub.s32 %v2604, %v2606
        %v2608 = vrot.slane %v2518, %v2607
        %v2609 = vcombine.high %v2608, %v2608
        %v2611 = vunpack.c.l.s4 1966171168
        %v2612 = vunpack.c.0.s8 %v2611
        %v2613 = vlaneseq
        %v2614 = vshrl.u32 %v2613, 7
        %v2615 = vsub.s32 %v2612, %v2614
        %v2616 = vrot.slane %v2608, %v2615
        %v2618 = vunpack.c.l.s4 1966171168
        %v2619 = vunpack.c.0.s8 %v2618
        %v2620 = vlaneseq
        %v2621 = vshrl.u32 %v2620, 7
        %v2622 = vsub.s32 %v2619, %v2621
        %v2623 = vrot.slane %v2609, %v2622
        %v2624 = vcombine.high %v2616, %v2616
        %v2625 = vcombine.high %v2623, %v2623
        %v2627 = vunpack.c.l.s4 1966171168
        %v2628 = vunpack.c.0.s8 %v2627
        %v2629 = vlaneseq
        %v2630 = vshrl.u32 %v2629, 7
        %v2631 = vsub.s32 %v2628, %v2630
        %v2632 = vrot.slane %v2519, %v2631
        %v2633 = vcombine.high %v2632, %v2632
        %v2635 = vunpack.c.l.s4 1966171168
        %v2636 = vunpack.c.0.s8 %v2635
        %v2637 = vlaneseq
        %v2638 = vshrl.u32 %v2637, 7
        %v2639 = vsub.s32 %v2636, %v2638
        %v2640 = vrot.slane %v2632, %v2639
        %v2642 = vunpack.c.l.s4 1966171168
        %v2643 = vunpack.c.0.s8 %v2642
        %v2644 = vlaneseq
        %v2645 = vshrl.u32 %v2644, 7
        %v2646 = vsub.s32 %v2643, %v2645
        %v2647 = vrot.slane %v2633, %v2646
        %v2649 = vunpack.c.l.s4 1966171168
        %v2650 = vunpack.c.0.s8 %v2649
        %v2651 = vlaneseq
        %v2652 = vshrl.u32 %v2651, 7
        %v2653 = vsub.s32 %v2650, %v2652
        %v2654 = vrot.slane %v2520, %v2653
        %v2655 = vcombine.high %v2654, %v2654
        %v2657 = vunpack.c.l.s4 1966171168
        %v2658 = vunpack.c.0.s8 %v2657
        %v2659 = vlaneseq
        %v2660 = vshrl.u32 %v2659, 7
        %v2661 = vsub.s32 %v2658, %v2660
        %v2662 = vrot.slane %v2654, %v2661
        %v2664 = vunpack.c.l.s4 1966171168
        %v2665 = vunpack.c.0.s8 %v2664
        %v2666 = vlaneseq
        %v2667 = vshrl.u32 %v2666, 7
        %v2668 = vsub.s32 %v2665, %v2667
        %v2669 = vrot.slane %v2655, %v2668
        %v2670 = vcombine.high %v2662, %v2662
        %v2671 = vcombine.high %v2669, %v2669
        %v2673 = vunpack.c.l.s4 1966171168
        %v2674 = vunpack.c.0.s8 %v2673
        %v2675 = vlaneseq
        %v2676 = vshrl.u32 %v2675, 7
        %v2677 = vsub.s32 %v2674, %v2676
        %v2678 = vrot.slane %v2521, %v2677
        %v2679 = vcombine.high %v2678, %v2678
        %v2681 = vunpack.c.l.s4 1966171168
        %v2682 = vunpack.c.0.s8 %v2681
        %v2683 = vlaneseq
        %v2684 = vshrl.u32 %v2683, 7
        %v2685 = vsub.s32 %v2682, %v2684
        %v2686 = vrot.slane %v2678, %v2685
        %v2688 = vunpack.c.l.s4 1966171168
        %v2689 = vunpack.c.0.s8 %v2688
        %v2690 = vlaneseq
        %v2691 = vshrl.u32 %v2690, 7
        %v2692 = vsub.s32 %v2689, %v2691
        %v2693 = vrot.slane %v2679, %v2692
        %v2695 = vunpack.c.l.s4 1966171168
        %v2696 = vunpack.c.0.s8 %v2695
        %v2697 = vlaneseq
        %v2698 = vshrl.u32 %v2697, 7
        %v2699 = vsub.s32 %v2696, %v2698
        %v2700 = vrot.slane %v2522, %v2699
        %v2701 = vcombine.high %v2700, %v2700
        %v2703 = vunpack.c.l.s4 1966171168
        %v2704 = vunpack.c.0.s8 %v2703
        %v2705 = vlaneseq
        %v2706 = vshrl.u32 %v2705, 7
        %v2707 = vsub.s32 %v2704, %v2706
        %v2708 = vrot.slane %v2700, %v2707
        %v2710 = vunpack.c.l.s4 1966171168
        %v2711 = vunpack.c.0.s8 %v2710
        %v2712 = vlaneseq
        %v2713 = vshrl.u32 %v2712, 7
        %v2714 = vsub.s32 %v2711, %v2713
        %v2715 = vrot.slane %v2701, %v2714
        %v2716 = vcombine.high %v2708, %v2708
        %v2717 = vcombine.high %v2715, %v2715
        %v2719 = vunpack.c.l.s4 1966171168
        %v2720 = vunpack.c.0.s8 %v2719
        %v2721 = vlaneseq
        %v2722 = vshrl.u32 %v2721, 7
        %v2723 = vsub.s32 %v2720, %v2722
        %v2724 = vrot.slane %v2523, %v2723
        %v2725 = vcombine.high %v2724, %v2724
        %v2727 = vunpack.c.l.s4 1966171168
        %v2728 = vunpack.c.0.s8 %v2727
        %v2729 = vlaneseq
        %v2730 = vshrl.u32 %v2729, 7
        %v2731 = vsub.s32 %v2728, %v2730
        %v2732 = vrot.slane %v2724, %v2731
        %v2734 = vunpack.c.l.s4 1966171168
        %v2735 = vunpack.c.0.s8 %v2734
        %v2736 = vlaneseq
        %v2737 = vshrl.u32 %v2736, 7
        %v2738 = vsub.s32 %v2735, %v2737
        %v2739 = vrot.slane %v2725, %v2738
        %v2741 = vunpack.c.l.s4 1966171168
        %v2742 = vunpack.c.0.s8 %v2741
        %v2743 = vlaneseq
        %v2744 = vshrl.u32 %v2743, 7
        %v2745 = vsub.s32 %v2742, %v2744
        %v2746 = vrot.slane %v2524, %v2745
        %v2747 = vcombine.high %v2746, %v2746
        %v2749 = vunpack.c.l.s4 1966171168
        %v2750 = vunpack.c.0.s8 %v2749
        %v2751 = vlaneseq
        %v2752 = vshrl.u32 %v2751, 7
        %v2753 = vsub.s32 %v2750, %v2752
        %v2754 = vrot.slane %v2746, %v2753
        %v2756 = vunpack.c.l.s4 1966171168
        %v2757 = vunpack.c.0.s8 %v2756
        %v2758 = vlaneseq
        %v2759 = vshrl.u32 %v2758, 7
        %v2760 = vsub.s32 %v2757, %v2759
        %v2761 = vrot.slane %v2747, %v2760
        %v2762 = vcombine.high %v2754, %v2754
        %v2763 = vcombine.high %v2761, %v2761
        %v2765 = vunpack.c.l.s4 1966171168
        %v2766 = vunpack.c.0.s8 %v2765
        %v2767 = vlaneseq
        %v2768 = vshrl.u32 %v2767, 7
        %v2769 = vsub.s32 %v2766, %v2768
        %v2770 = vrot.slane %v2525, %v2769
        %v2771 = vcombine.high %v2770, %v2770
        %v2773 = vunpack.c.l.s4 1966171168
        %v2774 = vunpack.c.0.s8 %v2773
        %v2775 = vlaneseq
        %v2776 = vshrl.u32 %v2775, 7
        %v2777 = vsub.s32 %v2774, %v2776
        %v2778 = vrot.slane %v2770, %v2777
        %v2780 = vunpack.c.l.s4 1966171168
        %v2781 = vunpack.c.0.s8 %v2780
        %v2782 = vlaneseq
        %v2783 = vshrl.u32 %v2782, 7
        %v2784 = vsub.s32 %v2781, %v2783
        %v2785 = vrot.slane %v2771, %v2784
        %v2787 = vunpack.c.l.s4 1966171168
        %v2788 = vunpack.c.0.s8 %v2787
        %v2789 = vlaneseq
        %v2790 = vshrl.u32 %v2789, 7
        %v2791 = vsub.s32 %v2788, %v2790
        %v2792 = vrot.slane %v2526, %v2791
        %v2793 = vcombine.high %v2792, %v2792
        %v2795 = vunpack.c.l.s4 1966171168
        %v2796 = vunpack.c.0.s8 %v2795
        %v2797 = vlaneseq
        %v2798 = vshrl.u32 %v2797, 7
        %v2799 = vsub.s32 %v2796, %v2798
        %v2800 = vrot.slane %v2792, %v2799
        %v2802 = vunpack.c.l.s4 1966171168
        %v2803 = vunpack.c.0.s8 %v2802
        %v2804 = vlaneseq
        %v2805 = vshrl.u32 %v2804, 7
        %v2806 = vsub.s32 %v2803, %v2805
        %v2807 = vrot.slane %v2793, %v2806
        %v2808 = vcombine.high %v2800, %v2800
        %v2809 = vcombine.high %v2807, %v2807
        %v2811 = vunpack.c.l.s4 1966171168
        %v2812 = vunpack.c.0.s8 %v2811
        %v2813 = vlaneseq
        %v2814 = vshrl.u32 %v2813, 7
        %v2815 = vsub.s32 %v2812, %v2814
        %v2816 = vrot.slane %v2527, %v2815
        %v2817 = vcombine.high %v2816, %v2816
        %v2819 = vunpack.c.l.s4 1966171168
        %v2820 = vunpack.c.0.s8 %v2819
        %v2821 = vlaneseq
        %v2822 = vshrl.u32 %v2821, 7
        %v2823 = vsub.s32 %v2820, %v2822
        %v2824 = vrot.slane %v2816, %v2823
        %v2826 = vunpack.c.l.s4 1966171168
        %v2827 = vunpack.c.0.s8 %v2826
        %v2828 = vlaneseq
        %v2829 = vshrl.u32 %v2828, 7
        %v2830 = vsub.s32 %v2827, %v2829
        %v2831 = vrot.slane %v2817, %v2830
        %v2833 = vunpack.c.l.s4 1966171168
        %v2834 = vunpack.c.0.s8 %v2833
        %v2835 = vlaneseq
        %v2836 = vshrl.u32 %v2835, 7
        %v2837 = vsub.s32 %v2834, %v2836
        %v2838 = vrot.slane %v2528, %v2837
        %v2839 = vcombine.high %v2838, %v2838
        %v2841 = vunpack.c.l.s4 1966171168
        %v2842 = vunpack.c.0.s8 %v2841
        %v2843 = vlaneseq
        %v2844 = vshrl.u32 %v2843, 7
        %v2845 = vsub.s32 %v2842, %v2844
        %v2846 = vrot.slane %v2838, %v2845
        %v2848 = vunpack.c.l.s4 1966171168
        %v2849 = vunpack.c.0.s8 %v2848
        %v2850 = vlaneseq
        %v2851 = vshrl.u32 %v2850, 7
        %v2852 = vsub.s32 %v2849, %v2851
        %v2853 = vrot.slane %v2839, %v2852
        %v2854 = vcombine.high %v2846, %v2846
        %v2855 = vcombine.high %v2853, %v2853
        %v2857 = vunpack.c.l.s4 1966171168
        %v2858 = vunpack.c.0.s8 %v2857
        %v2859 = vlaneseq
        %v2860 = vshrl.u32 %v2859, 7
        %v2861 = vsub.s32 %v2858, %v2860
        %v2862 = vrot.slane %v2529, %v2861
        %v2863 = vcombine.high %v2862, %v2862
        %v2865 = vunpack.c.l.s4 1966171168
        %v2866 = vunpack.c.0.s8 %v2865
        %v2867 = vlaneseq
        %v2868 = vshrl.u32 %v2867, 7
        %v2869 = vsub.s32 %v2866, %v2868
        %v2870 = vrot.slane %v2862, %v2869
        %v2872 = vunpack.c.l.s4 1966171168
        %v2873 = vunpack.c.0.s8 %v2872
        %v2874 = vlaneseq
        %v2875 = vshrl.u32 %v2874, 7
        %v2876 = vsub.s32 %v2873, %v2875
        %v2877 = vrot.slane %v2863, %v2876
        %v2879 = vunpack.c.l.s4 1966171168
        %v2880 = vunpack.c.0.s8 %v2879
        %v2881 = vlaneseq
        %v2882 = vshrl.u32 %v2881, 7
        %v2883 = vsub.s32 %v2880, %v2882
        %v2884 = vrot.slane %v2530, %v2883
        %v2885 = vcombine.high %v2884, %v2884
        %v2887 = vunpack.c.l.s4 1966171168
        %v2888 = vunpack.c.0.s8 %v2887
        %v2889 = vlaneseq
        %v2890 = vshrl.u32 %v2889, 7
        %v2891 = vsub.s32 %v2888, %v2890
        %v2892 = vrot.slane %v2884, %v2891
        %v2894 = vunpack.c.l.s4 1966171168
        %v2895 = vunpack.c.0.s8 %v2894
        %v2896 = vlaneseq
        %v2897 = vshrl.u32 %v2896, 7
        %v2898 = vsub.s32 %v2895, %v2897
        %v2899 = vrot.slane %v2885, %v2898
        %v2900 = vcombine.high %v2892, %v2892
        %v2901 = vcombine.high %v2899, %v2899
        %v2903 = vunpack.c.l.s4 1966171168
        %v2904 = vunpack.c.0.s8 %v2903
        %v2905 = vlaneseq
        %v2906 = vshrl.u32 %v2905, 7
        %v2907 = vsub.s32 %v2904, %v2906
        %v2908 = vrot.slane %v2531, %v2907
        %v2909 = vcombine.high %v2908, %v2908
        %v2911 = vunpack.c.l.s4 1966171168
        %v2912 = vunpack.c.0.s8 %v2911
        %v2913 = vlaneseq
        %v2914 = vshrl.u32 %v2913, 7
        %v2915 = vsub.s32 %v2912, %v2914
        %v2916 = vrot.slane %v2908, %v2915
        %v2918 = vunpack.c.l.s4 1966171168
        %v2919 = vunpack.c.0.s8 %v2918
        %v2920 = vlaneseq
        %v2921 = vshrl.u32 %v2920, 7
        %v2922 = vsub.s32 %v2919, %v2921
        %v2923 = vrot.slane %v2909, %v2922
        %v2925 = vunpack.c.l.s4 1966171168
        %v2926 = vunpack.c.0.s8 %v2925
        %v2927 = vlaneseq
        %v2928 = vshrl.u32 %v2927, 7
        %v2929 = vsub.s32 %v2926, %v2928
        %v2930 = vrot.slane %v2532, %v2929
        %v2931 = vcombine.high %v2930, %v2930
        %v2933 = vunpack.c.l.s4 1966171168
        %v2934 = vunpack.c.0.s8 %v2933
        %v2935 = vlaneseq
        %v2936 = vshrl.u32 %v2935, 7
        %v2937 = vsub.s32 %v2934, %v2936
        %v2938 = vrot.slane %v2930, %v2937
        %v2940 = vunpack.c.l.s4 1966171168
        %v2941 = vunpack.c.0.s8 %v2940
        %v2942 = vlaneseq
        %v2943 = vshrl.u32 %v2942, 7
        %v2944 = vsub.s32 %v2941, %v2943
        %v2945 = vrot.slane %v2931, %v2944
        %v2946 = vcombine.high %v2938, %v2938
        %v2947 = vcombine.high %v2945, %v2945
        %v2949 = vunpack.c.l.s4 1966171168
        %v2950 = vunpack.c.0.s8 %v2949
        %v2951 = vlaneseq
        %v2952 = vshrl.u32 %v2951, 7
        %v2953 = vsub.s32 %v2950, %v2952
        %v2954 = vrot.slane %v2533, %v2953
        %v2955 = vcombine.high %v2954, %v2954
        %v2957 = vunpack.c.l.s4 1966171168
        %v2958 = vunpack.c.0.s8 %v2957
        %v2959 = vlaneseq
        %v2960 = vshrl.u32 %v2959, 7
        %v2961 = vsub.s32 %v2958, %v2960
        %v2962 = vrot.slane %v2954, %v2961
        %v2964 = vunpack.c.l.s4 1966171168
        %v2965 = vunpack.c.0.s8 %v2964
        %v2966 = vlaneseq
        %v2967 = vshrl.u32 %v2966, 7
        %v2968 = vsub.s32 %v2965, %v2967
        %v2969 = vrot.slane %v2955, %v2968
        %v2971 = vunpack.c.l.s4 1966171168
        %v2972 = vunpack.c.0.s8 %v2971
        %v2973 = vlaneseq
        %v2974 = vshrl.u32 %v2973, 7
        %v2975 = vsub.s32 %v2972, %v2974
        %v2976 = vrot.slane %v2534, %v2975
        %v2977 = vcombine.high %v2976, %v2976
        %v2979 = vunpack.c.l.s4 1966171168
        %v2980 = vunpack.c.0.s8 %v2979
        %v2981 = vlaneseq
        %v2982 = vshrl.u32 %v2981, 7
        %v2983 = vsub.s32 %v2980, %v2982
        %v2984 = vrot.slane %v2976, %v2983
        %v2986 = vunpack.c.l.s4 1966171168
        %v2987 = vunpack.c.0.s8 %v2986
        %v2988 = vlaneseq
        %v2989 = vshrl.u32 %v2988, 7
        %v2990 = vsub.s32 %v2987, %v2989
        %v2991 = vrot.slane %v2977, %v2990
        %v2992 = vcombine.high %v2984, %v2984
        %v2993 = vcombine.high %v2991, %v2991
        %v2995 = vunpack.c.l.s4 1966171168
        %v2996 = vunpack.c.0.s8 %v2995
        %v2997 = vlaneseq
        %v2998 = vshrl.u32 %v2997, 7
        %v2999 = vsub.s32 %v2996, %v2998
        %v3000 = vrot.slane %v2535, %v2999
        %v3001 = vcombine.high %v3000, %v3000
        %v3003 = vunpack.c.l.s4 1966171168
        %v3004 = vunpack.c.0.s8 %v3003
        %v3005 = vlaneseq
        %v3006 = vshrl.u32 %v3005, 7
        %v3007 = vsub.s32 %v3004, %v3006
        %v3008 = vrot.slane %v3000, %v3007
        %v3010 = vunpack.c.l.s4 1966171168
        %v3011 = vunpack.c.0.s8 %v3010
        %v3012 = vlaneseq
        %v3013 = vshrl.u32 %v3012, 7
        %v3014 = vsub.s32 %v3011, %v3013
        %v3015 = vrot.slane %v3001, %v3014
        %v3016 = vcombine.low %v2577, %v2579
        %v3017 = vcombine.low %v2578, %v2594
        %v3019 = vunpack.c.l.s4 1935823168
        %v3020 = vunpack.c.0.s8 %v3019
        %v3021 = vlaneseq
        %v3022 = vshrl.u32 %v3021, 7
        %v3023 = vsub.s32 %v3020, %v3022
        %v3024 = vrot.slane %v3016, %v3023
        %v3026 = vunpack.c.l.s4 1935823168
        %v3027 = vunpack.c.0.s8 %v3026
        %v3028 = vlaneseq
        %v3029 = vshrl.u32 %v3028, 7
        %v3030 = vsub.s32 %v3027, %v3029
        %v3031 = vrot.slane %v3017, %v3030
        %v3032 = vcombine.low %v3024, %v3031
        %v3034 = vunpack.c.l.s4 1935823168
        %v3035 = vunpack.c.0.s8 %v3034
        %v3036 = vlaneseq
        %v3037 = vshrl.u32 %v3036, 7
        %v3038 = vsub.s32 %v3035, %v3037
        %v3039 = vrot.slane %v3032, %v3038
        %v3040 = vcombine.low %v2601, %v2624
        %v3041 = vcombine.low %v2623, %v2625
        %v3043 = vunpack.c.l.s4 1935823168
        %v3044 = vunpack.c.0.s8 %v3043
        %v3045 = vlaneseq
        %v3046 = vshrl.u32 %v3045, 7
        %v3047 = vsub.s32 %v3044, %v3046
        %v3048 = vrot.slane %v3040, %v3047
        %v3050 = vunpack.c.l.s4 1935823168
        %v3051 = vunpack.c.0.s8 %v3050
        %v3052 = vlaneseq
        %v3053 = vshrl.u32 %v3052, 7
        %v3054 = vsub.s32 %v3051, %v3053
        %v3055 = vrot.slane %v3041, %v3054
        %v3056 = vcombine.low %v3048, %v3055
        %v3058 = vunpack.c.l.s4 1935823168
        %v3059 = vunpack.c.0.s8 %v3058
        %v3060 = vlaneseq
        %v3061 = vshrl.u32 %v3060, 7
        %v3062 = vsub.s32 %v3059, %v3061
        %v3063 = vrot.slane %v3056, %v3062
        %v3064 = vcombine.low %v2640, %v2669
        %v3065 = vcombine.low %v2647, %v2670
        %v3067 = vunpack.c.l.s4 1935823168
        %v3068 = vunpack.c.0.s8 %v3067
        %v3069 = vlaneseq
        %v3070 = vshrl.u32 %v3069, 7
        %v3071 = vsub.s32 %v3068, %v3070
        %v3072 = vrot.slane %v3064, %v3071
        %v3074 = vunpack.c.l.s4 1935823168
        %v3075 = vunpack.c.0.s8 %v3074
        %v3076 = vlaneseq
        %v3077 = vshrl.u32 %v3076, 7
        %v3078 = vsub.s32 %v3075, %v3077
        %v3079 = vrot.slane %v3065, %v3078
        %v3080 = vcombine.low %v3072, %v3079
        %v3082 = vunpack.c.l.s4 1935823168
        %v3083 = vunpack.c.0.s8 %v3082
        %v3084 = vlaneseq
        %v3085 = vshrl.u32 %v3084, 7
        %v3086 = vsub.s32 %v3083, %v3085
        %v3087 = vrot.slane %v3080, %v3086
        %v3088 = vcombine.low %v2671, %v2693
        %v3089 = vcombine.low %v2686, %v2715
        %v3091 = vunpack.c.l.s4 1935823168
        %v3092 = vunpack.c.0.s8 %v3091
        %v3093 = vlaneseq
        %v3094 = vshrl.u32 %v3093, 7
        %v3095 = vsub.s32 %v3092, %v3094
        %v3096 = vrot.slane %v3088, %v3095
        %v3098 = vunpack.c.l.s4 1935823168
        %v3099 = vunpack.c.0.s8 %v3098
        %v3100 = vlaneseq
        %v3101 = vshrl.u32 %v3100, 7
        %v3102 = vsub.s32 %v3099, %v3101
        %v3103 = vrot.slane %v3089, %v3102
        %v3104 = vcombine.low %v3096, %v3103
        %v3106 = vunpack.c.l.s4 1935823168
        %v3107 = vunpack.c.0.s8 %v3106
        %v3108 = vlaneseq
        %v3109 = vshrl.u32 %v3108, 7
        %v3110 = vsub.s32 %v3107, %v3109
        %v3111 = vrot.slane %v3104, %v3110
        %v3112 = vcombine.low %v2716, %v2732
        %v3113 = vcombine.low %v2717, %v2739
        %v3115 = vunpack.c.l.s4 1935823168
        %v3116 = vunpack.c.0.s8 %v3115
        %v3117 = vlaneseq
        %v3118 = vshrl.u32 %v3117, 7
        %v3119 = vsub.s32 %v3116, %v3118
        %v3120 = vrot.slane %v3112, %v3119
        %v3122 = vunpack.c.l.s4 1935823168
        %v3123 = vunpack.c.0.s8 %v3122
        %v3124 = vlaneseq
        %v3125 = vshrl.u32 %v3124, 7
        %v3126 = vsub.s32 %v3123, %v3125
        %v3127 = vrot.slane %v3113, %v3126
        %v3128 = vcombine.low %v3120, %v3127
        %v3130 = vunpack.c.l.s4 1935823168
        %v3131 = vunpack.c.0.s8 %v3130
        %v3132 = vlaneseq
        %v3133 = vshrl.u32 %v3132, 7
        %v3134 = vsub.s32 %v3131, %v3133
        %v3135 = vrot.slane %v3128, %v3134
        %v3136 = vcombine.low %v2761, %v2763
        %v3137 = vcombine.low %v2762, %v2778
        %v3139 = vunpack.c.l.s4 1935823168
        %v3140 = vunpack.c.0.s8 %v3139
        %v3141 = vlaneseq
        %v3142 = vshrl.u32 %v3141, 7
        %v3143 = vsub.s32 %v3140, %v3142
        %v3144 = vrot.slane %v3136, %v3143
        %v3146 = vunpack.c.l.s4 1935823168
        %v3147 = vunpack.c.0.s8 %v3146
        %v3148 = vlaneseq
        %v3149 = vshrl.u32 %v3148, 7
        %v3150 = vsub.s32 %v3147, %v3149
        %v3151 = vrot.slane %v3137, %v3150
        %v3152 = vcombine.low %v3144, %v3151
        %v3154 = vunpack.c.l.s4 1935823168
        %v3155 = vunpack.c.0.s8 %v3154
        %v3156 = vlaneseq
        %v3157 = vshrl.u32 %v3156, 7
        %v3158 = vsub.s32 %v3155, %v3157
        %v3159 = vrot.slane %v3152, %v3158
        %v3160 = vcombine.low %v2785, %v2808
        %v3161 = vcombine.low %v2807, %v2809
        %v3163 = vunpack.c.l.s4 1935823168
        %v3164 = vunpack.c.0.s8 %v3163
        %v3165 = vlaneseq
        %v3166 = vshrl.u32 %v3165, 7
        %v3167 = vsub.s32 %v3164, %v3166
        %v3168 = vrot.slane %v3160, %v3167
        %v3170 = vunpack.c.l.s4 1935823168
        %v3171 = vunpack.c.0.s8 %v3170
        %v3172 = vlaneseq
        %v3173 = vshrl.u32 %v3172, 7
        %v3174 = vsub.s32 %v3171, %v3173
        %v3175 = vrot.slane %v3161, %v3174
        %v3176 = vcombine.low %v3168, %v3175
        %v3178 = vunpack.c.l.s4 1935823168
        %v3179 = vunpack.c.0.s8 %v3178
        %v3180 = vlaneseq
        %v3181 = vshrl.u32 %v3180, 7
        %v3182 = vsub.s32 %v3179, %v3181
        %v3183 = vrot.slane %v3176, %v3182
        %v3184 = vcombine.low %v2824, %v2853
        %v3185 = vcombine.low %v2831, %v2854
        %v3187 = vunpack.c.l.s4 1935823168
        %v3188 = vunpack.c.0.s8 %v3187
        %v3189 = vlaneseq
        %v3190 = vshrl.u32 %v3189, 7
        %v3191 = vsub.s32 %v3188, %v3190
        %v3192 = vrot.slane %v3184, %v3191
        %v3194 = vunpack.c.l.s4 1935823168
        %v3195 = vunpack.c.0.s8 %v3194
        %v3196 = vlaneseq
        %v3197 = vshrl.u32 %v3196, 7
        %v3198 = vsub.s32 %v3195, %v3197
        %v3199 = vrot.slane %v3185, %v3198
        %v3200 = vcombine.low %v3192, %v3199
        %v3202 = vunpack.c.l.s4 1935823168
        %v3203 = vunpack.c.0.s8 %v3202
        %v3204 = vlaneseq
        %v3205 = vshrl.u32 %v3204, 7
        %v3206 = vsub.s32 %v3203, %v3205
        %v3207 = vrot.slane %v3200, %v3206
        %v3208 = vcombine.low %v2855, %v2877
        %v3209 = vcombine.low %v2870, %v2899
        %v3211 = vunpack.c.l.s4 1935823168
        %v3212 = vunpack.c.0.s8 %v3211
        %v3213 = vlaneseq
        %v3214 = vshrl.u32 %v3213, 7
        %v3215 = vsub.s32 %v3212, %v3214
        %v3216 = vrot.slane %v3208, %v3215
        %v3218 = vunpack.c.l.s4 1935823168
        %v3219 = vunpack.c.0.s8 %v3218
        %v3220 = vlaneseq
        %v3221 = vshrl.u32 %v3220, 7
        %v3222 = vsub.s32 %v3219, %v3221
        %v3223 = vrot.slane %v3209, %v3222
        %v3224 = vcombine.low %v3216, %v3223
        %v3226 = vunpack.c.l.s4 1935823168
        %v3227 = vunpack.c.0.s8 %v3226
        %v3228 = vlaneseq
        %v3229 = vshrl.u32 %v3228, 7
        %v3230 = vsub.s32 %v3227, %v3229
        %v3231 = vrot.slane %v3224, %v3230
        %v3232 = vcombine.low %v2900, %v2916
        %v3233 = vcombine.low %v2901, %v2923
        %v3235 = vunpack.c.l.s4 1935823168
        %v3236 = vunpack.c.0.s8 %v3235
        %v3237 = vlaneseq
        %v3238 = vshrl.u32 %v3237, 7
        %v3239 = vsub.s32 %v3236, %v3238
        %v3240 = vrot.slane %v3232, %v3239
        %v3242 = vunpack.c.l.s4 1935823168
        %v3243 = vunpack.c.0.s8 %v3242
        %v3244 = vlaneseq
        %v3245 = vshrl.u32 %v3244, 7
        %v3246 = vsub.s32 %v3243, %v3245
        %v3247 = vrot.slane %v3233, %v3246
        %v3248 = vcombine.low %v3240, %v3247
        %v3250 = vunpack.c.l.s4 1935823168
        %v3251 = vunpack.c.0.s8 %v3250
        %v3252 = vlaneseq
        %v3253 = vshrl.u32 %v3252, 7
        %v3254 = vsub.s32 %v3251, %v3253
        %v3255 = vrot.slane %v3248, %v3254
        %v3256 = vcombine.low %v2945, %v2947
        %v3257 = vcombine.low %v2946, %v2962
        %v3259 = vunpack.c.l.s4 1935823168
        %v3260 = vunpack.c.0.s8 %v3259
        %v3261 = vlaneseq
        %v3262 = vshrl.u32 %v3261, 7
        %v3263 = vsub.s32 %v3260, %v3262
        %v3264 = vrot.slane %v3256, %v3263
        %v3266 = vunpack.c.l.s4 1935823168
        %v3267 = vunpack.c.0.s8 %v3266
        %v3268 = vlaneseq
        %v3269 = vshrl.u32 %v3268, 7
        %v3270 = vsub.s32 %v3267, %v3269
        %v3271 = vrot.slane %v3257, %v3270
        %v3272 = vcombine.low %v3264, %v3271
        %v3274 = vunpack.c.l.s4 1935823168
        %v3275 = vunpack.c.0.s8 %v3274
        %v3276 = vlaneseq
        %v3277 = vshrl.u32 %v3276, 7
        %v3278 = vsub.s32 %v3275, %v3277
        %v3279 = vrot.slane %v3272, %v3278
        %v3280 = vcombine.low %v2969, %v2992
        %v3281 = vcombine.low %v2991, %v2993
        %v3283 = vunpack.c.l.s4 1935823168
        %v3284 = vunpack.c.0.s8 %v3283
        %v3285 = vlaneseq
        %v3286 = vshrl.u32 %v3285, 7
        %v3287 = vsub.s32 %v3284, %v3286
        %v3288 = vrot.slane %v3280, %v3287
        %v3290 = vunpack.c.l.s4 1935823168
        %v3291 = vunpack.c.0.s8 %v3290
        %v3292 = vlaneseq
        %v3293 = vshrl.u32 %v3292, 7
        %v3294 = vsub.s32 %v3291, %v3293
        %v3295 = vrot.slane %v3281, %v3294
        %v3296 = vcombine.low %v3288, %v3295
        %v3298 = vunpack.c.l.s4 1935823168
        %v3299 = vunpack.c.0.s8 %v3298
        %v3300 = vlaneseq
        %v3301 = vshrl.u32 %v3300, 7
        %v3302 = vsub.s32 %v3299, %v3301
        %v3303 = vrot.slane %v3296, %v3302
        %v3305 = vunpack.c.l.s4 1935823168
        %v3306 = vunpack.c.0.s8 %v3305
        %v3307 = vlaneseq
        %v3308 = vshrl.u32 %v3307, 7
        %v3309 = vsub.s32 %v3306, %v3308
        %v3310 = vrot.slane %v3008, %v3309
        %v3312 = vunpack.c.l.s4 1935823168
        %v3313 = vunpack.c.0.s8 %v3312
        %v3314 = vlaneseq
        %v3315 = vshrl.u32 %v3314, 7
        %v3316 = vsub.s32 %v3313, %v3315
        %v3317 = vrot.slane %v3015, %v3316
        %v3318 = vcombine.low %v3310, %v3317
        %v3320 = vunpack.c.l.s4 1935823168
        %v3321 = vunpack.c.0.s8 %v3320
        %v3322 = vlaneseq
        %v3323 = vshrl.u32 %v3322, 7
        %v3324 = vsub.s32 %v3321, %v3323
        %v3325 = vrot.slane %v3318, %v3324
        %3339 = vst [vmem:[#allocation4 + $0x8] sm:$0xf] %v3039
        %3340 = vst [vmem:[#allocation4 + $0x2c] sm:$0xf] %v3063
        %3341 = vst [vmem:[#allocation4 + $0x50] sm:$0xf] %v3087
        %3342 = vst [vmem:[#allocation4 + $0x74] sm:$0xf] %v3111
        %3343 = vst [vmem:[#allocation4 + $0x98] sm:$0xf] %v3135
        %3344 = vst [vmem:[#allocation4 + $0xbc] sm:$0xf] %v3159
        %3345 = vst [vmem:[#allocation4 + $0xe0] sm:$0xf] %v3183
        %3346 = vst [vmem:[#allocation4 + $0x104] sm:$0xf] %v3207
        %3347 = vst [vmem:[#allocation4 + $0x128] sm:$0xf] %v3231
        %3348 = vst [vmem:[#allocation4 + $0x14c] sm:$0xf] %v3255
        %3349 = vst [vmem:[#allocation4 + $0x170] sm:$0xf] %v3279
        %3350 = vst [vmem:[#allocation4 + $0x194] sm:$0xf] %v3303
        %3351 = vst [vmem:[#allocation4 + $0x1b8] sm:$0x3] %v3325
        %s3352 = scalar_lea.vmem [#allocation2], 8
        %v3353 = vld [vmem:[%s3352] sm:$0xf]
        %v3354 = vld [vmem:[%s3352 + $0x4] sm:$0x1]
        %v3355 = vld [vmem:[%s3352 + $0x8] sm:$0xf]
        %v3356 = vld [vmem:[%s3352 + $0xc] sm:$0x1]
        %v3357 = vld [vmem:[%s3352 + $0x10] sm:$0xf]
        %v3358 = vld [vmem:[%s3352 + $0x14] sm:$0x1]
        %v3359 = vld [vmem:[%s3352 + $0x18] sm:$0xf]
        %v3360 = vld [vmem:[%s3352 + $0x1c] sm:$0x1]
        %v3361 = vld [vmem:[%s3352 + $0x20] sm:$0xf]
        %v3362 = vld [vmem:[%s3352 + $0x24] sm:$0x1]
        %v3363 = vld [vmem:[%s3352 + $0x28] sm:$0xf]
        %v3364 = vld [vmem:[%s3352 + $0x2c] sm:$0x1]
        %v3365 = vld [vmem:[%s3352 + $0x30] sm:$0xf]
        %v3366 = vld [vmem:[%s3352 + $0x34] sm:$0x1]
        %v3367 = vld [vmem:[%s3352 + $0x38] sm:$0xf]
        %v3368 = vld [vmem:[%s3352 + $0x3c] sm:$0x1]
        %v3369 = vld [vmem:[%s3352 + $0x40] sm:$0xf]
        %v3370 = vld [vmem:[%s3352 + $0x44] sm:$0x1]
        %v3371 = vld [vmem:[%s3352 + $0x48] sm:$0xf]
        %v3372 = vld [vmem:[%s3352 + $0x4c] sm:$0x1]
        %v3394 = vunpack.c.l.s4 1966171168
        %v3395 = vunpack.c.0.s8 %v3394
        %v3396 = vlaneseq
        %v3397 = vshrl.u32 %v3396, 7
        %v3398 = vsub.s32 %v3395, %v3397
        %v3399 = vrot.slane %v3353, %v3398
        %v3400 = vcombine.high %v3399, %v3399
        %v3402 = vunpack.c.l.s4 1966171168
        %v3403 = vunpack.c.0.s8 %v3402
        %v3404 = vlaneseq
        %v3405 = vshrl.u32 %v3404, 7
        %v3406 = vsub.s32 %v3403, %v3405
        %v3407 = vrot.slane %v3399, %v3406
        %v3409 = vunpack.c.l.s4 1966171168
        %v3410 = vunpack.c.0.s8 %v3409
        %v3411 = vlaneseq
        %v3412 = vshrl.u32 %v3411, 7
        %v3413 = vsub.s32 %v3410, %v3412
        %v3414 = vrot.slane %v3400, %v3413
        %v3415 = vcombine.high %v3407, %v3407
        %v3416 = vcombine.high %v3414, %v3414
        %v3418 = vunpack.c.l.s4 1966171168
        %v3419 = vunpack.c.0.s8 %v3418
        %v3420 = vlaneseq
        %v3421 = vshrl.u32 %v3420, 7
        %v3422 = vsub.s32 %v3419, %v3421
        %v3423 = vrot.slane %v3354, %v3422
        %v3425 = vunpack.c.l.s4 1966171168
        %v3426 = vunpack.c.0.s8 %v3425
        %v3427 = vlaneseq
        %v3428 = vshrl.u32 %v3427, 7
        %v3429 = vsub.s32 %v3426, %v3428
        %v3430 = vrot.slane %v3423, %v3429
        %v3432 = vunpack.c.l.s4 1966171168
        %v3433 = vunpack.c.0.s8 %v3432
        %v3434 = vlaneseq
        %v3435 = vshrl.u32 %v3434, 7
        %v3436 = vsub.s32 %v3433, %v3435
        %v3437 = vrot.slane %v3355, %v3436
        %v3438 = vcombine.high %v3437, %v3437
        %v3440 = vunpack.c.l.s4 1966171168
        %v3441 = vunpack.c.0.s8 %v3440
        %v3442 = vlaneseq
        %v3443 = vshrl.u32 %v3442, 7
        %v3444 = vsub.s32 %v3441, %v3443
        %v3445 = vrot.slane %v3437, %v3444
        %v3447 = vunpack.c.l.s4 1966171168
        %v3448 = vunpack.c.0.s8 %v3447
        %v3449 = vlaneseq
        %v3450 = vshrl.u32 %v3449, 7
        %v3451 = vsub.s32 %v3448, %v3450
        %v3452 = vrot.slane %v3438, %v3451
        %v3453 = vcombine.high %v3445, %v3445
        %v3454 = vcombine.high %v3452, %v3452
        %v3456 = vunpack.c.l.s4 1966171168
        %v3457 = vunpack.c.0.s8 %v3456
        %v3458 = vlaneseq
        %v3459 = vshrl.u32 %v3458, 7
        %v3460 = vsub.s32 %v3457, %v3459
        %v3461 = vrot.slane %v3356, %v3460
        %v3463 = vunpack.c.l.s4 1966171168
        %v3464 = vunpack.c.0.s8 %v3463
        %v3465 = vlaneseq
        %v3466 = vshrl.u32 %v3465, 7
        %v3467 = vsub.s32 %v3464, %v3466
        %v3468 = vrot.slane %v3461, %v3467
        %v3470 = vunpack.c.l.s4 1966171168
        %v3471 = vunpack.c.0.s8 %v3470
        %v3472 = vlaneseq
        %v3473 = vshrl.u32 %v3472, 7
        %v3474 = vsub.s32 %v3471, %v3473
        %v3475 = vrot.slane %v3357, %v3474
        %v3476 = vcombine.high %v3475, %v3475
        %v3478 = vunpack.c.l.s4 1966171168
        %v3479 = vunpack.c.0.s8 %v3478
        %v3480 = vlaneseq
        %v3481 = vshrl.u32 %v3480, 7
        %v3482 = vsub.s32 %v3479, %v3481
        %v3483 = vrot.slane %v3475, %v3482
        %v3485 = vunpack.c.l.s4 1966171168
        %v3486 = vunpack.c.0.s8 %v3485
        %v3487 = vlaneseq
        %v3488 = vshrl.u32 %v3487, 7
        %v3489 = vsub.s32 %v3486, %v3488
        %v3490 = vrot.slane %v3476, %v3489
        %v3491 = vcombine.high %v3483, %v3483
        %v3492 = vcombine.high %v3490, %v3490
        %v3494 = vunpack.c.l.s4 1966171168
        %v3495 = vunpack.c.0.s8 %v3494
        %v3496 = vlaneseq
        %v3497 = vshrl.u32 %v3496, 7
        %v3498 = vsub.s32 %v3495, %v3497
        %v3499 = vrot.slane %v3358, %v3498
        %v3501 = vunpack.c.l.s4 1966171168
        %v3502 = vunpack.c.0.s8 %v3501
        %v3503 = vlaneseq
        %v3504 = vshrl.u32 %v3503, 7
        %v3505 = vsub.s32 %v3502, %v3504
        %v3506 = vrot.slane %v3499, %v3505
        %v3508 = vunpack.c.l.s4 1966171168
        %v3509 = vunpack.c.0.s8 %v3508
        %v3510 = vlaneseq
        %v3511 = vshrl.u32 %v3510, 7
        %v3512 = vsub.s32 %v3509, %v3511
        %v3513 = vrot.slane %v3359, %v3512
        %v3514 = vcombine.high %v3513, %v3513
        %v3516 = vunpack.c.l.s4 1966171168
        %v3517 = vunpack.c.0.s8 %v3516
        %v3518 = vlaneseq
        %v3519 = vshrl.u32 %v3518, 7
        %v3520 = vsub.s32 %v3517, %v3519
        %v3521 = vrot.slane %v3513, %v3520
        %v3523 = vunpack.c.l.s4 1966171168
        %v3524 = vunpack.c.0.s8 %v3523
        %v3525 = vlaneseq
        %v3526 = vshrl.u32 %v3525, 7
        %v3527 = vsub.s32 %v3524, %v3526
        %v3528 = vrot.slane %v3514, %v3527
        %v3529 = vcombine.high %v3521, %v3521
        %v3530 = vcombine.high %v3528, %v3528
        %v3532 = vunpack.c.l.s4 1966171168
        %v3533 = vunpack.c.0.s8 %v3532
        %v3534 = vlaneseq
        %v3535 = vshrl.u32 %v3534, 7
        %v3536 = vsub.s32 %v3533, %v3535
        %v3537 = vrot.slane %v3360, %v3536
        %v3539 = vunpack.c.l.s4 1966171168
        %v3540 = vunpack.c.0.s8 %v3539
        %v3541 = vlaneseq
        %v3542 = vshrl.u32 %v3541, 7
        %v3543 = vsub.s32 %v3540, %v3542
        %v3544 = vrot.slane %v3537, %v3543
        %v3546 = vunpack.c.l.s4 1966171168
        %v3547 = vunpack.c.0.s8 %v3546
        %v3548 = vlaneseq
        %v3549 = vshrl.u32 %v3548, 7
        %v3550 = vsub.s32 %v3547, %v3549
        %v3551 = vrot.slane %v3361, %v3550
        %v3552 = vcombine.high %v3551, %v3551
        %v3554 = vunpack.c.l.s4 1966171168
        %v3555 = vunpack.c.0.s8 %v3554
        %v3556 = vlaneseq
        %v3557 = vshrl.u32 %v3556, 7
        %v3558 = vsub.s32 %v3555, %v3557
        %v3559 = vrot.slane %v3551, %v3558
        %v3561 = vunpack.c.l.s4 1966171168
        %v3562 = vunpack.c.0.s8 %v3561
        %v3563 = vlaneseq
        %v3564 = vshrl.u32 %v3563, 7
        %v3565 = vsub.s32 %v3562, %v3564
        %v3566 = vrot.slane %v3552, %v3565
        %v3567 = vcombine.high %v3559, %v3559
        %v3568 = vcombine.high %v3566, %v3566
        %v3570 = vunpack.c.l.s4 1966171168
        %v3571 = vunpack.c.0.s8 %v3570
        %v3572 = vlaneseq
        %v3573 = vshrl.u32 %v3572, 7
        %v3574 = vsub.s32 %v3571, %v3573
        %v3575 = vrot.slane %v3362, %v3574
        %v3577 = vunpack.c.l.s4 1966171168
        %v3578 = vunpack.c.0.s8 %v3577
        %v3579 = vlaneseq
        %v3580 = vshrl.u32 %v3579, 7
        %v3581 = vsub.s32 %v3578, %v3580
        %v3582 = vrot.slane %v3575, %v3581
        %v3584 = vunpack.c.l.s4 1966171168
        %v3585 = vunpack.c.0.s8 %v3584
        %v3586 = vlaneseq
        %v3587 = vshrl.u32 %v3586, 7
        %v3588 = vsub.s32 %v3585, %v3587
        %v3589 = vrot.slane %v3363, %v3588
        %v3590 = vcombine.high %v3589, %v3589
        %v3592 = vunpack.c.l.s4 1966171168
        %v3593 = vunpack.c.0.s8 %v3592
        %v3594 = vlaneseq
        %v3595 = vshrl.u32 %v3594, 7
        %v3596 = vsub.s32 %v3593, %v3595
        %v3597 = vrot.slane %v3589, %v3596
        %v3599 = vunpack.c.l.s4 1966171168
        %v3600 = vunpack.c.0.s8 %v3599
        %v3601 = vlaneseq
        %v3602 = vshrl.u32 %v3601, 7
        %v3603 = vsub.s32 %v3600, %v3602
        %v3604 = vrot.slane %v3590, %v3603
        %v3605 = vcombine.high %v3597, %v3597
        %v3606 = vcombine.high %v3604, %v3604
        %v3608 = vunpack.c.l.s4 1966171168
        %v3609 = vunpack.c.0.s8 %v3608
        %v3610 = vlaneseq
        %v3611 = vshrl.u32 %v3610, 7
        %v3612 = vsub.s32 %v3609, %v3611
        %v3613 = vrot.slane %v3364, %v3612
        %v3615 = vunpack.c.l.s4 1966171168
        %v3616 = vunpack.c.0.s8 %v3615
        %v3617 = vlaneseq
        %v3618 = vshrl.u32 %v3617, 7
        %v3619 = vsub.s32 %v3616, %v3618
        %v3620 = vrot.slane %v3613, %v3619
        %v3622 = vunpack.c.l.s4 1966171168
        %v3623 = vunpack.c.0.s8 %v3622
        %v3624 = vlaneseq
        %v3625 = vshrl.u32 %v3624, 7
        %v3626 = vsub.s32 %v3623, %v3625
        %v3627 = vrot.slane %v3365, %v3626
        %v3628 = vcombine.high %v3627, %v3627
        %v3630 = vunpack.c.l.s4 1966171168
        %v3631 = vunpack.c.0.s8 %v3630
        %v3632 = vlaneseq
        %v3633 = vshrl.u32 %v3632, 7
        %v3634 = vsub.s32 %v3631, %v3633
        %v3635 = vrot.slane %v3627, %v3634
        %v3637 = vunpack.c.l.s4 1966171168
        %v3638 = vunpack.c.0.s8 %v3637
        %v3639 = vlaneseq
        %v3640 = vshrl.u32 %v3639, 7
        %v3641 = vsub.s32 %v3638, %v3640
        %v3642 = vrot.slane %v3628, %v3641
        %v3643 = vcombine.high %v3635, %v3635
        %v3644 = vcombine.high %v3642, %v3642
        %v3646 = vunpack.c.l.s4 1966171168
        %v3647 = vunpack.c.0.s8 %v3646
        %v3648 = vlaneseq
        %v3649 = vshrl.u32 %v3648, 7
        %v3650 = vsub.s32 %v3647, %v3649
        %v3651 = vrot.slane %v3366, %v3650
        %v3653 = vunpack.c.l.s4 1966171168
        %v3654 = vunpack.c.0.s8 %v3653
        %v3655 = vlaneseq
        %v3656 = vshrl.u32 %v3655, 7
        %v3657 = vsub.s32 %v3654, %v3656
        %v3658 = vrot.slane %v3651, %v3657
        %v3660 = vunpack.c.l.s4 1966171168
        %v3661 = vunpack.c.0.s8 %v3660
        %v3662 = vlaneseq
        %v3663 = vshrl.u32 %v3662, 7
        %v3664 = vsub.s32 %v3661, %v3663
        %v3665 = vrot.slane %v3367, %v3664
        %v3666 = vcombine.high %v3665, %v3665
        %v3668 = vunpack.c.l.s4 1966171168
        %v3669 = vunpack.c.0.s8 %v3668
        %v3670 = vlaneseq
        %v3671 = vshrl.u32 %v3670, 7
        %v3672 = vsub.s32 %v3669, %v3671
        %v3673 = vrot.slane %v3665, %v3672
        %v3675 = vunpack.c.l.s4 1966171168
        %v3676 = vunpack.c.0.s8 %v3675
        %v3677 = vlaneseq
        %v3678 = vshrl.u32 %v3677, 7
        %v3679 = vsub.s32 %v3676, %v3678
        %v3680 = vrot.slane %v3666, %v3679
        %v3681 = vcombine.high %v3673, %v3673
        %v3682 = vcombine.high %v3680, %v3680
        %v3684 = vunpack.c.l.s4 1966171168
        %v3685 = vunpack.c.0.s8 %v3684
        %v3686 = vlaneseq
        %v3687 = vshrl.u32 %v3686, 7
        %v3688 = vsub.s32 %v3685, %v3687
        %v3689 = vrot.slane %v3368, %v3688
        %v3691 = vunpack.c.l.s4 1966171168
        %v3692 = vunpack.c.0.s8 %v3691
        %v3693 = vlaneseq
        %v3694 = vshrl.u32 %v3693, 7
        %v3695 = vsub.s32 %v3692, %v3694
        %v3696 = vrot.slane %v3689, %v3695
        %v3698 = vunpack.c.l.s4 1966171168
        %v3699 = vunpack.c.0.s8 %v3698
        %v3700 = vlaneseq
        %v3701 = vshrl.u32 %v3700, 7
        %v3702 = vsub.s32 %v3699, %v3701
        %v3703 = vrot.slane %v3369, %v3702
        %v3704 = vcombine.high %v3703, %v3703
        %v3706 = vunpack.c.l.s4 1966171168
        %v3707 = vunpack.c.0.s8 %v3706
        %v3708 = vlaneseq
        %v3709 = vshrl.u32 %v3708, 7
        %v3710 = vsub.s32 %v3707, %v3709
        %v3711 = vrot.slane %v3703, %v3710
        %v3713 = vunpack.c.l.s4 1966171168
        %v3714 = vunpack.c.0.s8 %v3713
        %v3715 = vlaneseq
        %v3716 = vshrl.u32 %v3715, 7
        %v3717 = vsub.s32 %v3714, %v3716
        %v3718 = vrot.slane %v3704, %v3717
        %v3719 = vcombine.high %v3711, %v3711
        %v3720 = vcombine.high %v3718, %v3718
        %v3722 = vunpack.c.l.s4 1966171168
        %v3723 = vunpack.c.0.s8 %v3722
        %v3724 = vlaneseq
        %v3725 = vshrl.u32 %v3724, 7
        %v3726 = vsub.s32 %v3723, %v3725
        %v3727 = vrot.slane %v3370, %v3726
        %v3729 = vunpack.c.l.s4 1966171168
        %v3730 = vunpack.c.0.s8 %v3729
        %v3731 = vlaneseq
        %v3732 = vshrl.u32 %v3731, 7
        %v3733 = vsub.s32 %v3730, %v3732
        %v3734 = vrot.slane %v3727, %v3733
        %v3736 = vunpack.c.l.s4 1966171168
        %v3737 = vunpack.c.0.s8 %v3736
        %v3738 = vlaneseq
        %v3739 = vshrl.u32 %v3738, 7
        %v3740 = vsub.s32 %v3737, %v3739
        %v3741 = vrot.slane %v3371, %v3740
        %v3742 = vcombine.high %v3741, %v3741
        %v3744 = vunpack.c.l.s4 1966171168
        %v3745 = vunpack.c.0.s8 %v3744
        %v3746 = vlaneseq
        %v3747 = vshrl.u32 %v3746, 7
        %v3748 = vsub.s32 %v3745, %v3747
        %v3749 = vrot.slane %v3741, %v3748
        %v3751 = vunpack.c.l.s4 1966171168
        %v3752 = vunpack.c.0.s8 %v3751
        %v3753 = vlaneseq
        %v3754 = vshrl.u32 %v3753, 7
        %v3755 = vsub.s32 %v3752, %v3754
        %v3756 = vrot.slane %v3742, %v3755
        %v3757 = vcombine.high %v3749, %v3749
        %v3758 = vcombine.high %v3756, %v3756
        %v3760 = vunpack.c.l.s4 1966171168
        %v3761 = vunpack.c.0.s8 %v3760
        %v3762 = vlaneseq
        %v3763 = vshrl.u32 %v3762, 7
        %v3764 = vsub.s32 %v3761, %v3763
        %v3765 = vrot.slane %v3372, %v3764
        %v3767 = vunpack.c.l.s4 1966171168
        %v3768 = vunpack.c.0.s8 %v3767
        %v3769 = vlaneseq
        %v3770 = vshrl.u32 %v3769, 7
        %v3771 = vsub.s32 %v3768, %v3770
        %v3772 = vrot.slane %v3765, %v3771
        %v3773 = vcombine.low %v3407, %v3415
        %v3774 = vcombine.low %v3414, %v3416
        %v3776 = vunpack.c.l.s4 1935823168
        %v3777 = vunpack.c.0.s8 %v3776
        %v3778 = vlaneseq
        %v3779 = vshrl.u32 %v3778, 7
        %v3780 = vsub.s32 %v3777, %v3779
        %v3781 = vrot.slane %v3773, %v3780
        %v3783 = vunpack.c.l.s4 1935823168
        %v3784 = vunpack.c.0.s8 %v3783
        %v3785 = vlaneseq
        %v3786 = vshrl.u32 %v3785, 7
        %v3787 = vsub.s32 %v3784, %v3786
        %v3788 = vrot.slane %v3774, %v3787
        %v3789 = vcombine.low %v3781, %v3788
        %v3791 = vunpack.c.l.s4 1935823168
        %v3792 = vunpack.c.0.s8 %v3791
        %v3793 = vlaneseq
        %v3794 = vshrl.u32 %v3793, 7
        %v3795 = vsub.s32 %v3792, %v3794
        %v3796 = vrot.slane %v3789, %v3795
        %v3797 = vcombine.low %v3430, %v3452
        %v3798 = vcombine.low %v3445, %v3453
        %v3800 = vunpack.c.l.s4 1935823168
        %v3801 = vunpack.c.0.s8 %v3800
        %v3802 = vlaneseq
        %v3803 = vshrl.u32 %v3802, 7
        %v3804 = vsub.s32 %v3801, %v3803
        %v3805 = vrot.slane %v3797, %v3804
        %v3807 = vunpack.c.l.s4 1935823168
        %v3808 = vunpack.c.0.s8 %v3807
        %v3809 = vlaneseq
        %v3810 = vshrl.u32 %v3809, 7
        %v3811 = vsub.s32 %v3808, %v3810
        %v3812 = vrot.slane %v3798, %v3811
        %v3813 = vcombine.low %v3805, %v3812
        %v3815 = vunpack.c.l.s4 1935823168
        %v3816 = vunpack.c.0.s8 %v3815
        %v3817 = vlaneseq
        %v3818 = vshrl.u32 %v3817, 7
        %v3819 = vsub.s32 %v3816, %v3818
        %v3820 = vrot.slane %v3813, %v3819
        %v3821 = vcombine.low %v3454, %v3483
        %v3822 = vcombine.low %v3468, %v3490
        %v3824 = vunpack.c.l.s4 1935823168
        %v3825 = vunpack.c.0.s8 %v3824
        %v3826 = vlaneseq
        %v3827 = vshrl.u32 %v3826, 7
        %v3828 = vsub.s32 %v3825, %v3827
        %v3829 = vrot.slane %v3821, %v3828
        %v3831 = vunpack.c.l.s4 1935823168
        %v3832 = vunpack.c.0.s8 %v3831
        %v3833 = vlaneseq
        %v3834 = vshrl.u32 %v3833, 7
        %v3835 = vsub.s32 %v3832, %v3834
        %v3836 = vrot.slane %v3822, %v3835
        %v3837 = vcombine.low %v3829, %v3836
        %v3839 = vunpack.c.l.s4 1935823168
        %v3840 = vunpack.c.0.s8 %v3839
        %v3841 = vlaneseq
        %v3842 = vshrl.u32 %v3841, 7
        %v3843 = vsub.s32 %v3840, %v3842
        %v3844 = vrot.slane %v3837, %v3843
        %v3845 = vcombine.low %v3491, %v3506
        %v3846 = vcombine.low %v3492, %v3521
        %v3848 = vunpack.c.l.s4 1935823168
        %v3849 = vunpack.c.0.s8 %v3848
        %v3850 = vlaneseq
        %v3851 = vshrl.u32 %v3850, 7
        %v3852 = vsub.s32 %v3849, %v3851
        %v3853 = vrot.slane %v3845, %v3852
        %v3855 = vunpack.c.l.s4 1935823168
        %v3856 = vunpack.c.0.s8 %v3855
        %v3857 = vlaneseq
        %v3858 = vshrl.u32 %v3857, 7
        %v3859 = vsub.s32 %v3856, %v3858
        %v3860 = vrot.slane %v3846, %v3859
        %v3861 = vcombine.low %v3853, %v3860
        %v3863 = vunpack.c.l.s4 1935823168
        %v3864 = vunpack.c.0.s8 %v3863
        %v3865 = vlaneseq
        %v3866 = vshrl.u32 %v3865, 7
        %v3867 = vsub.s32 %v3864, %v3866
        %v3868 = vrot.slane %v3861, %v3867
        %v3869 = vcombine.low %v3528, %v3530
        %v3870 = vcombine.low %v3529, %v3544
        %v3872 = vunpack.c.l.s4 1935823168
        %v3873 = vunpack.c.0.s8 %v3872
        %v3874 = vlaneseq
        %v3875 = vshrl.u32 %v3874, 7
        %v3876 = vsub.s32 %v3873, %v3875
        %v3877 = vrot.slane %v3869, %v3876
        %v3879 = vunpack.c.l.s4 1935823168
        %v3880 = vunpack.c.0.s8 %v3879
        %v3881 = vlaneseq
        %v3882 = vshrl.u32 %v3881, 7
        %v3883 = vsub.s32 %v3880, %v3882
        %v3884 = vrot.slane %v3870, %v3883
        %v3885 = vcombine.low %v3877, %v3884
        %v3887 = vunpack.c.l.s4 1935823168
        %v3888 = vunpack.c.0.s8 %v3887
        %v3889 = vlaneseq
        %v3890 = vshrl.u32 %v3889, 7
        %v3891 = vsub.s32 %v3888, %v3890
        %v3892 = vrot.slane %v3885, %v3891
        %v3893 = vcombine.low %v3559, %v3567
        %v3894 = vcombine.low %v3566, %v3568
        %v3896 = vunpack.c.l.s4 1935823168
        %v3897 = vunpack.c.0.s8 %v3896
        %v3898 = vlaneseq
        %v3899 = vshrl.u32 %v3898, 7
        %v3900 = vsub.s32 %v3897, %v3899
        %v3901 = vrot.slane %v3893, %v3900
        %v3903 = vunpack.c.l.s4 1935823168
        %v3904 = vunpack.c.0.s8 %v3903
        %v3905 = vlaneseq
        %v3906 = vshrl.u32 %v3905, 7
        %v3907 = vsub.s32 %v3904, %v3906
        %v3908 = vrot.slane %v3894, %v3907
        %v3909 = vcombine.low %v3901, %v3908
        %v3911 = vunpack.c.l.s4 1935823168
        %v3912 = vunpack.c.0.s8 %v3911
        %v3913 = vlaneseq
        %v3914 = vshrl.u32 %v3913, 7
        %v3915 = vsub.s32 %v3912, %v3914
        %v3916 = vrot.slane %v3909, %v3915
        %v3917 = vcombine.low %v3582, %v3604
        %v3918 = vcombine.low %v3597, %v3605
        %v3920 = vunpack.c.l.s4 1935823168
        %v3921 = vunpack.c.0.s8 %v3920
        %v3922 = vlaneseq
        %v3923 = vshrl.u32 %v3922, 7
        %v3924 = vsub.s32 %v3921, %v3923
        %v3925 = vrot.slane %v3917, %v3924
        %v3927 = vunpack.c.l.s4 1935823168
        %v3928 = vunpack.c.0.s8 %v3927
        %v3929 = vlaneseq
        %v3930 = vshrl.u32 %v3929, 7
        %v3931 = vsub.s32 %v3928, %v3930
        %v3932 = vrot.slane %v3918, %v3931
        %v3933 = vcombine.low %v3925, %v3932
        %v3935 = vunpack.c.l.s4 1935823168
        %v3936 = vunpack.c.0.s8 %v3935
        %v3937 = vlaneseq
        %v3938 = vshrl.u32 %v3937, 7
        %v3939 = vsub.s32 %v3936, %v3938
        %v3940 = vrot.slane %v3933, %v3939
        %v3941 = vcombine.low %v3606, %v3635
        %v3942 = vcombine.low %v3620, %v3642
        %v3944 = vunpack.c.l.s4 1935823168
        %v3945 = vunpack.c.0.s8 %v3944
        %v3946 = vlaneseq
        %v3947 = vshrl.u32 %v3946, 7
        %v3948 = vsub.s32 %v3945, %v3947
        %v3949 = vrot.slane %v3941, %v3948
        %v3951 = vunpack.c.l.s4 1935823168
        %v3952 = vunpack.c.0.s8 %v3951
        %v3953 = vlaneseq
        %v3954 = vshrl.u32 %v3953, 7
        %v3955 = vsub.s32 %v3952, %v3954
        %v3956 = vrot.slane %v3942, %v3955
        %v3957 = vcombine.low %v3949, %v3956
        %v3959 = vunpack.c.l.s4 1935823168
        %v3960 = vunpack.c.0.s8 %v3959
        %v3961 = vlaneseq
        %v3962 = vshrl.u32 %v3961, 7
        %v3963 = vsub.s32 %v3960, %v3962
        %v3964 = vrot.slane %v3957, %v3963
        %v3965 = vcombine.low %v3643, %v3658
        %v3966 = vcombine.low %v3644, %v3673
        %v3968 = vunpack.c.l.s4 1935823168
        %v3969 = vunpack.c.0.s8 %v3968
        %v3970 = vlaneseq
        %v3971 = vshrl.u32 %v3970, 7
        %v3972 = vsub.s32 %v3969, %v3971
        %v3973 = vrot.slane %v3965, %v3972
        %v3975 = vunpack.c.l.s4 1935823168
        %v3976 = vunpack.c.0.s8 %v3975
        %v3977 = vlaneseq
        %v3978 = vshrl.u32 %v3977, 7
        %v3979 = vsub.s32 %v3976, %v3978
        %v3980 = vrot.slane %v3966, %v3979
        %v3981 = vcombine.low %v3973, %v3980
        %v3983 = vunpack.c.l.s4 1935823168
        %v3984 = vunpack.c.0.s8 %v3983
        %v3985 = vlaneseq
        %v3986 = vshrl.u32 %v3985, 7
        %v3987 = vsub.s32 %v3984, %v3986
        %v3988 = vrot.slane %v3981, %v3987
        %v3989 = vcombine.low %v3680, %v3682
        %v3990 = vcombine.low %v3681, %v3696
        %v3992 = vunpack.c.l.s4 1935823168
        %v3993 = vunpack.c.0.s8 %v3992
        %v3994 = vlaneseq
        %v3995 = vshrl.u32 %v3994, 7
        %v3996 = vsub.s32 %v3993, %v3995
        %v3997 = vrot.slane %v3989, %v3996
        %v3999 = vunpack.c.l.s4 1935823168
        %v4000 = vunpack.c.0.s8 %v3999
        %v4001 = vlaneseq
        %v4002 = vshrl.u32 %v4001, 7
        %v4003 = vsub.s32 %v4000, %v4002
        %v4004 = vrot.slane %v3990, %v4003
        %v4005 = vcombine.low %v3997, %v4004
        %v4007 = vunpack.c.l.s4 1935823168
        %v4008 = vunpack.c.0.s8 %v4007
        %v4009 = vlaneseq
        %v4010 = vshrl.u32 %v4009, 7
        %v4011 = vsub.s32 %v4008, %v4010
        %v4012 = vrot.slane %v4005, %v4011
        %v4013 = vcombine.low %v3711, %v3719
        %v4014 = vcombine.low %v3718, %v3720
        %v4016 = vunpack.c.l.s4 1935823168
        %v4017 = vunpack.c.0.s8 %v4016
        %v4018 = vlaneseq
        %v4019 = vshrl.u32 %v4018, 7
        %v4020 = vsub.s32 %v4017, %v4019
        %v4021 = vrot.slane %v4013, %v4020
        %v4023 = vunpack.c.l.s4 1935823168
        %v4024 = vunpack.c.0.s8 %v4023
        %v4025 = vlaneseq
        %v4026 = vshrl.u32 %v4025, 7
        %v4027 = vsub.s32 %v4024, %v4026
        %v4028 = vrot.slane %v4014, %v4027
        %v4029 = vcombine.low %v4021, %v4028
        %v4031 = vunpack.c.l.s4 1935823168
        %v4032 = vunpack.c.0.s8 %v4031
        %v4033 = vlaneseq
        %v4034 = vshrl.u32 %v4033, 7
        %v4035 = vsub.s32 %v4032, %v4034
        %v4036 = vrot.slane %v4029, %v4035
        %v4037 = vcombine.low %v3734, %v3756
        %v4038 = vcombine.low %v3749, %v3757
        %v4040 = vunpack.c.l.s4 1935823168
        %v4041 = vunpack.c.0.s8 %v4040
        %v4042 = vlaneseq
        %v4043 = vshrl.u32 %v4042, 7
        %v4044 = vsub.s32 %v4041, %v4043
        %v4045 = vrot.slane %v4037, %v4044
        %v4047 = vunpack.c.l.s4 1935823168
        %v4048 = vunpack.c.0.s8 %v4047
        %v4049 = vlaneseq
        %v4050 = vshrl.u32 %v4049, 7
        %v4051 = vsub.s32 %v4048, %v4050
        %v4052 = vrot.slane %v4038, %v4051
        %v4053 = vcombine.low %v4045, %v4052
        %v4055 = vunpack.c.l.s4 1935823168
        %v4056 = vunpack.c.0.s8 %v4055
        %v4057 = vlaneseq
        %v4058 = vshrl.u32 %v4057, 7
        %v4059 = vsub.s32 %v4056, %v4058
        %v4060 = vrot.slane %v4053, %v4059
        %v4062 = vunpack.c.l.s4 1935823168
        %v4063 = vunpack.c.0.s8 %v4062
        %v4064 = vlaneseq
        %v4065 = vshrl.u32 %v4064, 7
        %v4066 = vsub.s32 %v4063, %v4065
        %v4067 = vrot.slane %v3758, %v4066
        %v4069 = vunpack.c.l.s4 1935823168
        %v4070 = vunpack.c.0.s8 %v4069
        %v4071 = vlaneseq
        %v4072 = vshrl.u32 %v4071, 7
        %v4073 = vsub.s32 %v4070, %v4072
        %v4074 = vrot.slane %v3772, %v4073
        %v4075 = vcombine.low %v4067, %v4074
        %v4077 = vunpack.c.l.s4 1935823168
        %v4078 = vunpack.c.0.s8 %v4077
        %v4079 = vlaneseq
        %v4080 = vshrl.u32 %v4079, 7
        %v4081 = vsub.s32 %v4078, %v4080
        %v4082 = vrot.slane %v4075, %v4081
        %4096 = vst [vmem:[#allocation4 + $0xc] sm:$0xf] %v3796
        %4097 = vst [vmem:[#allocation4 + $0x30] sm:$0xf] %v3820
        %4098 = vst [vmem:[#allocation4 + $0x54] sm:$0xf] %v3844
        %4099 = vst [vmem:[#allocation4 + $0x78] sm:$0xf] %v3868
        %4100 = vst [vmem:[#allocation4 + $0x9c] sm:$0xf] %v3892
        %4101 = vst [vmem:[#allocation4 + $0xc0] sm:$0xf] %v3916
        %4102 = vst [vmem:[#allocation4 + $0xe4] sm:$0xf] %v3940
        %4103 = vst [vmem:[#allocation4 + $0x108] sm:$0xf] %v3964
        %4104 = vst [vmem:[#allocation4 + $0x12c] sm:$0xf] %v3988
        %4105 = vst [vmem:[#allocation4 + $0x150] sm:$0xf] %v4012
        %4106 = vst [vmem:[#allocation4 + $0x174] sm:$0xf] %v4036
        %4107 = vst [vmem:[#allocation4 + $0x198] sm:$0xf] %v4060
        %4108 = vst [vmem:[#allocation4 + $0x1bc] sm:$0x3] %v4082
        %v4109 = vld [vmem:[%s3352] sm:$0xf]
        %v4110 = vld [vmem:[%s3352 + $0x4] sm:$0x3]
        %v4111 = vld [vmem:[%s3352 + $0x8] sm:$0xf]
        %v4112 = vld [vmem:[%s3352 + $0xc] sm:$0x3]
        %v4113 = vld [vmem:[%s3352 + $0x10] sm:$0xf]
        %v4114 = vld [vmem:[%s3352 + $0x14] sm:$0x3]
        %v4115 = vld [vmem:[%s3352 + $0x18] sm:$0xf]
        %v4116 = vld [vmem:[%s3352 + $0x1c] sm:$0x3]
        %v4117 = vld [vmem:[%s3352 + $0x20] sm:$0xf]
        %v4118 = vld [vmem:[%s3352 + $0x24] sm:$0x3]
        %v4119 = vld [vmem:[%s3352 + $0x28] sm:$0xf]
        %v4120 = vld [vmem:[%s3352 + $0x2c] sm:$0x3]
        %v4121 = vld [vmem:[%s3352 + $0x30] sm:$0xf]
        %v4122 = vld [vmem:[%s3352 + $0x34] sm:$0x3]
        %v4123 = vld [vmem:[%s3352 + $0x38] sm:$0xf]
        %v4124 = vld [vmem:[%s3352 + $0x3c] sm:$0x3]
        %v4125 = vld [vmem:[%s3352 + $0x40] sm:$0xf]
        %v4126 = vld [vmem:[%s3352 + $0x44] sm:$0x3]
        %v4127 = vld [vmem:[%s3352 + $0x48] sm:$0xf]
        %v4128 = vld [vmem:[%s3352 + $0x4c] sm:$0x3]
        %v4150 = vunpack.c.l.s4 1966171168
        %v4151 = vunpack.c.0.s8 %v4150
        %v4152 = vlaneseq
        %v4153 = vshrl.u32 %v4152, 7
        %v4154 = vsub.s32 %v4151, %v4153
        %v4155 = vrot.slane %v4109, %v4154
        %v4156 = vcombine.high %v4155, %v4155
        %v4158 = vunpack.c.l.s4 1966171168
        %v4159 = vunpack.c.0.s8 %v4158
        %v4160 = vlaneseq
        %v4161 = vshrl.u32 %v4160, 7
        %v4162 = vsub.s32 %v4159, %v4161
        %v4163 = vrot.slane %v4155, %v4162
        %v4165 = vunpack.c.l.s4 1966171168
        %v4166 = vunpack.c.0.s8 %v4165
        %v4167 = vlaneseq
        %v4168 = vshrl.u32 %v4167, 7
        %v4169 = vsub.s32 %v4166, %v4168
        %v4170 = vrot.slane %v4156, %v4169
        %v4171 = vcombine.high %v4163, %v4163
        %v4172 = vcombine.high %v4170, %v4170
        %v4174 = vunpack.c.l.s4 1966171168
        %v4175 = vunpack.c.0.s8 %v4174
        %v4176 = vlaneseq
        %v4177 = vshrl.u32 %v4176, 7
        %v4178 = vsub.s32 %v4175, %v4177
        %v4179 = vrot.slane %v4110, %v4178
        %v4180 = vcombine.high %v4179, %v4179
        %v4182 = vunpack.c.l.s4 1966171168
        %v4183 = vunpack.c.0.s8 %v4182
        %v4184 = vlaneseq
        %v4185 = vshrl.u32 %v4184, 7
        %v4186 = vsub.s32 %v4183, %v4185
        %v4187 = vrot.slane %v4179, %v4186
        %v4189 = vunpack.c.l.s4 1966171168
        %v4190 = vunpack.c.0.s8 %v4189
        %v4191 = vlaneseq
        %v4192 = vshrl.u32 %v4191, 7
        %v4193 = vsub.s32 %v4190, %v4192
        %v4194 = vrot.slane %v4180, %v4193
        %v4196 = vunpack.c.l.s4 1966171168
        %v4197 = vunpack.c.0.s8 %v4196
        %v4198 = vlaneseq
        %v4199 = vshrl.u32 %v4198, 7
        %v4200 = vsub.s32 %v4197, %v4199
        %v4201 = vrot.slane %v4111, %v4200
        %v4202 = vcombine.high %v4201, %v4201
        %v4204 = vunpack.c.l.s4 1966171168
        %v4205 = vunpack.c.0.s8 %v4204
        %v4206 = vlaneseq
        %v4207 = vshrl.u32 %v4206, 7
        %v4208 = vsub.s32 %v4205, %v4207
        %v4209 = vrot.slane %v4201, %v4208
        %v4211 = vunpack.c.l.s4 1966171168
        %v4212 = vunpack.c.0.s8 %v4211
        %v4213 = vlaneseq
        %v4214 = vshrl.u32 %v4213, 7
        %v4215 = vsub.s32 %v4212, %v4214
        %v4216 = vrot.slane %v4202, %v4215
        %v4217 = vcombine.high %v4209, %v4209
        %v4218 = vcombine.high %v4216, %v4216
        %v4220 = vunpack.c.l.s4 1966171168
        %v4221 = vunpack.c.0.s8 %v4220
        %v4222 = vlaneseq
        %v4223 = vshrl.u32 %v4222, 7
        %v4224 = vsub.s32 %v4221, %v4223
        %v4225 = vrot.slane %v4112, %v4224
        %v4226 = vcombine.high %v4225, %v4225
        %v4228 = vunpack.c.l.s4 1966171168
        %v4229 = vunpack.c.0.s8 %v4228
        %v4230 = vlaneseq
        %v4231 = vshrl.u32 %v4230, 7
        %v4232 = vsub.s32 %v4229, %v4231
        %v4233 = vrot.slane %v4225, %v4232
        %v4235 = vunpack.c.l.s4 1966171168
        %v4236 = vunpack.c.0.s8 %v4235
        %v4237 = vlaneseq
        %v4238 = vshrl.u32 %v4237, 7
        %v4239 = vsub.s32 %v4236, %v4238
        %v4240 = vrot.slane %v4226, %v4239
        %v4242 = vunpack.c.l.s4 1966171168
        %v4243 = vunpack.c.0.s8 %v4242
        %v4244 = vlaneseq
        %v4245 = vshrl.u32 %v4244, 7
        %v4246 = vsub.s32 %v4243, %v4245
        %v4247 = vrot.slane %v4113, %v4246
        %v4248 = vcombine.high %v4247, %v4247
        %v4250 = vunpack.c.l.s4 1966171168
        %v4251 = vunpack.c.0.s8 %v4250
        %v4252 = vlaneseq
        %v4253 = vshrl.u32 %v4252, 7
        %v4254 = vsub.s32 %v4251, %v4253
        %v4255 = vrot.slane %v4247, %v4254
        %v4257 = vunpack.c.l.s4 1966171168
        %v4258 = vunpack.c.0.s8 %v4257
        %v4259 = vlaneseq
        %v4260 = vshrl.u32 %v4259, 7
        %v4261 = vsub.s32 %v4258, %v4260
        %v4262 = vrot.slane %v4248, %v4261
        %v4263 = vcombine.high %v4255, %v4255
        %v4264 = vcombine.high %v4262, %v4262
        %v4266 = vunpack.c.l.s4 1966171168
        %v4267 = vunpack.c.0.s8 %v4266
        %v4268 = vlaneseq
        %v4269 = vshrl.u32 %v4268, 7
        %v4270 = vsub.s32 %v4267, %v4269
        %v4271 = vrot.slane %v4114, %v4270
        %v4272 = vcombine.high %v4271, %v4271
        %v4274 = vunpack.c.l.s4 1966171168
        %v4275 = vunpack.c.0.s8 %v4274
        %v4276 = vlaneseq
        %v4277 = vshrl.u32 %v4276, 7
        %v4278 = vsub.s32 %v4275, %v4277
        %v4279 = vrot.slane %v4271, %v4278
        %v4281 = vunpack.c.l.s4 1966171168
        %v4282 = vunpack.c.0.s8 %v4281
        %v4283 = vlaneseq
        %v4284 = vshrl.u32 %v4283, 7
        %v4285 = vsub.s32 %v4282, %v4284
        %v4286 = vrot.slane %v4272, %v4285
        %v4288 = vunpack.c.l.s4 1966171168
        %v4289 = vunpack.c.0.s8 %v4288
        %v4290 = vlaneseq
        %v4291 = vshrl.u32 %v4290, 7
        %v4292 = vsub.s32 %v4289, %v4291
        %v4293 = vrot.slane %v4115, %v4292
        %v4294 = vcombine.high %v4293, %v4293
        %v4296 = vunpack.c.l.s4 1966171168
        %v4297 = vunpack.c.0.s8 %v4296
        %v4298 = vlaneseq
        %v4299 = vshrl.u32 %v4298, 7
        %v4300 = vsub.s32 %v4297, %v4299
        %v4301 = vrot.slane %v4293, %v4300
        %v4303 = vunpack.c.l.s4 1966171168
        %v4304 = vunpack.c.0.s8 %v4303
        %v4305 = vlaneseq
        %v4306 = vshrl.u32 %v4305, 7
        %v4307 = vsub.s32 %v4304, %v4306
        %v4308 = vrot.slane %v4294, %v4307
        %v4309 = vcombine.high %v4301, %v4301
        %v4310 = vcombine.high %v4308, %v4308
        %v4312 = vunpack.c.l.s4 1966171168
        %v4313 = vunpack.c.0.s8 %v4312
        %v4314 = vlaneseq
        %v4315 = vshrl.u32 %v4314, 7
        %v4316 = vsub.s32 %v4313, %v4315
        %v4317 = vrot.slane %v4116, %v4316
        %v4318 = vcombine.high %v4317, %v4317
        %v4320 = vunpack.c.l.s4 1966171168
        %v4321 = vunpack.c.0.s8 %v4320
        %v4322 = vlaneseq
        %v4323 = vshrl.u32 %v4322, 7
        %v4324 = vsub.s32 %v4321, %v4323
        %v4325 = vrot.slane %v4317, %v4324
        %v4327 = vunpack.c.l.s4 1966171168
        %v4328 = vunpack.c.0.s8 %v4327
        %v4329 = vlaneseq
        %v4330 = vshrl.u32 %v4329, 7
        %v4331 = vsub.s32 %v4328, %v4330
        %v4332 = vrot.slane %v4318, %v4331
        %v4334 = vunpack.c.l.s4 1966171168
        %v4335 = vunpack.c.0.s8 %v4334
        %v4336 = vlaneseq
        %v4337 = vshrl.u32 %v4336, 7
        %v4338 = vsub.s32 %v4335, %v4337
        %v4339 = vrot.slane %v4117, %v4338
        %v4340 = vcombine.high %v4339, %v4339
        %v4342 = vunpack.c.l.s4 1966171168
        %v4343 = vunpack.c.0.s8 %v4342
        %v4344 = vlaneseq
        %v4345 = vshrl.u32 %v4344, 7
        %v4346 = vsub.s32 %v4343, %v4345
        %v4347 = vrot.slane %v4339, %v4346
        %v4349 = vunpack.c.l.s4 1966171168
        %v4350 = vunpack.c.0.s8 %v4349
        %v4351 = vlaneseq
        %v4352 = vshrl.u32 %v4351, 7
        %v4353 = vsub.s32 %v4350, %v4352
        %v4354 = vrot.slane %v4340, %v4353
        %v4355 = vcombine.high %v4347, %v4347
        %v4356 = vcombine.high %v4354, %v4354
        %v4358 = vunpack.c.l.s4 1966171168
        %v4359 = vunpack.c.0.s8 %v4358
        %v4360 = vlaneseq
        %v4361 = vshrl.u32 %v4360, 7
        %v4362 = vsub.s32 %v4359, %v4361
        %v4363 = vrot.slane %v4118, %v4362
        %v4364 = vcombine.high %v4363, %v4363
        %v4366 = vunpack.c.l.s4 1966171168
        %v4367 = vunpack.c.0.s8 %v4366
        %v4368 = vlaneseq
        %v4369 = vshrl.u32 %v4368, 7
        %v4370 = vsub.s32 %v4367, %v4369
        %v4371 = vrot.slane %v4363, %v4370
        %v4373 = vunpack.c.l.s4 1966171168
        %v4374 = vunpack.c.0.s8 %v4373
        %v4375 = vlaneseq
        %v4376 = vshrl.u32 %v4375, 7
        %v4377 = vsub.s32 %v4374, %v4376
        %v4378 = vrot.slane %v4364, %v4377
        %v4380 = vunpack.c.l.s4 1966171168
        %v4381 = vunpack.c.0.s8 %v4380
        %v4382 = vlaneseq
        %v4383 = vshrl.u32 %v4382, 7
        %v4384 = vsub.s32 %v4381, %v4383
        %v4385 = vrot.slane %v4119, %v4384
        %v4386 = vcombine.high %v4385, %v4385
        %v4388 = vunpack.c.l.s4 1966171168
        %v4389 = vunpack.c.0.s8 %v4388
        %v4390 = vlaneseq
        %v4391 = vshrl.u32 %v4390, 7
        %v4392 = vsub.s32 %v4389, %v4391
        %v4393 = vrot.slane %v4385, %v4392
        %v4395 = vunpack.c.l.s4 1966171168
        %v4396 = vunpack.c.0.s8 %v4395
        %v4397 = vlaneseq
        %v4398 = vshrl.u32 %v4397, 7
        %v4399 = vsub.s32 %v4396, %v4398
        %v4400 = vrot.slane %v4386, %v4399
        %v4401 = vcombine.high %v4393, %v4393
        %v4402 = vcombine.high %v4400, %v4400
        %v4404 = vunpack.c.l.s4 1966171168
        %v4405 = vunpack.c.0.s8 %v4404
        %v4406 = vlaneseq
        %v4407 = vshrl.u32 %v4406, 7
        %v4408 = vsub.s32 %v4405, %v4407
        %v4409 = vrot.slane %v4120, %v4408
        %v4410 = vcombine.high %v4409, %v4409
        %v4412 = vunpack.c.l.s4 1966171168
        %v4413 = vunpack.c.0.s8 %v4412
        %v4414 = vlaneseq
        %v4415 = vshrl.u32 %v4414, 7
        %v4416 = vsub.s32 %v4413, %v4415
        %v4417 = vrot.slane %v4409, %v4416
        %v4419 = vunpack.c.l.s4 1966171168
        %v4420 = vunpack.c.0.s8 %v4419
        %v4421 = vlaneseq
        %v4422 = vshrl.u32 %v4421, 7
        %v4423 = vsub.s32 %v4420, %v4422
        %v4424 = vrot.slane %v4410, %v4423
        %v4426 = vunpack.c.l.s4 1966171168
        %v4427 = vunpack.c.0.s8 %v4426
        %v4428 = vlaneseq
        %v4429 = vshrl.u32 %v4428, 7
        %v4430 = vsub.s32 %v4427, %v4429
        %v4431 = vrot.slane %v4121, %v4430
        %v4432 = vcombine.high %v4431, %v4431
        %v4434 = vunpack.c.l.s4 1966171168
        %v4435 = vunpack.c.0.s8 %v4434
        %v4436 = vlaneseq
        %v4437 = vshrl.u32 %v4436, 7
        %v4438 = vsub.s32 %v4435, %v4437
        %v4439 = vrot.slane %v4431, %v4438
        %v4441 = vunpack.c.l.s4 1966171168
        %v4442 = vunpack.c.0.s8 %v4441
        %v4443 = vlaneseq
        %v4444 = vshrl.u32 %v4443, 7
        %v4445 = vsub.s32 %v4442, %v4444
        %v4446 = vrot.slane %v4432, %v4445
        %v4447 = vcombine.high %v4439, %v4439
        %v4448 = vcombine.high %v4446, %v4446
        %v4450 = vunpack.c.l.s4 1966171168
        %v4451 = vunpack.c.0.s8 %v4450
        %v4452 = vlaneseq
        %v4453 = vshrl.u32 %v4452, 7
        %v4454 = vsub.s32 %v4451, %v4453
        %v4455 = vrot.slane %v4122, %v4454
        %v4456 = vcombine.high %v4455, %v4455
        %v4458 = vunpack.c.l.s4 1966171168
        %v4459 = vunpack.c.0.s8 %v4458
        %v4460 = vlaneseq
        %v4461 = vshrl.u32 %v4460, 7
        %v4462 = vsub.s32 %v4459, %v4461
        %v4463 = vrot.slane %v4455, %v4462
        %v4465 = vunpack.c.l.s4 1966171168
        %v4466 = vunpack.c.0.s8 %v4465
        %v4467 = vlaneseq
        %v4468 = vshrl.u32 %v4467, 7
        %v4469 = vsub.s32 %v4466, %v4468
        %v4470 = vrot.slane %v4456, %v4469
        %v4472 = vunpack.c.l.s4 1966171168
        %v4473 = vunpack.c.0.s8 %v4472
        %v4474 = vlaneseq
        %v4475 = vshrl.u32 %v4474, 7
        %v4476 = vsub.s32 %v4473, %v4475
        %v4477 = vrot.slane %v4123, %v4476
        %v4478 = vcombine.high %v4477, %v4477
        %v4480 = vunpack.c.l.s4 1966171168
        %v4481 = vunpack.c.0.s8 %v4480
        %v4482 = vlaneseq
        %v4483 = vshrl.u32 %v4482, 7
        %v4484 = vsub.s32 %v4481, %v4483
        %v4485 = vrot.slane %v4477, %v4484
        %v4487 = vunpack.c.l.s4 1966171168
        %v4488 = vunpack.c.0.s8 %v4487
        %v4489 = vlaneseq
        %v4490 = vshrl.u32 %v4489, 7
        %v4491 = vsub.s32 %v4488, %v4490
        %v4492 = vrot.slane %v4478, %v4491
        %v4493 = vcombine.high %v4485, %v4485
        %v4494 = vcombine.high %v4492, %v4492
        %v4496 = vunpack.c.l.s4 1966171168
        %v4497 = vunpack.c.0.s8 %v4496
        %v4498 = vlaneseq
        %v4499 = vshrl.u32 %v4498, 7
        %v4500 = vsub.s32 %v4497, %v4499
        %v4501 = vrot.slane %v4124, %v4500
        %v4502 = vcombine.high %v4501, %v4501
        %v4504 = vunpack.c.l.s4 1966171168
        %v4505 = vunpack.c.0.s8 %v4504
        %v4506 = vlaneseq
        %v4507 = vshrl.u32 %v4506, 7
        %v4508 = vsub.s32 %v4505, %v4507
        %v4509 = vrot.slane %v4501, %v4508
        %v4511 = vunpack.c.l.s4 1966171168
        %v4512 = vunpack.c.0.s8 %v4511
        %v4513 = vlaneseq
        %v4514 = vshrl.u32 %v4513, 7
        %v4515 = vsub.s32 %v4512, %v4514
        %v4516 = vrot.slane %v4502, %v4515
        %v4518 = vunpack.c.l.s4 1966171168
        %v4519 = vunpack.c.0.s8 %v4518
        %v4520 = vlaneseq
        %v4521 = vshrl.u32 %v4520, 7
        %v4522 = vsub.s32 %v4519, %v4521
        %v4523 = vrot.slane %v4125, %v4522
        %v4524 = vcombine.high %v4523, %v4523
        %v4526 = vunpack.c.l.s4 1966171168
        %v4527 = vunpack.c.0.s8 %v4526
        %v4528 = vlaneseq
        %v4529 = vshrl.u32 %v4528, 7
        %v4530 = vsub.s32 %v4527, %v4529
        %v4531 = vrot.slane %v4523, %v4530
        %v4533 = vunpack.c.l.s4 1966171168
        %v4534 = vunpack.c.0.s8 %v4533
        %v4535 = vlaneseq
        %v4536 = vshrl.u32 %v4535, 7
        %v4537 = vsub.s32 %v4534, %v4536
        %v4538 = vrot.slane %v4524, %v4537
        %v4539 = vcombine.high %v4531, %v4531
        %v4540 = vcombine.high %v4538, %v4538
        %v4542 = vunpack.c.l.s4 1966171168
        %v4543 = vunpack.c.0.s8 %v4542
        %v4544 = vlaneseq
        %v4545 = vshrl.u32 %v4544, 7
        %v4546 = vsub.s32 %v4543, %v4545
        %v4547 = vrot.slane %v4126, %v4546
        %v4548 = vcombine.high %v4547, %v4547
        %v4550 = vunpack.c.l.s4 1966171168
        %v4551 = vunpack.c.0.s8 %v4550
        %v4552 = vlaneseq
        %v4553 = vshrl.u32 %v4552, 7
        %v4554 = vsub.s32 %v4551, %v4553
        %v4555 = vrot.slane %v4547, %v4554
        %v4557 = vunpack.c.l.s4 1966171168
        %v4558 = vunpack.c.0.s8 %v4557
        %v4559 = vlaneseq
        %v4560 = vshrl.u32 %v4559, 7
        %v4561 = vsub.s32 %v4558, %v4560
        %v4562 = vrot.slane %v4548, %v4561
        %v4564 = vunpack.c.l.s4 1966171168
        %v4565 = vunpack.c.0.s8 %v4564
        %v4566 = vlaneseq
        %v4567 = vshrl.u32 %v4566, 7
        %v4568 = vsub.s32 %v4565, %v4567
        %v4569 = vrot.slane %v4127, %v4568
        %v4570 = vcombine.high %v4569, %v4569
        %v4572 = vunpack.c.l.s4 1966171168
        %v4573 = vunpack.c.0.s8 %v4572
        %v4574 = vlaneseq
        %v4575 = vshrl.u32 %v4574, 7
        %v4576 = vsub.s32 %v4573, %v4575
        %v4577 = vrot.slane %v4569, %v4576
        %v4579 = vunpack.c.l.s4 1966171168
        %v4580 = vunpack.c.0.s8 %v4579
        %v4581 = vlaneseq
        %v4582 = vshrl.u32 %v4581, 7
        %v4583 = vsub.s32 %v4580, %v4582
        %v4584 = vrot.slane %v4570, %v4583
        %v4585 = vcombine.high %v4577, %v4577
        %v4586 = vcombine.high %v4584, %v4584
        %v4588 = vunpack.c.l.s4 1966171168
        %v4589 = vunpack.c.0.s8 %v4588
        %v4590 = vlaneseq
        %v4591 = vshrl.u32 %v4590, 7
        %v4592 = vsub.s32 %v4589, %v4591
        %v4593 = vrot.slane %v4128, %v4592
        %v4594 = vcombine.high %v4593, %v4593
        %v4596 = vunpack.c.l.s4 1966171168
        %v4597 = vunpack.c.0.s8 %v4596
        %v4598 = vlaneseq
        %v4599 = vshrl.u32 %v4598, 7
        %v4600 = vsub.s32 %v4597, %v4599
        %v4601 = vrot.slane %v4593, %v4600
        %v4603 = vunpack.c.l.s4 1966171168
        %v4604 = vunpack.c.0.s8 %v4603
        %v4605 = vlaneseq
        %v4606 = vshrl.u32 %v4605, 7
        %v4607 = vsub.s32 %v4604, %v4606
        %v4608 = vrot.slane %v4594, %v4607
        %v4610 = vshrl.u32 %v4163, 16
        %v4612 = vrot.slane %v4610, 7
        %v4613 = vrot.slane %v4612, 1
        %v4615 = vshll.u32 %v4170, 16
        %v4617 = vsel %vm1769, %v4613, %v4615
        %v4618 = vshrl.u32 %v4170, 16
        %v4620 = vrot.slane %v4618, 7
        %v4621 = vrot.slane %v4620, 1
        %v4623 = vshll.u32 %v4171, 16
        %v4625 = vsel %vm1769, %v4621, %v4623
        %v4626 = vshrl.u32 %v4171, 16
        %v4628 = vrot.slane %v4626, 7
        %v4629 = vrot.slane %v4628, 1
        %v4631 = vshll.u32 %v4172, 16
        %v4633 = vsel %vm1769, %v4629, %v4631
        %v4634 = vshrl.u32 %v4172, 16
        %v4636 = vrot.slane %v4634, 7
        %v4637 = vrot.slane %v4636, 1
        %v4639 = vshll.u32 %v4187, 16
        %v4641 = vsel %vm1769, %v4637, %v4639
        %v4642 = vshrl.u32 %v4187, 16
        %v4644 = vrot.slane %v4642, 7
        %v4645 = vrot.slane %v4644, 1
        %v4647 = vshll.u32 %v4194, 16
        %v4649 = vsel %vm1769, %v4645, %v4647
        %v4651 = vshrl.u32 %v4209, 16
        %v4653 = vrot.slane %v4651, 7
        %v4654 = vrot.slane %v4653, 1
        %v4656 = vshll.u32 %v4216, 16
        %v4658 = vsel %vm1769, %v4654, %v4656
        %v4659 = vshrl.u32 %v4216, 16
        %v4661 = vrot.slane %v4659, 7
        %v4662 = vrot.slane %v4661, 1
        %v4664 = vshll.u32 %v4217, 16
        %v4666 = vsel %vm1769, %v4662, %v4664
        %v4667 = vshrl.u32 %v4217, 16
        %v4669 = vrot.slane %v4667, 7
        %v4670 = vrot.slane %v4669, 1
        %v4672 = vshll.u32 %v4218, 16
        %v4674 = vsel %vm1769, %v4670, %v4672
        %v4675 = vshrl.u32 %v4218, 16
        %v4677 = vrot.slane %v4675, 7
        %v4678 = vrot.slane %v4677, 1
        %v4680 = vshll.u32 %v4233, 16
        %v4682 = vsel %vm1769, %v4678, %v4680
        %v4683 = vshrl.u32 %v4233, 16
        %v4685 = vrot.slane %v4683, 7
        %v4686 = vrot.slane %v4685, 1
        %v4688 = vshll.u32 %v4240, 16
        %v4690 = vsel %vm1769, %v4686, %v4688
        %v4692 = vshrl.u32 %v4255, 16
        %v4694 = vrot.slane %v4692, 7
        %v4695 = vrot.slane %v4694, 1
        %v4697 = vshll.u32 %v4262, 16
        %v4699 = vsel %vm1769, %v4695, %v4697
        %v4700 = vshrl.u32 %v4262, 16
        %v4702 = vrot.slane %v4700, 7
        %v4703 = vrot.slane %v4702, 1
        %v4705 = vshll.u32 %v4263, 16
        %v4707 = vsel %vm1769, %v4703, %v4705
        %v4708 = vshrl.u32 %v4263, 16
        %v4710 = vrot.slane %v4708, 7
        %v4711 = vrot.slane %v4710, 1
        %v4713 = vshll.u32 %v4264, 16
        %v4715 = vsel %vm1769, %v4711, %v4713
        %v4716 = vshrl.u32 %v4264, 16
        %v4718 = vrot.slane %v4716, 7
        %v4719 = vrot.slane %v4718, 1
        %v4721 = vshll.u32 %v4279, 16
        %v4723 = vsel %vm1769, %v4719, %v4721
        %v4724 = vshrl.u32 %v4279, 16
        %v4726 = vrot.slane %v4724, 7
        %v4727 = vrot.slane %v4726, 1
        %v4729 = vshll.u32 %v4286, 16
        %v4731 = vsel %vm1769, %v4727, %v4729
        %v4733 = vshrl.u32 %v4301, 16
        %v4735 = vrot.slane %v4733, 7
        %v4736 = vrot.slane %v4735, 1
        %v4738 = vshll.u32 %v4308, 16
        %v4740 = vsel %vm1769, %v4736, %v4738
        %v4741 = vshrl.u32 %v4308, 16
        %v4743 = vrot.slane %v4741, 7
        %v4744 = vrot.slane %v4743, 1
        %v4746 = vshll.u32 %v4309, 16
        %v4748 = vsel %vm1769, %v4744, %v4746
        %v4749 = vshrl.u32 %v4309, 16
        %v4751 = vrot.slane %v4749, 7
        %v4752 = vrot.slane %v4751, 1
        %v4754 = vshll.u32 %v4310, 16
        %v4756 = vsel %vm1769, %v4752, %v4754
        %v4757 = vshrl.u32 %v4310, 16
        %v4759 = vrot.slane %v4757, 7
        %v4760 = vrot.slane %v4759, 1
        %v4762 = vshll.u32 %v4325, 16
        %v4764 = vsel %vm1769, %v4760, %v4762
        %v4765 = vshrl.u32 %v4325, 16
        %v4767 = vrot.slane %v4765, 7
        %v4768 = vrot.slane %v4767, 1
        %v4770 = vshll.u32 %v4332, 16
        %v4772 = vsel %vm1769, %v4768, %v4770
        %v4774 = vshrl.u32 %v4347, 16
        %v4776 = vrot.slane %v4774, 7
        %v4777 = vrot.slane %v4776, 1
        %v4779 = vshll.u32 %v4354, 16
        %v4781 = vsel %vm1769, %v4777, %v4779
        %v4782 = vshrl.u32 %v4354, 16
        %v4784 = vrot.slane %v4782, 7
        %v4785 = vrot.slane %v4784, 1
        %v4787 = vshll.u32 %v4355, 16
        %v4789 = vsel %vm1769, %v4785, %v4787
        %v4790 = vshrl.u32 %v4355, 16
        %v4792 = vrot.slane %v4790, 7
        %v4793 = vrot.slane %v4792, 1
        %v4795 = vshll.u32 %v4356, 16
        %v4797 = vsel %vm1769, %v4793, %v4795
        %v4798 = vshrl.u32 %v4356, 16
        %v4800 = vrot.slane %v4798, 7
        %v4801 = vrot.slane %v4800, 1
        %v4803 = vshll.u32 %v4371, 16
        %v4805 = vsel %vm1769, %v4801, %v4803
        %v4806 = vshrl.u32 %v4371, 16
        %v4808 = vrot.slane %v4806, 7
        %v4809 = vrot.slane %v4808, 1
        %v4811 = vshll.u32 %v4378, 16
        %v4813 = vsel %vm1769, %v4809, %v4811
        %v4815 = vshrl.u32 %v4393, 16
        %v4817 = vrot.slane %v4815, 7
        %v4818 = vrot.slane %v4817, 1
        %v4820 = vshll.u32 %v4400, 16
        %v4822 = vsel %vm1769, %v4818, %v4820
        %v4823 = vshrl.u32 %v4400, 16
        %v4825 = vrot.slane %v4823, 7
        %v4826 = vrot.slane %v4825, 1
        %v4828 = vshll.u32 %v4401, 16
        %v4830 = vsel %vm1769, %v4826, %v4828
        %v4831 = vshrl.u32 %v4401, 16
        %v4833 = vrot.slane %v4831, 7
        %v4834 = vrot.slane %v4833, 1
        %v4836 = vshll.u32 %v4402, 16
        %v4838 = vsel %vm1769, %v4834, %v4836
        %v4839 = vshrl.u32 %v4402, 16
        %v4841 = vrot.slane %v4839, 7
        %v4842 = vrot.slane %v4841, 1
        %v4844 = vshll.u32 %v4417, 16
        %v4846 = vsel %vm1769, %v4842, %v4844
        %v4847 = vshrl.u32 %v4417, 16
        %v4849 = vrot.slane %v4847, 7
        %v4850 = vrot.slane %v4849, 1
        %v4852 = vshll.u32 %v4424, 16
        %v4854 = vsel %vm1769, %v4850, %v4852
        %v4856 = vshrl.u32 %v4439, 16
        %v4858 = vrot.slane %v4856, 7
        %v4859 = vrot.slane %v4858, 1
        %v4861 = vshll.u32 %v4446, 16
        %v4863 = vsel %vm1769, %v4859, %v4861
        %v4864 = vshrl.u32 %v4446, 16
        %v4866 = vrot.slane %v4864, 7
        %v4867 = vrot.slane %v4866, 1
        %v4869 = vshll.u32 %v4447, 16
        %v4871 = vsel %vm1769, %v4867, %v4869
        %v4872 = vshrl.u32 %v4447, 16
        %v4874 = vrot.slane %v4872, 7
        %v4875 = vrot.slane %v4874, 1
        %v4877 = vshll.u32 %v4448, 16
        %v4879 = vsel %vm1769, %v4875, %v4877
        %v4880 = vshrl.u32 %v4448, 16
        %v4882 = vrot.slane %v4880, 7
        %v4883 = vrot.slane %v4882, 1
        %v4885 = vshll.u32 %v4463, 16
        %v4887 = vsel %vm1769, %v4883, %v4885
        %v4888 = vshrl.u32 %v4463, 16
        %v4890 = vrot.slane %v4888, 7
        %v4891 = vrot.slane %v4890, 1
        %v4893 = vshll.u32 %v4470, 16
        %v4895 = vsel %vm1769, %v4891, %v4893
        %v4897 = vshrl.u32 %v4485, 16
        %v4899 = vrot.slane %v4897, 7
        %v4900 = vrot.slane %v4899, 1
        %v4902 = vshll.u32 %v4492, 16
        %v4904 = vsel %vm1769, %v4900, %v4902
        %v4905 = vshrl.u32 %v4492, 16
        %v4907 = vrot.slane %v4905, 7
        %v4908 = vrot.slane %v4907, 1
        %v4910 = vshll.u32 %v4493, 16
        %v4912 = vsel %vm1769, %v4908, %v4910
        %v4913 = vshrl.u32 %v4493, 16
        %v4915 = vrot.slane %v4913, 7
        %v4916 = vrot.slane %v4915, 1
        %v4918 = vshll.u32 %v4494, 16
        %v4920 = vsel %vm1769, %v4916, %v4918
        %v4921 = vshrl.u32 %v4494, 16
        %v4923 = vrot.slane %v4921, 7
        %v4924 = vrot.slane %v4923, 1
        %v4926 = vshll.u32 %v4509, 16
        %v4928 = vsel %vm1769, %v4924, %v4926
        %v4929 = vshrl.u32 %v4509, 16
        %v4931 = vrot.slane %v4929, 7
        %v4932 = vrot.slane %v4931, 1
        %v4934 = vshll.u32 %v4516, 16
        %v4936 = vsel %vm1769, %v4932, %v4934
        %v4938 = vshrl.u32 %v4531, 16
        %v4940 = vrot.slane %v4938, 7
        %v4941 = vrot.slane %v4940, 1
        %v4943 = vshll.u32 %v4538, 16
        %v4945 = vsel %vm1769, %v4941, %v4943
        %v4946 = vshrl.u32 %v4538, 16
        %v4948 = vrot.slane %v4946, 7
        %v4949 = vrot.slane %v4948, 1
        %v4951 = vshll.u32 %v4539, 16
        %v4953 = vsel %vm1769, %v4949, %v4951
        %v4954 = vshrl.u32 %v4539, 16
        %v4956 = vrot.slane %v4954, 7
        %v4957 = vrot.slane %v4956, 1
        %v4959 = vshll.u32 %v4540, 16
        %v4961 = vsel %vm1769, %v4957, %v4959
        %v4962 = vshrl.u32 %v4540, 16
        %v4964 = vrot.slane %v4962, 7
        %v4965 = vrot.slane %v4964, 1
        %v4967 = vshll.u32 %v4555, 16
        %v4969 = vsel %vm1769, %v4965, %v4967
        %v4970 = vshrl.u32 %v4555, 16
        %v4972 = vrot.slane %v4970, 7
        %v4973 = vrot.slane %v4972, 1
        %v4975 = vshll.u32 %v4562, 16
        %v4977 = vsel %vm1769, %v4973, %v4975
        %v4979 = vshrl.u32 %v4577, 16
        %v4981 = vrot.slane %v4979, 7
        %v4982 = vrot.slane %v4981, 1
        %v4984 = vshll.u32 %v4584, 16
        %v4986 = vsel %vm1769, %v4982, %v4984
        %v4987 = vshrl.u32 %v4584, 16
        %v4989 = vrot.slane %v4987, 7
        %v4990 = vrot.slane %v4989, 1
        %v4992 = vshll.u32 %v4585, 16
        %v4994 = vsel %vm1769, %v4990, %v4992
        %v4995 = vshrl.u32 %v4585, 16
        %v4997 = vrot.slane %v4995, 7
        %v4998 = vrot.slane %v4997, 1
        %v5000 = vshll.u32 %v4586, 16
        %v5002 = vsel %vm1769, %v4998, %v5000
        %v5003 = vshrl.u32 %v4586, 16
        %v5005 = vrot.slane %v5003, 7
        %v5006 = vrot.slane %v5005, 1
        %v5008 = vshll.u32 %v4601, 16
        %v5010 = vsel %vm1769, %v5006, %v5008
        %v5011 = vshrl.u32 %v4601, 16
        %v5013 = vrot.slane %v5011, 7
        %v5014 = vrot.slane %v5013, 1
        %v5016 = vshll.u32 %v4608, 16
        %v5018 = vsel %vm1769, %v5014, %v5016
        %v5019 = vcombine.low %v4617, %v4633
        %v5020 = vcombine.low %v4625, %v4641
        %v5022 = vunpack.c.l.s4 1935823168
        %v5023 = vunpack.c.0.s8 %v5022
        %v5024 = vlaneseq
        %v5025 = vshrl.u32 %v5024, 7
        %v5026 = vsub.s32 %v5023, %v5025
        %v5027 = vrot.slane %v5019, %v5026
        %v5029 = vunpack.c.l.s4 1935823168
        %v5030 = vunpack.c.0.s8 %v5029
        %v5031 = vlaneseq
        %v5032 = vshrl.u32 %v5031, 7
        %v5033 = vsub.s32 %v5030, %v5032
        %v5034 = vrot.slane %v5020, %v5033
        %v5035 = vcombine.low %v5027, %v5034
        %v5037 = vunpack.c.l.s4 1935823168
        %v5038 = vunpack.c.0.s8 %v5037
        %v5039 = vlaneseq
        %v5040 = vshrl.u32 %v5039, 7
        %v5041 = vsub.s32 %v5038, %v5040
        %v5042 = vrot.slane %v5035, %v5041
        %v5043 = vcombine.low %v4649, %v4666
        %v5044 = vcombine.low %v4658, %v4674
        %v5046 = vunpack.c.l.s4 1935823168
        %v5047 = vunpack.c.0.s8 %v5046
        %v5048 = vlaneseq
        %v5049 = vshrl.u32 %v5048, 7
        %v5050 = vsub.s32 %v5047, %v5049
        %v5051 = vrot.slane %v5043, %v5050
        %v5053 = vunpack.c.l.s4 1935823168
        %v5054 = vunpack.c.0.s8 %v5053
        %v5055 = vlaneseq
        %v5056 = vshrl.u32 %v5055, 7
        %v5057 = vsub.s32 %v5054, %v5056
        %v5058 = vrot.slane %v5044, %v5057
        %v5059 = vcombine.low %v5051, %v5058
        %v5061 = vunpack.c.l.s4 1935823168
        %v5062 = vunpack.c.0.s8 %v5061
        %v5063 = vlaneseq
        %v5064 = vshrl.u32 %v5063, 7
        %v5065 = vsub.s32 %v5062, %v5064
        %v5066 = vrot.slane %v5059, %v5065
        %v5067 = vcombine.low %v4682, %v4699
        %v5068 = vcombine.low %v4690, %v4707
        %v5070 = vunpack.c.l.s4 1935823168
        %v5071 = vunpack.c.0.s8 %v5070
        %v5072 = vlaneseq
        %v5073 = vshrl.u32 %v5072, 7
        %v5074 = vsub.s32 %v5071, %v5073
        %v5075 = vrot.slane %v5067, %v5074
        %v5077 = vunpack.c.l.s4 1935823168
        %v5078 = vunpack.c.0.s8 %v5077
        %v5079 = vlaneseq
        %v5080 = vshrl.u32 %v5079, 7
        %v5081 = vsub.s32 %v5078, %v5080
        %v5082 = vrot.slane %v5068, %v5081
        %v5083 = vcombine.low %v5075, %v5082
        %v5085 = vunpack.c.l.s4 1935823168
        %v5086 = vunpack.c.0.s8 %v5085
        %v5087 = vlaneseq
        %v5088 = vshrl.u32 %v5087, 7
        %v5089 = vsub.s32 %v5086, %v5088
        %v5090 = vrot.slane %v5083, %v5089
        %v5091 = vcombine.low %v4715, %v4731
        %v5092 = vcombine.low %v4723, %v4740
        %v5094 = vunpack.c.l.s4 1935823168
        %v5095 = vunpack.c.0.s8 %v5094
        %v5096 = vlaneseq
        %v5097 = vshrl.u32 %v5096, 7
        %v5098 = vsub.s32 %v5095, %v5097
        %v5099 = vrot.slane %v5091, %v5098
        %v5101 = vunpack.c.l.s4 1935823168
        %v5102 = vunpack.c.0.s8 %v5101
        %v5103 = vlaneseq
        %v5104 = vshrl.u32 %v5103, 7
        %v5105 = vsub.s32 %v5102, %v5104
        %v5106 = vrot.slane %v5092, %v5105
        %v5107 = vcombine.low %v5099, %v5106
        %v5109 = vunpack.c.l.s4 1935823168
        %v5110 = vunpack.c.0.s8 %v5109
        %v5111 = vlaneseq
        %v5112 = vshrl.u32 %v5111, 7
        %v5113 = vsub.s32 %v5110, %v5112
        %v5114 = vrot.slane %v5107, %v5113
        %v5115 = vcombine.low %v4748, %v4764
        %v5116 = vcombine.low %v4756, %v4772
        %v5118 = vunpack.c.l.s4 1935823168
        %v5119 = vunpack.c.0.s8 %v5118
        %v5120 = vlaneseq
        %v5121 = vshrl.u32 %v5120, 7
        %v5122 = vsub.s32 %v5119, %v5121
        %v5123 = vrot.slane %v5115, %v5122
        %v5125 = vunpack.c.l.s4 1935823168
        %v5126 = vunpack.c.0.s8 %v5125
        %v5127 = vlaneseq
        %v5128 = vshrl.u32 %v5127, 7
        %v5129 = vsub.s32 %v5126, %v5128
        %v5130 = vrot.slane %v5116, %v5129
        %v5131 = vcombine.low %v5123, %v5130
        %v5133 = vunpack.c.l.s4 1935823168
        %v5134 = vunpack.c.0.s8 %v5133
        %v5135 = vlaneseq
        %v5136 = vshrl.u32 %v5135, 7
        %v5137 = vsub.s32 %v5134, %v5136
        %v5138 = vrot.slane %v5131, %v5137
        %v5139 = vcombine.low %v4781, %v4797
        %v5140 = vcombine.low %v4789, %v4805
        %v5142 = vunpack.c.l.s4 1935823168
        %v5143 = vunpack.c.0.s8 %v5142
        %v5144 = vlaneseq
        %v5145 = vshrl.u32 %v5144, 7
        %v5146 = vsub.s32 %v5143, %v5145
        %v5147 = vrot.slane %v5139, %v5146
        %v5149 = vunpack.c.l.s4 1935823168
        %v5150 = vunpack.c.0.s8 %v5149
        %v5151 = vlaneseq
        %v5152 = vshrl.u32 %v5151, 7
        %v5153 = vsub.s32 %v5150, %v5152
        %v5154 = vrot.slane %v5140, %v5153
        %v5155 = vcombine.low %v5147, %v5154
        %v5157 = vunpack.c.l.s4 1935823168
        %v5158 = vunpack.c.0.s8 %v5157
        %v5159 = vlaneseq
        %v5160 = vshrl.u32 %v5159, 7
        %v5161 = vsub.s32 %v5158, %v5160
        %v5162 = vrot.slane %v5155, %v5161
        %v5163 = vcombine.low %v4813, %v4830
        %v5164 = vcombine.low %v4822, %v4838
        %v5166 = vunpack.c.l.s4 1935823168
        %v5167 = vunpack.c.0.s8 %v5166
        %v5168 = vlaneseq
        %v5169 = vshrl.u32 %v5168, 7
        %v5170 = vsub.s32 %v5167, %v5169
        %v5171 = vrot.slane %v5163, %v5170
        %v5173 = vunpack.c.l.s4 1935823168
        %v5174 = vunpack.c.0.s8 %v5173
        %v5175 = vlaneseq
        %v5176 = vshrl.u32 %v5175, 7
        %v5177 = vsub.s32 %v5174, %v5176
        %v5178 = vrot.slane %v5164, %v5177
        %v5179 = vcombine.low %v5171, %v5178
        %v5181 = vunpack.c.l.s4 1935823168
        %v5182 = vunpack.c.0.s8 %v5181
        %v5183 = vlaneseq
        %v5184 = vshrl.u32 %v5183, 7
        %v5185 = vsub.s32 %v5182, %v5184
        %v5186 = vrot.slane %v5179, %v5185
        %v5187 = vcombine.low %v4846, %v4863
        %v5188 = vcombine.low %v4854, %v4871
        %v5190 = vunpack.c.l.s4 1935823168
        %v5191 = vunpack.c.0.s8 %v5190
        %v5192 = vlaneseq
        %v5193 = vshrl.u32 %v5192, 7
        %v5194 = vsub.s32 %v5191, %v5193
        %v5195 = vrot.slane %v5187, %v5194
        %v5197 = vunpack.c.l.s4 1935823168
        %v5198 = vunpack.c.0.s8 %v5197
        %v5199 = vlaneseq
        %v5200 = vshrl.u32 %v5199, 7
        %v5201 = vsub.s32 %v5198, %v5200
        %v5202 = vrot.slane %v5188, %v5201
        %v5203 = vcombine.low %v5195, %v5202
        %v5205 = vunpack.c.l.s4 1935823168
        %v5206 = vunpack.c.0.s8 %v5205
        %v5207 = vlaneseq
        %v5208 = vshrl.u32 %v5207, 7
        %v5209 = vsub.s32 %v5206, %v5208
        %v5210 = vrot.slane %v5203, %v5209
        %v5211 = vcombine.low %v4879, %v4895
        %v5212 = vcombine.low %v4887, %v4904
        %v5214 = vunpack.c.l.s4 1935823168
        %v5215 = vunpack.c.0.s8 %v5214
        %v5216 = vlaneseq
        %v5217 = vshrl.u32 %v5216, 7
        %v5218 = vsub.s32 %v5215, %v5217
        %v5219 = vrot.slane %v5211, %v5218
        %v5221 = vunpack.c.l.s4 1935823168
        %v5222 = vunpack.c.0.s8 %v5221
        %v5223 = vlaneseq
        %v5224 = vshrl.u32 %v5223, 7
        %v5225 = vsub.s32 %v5222, %v5224
        %v5226 = vrot.slane %v5212, %v5225
        %v5227 = vcombine.low %v5219, %v5226
        %v5229 = vunpack.c.l.s4 1935823168
        %v5230 = vunpack.c.0.s8 %v5229
        %v5231 = vlaneseq
        %v5232 = vshrl.u32 %v5231, 7
        %v5233 = vsub.s32 %v5230, %v5232
        %v5234 = vrot.slane %v5227, %v5233
        %v5235 = vcombine.low %v4912, %v4928
        %v5236 = vcombine.low %v4920, %v4936
        %v5238 = vunpack.c.l.s4 1935823168
        %v5239 = vunpack.c.0.s8 %v5238
        %v5240 = vlaneseq
        %v5241 = vshrl.u32 %v5240, 7
        %v5242 = vsub.s32 %v5239, %v5241
        %v5243 = vrot.slane %v5235, %v5242
        %v5245 = vunpack.c.l.s4 1935823168
        %v5246 = vunpack.c.0.s8 %v5245
        %v5247 = vlaneseq
        %v5248 = vshrl.u32 %v5247, 7
        %v5249 = vsub.s32 %v5246, %v5248
        %v5250 = vrot.slane %v5236, %v5249
        %v5251 = vcombine.low %v5243, %v5250
        %v5253 = vunpack.c.l.s4 1935823168
        %v5254 = vunpack.c.0.s8 %v5253
        %v5255 = vlaneseq
        %v5256 = vshrl.u32 %v5255, 7
        %v5257 = vsub.s32 %v5254, %v5256
        %v5258 = vrot.slane %v5251, %v5257
        %v5259 = vcombine.low %v4945, %v4961
        %v5260 = vcombine.low %v4953, %v4969
        %v5262 = vunpack.c.l.s4 1935823168
        %v5263 = vunpack.c.0.s8 %v5262
        %v5264 = vlaneseq
        %v5265 = vshrl.u32 %v5264, 7
        %v5266 = vsub.s32 %v5263, %v5265
        %v5267 = vrot.slane %v5259, %v5266
        %v5269 = vunpack.c.l.s4 1935823168
        %v5270 = vunpack.c.0.s8 %v5269
        %v5271 = vlaneseq
        %v5272 = vshrl.u32 %v5271, 7
        %v5273 = vsub.s32 %v5270, %v5272
        %v5274 = vrot.slane %v5260, %v5273
        %v5275 = vcombine.low %v5267, %v5274
        %v5277 = vunpack.c.l.s4 1935823168
        %v5278 = vunpack.c.0.s8 %v5277
        %v5279 = vlaneseq
        %v5280 = vshrl.u32 %v5279, 7
        %v5281 = vsub.s32 %v5278, %v5280
        %v5282 = vrot.slane %v5275, %v5281
        %v5283 = vcombine.low %v4977, %v4994
        %v5284 = vcombine.low %v4986, %v5002
        %v5286 = vunpack.c.l.s4 1935823168
        %v5287 = vunpack.c.0.s8 %v5286
        %v5288 = vlaneseq
        %v5289 = vshrl.u32 %v5288, 7
        %v5290 = vsub.s32 %v5287, %v5289
        %v5291 = vrot.slane %v5283, %v5290
        %v5293 = vunpack.c.l.s4 1935823168
        %v5294 = vunpack.c.0.s8 %v5293
        %v5295 = vlaneseq
        %v5296 = vshrl.u32 %v5295, 7
        %v5297 = vsub.s32 %v5294, %v5296
        %v5298 = vrot.slane %v5284, %v5297
        %v5299 = vcombine.low %v5291, %v5298
        %v5301 = vunpack.c.l.s4 1935823168
        %v5302 = vunpack.c.0.s8 %v5301
        %v5303 = vlaneseq
        %v5304 = vshrl.u32 %v5303, 7
        %v5305 = vsub.s32 %v5302, %v5304
        %v5306 = vrot.slane %v5299, %v5305
        %v5308 = vunpack.c.l.s4 1935823168
        %v5309 = vunpack.c.0.s8 %v5308
        %v5310 = vlaneseq
        %v5311 = vshrl.u32 %v5310, 7
        %v5312 = vsub.s32 %v5309, %v5311
        %v5313 = vrot.slane %v5010, %v5312
        %v5315 = vunpack.c.l.s4 1935823168
        %v5316 = vunpack.c.0.s8 %v5315
        %v5317 = vlaneseq
        %v5318 = vshrl.u32 %v5317, 7
        %v5319 = vsub.s32 %v5316, %v5318
        %v5320 = vrot.slane %v5018, %v5319
        %v5321 = vcombine.low %v5313, %v5320
        %v5323 = vunpack.c.l.s4 1935823168
        %v5324 = vunpack.c.0.s8 %v5323
        %v5325 = vlaneseq
        %v5326 = vshrl.u32 %v5325, 7
        %v5327 = vsub.s32 %v5324, %v5326
        %v5328 = vrot.slane %v5321, %v5327
        %5342 = vst [vmem:[#allocation4 + $0x10] sm:$0xf] %v5042
        %5343 = vst [vmem:[#allocation4 + $0x34] sm:$0xf] %v5066
        %5344 = vst [vmem:[#allocation4 + $0x58] sm:$0xf] %v5090
        %5345 = vst [vmem:[#allocation4 + $0x7c] sm:$0xf] %v5114
        %5346 = vst [vmem:[#allocation4 + $0xa0] sm:$0xf] %v5138
        %5347 = vst [vmem:[#allocation4 + $0xc4] sm:$0xf] %v5162
        %5348 = vst [vmem:[#allocation4 + $0xe8] sm:$0xf] %v5186
        %5349 = vst [vmem:[#allocation4 + $0x10c] sm:$0xf] %v5210
        %5350 = vst [vmem:[#allocation4 + $0x130] sm:$0xf] %v5234
        %5351 = vst [vmem:[#allocation4 + $0x154] sm:$0xf] %v5258
        %5352 = vst [vmem:[#allocation4 + $0x178] sm:$0xf] %v5282
        %5353 = vst [vmem:[#allocation4 + $0x19c] sm:$0xf] %v5306
        %5354 = vst [vmem:[#allocation4 + $0x1c0] sm:$0x3] %v5328
        %v5355 = vld [vmem:[%s3352] sm:$0xe]
        %v5356 = vld [vmem:[%s3352 + $0x4] sm:$0x3]
        %v5357 = vld [vmem:[%s3352 + $0x8] sm:$0xe]
        %v5358 = vld [vmem:[%s3352 + $0xc] sm:$0x3]
        %v5359 = vld [vmem:[%s3352 + $0x10] sm:$0xe]
        %v5360 = vld [vmem:[%s3352 + $0x14] sm:$0x3]
        %v5361 = vld [vmem:[%s3352 + $0x18] sm:$0xe]
        %v5362 = vld [vmem:[%s3352 + $0x1c] sm:$0x3]
        %v5363 = vld [vmem:[%s3352 + $0x20] sm:$0xe]
        %v5364 = vld [vmem:[%s3352 + $0x24] sm:$0x3]
        %v5365 = vld [vmem:[%s3352 + $0x28] sm:$0xe]
        %v5366 = vld [vmem:[%s3352 + $0x2c] sm:$0x3]
        %v5367 = vld [vmem:[%s3352 + $0x30] sm:$0xe]
        %v5368 = vld [vmem:[%s3352 + $0x34] sm:$0x3]
        %v5369 = vld [vmem:[%s3352 + $0x38] sm:$0xe]
        %v5370 = vld [vmem:[%s3352 + $0x3c] sm:$0x3]
        %v5371 = vld [vmem:[%s3352 + $0x40] sm:$0xe]
        %v5372 = vld [vmem:[%s3352 + $0x44] sm:$0x3]
        %v5373 = vld [vmem:[%s3352 + $0x48] sm:$0xe]
        %v5374 = vld [vmem:[%s3352 + $0x4c] sm:$0x3]
        %v5396 = vunpack.c.l.s4 1966171168
        %v5397 = vunpack.c.0.s8 %v5396
        %v5398 = vlaneseq
        %v5399 = vshrl.u32 %v5398, 7
        %v5400 = vsub.s32 %v5397, %v5399
        %v5401 = vrot.slane %v5355, %v5400
        %v5402 = vcombine.high %v5401, %v5401
        %v5404 = vunpack.c.l.s4 1966171168
        %v5405 = vunpack.c.0.s8 %v5404
        %v5406 = vlaneseq
        %v5407 = vshrl.u32 %v5406, 7
        %v5408 = vsub.s32 %v5405, %v5407
        %v5409 = vrot.slane %v5401, %v5408
        %v5411 = vunpack.c.l.s4 1966171168
        %v5412 = vunpack.c.0.s8 %v5411
        %v5413 = vlaneseq
        %v5414 = vshrl.u32 %v5413, 7
        %v5415 = vsub.s32 %v5412, %v5414
        %v5416 = vrot.slane %v5402, %v5415
        %v5417 = vcombine.high %v5409, %v5409
        %v5418 = vcombine.high %v5416, %v5416
        %v5420 = vunpack.c.l.s4 1966171168
        %v5421 = vunpack.c.0.s8 %v5420
        %v5422 = vlaneseq
        %v5423 = vshrl.u32 %v5422, 7
        %v5424 = vsub.s32 %v5421, %v5423
        %v5425 = vrot.slane %v5356, %v5424
        %v5426 = vcombine.high %v5425, %v5425
        %v5428 = vunpack.c.l.s4 1966171168
        %v5429 = vunpack.c.0.s8 %v5428
        %v5430 = vlaneseq
        %v5431 = vshrl.u32 %v5430, 7
        %v5432 = vsub.s32 %v5429, %v5431
        %v5433 = vrot.slane %v5425, %v5432
        %v5435 = vunpack.c.l.s4 1966171168
        %v5436 = vunpack.c.0.s8 %v5435
        %v5437 = vlaneseq
        %v5438 = vshrl.u32 %v5437, 7
        %v5439 = vsub.s32 %v5436, %v5438
        %v5440 = vrot.slane %v5426, %v5439
        %v5442 = vunpack.c.l.s4 1966171168
        %v5443 = vunpack.c.0.s8 %v5442
        %v5444 = vlaneseq
        %v5445 = vshrl.u32 %v5444, 7
        %v5446 = vsub.s32 %v5443, %v5445
        %v5447 = vrot.slane %v5357, %v5446
        %v5448 = vcombine.high %v5447, %v5447
        %v5450 = vunpack.c.l.s4 1966171168
        %v5451 = vunpack.c.0.s8 %v5450
        %v5452 = vlaneseq
        %v5453 = vshrl.u32 %v5452, 7
        %v5454 = vsub.s32 %v5451, %v5453
        %v5455 = vrot.slane %v5447, %v5454
        %v5457 = vunpack.c.l.s4 1966171168
        %v5458 = vunpack.c.0.s8 %v5457
        %v5459 = vlaneseq
        %v5460 = vshrl.u32 %v5459, 7
        %v5461 = vsub.s32 %v5458, %v5460
        %v5462 = vrot.slane %v5448, %v5461
        %v5463 = vcombine.high %v5455, %v5455
        %v5464 = vcombine.high %v5462, %v5462
        %v5466 = vunpack.c.l.s4 1966171168
        %v5467 = vunpack.c.0.s8 %v5466
        %v5468 = vlaneseq
        %v5469 = vshrl.u32 %v5468, 7
        %v5470 = vsub.s32 %v5467, %v5469
        %v5471 = vrot.slane %v5358, %v5470
        %v5472 = vcombine.high %v5471, %v5471
        %v5474 = vunpack.c.l.s4 1966171168
        %v5475 = vunpack.c.0.s8 %v5474
        %v5476 = vlaneseq
        %v5477 = vshrl.u32 %v5476, 7
        %v5478 = vsub.s32 %v5475, %v5477
        %v5479 = vrot.slane %v5471, %v5478
        %v5481 = vunpack.c.l.s4 1966171168
        %v5482 = vunpack.c.0.s8 %v5481
        %v5483 = vlaneseq
        %v5484 = vshrl.u32 %v5483, 7
        %v5485 = vsub.s32 %v5482, %v5484
        %v5486 = vrot.slane %v5472, %v5485
        %v5488 = vunpack.c.l.s4 1966171168
        %v5489 = vunpack.c.0.s8 %v5488
        %v5490 = vlaneseq
        %v5491 = vshrl.u32 %v5490, 7
        %v5492 = vsub.s32 %v5489, %v5491
        %v5493 = vrot.slane %v5359, %v5492
        %v5494 = vcombine.high %v5493, %v5493
        %v5496 = vunpack.c.l.s4 1966171168
        %v5497 = vunpack.c.0.s8 %v5496
        %v5498 = vlaneseq
        %v5499 = vshrl.u32 %v5498, 7
        %v5500 = vsub.s32 %v5497, %v5499
        %v5501 = vrot.slane %v5493, %v5500
        %v5503 = vunpack.c.l.s4 1966171168
        %v5504 = vunpack.c.0.s8 %v5503
        %v5505 = vlaneseq
        %v5506 = vshrl.u32 %v5505, 7
        %v5507 = vsub.s32 %v5504, %v5506
        %v5508 = vrot.slane %v5494, %v5507
        %v5509 = vcombine.high %v5501, %v5501
        %v5510 = vcombine.high %v5508, %v5508
        %v5512 = vunpack.c.l.s4 1966171168
        %v5513 = vunpack.c.0.s8 %v5512
        %v5514 = vlaneseq
        %v5515 = vshrl.u32 %v5514, 7
        %v5516 = vsub.s32 %v5513, %v5515
        %v5517 = vrot.slane %v5360, %v5516
        %v5518 = vcombine.high %v5517, %v5517
        %v5520 = vunpack.c.l.s4 1966171168
        %v5521 = vunpack.c.0.s8 %v5520
        %v5522 = vlaneseq
        %v5523 = vshrl.u32 %v5522, 7
        %v5524 = vsub.s32 %v5521, %v5523
        %v5525 = vrot.slane %v5517, %v5524
        %v5527 = vunpack.c.l.s4 1966171168
        %v5528 = vunpack.c.0.s8 %v5527
        %v5529 = vlaneseq
        %v5530 = vshrl.u32 %v5529, 7
        %v5531 = vsub.s32 %v5528, %v5530
        %v5532 = vrot.slane %v5518, %v5531
        %v5534 = vunpack.c.l.s4 1966171168
        %v5535 = vunpack.c.0.s8 %v5534
        %v5536 = vlaneseq
        %v5537 = vshrl.u32 %v5536, 7
        %v5538 = vsub.s32 %v5535, %v5537
        %v5539 = vrot.slane %v5361, %v5538
        %v5540 = vcombine.high %v5539, %v5539
        %v5542 = vunpack.c.l.s4 1966171168
        %v5543 = vunpack.c.0.s8 %v5542
        %v5544 = vlaneseq
        %v5545 = vshrl.u32 %v5544, 7
        %v5546 = vsub.s32 %v5543, %v5545
        %v5547 = vrot.slane %v5539, %v5546
        %v5549 = vunpack.c.l.s4 1966171168
        %v5550 = vunpack.c.0.s8 %v5549
        %v5551 = vlaneseq
        %v5552 = vshrl.u32 %v5551, 7
        %v5553 = vsub.s32 %v5550, %v5552
        %v5554 = vrot.slane %v5540, %v5553
        %v5555 = vcombine.high %v5547, %v5547
        %v5556 = vcombine.high %v5554, %v5554
        %v5558 = vunpack.c.l.s4 1966171168
        %v5559 = vunpack.c.0.s8 %v5558
        %v5560 = vlaneseq
        %v5561 = vshrl.u32 %v5560, 7
        %v5562 = vsub.s32 %v5559, %v5561
        %v5563 = vrot.slane %v5362, %v5562
        %v5564 = vcombine.high %v5563, %v5563
        %v5566 = vunpack.c.l.s4 1966171168
        %v5567 = vunpack.c.0.s8 %v5566
        %v5568 = vlaneseq
        %v5569 = vshrl.u32 %v5568, 7
        %v5570 = vsub.s32 %v5567, %v5569
        %v5571 = vrot.slane %v5563, %v5570
        %v5573 = vunpack.c.l.s4 1966171168
        %v5574 = vunpack.c.0.s8 %v5573
        %v5575 = vlaneseq
        %v5576 = vshrl.u32 %v5575, 7
        %v5577 = vsub.s32 %v5574, %v5576
        %v5578 = vrot.slane %v5564, %v5577
        %v5580 = vunpack.c.l.s4 1966171168
        %v5581 = vunpack.c.0.s8 %v5580
        %v5582 = vlaneseq
        %v5583 = vshrl.u32 %v5582, 7
        %v5584 = vsub.s32 %v5581, %v5583
        %v5585 = vrot.slane %v5363, %v5584
        %v5586 = vcombine.high %v5585, %v5585
        %v5588 = vunpack.c.l.s4 1966171168
        %v5589 = vunpack.c.0.s8 %v5588
        %v5590 = vlaneseq
        %v5591 = vshrl.u32 %v5590, 7
        %v5592 = vsub.s32 %v5589, %v5591
        %v5593 = vrot.slane %v5585, %v5592
        %v5595 = vunpack.c.l.s4 1966171168
        %v5596 = vunpack.c.0.s8 %v5595
        %v5597 = vlaneseq
        %v5598 = vshrl.u32 %v5597, 7
        %v5599 = vsub.s32 %v5596, %v5598
        %v5600 = vrot.slane %v5586, %v5599
        %v5601 = vcombine.high %v5593, %v5593
        %v5602 = vcombine.high %v5600, %v5600
        %v5604 = vunpack.c.l.s4 1966171168
        %v5605 = vunpack.c.0.s8 %v5604
        %v5606 = vlaneseq
        %v5607 = vshrl.u32 %v5606, 7
        %v5608 = vsub.s32 %v5605, %v5607
        %v5609 = vrot.slane %v5364, %v5608
        %v5610 = vcombine.high %v5609, %v5609
        %v5612 = vunpack.c.l.s4 1966171168
        %v5613 = vunpack.c.0.s8 %v5612
        %v5614 = vlaneseq
        %v5615 = vshrl.u32 %v5614, 7
        %v5616 = vsub.s32 %v5613, %v5615
        %v5617 = vrot.slane %v5609, %v5616
        %v5619 = vunpack.c.l.s4 1966171168
        %v5620 = vunpack.c.0.s8 %v5619
        %v5621 = vlaneseq
        %v5622 = vshrl.u32 %v5621, 7
        %v5623 = vsub.s32 %v5620, %v5622
        %v5624 = vrot.slane %v5610, %v5623
        %v5626 = vunpack.c.l.s4 1966171168
        %v5627 = vunpack.c.0.s8 %v5626
        %v5628 = vlaneseq
        %v5629 = vshrl.u32 %v5628, 7
        %v5630 = vsub.s32 %v5627, %v5629
        %v5631 = vrot.slane %v5365, %v5630
        %v5632 = vcombine.high %v5631, %v5631
        %v5634 = vunpack.c.l.s4 1966171168
        %v5635 = vunpack.c.0.s8 %v5634
        %v5636 = vlaneseq
        %v5637 = vshrl.u32 %v5636, 7
        %v5638 = vsub.s32 %v5635, %v5637
        %v5639 = vrot.slane %v5631, %v5638
        %v5641 = vunpack.c.l.s4 1966171168
        %v5642 = vunpack.c.0.s8 %v5641
        %v5643 = vlaneseq
        %v5644 = vshrl.u32 %v5643, 7
        %v5645 = vsub.s32 %v5642, %v5644
        %v5646 = vrot.slane %v5632, %v5645
        %v5647 = vcombine.high %v5639, %v5639
        %v5648 = vcombine.high %v5646, %v5646
        %v5650 = vunpack.c.l.s4 1966171168
        %v5651 = vunpack.c.0.s8 %v5650
        %v5652 = vlaneseq
        %v5653 = vshrl.u32 %v5652, 7
        %v5654 = vsub.s32 %v5651, %v5653
        %v5655 = vrot.slane %v5366, %v5654
        %v5656 = vcombine.high %v5655, %v5655
        %v5658 = vunpack.c.l.s4 1966171168
        %v5659 = vunpack.c.0.s8 %v5658
        %v5660 = vlaneseq
        %v5661 = vshrl.u32 %v5660, 7
        %v5662 = vsub.s32 %v5659, %v5661
        %v5663 = vrot.slane %v5655, %v5662
        %v5665 = vunpack.c.l.s4 1966171168
        %v5666 = vunpack.c.0.s8 %v5665
        %v5667 = vlaneseq
        %v5668 = vshrl.u32 %v5667, 7
        %v5669 = vsub.s32 %v5666, %v5668
        %v5670 = vrot.slane %v5656, %v5669
        %v5672 = vunpack.c.l.s4 1966171168
        %v5673 = vunpack.c.0.s8 %v5672
        %v5674 = vlaneseq
        %v5675 = vshrl.u32 %v5674, 7
        %v5676 = vsub.s32 %v5673, %v5675
        %v5677 = vrot.slane %v5367, %v5676
        %v5678 = vcombine.high %v5677, %v5677
        %v5680 = vunpack.c.l.s4 1966171168
        %v5681 = vunpack.c.0.s8 %v5680
        %v5682 = vlaneseq
        %v5683 = vshrl.u32 %v5682, 7
        %v5684 = vsub.s32 %v5681, %v5683
        %v5685 = vrot.slane %v5677, %v5684
        %v5687 = vunpack.c.l.s4 1966171168
        %v5688 = vunpack.c.0.s8 %v5687
        %v5689 = vlaneseq
        %v5690 = vshrl.u32 %v5689, 7
        %v5691 = vsub.s32 %v5688, %v5690
        %v5692 = vrot.slane %v5678, %v5691
        %v5693 = vcombine.high %v5685, %v5685
        %v5694 = vcombine.high %v5692, %v5692
        %v5696 = vunpack.c.l.s4 1966171168
        %v5697 = vunpack.c.0.s8 %v5696
        %v5698 = vlaneseq
        %v5699 = vshrl.u32 %v5698, 7
        %v5700 = vsub.s32 %v5697, %v5699
        %v5701 = vrot.slane %v5368, %v5700
        %v5702 = vcombine.high %v5701, %v5701
        %v5704 = vunpack.c.l.s4 1966171168
        %v5705 = vunpack.c.0.s8 %v5704
        %v5706 = vlaneseq
        %v5707 = vshrl.u32 %v5706, 7
        %v5708 = vsub.s32 %v5705, %v5707
        %v5709 = vrot.slane %v5701, %v5708
        %v5711 = vunpack.c.l.s4 1966171168
        %v5712 = vunpack.c.0.s8 %v5711
        %v5713 = vlaneseq
        %v5714 = vshrl.u32 %v5713, 7
        %v5715 = vsub.s32 %v5712, %v5714
        %v5716 = vrot.slane %v5702, %v5715
        %v5718 = vunpack.c.l.s4 1966171168
        %v5719 = vunpack.c.0.s8 %v5718
        %v5720 = vlaneseq
        %v5721 = vshrl.u32 %v5720, 7
        %v5722 = vsub.s32 %v5719, %v5721
        %v5723 = vrot.slane %v5369, %v5722
        %v5724 = vcombine.high %v5723, %v5723
        %v5726 = vunpack.c.l.s4 1966171168
        %v5727 = vunpack.c.0.s8 %v5726
        %v5728 = vlaneseq
        %v5729 = vshrl.u32 %v5728, 7
        %v5730 = vsub.s32 %v5727, %v5729
        %v5731 = vrot.slane %v5723, %v5730
        %v5733 = vunpack.c.l.s4 1966171168
        %v5734 = vunpack.c.0.s8 %v5733
        %v5735 = vlaneseq
        %v5736 = vshrl.u32 %v5735, 7
        %v5737 = vsub.s32 %v5734, %v5736
        %v5738 = vrot.slane %v5724, %v5737
        %v5739 = vcombine.high %v5731, %v5731
        %v5740 = vcombine.high %v5738, %v5738
        %v5742 = vunpack.c.l.s4 1966171168
        %v5743 = vunpack.c.0.s8 %v5742
        %v5744 = vlaneseq
        %v5745 = vshrl.u32 %v5744, 7
        %v5746 = vsub.s32 %v5743, %v5745
        %v5747 = vrot.slane %v5370, %v5746
        %v5748 = vcombine.high %v5747, %v5747
        %v5750 = vunpack.c.l.s4 1966171168
        %v5751 = vunpack.c.0.s8 %v5750
        %v5752 = vlaneseq
        %v5753 = vshrl.u32 %v5752, 7
        %v5754 = vsub.s32 %v5751, %v5753
        %v5755 = vrot.slane %v5747, %v5754
        %v5757 = vunpack.c.l.s4 1966171168
        %v5758 = vunpack.c.0.s8 %v5757
        %v5759 = vlaneseq
        %v5760 = vshrl.u32 %v5759, 7
        %v5761 = vsub.s32 %v5758, %v5760
        %v5762 = vrot.slane %v5748, %v5761
        %v5764 = vunpack.c.l.s4 1966171168
        %v5765 = vunpack.c.0.s8 %v5764
        %v5766 = vlaneseq
        %v5767 = vshrl.u32 %v5766, 7
        %v5768 = vsub.s32 %v5765, %v5767
        %v5769 = vrot.slane %v5371, %v5768
        %v5770 = vcombine.high %v5769, %v5769
        %v5772 = vunpack.c.l.s4 1966171168
        %v5773 = vunpack.c.0.s8 %v5772
        %v5774 = vlaneseq
        %v5775 = vshrl.u32 %v5774, 7
        %v5776 = vsub.s32 %v5773, %v5775
        %v5777 = vrot.slane %v5769, %v5776
        %v5779 = vunpack.c.l.s4 1966171168
        %v5780 = vunpack.c.0.s8 %v5779
        %v5781 = vlaneseq
        %v5782 = vshrl.u32 %v5781, 7
        %v5783 = vsub.s32 %v5780, %v5782
        %v5784 = vrot.slane %v5770, %v5783
        %v5785 = vcombine.high %v5777, %v5777
        %v5786 = vcombine.high %v5784, %v5784
        %v5788 = vunpack.c.l.s4 1966171168
        %v5789 = vunpack.c.0.s8 %v5788
        %v5790 = vlaneseq
        %v5791 = vshrl.u32 %v5790, 7
        %v5792 = vsub.s32 %v5789, %v5791
        %v5793 = vrot.slane %v5372, %v5792
        %v5794 = vcombine.high %v5793, %v5793
        %v5796 = vunpack.c.l.s4 1966171168
        %v5797 = vunpack.c.0.s8 %v5796
        %v5798 = vlaneseq
        %v5799 = vshrl.u32 %v5798, 7
        %v5800 = vsub.s32 %v5797, %v5799
        %v5801 = vrot.slane %v5793, %v5800
        %v5803 = vunpack.c.l.s4 1966171168
        %v5804 = vunpack.c.0.s8 %v5803
        %v5805 = vlaneseq
        %v5806 = vshrl.u32 %v5805, 7
        %v5807 = vsub.s32 %v5804, %v5806
        %v5808 = vrot.slane %v5794, %v5807
        %v5810 = vunpack.c.l.s4 1966171168
        %v5811 = vunpack.c.0.s8 %v5810
        %v5812 = vlaneseq
        %v5813 = vshrl.u32 %v5812, 7
        %v5814 = vsub.s32 %v5811, %v5813
        %v5815 = vrot.slane %v5373, %v5814
        %v5816 = vcombine.high %v5815, %v5815
        %v5818 = vunpack.c.l.s4 1966171168
        %v5819 = vunpack.c.0.s8 %v5818
        %v5820 = vlaneseq
        %v5821 = vshrl.u32 %v5820, 7
        %v5822 = vsub.s32 %v5819, %v5821
        %v5823 = vrot.slane %v5815, %v5822
        %v5825 = vunpack.c.l.s4 1966171168
        %v5826 = vunpack.c.0.s8 %v5825
        %v5827 = vlaneseq
        %v5828 = vshrl.u32 %v5827, 7
        %v5829 = vsub.s32 %v5826, %v5828
        %v5830 = vrot.slane %v5816, %v5829
        %v5831 = vcombine.high %v5823, %v5823
        %v5832 = vcombine.high %v5830, %v5830
        %v5834 = vunpack.c.l.s4 1966171168
        %v5835 = vunpack.c.0.s8 %v5834
        %v5836 = vlaneseq
        %v5837 = vshrl.u32 %v5836, 7
        %v5838 = vsub.s32 %v5835, %v5837
        %v5839 = vrot.slane %v5374, %v5838
        %v5840 = vcombine.high %v5839, %v5839
        %v5842 = vunpack.c.l.s4 1966171168
        %v5843 = vunpack.c.0.s8 %v5842
        %v5844 = vlaneseq
        %v5845 = vshrl.u32 %v5844, 7
        %v5846 = vsub.s32 %v5843, %v5845
        %v5847 = vrot.slane %v5839, %v5846
        %v5849 = vunpack.c.l.s4 1966171168
        %v5850 = vunpack.c.0.s8 %v5849
        %v5851 = vlaneseq
        %v5852 = vshrl.u32 %v5851, 7
        %v5853 = vsub.s32 %v5850, %v5852
        %v5854 = vrot.slane %v5840, %v5853
        %v5855 = vcombine.low %v5416, %v5418
        %v5856 = vcombine.low %v5417, %v5433
        %v5858 = vunpack.c.l.s4 1935823168
        %v5859 = vunpack.c.0.s8 %v5858
        %v5860 = vlaneseq
        %v5861 = vshrl.u32 %v5860, 7
        %v5862 = vsub.s32 %v5859, %v5861
        %v5863 = vrot.slane %v5855, %v5862
        %v5865 = vunpack.c.l.s4 1935823168
        %v5866 = vunpack.c.0.s8 %v5865
        %v5867 = vlaneseq
        %v5868 = vshrl.u32 %v5867, 7
        %v5869 = vsub.s32 %v5866, %v5868
        %v5870 = vrot.slane %v5856, %v5869
        %v5871 = vcombine.low %v5863, %v5870
        %v5873 = vunpack.c.l.s4 1935823168
        %v5874 = vunpack.c.0.s8 %v5873
        %v5875 = vlaneseq
        %v5876 = vshrl.u32 %v5875, 7
        %v5877 = vsub.s32 %v5874, %v5876
        %v5878 = vrot.slane %v5871, %v5877
        %v5879 = vcombine.low %v5440, %v5463
        %v5880 = vcombine.low %v5462, %v5464
        %v5882 = vunpack.c.l.s4 1935823168
        %v5883 = vunpack.c.0.s8 %v5882
        %v5884 = vlaneseq
        %v5885 = vshrl.u32 %v5884, 7
        %v5886 = vsub.s32 %v5883, %v5885
        %v5887 = vrot.slane %v5879, %v5886
        %v5889 = vunpack.c.l.s4 1935823168
        %v5890 = vunpack.c.0.s8 %v5889
        %v5891 = vlaneseq
        %v5892 = vshrl.u32 %v5891, 7
        %v5893 = vsub.s32 %v5890, %v5892
        %v5894 = vrot.slane %v5880, %v5893
        %v5895 = vcombine.low %v5887, %v5894
        %v5897 = vunpack.c.l.s4 1935823168
        %v5898 = vunpack.c.0.s8 %v5897
        %v5899 = vlaneseq
        %v5900 = vshrl.u32 %v5899, 7
        %v5901 = vsub.s32 %v5898, %v5900
        %v5902 = vrot.slane %v5895, %v5901
        %v5903 = vcombine.low %v5479, %v5508
        %v5904 = vcombine.low %v5486, %v5509
        %v5906 = vunpack.c.l.s4 1935823168
        %v5907 = vunpack.c.0.s8 %v5906
        %v5908 = vlaneseq
        %v5909 = vshrl.u32 %v5908, 7
        %v5910 = vsub.s32 %v5907, %v5909
        %v5911 = vrot.slane %v5903, %v5910
        %v5913 = vunpack.c.l.s4 1935823168
        %v5914 = vunpack.c.0.s8 %v5913
        %v5915 = vlaneseq
        %v5916 = vshrl.u32 %v5915, 7
        %v5917 = vsub.s32 %v5914, %v5916
        %v5918 = vrot.slane %v5904, %v5917
        %v5919 = vcombine.low %v5911, %v5918
        %v5921 = vunpack.c.l.s4 1935823168
        %v5922 = vunpack.c.0.s8 %v5921
        %v5923 = vlaneseq
        %v5924 = vshrl.u32 %v5923, 7
        %v5925 = vsub.s32 %v5922, %v5924
        %v5926 = vrot.slane %v5919, %v5925
        %v5927 = vcombine.low %v5510, %v5532
        %v5928 = vcombine.low %v5525, %v5554
        %v5930 = vunpack.c.l.s4 1935823168
        %v5931 = vunpack.c.0.s8 %v5930
        %v5932 = vlaneseq
        %v5933 = vshrl.u32 %v5932, 7
        %v5934 = vsub.s32 %v5931, %v5933
        %v5935 = vrot.slane %v5927, %v5934
        %v5937 = vunpack.c.l.s4 1935823168
        %v5938 = vunpack.c.0.s8 %v5937
        %v5939 = vlaneseq
        %v5940 = vshrl.u32 %v5939, 7
        %v5941 = vsub.s32 %v5938, %v5940
        %v5942 = vrot.slane %v5928, %v5941
        %v5943 = vcombine.low %v5935, %v5942
        %v5945 = vunpack.c.l.s4 1935823168
        %v5946 = vunpack.c.0.s8 %v5945
        %v5947 = vlaneseq
        %v5948 = vshrl.u32 %v5947, 7
        %v5949 = vsub.s32 %v5946, %v5948
        %v5950 = vrot.slane %v5943, %v5949
        %v5951 = vcombine.low %v5555, %v5571
        %v5952 = vcombine.low %v5556, %v5578
        %v5954 = vunpack.c.l.s4 1935823168
        %v5955 = vunpack.c.0.s8 %v5954
        %v5956 = vlaneseq
        %v5957 = vshrl.u32 %v5956, 7
        %v5958 = vsub.s32 %v5955, %v5957
        %v5959 = vrot.slane %v5951, %v5958
        %v5961 = vunpack.c.l.s4 1935823168
        %v5962 = vunpack.c.0.s8 %v5961
        %v5963 = vlaneseq
        %v5964 = vshrl.u32 %v5963, 7
        %v5965 = vsub.s32 %v5962, %v5964
        %v5966 = vrot.slane %v5952, %v5965
        %v5967 = vcombine.low %v5959, %v5966
        %v5969 = vunpack.c.l.s4 1935823168
        %v5970 = vunpack.c.0.s8 %v5969
        %v5971 = vlaneseq
        %v5972 = vshrl.u32 %v5971, 7
        %v5973 = vsub.s32 %v5970, %v5972
        %v5974 = vrot.slane %v5967, %v5973
        %v5975 = vcombine.low %v5600, %v5602
        %v5976 = vcombine.low %v5601, %v5617
        %v5978 = vunpack.c.l.s4 1935823168
        %v5979 = vunpack.c.0.s8 %v5978
        %v5980 = vlaneseq
        %v5981 = vshrl.u32 %v5980, 7
        %v5982 = vsub.s32 %v5979, %v5981
        %v5983 = vrot.slane %v5975, %v5982
        %v5985 = vunpack.c.l.s4 1935823168
        %v5986 = vunpack.c.0.s8 %v5985
        %v5987 = vlaneseq
        %v5988 = vshrl.u32 %v5987, 7
        %v5989 = vsub.s32 %v5986, %v5988
        %v5990 = vrot.slane %v5976, %v5989
        %v5991 = vcombine.low %v5983, %v5990
        %v5993 = vunpack.c.l.s4 1935823168
        %v5994 = vunpack.c.0.s8 %v5993
        %v5995 = vlaneseq
        %v5996 = vshrl.u32 %v5995, 7
        %v5997 = vsub.s32 %v5994, %v5996
        %v5998 = vrot.slane %v5991, %v5997
        %v5999 = vcombine.low %v5624, %v5647
        %v6000 = vcombine.low %v5646, %v5648
        %v6002 = vunpack.c.l.s4 1935823168
        %v6003 = vunpack.c.0.s8 %v6002
        %v6004 = vlaneseq
        %v6005 = vshrl.u32 %v6004, 7
        %v6006 = vsub.s32 %v6003, %v6005
        %v6007 = vrot.slane %v5999, %v6006
        %v6009 = vunpack.c.l.s4 1935823168
        %v6010 = vunpack.c.0.s8 %v6009
        %v6011 = vlaneseq
        %v6012 = vshrl.u32 %v6011, 7
        %v6013 = vsub.s32 %v6010, %v6012
        %v6014 = vrot.slane %v6000, %v6013
        %v6015 = vcombine.low %v6007, %v6014
        %v6017 = vunpack.c.l.s4 1935823168
        %v6018 = vunpack.c.0.s8 %v6017
        %v6019 = vlaneseq
        %v6020 = vshrl.u32 %v6019, 7
        %v6021 = vsub.s32 %v6018, %v6020
        %v6022 = vrot.slane %v6015, %v6021
        %v6023 = vcombine.low %v5663, %v5692
        %v6024 = vcombine.low %v5670, %v5693
        %v6026 = vunpack.c.l.s4 1935823168
        %v6027 = vunpack.c.0.s8 %v6026
        %v6028 = vlaneseq
        %v6029 = vshrl.u32 %v6028, 7
        %v6030 = vsub.s32 %v6027, %v6029
        %v6031 = vrot.slane %v6023, %v6030
        %v6033 = vunpack.c.l.s4 1935823168
        %v6034 = vunpack.c.0.s8 %v6033
        %v6035 = vlaneseq
        %v6036 = vshrl.u32 %v6035, 7
        %v6037 = vsub.s32 %v6034, %v6036
        %v6038 = vrot.slane %v6024, %v6037
        %v6039 = vcombine.low %v6031, %v6038
        %v6041 = vunpack.c.l.s4 1935823168
        %v6042 = vunpack.c.0.s8 %v6041
        %v6043 = vlaneseq
        %v6044 = vshrl.u32 %v6043, 7
        %v6045 = vsub.s32 %v6042, %v6044
        %v6046 = vrot.slane %v6039, %v6045
        %v6047 = vcombine.low %v5694, %v5716
        %v6048 = vcombine.low %v5709, %v5738
        %v6050 = vunpack.c.l.s4 1935823168
        %v6051 = vunpack.c.0.s8 %v6050
        %v6052 = vlaneseq
        %v6053 = vshrl.u32 %v6052, 7
        %v6054 = vsub.s32 %v6051, %v6053
        %v6055 = vrot.slane %v6047, %v6054
        %v6057 = vunpack.c.l.s4 1935823168
        %v6058 = vunpack.c.0.s8 %v6057
        %v6059 = vlaneseq
        %v6060 = vshrl.u32 %v6059, 7
        %v6061 = vsub.s32 %v6058, %v6060
        %v6062 = vrot.slane %v6048, %v6061
        %v6063 = vcombine.low %v6055, %v6062
        %v6065 = vunpack.c.l.s4 1935823168
        %v6066 = vunpack.c.0.s8 %v6065
        %v6067 = vlaneseq
        %v6068 = vshrl.u32 %v6067, 7
        %v6069 = vsub.s32 %v6066, %v6068
        %v6070 = vrot.slane %v6063, %v6069
        %v6071 = vcombine.low %v5739, %v5755
        %v6072 = vcombine.low %v5740, %v5762
        %v6074 = vunpack.c.l.s4 1935823168
        %v6075 = vunpack.c.0.s8 %v6074
        %v6076 = vlaneseq
        %v6077 = vshrl.u32 %v6076, 7
        %v6078 = vsub.s32 %v6075, %v6077
        %v6079 = vrot.slane %v6071, %v6078
        %v6081 = vunpack.c.l.s4 1935823168
        %v6082 = vunpack.c.0.s8 %v6081
        %v6083 = vlaneseq
        %v6084 = vshrl.u32 %v6083, 7
        %v6085 = vsub.s32 %v6082, %v6084
        %v6086 = vrot.slane %v6072, %v6085
        %v6087 = vcombine.low %v6079, %v6086
        %v6089 = vunpack.c.l.s4 1935823168
        %v6090 = vunpack.c.0.s8 %v6089
        %v6091 = vlaneseq
        %v6092 = vshrl.u32 %v6091, 7
        %v6093 = vsub.s32 %v6090, %v6092
        %v6094 = vrot.slane %v6087, %v6093
        %v6095 = vcombine.low %v5784, %v5786
        %v6096 = vcombine.low %v5785, %v5801
        %v6098 = vunpack.c.l.s4 1935823168
        %v6099 = vunpack.c.0.s8 %v6098
        %v6100 = vlaneseq
        %v6101 = vshrl.u32 %v6100, 7
        %v6102 = vsub.s32 %v6099, %v6101
        %v6103 = vrot.slane %v6095, %v6102
        %v6105 = vunpack.c.l.s4 1935823168
        %v6106 = vunpack.c.0.s8 %v6105
        %v6107 = vlaneseq
        %v6108 = vshrl.u32 %v6107, 7
        %v6109 = vsub.s32 %v6106, %v6108
        %v6110 = vrot.slane %v6096, %v6109
        %v6111 = vcombine.low %v6103, %v6110
        %v6113 = vunpack.c.l.s4 1935823168
        %v6114 = vunpack.c.0.s8 %v6113
        %v6115 = vlaneseq
        %v6116 = vshrl.u32 %v6115, 7
        %v6117 = vsub.s32 %v6114, %v6116
        %v6118 = vrot.slane %v6111, %v6117
        %v6119 = vcombine.low %v5808, %v5831
        %v6120 = vcombine.low %v5830, %v5832
        %v6122 = vunpack.c.l.s4 1935823168
        %v6123 = vunpack.c.0.s8 %v6122
        %v6124 = vlaneseq
        %v6125 = vshrl.u32 %v6124, 7
        %v6126 = vsub.s32 %v6123, %v6125
        %v6127 = vrot.slane %v6119, %v6126
        %v6129 = vunpack.c.l.s4 1935823168
        %v6130 = vunpack.c.0.s8 %v6129
        %v6131 = vlaneseq
        %v6132 = vshrl.u32 %v6131, 7
        %v6133 = vsub.s32 %v6130, %v6132
        %v6134 = vrot.slane %v6120, %v6133
        %v6135 = vcombine.low %v6127, %v6134
        %v6137 = vunpack.c.l.s4 1935823168
        %v6138 = vunpack.c.0.s8 %v6137
        %v6139 = vlaneseq
        %v6140 = vshrl.u32 %v6139, 7
        %v6141 = vsub.s32 %v6138, %v6140
        %v6142 = vrot.slane %v6135, %v6141
        %v6144 = vunpack.c.l.s4 1935823168
        %v6145 = vunpack.c.0.s8 %v6144
        %v6146 = vlaneseq
        %v6147 = vshrl.u32 %v6146, 7
        %v6148 = vsub.s32 %v6145, %v6147
        %v6149 = vrot.slane %v5847, %v6148
        %v6151 = vunpack.c.l.s4 1935823168
        %v6152 = vunpack.c.0.s8 %v6151
        %v6153 = vlaneseq
        %v6154 = vshrl.u32 %v6153, 7
        %v6155 = vsub.s32 %v6152, %v6154
        %v6156 = vrot.slane %v5854, %v6155
        %v6157 = vcombine.low %v6149, %v6156
        %v6159 = vunpack.c.l.s4 1935823168
        %v6160 = vunpack.c.0.s8 %v6159
        %v6161 = vlaneseq
        %v6162 = vshrl.u32 %v6161, 7
        %v6163 = vsub.s32 %v6160, %v6162
        %v6164 = vrot.slane %v6157, %v6163
        %6178 = vst [vmem:[#allocation4 + $0x14] sm:$0xf] %v5878
        %6179 = vst [vmem:[#allocation4 + $0x38] sm:$0xf] %v5902
        %6180 = vst [vmem:[#allocation4 + $0x5c] sm:$0xf] %v5926
        %6181 = vst [vmem:[#allocation4 + $0x80] sm:$0xf] %v5950
        %6182 = vst [vmem:[#allocation4 + $0xa4] sm:$0xf] %v5974
        %6183 = vst [vmem:[#allocation4 + $0xc8] sm:$0xf] %v5998
        %6184 = vst [vmem:[#allocation4 + $0xec] sm:$0xf] %v6022
        %6185 = vst [vmem:[#allocation4 + $0x110] sm:$0xf] %v6046
        %6186 = vst [vmem:[#allocation4 + $0x134] sm:$0xf] %v6070
        %6187 = vst [vmem:[#allocation4 + $0x158] sm:$0xf] %v6094
        %6188 = vst [vmem:[#allocation4 + $0x17c] sm:$0xf] %v6118
        %6189 = vst [vmem:[#allocation4 + $0x1a0] sm:$0xf] %v6142
        %6190 = vst [vmem:[#allocation4 + $0x1c4] sm:$0x3] %v6164
        %s6191 = scalar_lea.vmem [#allocation2], 16
        %v6192 = vld [vmem:[%s6191] sm:$0xf]
        %v6193 = vld [vmem:[%s6191 + $0x4] sm:$0x1]
        %v6194 = vld [vmem:[%s6191 + $0x8] sm:$0xf]
        %v6195 = vld [vmem:[%s6191 + $0xc] sm:$0x1]
        %v6196 = vld [vmem:[%s6191 + $0x10] sm:$0xf]
        %v6197 = vld [vmem:[%s6191 + $0x14] sm:$0x1]
        %v6198 = vld [vmem:[%s6191 + $0x18] sm:$0xf]
        %v6199 = vld [vmem:[%s6191 + $0x1c] sm:$0x1]
        %v6200 = vld [vmem:[%s6191 + $0x20] sm:$0xf]
        %v6201 = vld [vmem:[%s6191 + $0x24] sm:$0x1]
        %v6202 = vld [vmem:[%s6191 + $0x28] sm:$0xf]
        %v6203 = vld [vmem:[%s6191 + $0x2c] sm:$0x1]
        %v6204 = vld [vmem:[%s6191 + $0x30] sm:$0xf]
        %v6205 = vld [vmem:[%s6191 + $0x34] sm:$0x1]
        %v6206 = vld [vmem:[%s6191 + $0x38] sm:$0xf]
        %v6207 = vld [vmem:[%s6191 + $0x3c] sm:$0x1]
        %v6208 = vld [vmem:[%s6191 + $0x40] sm:$0xf]
        %v6209 = vld [vmem:[%s6191 + $0x44] sm:$0x1]
        %v6210 = vld [vmem:[%s6191 + $0x48] sm:$0xf]
        %v6211 = vld [vmem:[%s6191 + $0x4c] sm:$0x1]
        %v6233 = vunpack.c.l.s4 1966171168
        %v6234 = vunpack.c.0.s8 %v6233
        %v6235 = vlaneseq
        %v6236 = vshrl.u32 %v6235, 7
        %v6237 = vsub.s32 %v6234, %v6236
        %v6238 = vrot.slane %v6192, %v6237
        %v6239 = vcombine.high %v6238, %v6238
        %v6241 = vunpack.c.l.s4 1966171168
        %v6242 = vunpack.c.0.s8 %v6241
        %v6243 = vlaneseq
        %v6244 = vshrl.u32 %v6243, 7
        %v6245 = vsub.s32 %v6242, %v6244
        %v6246 = vrot.slane %v6238, %v6245
        %v6248 = vunpack.c.l.s4 1966171168
        %v6249 = vunpack.c.0.s8 %v6248
        %v6250 = vlaneseq
        %v6251 = vshrl.u32 %v6250, 7
        %v6252 = vsub.s32 %v6249, %v6251
        %v6253 = vrot.slane %v6239, %v6252
        %v6254 = vcombine.high %v6246, %v6246
        %v6255 = vcombine.high %v6253, %v6253
        %v6257 = vunpack.c.l.s4 1966171168
        %v6258 = vunpack.c.0.s8 %v6257
        %v6259 = vlaneseq
        %v6260 = vshrl.u32 %v6259, 7
        %v6261 = vsub.s32 %v6258, %v6260
        %v6262 = vrot.slane %v6193, %v6261
        %v6264 = vunpack.c.l.s4 1966171168
        %v6265 = vunpack.c.0.s8 %v6264
        %v6266 = vlaneseq
        %v6267 = vshrl.u32 %v6266, 7
        %v6268 = vsub.s32 %v6265, %v6267
        %v6269 = vrot.slane %v6262, %v6268
        %v6271 = vunpack.c.l.s4 1966171168
        %v6272 = vunpack.c.0.s8 %v6271
        %v6273 = vlaneseq
        %v6274 = vshrl.u32 %v6273, 7
        %v6275 = vsub.s32 %v6272, %v6274
        %v6276 = vrot.slane %v6194, %v6275
        %v6277 = vcombine.high %v6276, %v6276
        %v6279 = vunpack.c.l.s4 1966171168
        %v6280 = vunpack.c.0.s8 %v6279
        %v6281 = vlaneseq
        %v6282 = vshrl.u32 %v6281, 7
        %v6283 = vsub.s32 %v6280, %v6282
        %v6284 = vrot.slane %v6276, %v6283
        %v6286 = vunpack.c.l.s4 1966171168
        %v6287 = vunpack.c.0.s8 %v6286
        %v6288 = vlaneseq
        %v6289 = vshrl.u32 %v6288, 7
        %v6290 = vsub.s32 %v6287, %v6289
        %v6291 = vrot.slane %v6277, %v6290
        %v6292 = vcombine.high %v6284, %v6284
        %v6293 = vcombine.high %v6291, %v6291
        %v6295 = vunpack.c.l.s4 1966171168
        %v6296 = vunpack.c.0.s8 %v6295
        %v6297 = vlaneseq
        %v6298 = vshrl.u32 %v6297, 7
        %v6299 = vsub.s32 %v6296, %v6298
        %v6300 = vrot.slane %v6195, %v6299
        %v6302 = vunpack.c.l.s4 1966171168
        %v6303 = vunpack.c.0.s8 %v6302
        %v6304 = vlaneseq
        %v6305 = vshrl.u32 %v6304, 7
        %v6306 = vsub.s32 %v6303, %v6305
        %v6307 = vrot.slane %v6300, %v6306
        %v6309 = vunpack.c.l.s4 1966171168
        %v6310 = vunpack.c.0.s8 %v6309
        %v6311 = vlaneseq
        %v6312 = vshrl.u32 %v6311, 7
        %v6313 = vsub.s32 %v6310, %v6312
        %v6314 = vrot.slane %v6196, %v6313
        %v6315 = vcombine.high %v6314, %v6314
        %v6317 = vunpack.c.l.s4 1966171168
        %v6318 = vunpack.c.0.s8 %v6317
        %v6319 = vlaneseq
        %v6320 = vshrl.u32 %v6319, 7
        %v6321 = vsub.s32 %v6318, %v6320
        %v6322 = vrot.slane %v6314, %v6321
        %v6324 = vunpack.c.l.s4 1966171168
        %v6325 = vunpack.c.0.s8 %v6324
        %v6326 = vlaneseq
        %v6327 = vshrl.u32 %v6326, 7
        %v6328 = vsub.s32 %v6325, %v6327
        %v6329 = vrot.slane %v6315, %v6328
        %v6330 = vcombine.high %v6322, %v6322
        %v6331 = vcombine.high %v6329, %v6329
        %v6333 = vunpack.c.l.s4 1966171168
        %v6334 = vunpack.c.0.s8 %v6333
        %v6335 = vlaneseq
        %v6336 = vshrl.u32 %v6335, 7
        %v6337 = vsub.s32 %v6334, %v6336
        %v6338 = vrot.slane %v6197, %v6337
        %v6340 = vunpack.c.l.s4 1966171168
        %v6341 = vunpack.c.0.s8 %v6340
        %v6342 = vlaneseq
        %v6343 = vshrl.u32 %v6342, 7
        %v6344 = vsub.s32 %v6341, %v6343
        %v6345 = vrot.slane %v6338, %v6344
        %v6347 = vunpack.c.l.s4 1966171168
        %v6348 = vunpack.c.0.s8 %v6347
        %v6349 = vlaneseq
        %v6350 = vshrl.u32 %v6349, 7
        %v6351 = vsub.s32 %v6348, %v6350
        %v6352 = vrot.slane %v6198, %v6351
        %v6353 = vcombine.high %v6352, %v6352
        %v6355 = vunpack.c.l.s4 1966171168
        %v6356 = vunpack.c.0.s8 %v6355
        %v6357 = vlaneseq
        %v6358 = vshrl.u32 %v6357, 7
        %v6359 = vsub.s32 %v6356, %v6358
        %v6360 = vrot.slane %v6352, %v6359
        %v6362 = vunpack.c.l.s4 1966171168
        %v6363 = vunpack.c.0.s8 %v6362
        %v6364 = vlaneseq
        %v6365 = vshrl.u32 %v6364, 7
        %v6366 = vsub.s32 %v6363, %v6365
        %v6367 = vrot.slane %v6353, %v6366
        %v6368 = vcombine.high %v6360, %v6360
        %v6369 = vcombine.high %v6367, %v6367
        %v6371 = vunpack.c.l.s4 1966171168
        %v6372 = vunpack.c.0.s8 %v6371
        %v6373 = vlaneseq
        %v6374 = vshrl.u32 %v6373, 7
        %v6375 = vsub.s32 %v6372, %v6374
        %v6376 = vrot.slane %v6199, %v6375
        %v6378 = vunpack.c.l.s4 1966171168
        %v6379 = vunpack.c.0.s8 %v6378
        %v6380 = vlaneseq
        %v6381 = vshrl.u32 %v6380, 7
        %v6382 = vsub.s32 %v6379, %v6381
        %v6383 = vrot.slane %v6376, %v6382
        %v6385 = vunpack.c.l.s4 1966171168
        %v6386 = vunpack.c.0.s8 %v6385
        %v6387 = vlaneseq
        %v6388 = vshrl.u32 %v6387, 7
        %v6389 = vsub.s32 %v6386, %v6388
        %v6390 = vrot.slane %v6200, %v6389
        %v6391 = vcombine.high %v6390, %v6390
        %v6393 = vunpack.c.l.s4 1966171168
        %v6394 = vunpack.c.0.s8 %v6393
        %v6395 = vlaneseq
        %v6396 = vshrl.u32 %v6395, 7
        %v6397 = vsub.s32 %v6394, %v6396
        %v6398 = vrot.slane %v6390, %v6397
        %v6400 = vunpack.c.l.s4 1966171168
        %v6401 = vunpack.c.0.s8 %v6400
        %v6402 = vlaneseq
        %v6403 = vshrl.u32 %v6402, 7
        %v6404 = vsub.s32 %v6401, %v6403
        %v6405 = vrot.slane %v6391, %v6404
        %v6406 = vcombine.high %v6398, %v6398
        %v6407 = vcombine.high %v6405, %v6405
        %v6409 = vunpack.c.l.s4 1966171168
        %v6410 = vunpack.c.0.s8 %v6409
        %v6411 = vlaneseq
        %v6412 = vshrl.u32 %v6411, 7
        %v6413 = vsub.s32 %v6410, %v6412
        %v6414 = vrot.slane %v6201, %v6413
        %v6416 = vunpack.c.l.s4 1966171168
        %v6417 = vunpack.c.0.s8 %v6416
        %v6418 = vlaneseq
        %v6419 = vshrl.u32 %v6418, 7
        %v6420 = vsub.s32 %v6417, %v6419
        %v6421 = vrot.slane %v6414, %v6420
        %v6423 = vunpack.c.l.s4 1966171168
        %v6424 = vunpack.c.0.s8 %v6423
        %v6425 = vlaneseq
        %v6426 = vshrl.u32 %v6425, 7
        %v6427 = vsub.s32 %v6424, %v6426
        %v6428 = vrot.slane %v6202, %v6427
        %v6429 = vcombine.high %v6428, %v6428
        %v6431 = vunpack.c.l.s4 1966171168
        %v6432 = vunpack.c.0.s8 %v6431
        %v6433 = vlaneseq
        %v6434 = vshrl.u32 %v6433, 7
        %v6435 = vsub.s32 %v6432, %v6434
        %v6436 = vrot.slane %v6428, %v6435
        %v6438 = vunpack.c.l.s4 1966171168
        %v6439 = vunpack.c.0.s8 %v6438
        %v6440 = vlaneseq
        %v6441 = vshrl.u32 %v6440, 7
        %v6442 = vsub.s32 %v6439, %v6441
        %v6443 = vrot.slane %v6429, %v6442
        %v6444 = vcombine.high %v6436, %v6436
        %v6445 = vcombine.high %v6443, %v6443
        %v6447 = vunpack.c.l.s4 1966171168
        %v6448 = vunpack.c.0.s8 %v6447
        %v6449 = vlaneseq
        %v6450 = vshrl.u32 %v6449, 7
        %v6451 = vsub.s32 %v6448, %v6450
        %v6452 = vrot.slane %v6203, %v6451
        %v6454 = vunpack.c.l.s4 1966171168
        %v6455 = vunpack.c.0.s8 %v6454
        %v6456 = vlaneseq
        %v6457 = vshrl.u32 %v6456, 7
        %v6458 = vsub.s32 %v6455, %v6457
        %v6459 = vrot.slane %v6452, %v6458
        %v6461 = vunpack.c.l.s4 1966171168
        %v6462 = vunpack.c.0.s8 %v6461
        %v6463 = vlaneseq
        %v6464 = vshrl.u32 %v6463, 7
        %v6465 = vsub.s32 %v6462, %v6464
        %v6466 = vrot.slane %v6204, %v6465
        %v6467 = vcombine.high %v6466, %v6466
        %v6469 = vunpack.c.l.s4 1966171168
        %v6470 = vunpack.c.0.s8 %v6469
        %v6471 = vlaneseq
        %v6472 = vshrl.u32 %v6471, 7
        %v6473 = vsub.s32 %v6470, %v6472
        %v6474 = vrot.slane %v6466, %v6473
        %v6476 = vunpack.c.l.s4 1966171168
        %v6477 = vunpack.c.0.s8 %v6476
        %v6478 = vlaneseq
        %v6479 = vshrl.u32 %v6478, 7
        %v6480 = vsub.s32 %v6477, %v6479
        %v6481 = vrot.slane %v6467, %v6480
        %v6482 = vcombine.high %v6474, %v6474
        %v6483 = vcombine.high %v6481, %v6481
        %v6485 = vunpack.c.l.s4 1966171168
        %v6486 = vunpack.c.0.s8 %v6485
        %v6487 = vlaneseq
        %v6488 = vshrl.u32 %v6487, 7
        %v6489 = vsub.s32 %v6486, %v6488
        %v6490 = vrot.slane %v6205, %v6489
        %v6492 = vunpack.c.l.s4 1966171168
        %v6493 = vunpack.c.0.s8 %v6492
        %v6494 = vlaneseq
        %v6495 = vshrl.u32 %v6494, 7
        %v6496 = vsub.s32 %v6493, %v6495
        %v6497 = vrot.slane %v6490, %v6496
        %v6499 = vunpack.c.l.s4 1966171168
        %v6500 = vunpack.c.0.s8 %v6499
        %v6501 = vlaneseq
        %v6502 = vshrl.u32 %v6501, 7
        %v6503 = vsub.s32 %v6500, %v6502
        %v6504 = vrot.slane %v6206, %v6503
        %v6505 = vcombine.high %v6504, %v6504
        %v6507 = vunpack.c.l.s4 1966171168
        %v6508 = vunpack.c.0.s8 %v6507
        %v6509 = vlaneseq
        %v6510 = vshrl.u32 %v6509, 7
        %v6511 = vsub.s32 %v6508, %v6510
        %v6512 = vrot.slane %v6504, %v6511
        %v6514 = vunpack.c.l.s4 1966171168
        %v6515 = vunpack.c.0.s8 %v6514
        %v6516 = vlaneseq
        %v6517 = vshrl.u32 %v6516, 7
        %v6518 = vsub.s32 %v6515, %v6517
        %v6519 = vrot.slane %v6505, %v6518
        %v6520 = vcombine.high %v6512, %v6512
        %v6521 = vcombine.high %v6519, %v6519
        %v6523 = vunpack.c.l.s4 1966171168
        %v6524 = vunpack.c.0.s8 %v6523
        %v6525 = vlaneseq
        %v6526 = vshrl.u32 %v6525, 7
        %v6527 = vsub.s32 %v6524, %v6526
        %v6528 = vrot.slane %v6207, %v6527
        %v6530 = vunpack.c.l.s4 1966171168
        %v6531 = vunpack.c.0.s8 %v6530
        %v6532 = vlaneseq
        %v6533 = vshrl.u32 %v6532, 7
        %v6534 = vsub.s32 %v6531, %v6533
        %v6535 = vrot.slane %v6528, %v6534
        %v6537 = vunpack.c.l.s4 1966171168
        %v6538 = vunpack.c.0.s8 %v6537
        %v6539 = vlaneseq
        %v6540 = vshrl.u32 %v6539, 7
        %v6541 = vsub.s32 %v6538, %v6540
        %v6542 = vrot.slane %v6208, %v6541
        %v6543 = vcombine.high %v6542, %v6542
        %v6545 = vunpack.c.l.s4 1966171168
        %v6546 = vunpack.c.0.s8 %v6545
        %v6547 = vlaneseq
        %v6548 = vshrl.u32 %v6547, 7
        %v6549 = vsub.s32 %v6546, %v6548
        %v6550 = vrot.slane %v6542, %v6549
        %v6552 = vunpack.c.l.s4 1966171168
        %v6553 = vunpack.c.0.s8 %v6552
        %v6554 = vlaneseq
        %v6555 = vshrl.u32 %v6554, 7
        %v6556 = vsub.s32 %v6553, %v6555
        %v6557 = vrot.slane %v6543, %v6556
        %v6558 = vcombine.high %v6550, %v6550
        %v6559 = vcombine.high %v6557, %v6557
        %v6561 = vunpack.c.l.s4 1966171168
        %v6562 = vunpack.c.0.s8 %v6561
        %v6563 = vlaneseq
        %v6564 = vshrl.u32 %v6563, 7
        %v6565 = vsub.s32 %v6562, %v6564
        %v6566 = vrot.slane %v6209, %v6565
        %v6568 = vunpack.c.l.s4 1966171168
        %v6569 = vunpack.c.0.s8 %v6568
        %v6570 = vlaneseq
        %v6571 = vshrl.u32 %v6570, 7
        %v6572 = vsub.s32 %v6569, %v6571
        %v6573 = vrot.slane %v6566, %v6572
        %v6575 = vunpack.c.l.s4 1966171168
        %v6576 = vunpack.c.0.s8 %v6575
        %v6577 = vlaneseq
        %v6578 = vshrl.u32 %v6577, 7
        %v6579 = vsub.s32 %v6576, %v6578
        %v6580 = vrot.slane %v6210, %v6579
        %v6581 = vcombine.high %v6580, %v6580
        %v6583 = vunpack.c.l.s4 1966171168
        %v6584 = vunpack.c.0.s8 %v6583
        %v6585 = vlaneseq
        %v6586 = vshrl.u32 %v6585, 7
        %v6587 = vsub.s32 %v6584, %v6586
        %v6588 = vrot.slane %v6580, %v6587
        %v6590 = vunpack.c.l.s4 1966171168
        %v6591 = vunpack.c.0.s8 %v6590
        %v6592 = vlaneseq
        %v6593 = vshrl.u32 %v6592, 7
        %v6594 = vsub.s32 %v6591, %v6593
        %v6595 = vrot.slane %v6581, %v6594
        %v6596 = vcombine.high %v6588, %v6588
        %v6597 = vcombine.high %v6595, %v6595
        %v6599 = vunpack.c.l.s4 1966171168
        %v6600 = vunpack.c.0.s8 %v6599
        %v6601 = vlaneseq
        %v6602 = vshrl.u32 %v6601, 7
        %v6603 = vsub.s32 %v6600, %v6602
        %v6604 = vrot.slane %v6211, %v6603
        %v6606 = vunpack.c.l.s4 1966171168
        %v6607 = vunpack.c.0.s8 %v6606
        %v6608 = vlaneseq
        %v6609 = vshrl.u32 %v6608, 7
        %v6610 = vsub.s32 %v6607, %v6609
        %v6611 = vrot.slane %v6604, %v6610
        %v6612 = vcombine.low %v6246, %v6254
        %v6613 = vcombine.low %v6253, %v6255
        %v6615 = vunpack.c.l.s4 1935823168
        %v6616 = vunpack.c.0.s8 %v6615
        %v6617 = vlaneseq
        %v6618 = vshrl.u32 %v6617, 7
        %v6619 = vsub.s32 %v6616, %v6618
        %v6620 = vrot.slane %v6612, %v6619
        %v6622 = vunpack.c.l.s4 1935823168
        %v6623 = vunpack.c.0.s8 %v6622
        %v6624 = vlaneseq
        %v6625 = vshrl.u32 %v6624, 7
        %v6626 = vsub.s32 %v6623, %v6625
        %v6627 = vrot.slane %v6613, %v6626
        %v6628 = vcombine.low %v6620, %v6627
        %v6630 = vunpack.c.l.s4 1935823168
        %v6631 = vunpack.c.0.s8 %v6630
        %v6632 = vlaneseq
        %v6633 = vshrl.u32 %v6632, 7
        %v6634 = vsub.s32 %v6631, %v6633
        %v6635 = vrot.slane %v6628, %v6634
        %v6636 = vcombine.low %v6269, %v6291
        %v6637 = vcombine.low %v6284, %v6292
        %v6639 = vunpack.c.l.s4 1935823168
        %v6640 = vunpack.c.0.s8 %v6639
        %v6641 = vlaneseq
        %v6642 = vshrl.u32 %v6641, 7
        %v6643 = vsub.s32 %v6640, %v6642
        %v6644 = vrot.slane %v6636, %v6643
        %v6646 = vunpack.c.l.s4 1935823168
        %v6647 = vunpack.c.0.s8 %v6646
        %v6648 = vlaneseq
        %v6649 = vshrl.u32 %v6648, 7
        %v6650 = vsub.s32 %v6647, %v6649
        %v6651 = vrot.slane %v6637, %v6650
        %v6652 = vcombine.low %v6644, %v6651
        %v6654 = vunpack.c.l.s4 1935823168
        %v6655 = vunpack.c.0.s8 %v6654
        %v6656 = vlaneseq
        %v6657 = vshrl.u32 %v6656, 7
        %v6658 = vsub.s32 %v6655, %v6657
        %v6659 = vrot.slane %v6652, %v6658
        %v6660 = vcombine.low %v6293, %v6322
        %v6661 = vcombine.low %v6307, %v6329
        %v6663 = vunpack.c.l.s4 1935823168
        %v6664 = vunpack.c.0.s8 %v6663
        %v6665 = vlaneseq
        %v6666 = vshrl.u32 %v6665, 7
        %v6667 = vsub.s32 %v6664, %v6666
        %v6668 = vrot.slane %v6660, %v6667
        %v6670 = vunpack.c.l.s4 1935823168
        %v6671 = vunpack.c.0.s8 %v6670
        %v6672 = vlaneseq
        %v6673 = vshrl.u32 %v6672, 7
        %v6674 = vsub.s32 %v6671, %v6673
        %v6675 = vrot.slane %v6661, %v6674
        %v6676 = vcombine.low %v6668, %v6675
        %v6678 = vunpack.c.l.s4 1935823168
        %v6679 = vunpack.c.0.s8 %v6678
        %v6680 = vlaneseq
        %v6681 = vshrl.u32 %v6680, 7
        %v6682 = vsub.s32 %v6679, %v6681
        %v6683 = vrot.slane %v6676, %v6682
        %v6684 = vcombine.low %v6330, %v6345
        %v6685 = vcombine.low %v6331, %v6360
        %v6687 = vunpack.c.l.s4 1935823168
        %v6688 = vunpack.c.0.s8 %v6687
        %v6689 = vlaneseq
        %v6690 = vshrl.u32 %v6689, 7
        %v6691 = vsub.s32 %v6688, %v6690
        %v6692 = vrot.slane %v6684, %v6691
        %v6694 = vunpack.c.l.s4 1935823168
        %v6695 = vunpack.c.0.s8 %v6694
        %v6696 = vlaneseq
        %v6697 = vshrl.u32 %v6696, 7
        %v6698 = vsub.s32 %v6695, %v6697
        %v6699 = vrot.slane %v6685, %v6698
        %v6700 = vcombine.low %v6692, %v6699
        %v6702 = vunpack.c.l.s4 1935823168
        %v6703 = vunpack.c.0.s8 %v6702
        %v6704 = vlaneseq
        %v6705 = vshrl.u32 %v6704, 7
        %v6706 = vsub.s32 %v6703, %v6705
        %v6707 = vrot.slane %v6700, %v6706
        %v6708 = vcombine.low %v6367, %v6369
        %v6709 = vcombine.low %v6368, %v6383
        %v6711 = vunpack.c.l.s4 1935823168
        %v6712 = vunpack.c.0.s8 %v6711
        %v6713 = vlaneseq
        %v6714 = vshrl.u32 %v6713, 7
        %v6715 = vsub.s32 %v6712, %v6714
        %v6716 = vrot.slane %v6708, %v6715
        %v6718 = vunpack.c.l.s4 1935823168
        %v6719 = vunpack.c.0.s8 %v6718
        %v6720 = vlaneseq
        %v6721 = vshrl.u32 %v6720, 7
        %v6722 = vsub.s32 %v6719, %v6721
        %v6723 = vrot.slane %v6709, %v6722
        %v6724 = vcombine.low %v6716, %v6723
        %v6726 = vunpack.c.l.s4 1935823168
        %v6727 = vunpack.c.0.s8 %v6726
        %v6728 = vlaneseq
        %v6729 = vshrl.u32 %v6728, 7
        %v6730 = vsub.s32 %v6727, %v6729
        %v6731 = vrot.slane %v6724, %v6730
        %v6732 = vcombine.low %v6398, %v6406
        %v6733 = vcombine.low %v6405, %v6407
        %v6735 = vunpack.c.l.s4 1935823168
        %v6736 = vunpack.c.0.s8 %v6735
        %v6737 = vlaneseq
        %v6738 = vshrl.u32 %v6737, 7
        %v6739 = vsub.s32 %v6736, %v6738
        %v6740 = vrot.slane %v6732, %v6739
        %v6742 = vunpack.c.l.s4 1935823168
        %v6743 = vunpack.c.0.s8 %v6742
        %v6744 = vlaneseq
        %v6745 = vshrl.u32 %v6744, 7
        %v6746 = vsub.s32 %v6743, %v6745
        %v6747 = vrot.slane %v6733, %v6746
        %v6748 = vcombine.low %v6740, %v6747
        %v6750 = vunpack.c.l.s4 1935823168
        %v6751 = vunpack.c.0.s8 %v6750
        %v6752 = vlaneseq
        %v6753 = vshrl.u32 %v6752, 7
        %v6754 = vsub.s32 %v6751, %v6753
        %v6755 = vrot.slane %v6748, %v6754
        %v6756 = vcombine.low %v6421, %v6443
        %v6757 = vcombine.low %v6436, %v6444
        %v6759 = vunpack.c.l.s4 1935823168
        %v6760 = vunpack.c.0.s8 %v6759
        %v6761 = vlaneseq
        %v6762 = vshrl.u32 %v6761, 7
        %v6763 = vsub.s32 %v6760, %v6762
        %v6764 = vrot.slane %v6756, %v6763
        %v6766 = vunpack.c.l.s4 1935823168
        %v6767 = vunpack.c.0.s8 %v6766
        %v6768 = vlaneseq
        %v6769 = vshrl.u32 %v6768, 7
        %v6770 = vsub.s32 %v6767, %v6769
        %v6771 = vrot.slane %v6757, %v6770
        %v6772 = vcombine.low %v6764, %v6771
        %v6774 = vunpack.c.l.s4 1935823168
        %v6775 = vunpack.c.0.s8 %v6774
        %v6776 = vlaneseq
        %v6777 = vshrl.u32 %v6776, 7
        %v6778 = vsub.s32 %v6775, %v6777
        %v6779 = vrot.slane %v6772, %v6778
        %v6780 = vcombine.low %v6445, %v6474
        %v6781 = vcombine.low %v6459, %v6481
        %v6783 = vunpack.c.l.s4 1935823168
        %v6784 = vunpack.c.0.s8 %v6783
        %v6785 = vlaneseq
        %v6786 = vshrl.u32 %v6785, 7
        %v6787 = vsub.s32 %v6784, %v6786
        %v6788 = vrot.slane %v6780, %v6787
        %v6790 = vunpack.c.l.s4 1935823168
        %v6791 = vunpack.c.0.s8 %v6790
        %v6792 = vlaneseq
        %v6793 = vshrl.u32 %v6792, 7
        %v6794 = vsub.s32 %v6791, %v6793
        %v6795 = vrot.slane %v6781, %v6794
        %v6796 = vcombine.low %v6788, %v6795
        %v6798 = vunpack.c.l.s4 1935823168
        %v6799 = vunpack.c.0.s8 %v6798
        %v6800 = vlaneseq
        %v6801 = vshrl.u32 %v6800, 7
        %v6802 = vsub.s32 %v6799, %v6801
        %v6803 = vrot.slane %v6796, %v6802
        %v6804 = vcombine.low %v6482, %v6497
        %v6805 = vcombine.low %v6483, %v6512
        %v6807 = vunpack.c.l.s4 1935823168
        %v6808 = vunpack.c.0.s8 %v6807
        %v6809 = vlaneseq
        %v6810 = vshrl.u32 %v6809, 7
        %v6811 = vsub.s32 %v6808, %v6810
        %v6812 = vrot.slane %v6804, %v6811
        %v6814 = vunpack.c.l.s4 1935823168
        %v6815 = vunpack.c.0.s8 %v6814
        %v6816 = vlaneseq
        %v6817 = vshrl.u32 %v6816, 7
        %v6818 = vsub.s32 %v6815, %v6817
        %v6819 = vrot.slane %v6805, %v6818
        %v6820 = vcombine.low %v6812, %v6819
        %v6822 = vunpack.c.l.s4 1935823168
        %v6823 = vunpack.c.0.s8 %v6822
        %v6824 = vlaneseq
        %v6825 = vshrl.u32 %v6824, 7
        %v6826 = vsub.s32 %v6823, %v6825
        %v6827 = vrot.slane %v6820, %v6826
        %v6828 = vcombine.low %v6519, %v6521
        %v6829 = vcombine.low %v6520, %v6535
        %v6831 = vunpack.c.l.s4 1935823168
        %v6832 = vunpack.c.0.s8 %v6831
        %v6833 = vlaneseq
        %v6834 = vshrl.u32 %v6833, 7
        %v6835 = vsub.s32 %v6832, %v6834
        %v6836 = vrot.slane %v6828, %v6835
        %v6838 = vunpack.c.l.s4 1935823168
        %v6839 = vunpack.c.0.s8 %v6838
        %v6840 = vlaneseq
        %v6841 = vshrl.u32 %v6840, 7
        %v6842 = vsub.s32 %v6839, %v6841
        %v6843 = vrot.slane %v6829, %v6842
        %v6844 = vcombine.low %v6836, %v6843
        %v6846 = vunpack.c.l.s4 1935823168
        %v6847 = vunpack.c.0.s8 %v6846
        %v6848 = vlaneseq
        %v6849 = vshrl.u32 %v6848, 7
        %v6850 = vsub.s32 %v6847, %v6849
        %v6851 = vrot.slane %v6844, %v6850
        %v6852 = vcombine.low %v6550, %v6558
        %v6853 = vcombine.low %v6557, %v6559
        %v6855 = vunpack.c.l.s4 1935823168
        %v6856 = vunpack.c.0.s8 %v6855
        %v6857 = vlaneseq
        %v6858 = vshrl.u32 %v6857, 7
        %v6859 = vsub.s32 %v6856, %v6858
        %v6860 = vrot.slane %v6852, %v6859
        %v6862 = vunpack.c.l.s4 1935823168
        %v6863 = vunpack.c.0.s8 %v6862
        %v6864 = vlaneseq
        %v6865 = vshrl.u32 %v6864, 7
        %v6866 = vsub.s32 %v6863, %v6865
        %v6867 = vrot.slane %v6853, %v6866
        %v6868 = vcombine.low %v6860, %v6867
        %v6870 = vunpack.c.l.s4 1935823168
        %v6871 = vunpack.c.0.s8 %v6870
        %v6872 = vlaneseq
        %v6873 = vshrl.u32 %v6872, 7
        %v6874 = vsub.s32 %v6871, %v6873
        %v6875 = vrot.slane %v6868, %v6874
        %v6876 = vcombine.low %v6573, %v6595
        %v6877 = vcombine.low %v6588, %v6596
        %v6879 = vunpack.c.l.s4 1935823168
        %v6880 = vunpack.c.0.s8 %v6879
        %v6881 = vlaneseq
        %v6882 = vshrl.u32 %v6881, 7
        %v6883 = vsub.s32 %v6880, %v6882
        %v6884 = vrot.slane %v6876, %v6883
        %v6886 = vunpack.c.l.s4 1935823168
        %v6887 = vunpack.c.0.s8 %v6886
        %v6888 = vlaneseq
        %v6889 = vshrl.u32 %v6888, 7
        %v6890 = vsub.s32 %v6887, %v6889
        %v6891 = vrot.slane %v6877, %v6890
        %v6892 = vcombine.low %v6884, %v6891
        %v6894 = vunpack.c.l.s4 1935823168
        %v6895 = vunpack.c.0.s8 %v6894
        %v6896 = vlaneseq
        %v6897 = vshrl.u32 %v6896, 7
        %v6898 = vsub.s32 %v6895, %v6897
        %v6899 = vrot.slane %v6892, %v6898
        %v6901 = vunpack.c.l.s4 1935823168
        %v6902 = vunpack.c.0.s8 %v6901
        %v6903 = vlaneseq
        %v6904 = vshrl.u32 %v6903, 7
        %v6905 = vsub.s32 %v6902, %v6904
        %v6906 = vrot.slane %v6597, %v6905
        %v6908 = vunpack.c.l.s4 1935823168
        %v6909 = vunpack.c.0.s8 %v6908
        %v6910 = vlaneseq
        %v6911 = vshrl.u32 %v6910, 7
        %v6912 = vsub.s32 %v6909, %v6911
        %v6913 = vrot.slane %v6611, %v6912
        %v6914 = vcombine.low %v6906, %v6913
        %v6916 = vunpack.c.l.s4 1935823168
        %v6917 = vunpack.c.0.s8 %v6916
        %v6918 = vlaneseq
        %v6919 = vshrl.u32 %v6918, 7
        %v6920 = vsub.s32 %v6917, %v6919
        %v6921 = vrot.slane %v6914, %v6920
        %6935 = vst [vmem:[#allocation4 + $0x18] sm:$0xf] %v6635
        %6936 = vst [vmem:[#allocation4 + $0x3c] sm:$0xf] %v6659
        %6937 = vst [vmem:[#allocation4 + $0x60] sm:$0xf] %v6683
        %6938 = vst [vmem:[#allocation4 + $0x84] sm:$0xf] %v6707
        %6939 = vst [vmem:[#allocation4 + $0xa8] sm:$0xf] %v6731
        %6940 = vst [vmem:[#allocation4 + $0xcc] sm:$0xf] %v6755
        %6941 = vst [vmem:[#allocation4 + $0xf0] sm:$0xf] %v6779
        %6942 = vst [vmem:[#allocation4 + $0x114] sm:$0xf] %v6803
        %6943 = vst [vmem:[#allocation4 + $0x138] sm:$0xf] %v6827
        %6944 = vst [vmem:[#allocation4 + $0x15c] sm:$0xf] %v6851
        %6945 = vst [vmem:[#allocation4 + $0x180] sm:$0xf] %v6875
        %6946 = vst [vmem:[#allocation4 + $0x1a4] sm:$0xf] %v6899
        %6947 = vst [vmem:[#allocation4 + $0x1c8] sm:$0x3] %v6921
        %v6948 = vld [vmem:[%s6191] sm:$0xf]
        %v6949 = vld [vmem:[%s6191 + $0x4] sm:$0x3]
        %v6950 = vld [vmem:[%s6191 + $0x8] sm:$0xf]
        %v6951 = vld [vmem:[%s6191 + $0xc] sm:$0x3]
        %v6952 = vld [vmem:[%s6191 + $0x10] sm:$0xf]
        %v6953 = vld [vmem:[%s6191 + $0x14] sm:$0x3]
        %v6954 = vld [vmem:[%s6191 + $0x18] sm:$0xf]
        %v6955 = vld [vmem:[%s6191 + $0x1c] sm:$0x3]
        %v6956 = vld [vmem:[%s6191 + $0x20] sm:$0xf]
        %v6957 = vld [vmem:[%s6191 + $0x24] sm:$0x3]
        %v6958 = vld [vmem:[%s6191 + $0x28] sm:$0xf]
        %v6959 = vld [vmem:[%s6191 + $0x2c] sm:$0x3]
        %v6960 = vld [vmem:[%s6191 + $0x30] sm:$0xf]
        %v6961 = vld [vmem:[%s6191 + $0x34] sm:$0x3]
        %v6962 = vld [vmem:[%s6191 + $0x38] sm:$0xf]
        %v6963 = vld [vmem:[%s6191 + $0x3c] sm:$0x3]
        %v6964 = vld [vmem:[%s6191 + $0x40] sm:$0xf]
        %v6965 = vld [vmem:[%s6191 + $0x44] sm:$0x3]
        %v6966 = vld [vmem:[%s6191 + $0x48] sm:$0xf]
        %v6967 = vld [vmem:[%s6191 + $0x4c] sm:$0x3]
        %v6989 = vunpack.c.l.s4 1966171168
        %v6990 = vunpack.c.0.s8 %v6989
        %v6991 = vlaneseq
        %v6992 = vshrl.u32 %v6991, 7
        %v6993 = vsub.s32 %v6990, %v6992
        %v6994 = vrot.slane %v6948, %v6993
        %v6995 = vcombine.high %v6994, %v6994
        %v6997 = vunpack.c.l.s4 1966171168
        %v6998 = vunpack.c.0.s8 %v6997
        %v6999 = vlaneseq
        %v7000 = vshrl.u32 %v6999, 7
        %v7001 = vsub.s32 %v6998, %v7000
        %v7002 = vrot.slane %v6994, %v7001
        %v7004 = vunpack.c.l.s4 1966171168
        %v7005 = vunpack.c.0.s8 %v7004
        %v7006 = vlaneseq
        %v7007 = vshrl.u32 %v7006, 7
        %v7008 = vsub.s32 %v7005, %v7007
        %v7009 = vrot.slane %v6995, %v7008
        %v7010 = vcombine.high %v7002, %v7002
        %v7011 = vcombine.high %v7009, %v7009
        %v7013 = vunpack.c.l.s4 1966171168
        %v7014 = vunpack.c.0.s8 %v7013
        %v7015 = vlaneseq
        %v7016 = vshrl.u32 %v7015, 7
        %v7017 = vsub.s32 %v7014, %v7016
        %v7018 = vrot.slane %v6949, %v7017
        %v7019 = vcombine.high %v7018, %v7018
        %v7021 = vunpack.c.l.s4 1966171168
        %v7022 = vunpack.c.0.s8 %v7021
        %v7023 = vlaneseq
        %v7024 = vshrl.u32 %v7023, 7
        %v7025 = vsub.s32 %v7022, %v7024
        %v7026 = vrot.slane %v7018, %v7025
        %v7028 = vunpack.c.l.s4 1966171168
        %v7029 = vunpack.c.0.s8 %v7028
        %v7030 = vlaneseq
        %v7031 = vshrl.u32 %v7030, 7
        %v7032 = vsub.s32 %v7029, %v7031
        %v7033 = vrot.slane %v7019, %v7032
        %v7035 = vunpack.c.l.s4 1966171168
        %v7036 = vunpack.c.0.s8 %v7035
        %v7037 = vlaneseq
        %v7038 = vshrl.u32 %v7037, 7
        %v7039 = vsub.s32 %v7036, %v7038
        %v7040 = vrot.slane %v6950, %v7039
        %v7041 = vcombine.high %v7040, %v7040
        %v7043 = vunpack.c.l.s4 1966171168
        %v7044 = vunpack.c.0.s8 %v7043
        %v7045 = vlaneseq
        %v7046 = vshrl.u32 %v7045, 7
        %v7047 = vsub.s32 %v7044, %v7046
        %v7048 = vrot.slane %v7040, %v7047
        %v7050 = vunpack.c.l.s4 1966171168
        %v7051 = vunpack.c.0.s8 %v7050
        %v7052 = vlaneseq
        %v7053 = vshrl.u32 %v7052, 7
        %v7054 = vsub.s32 %v7051, %v7053
        %v7055 = vrot.slane %v7041, %v7054
        %v7056 = vcombine.high %v7048, %v7048
        %v7057 = vcombine.high %v7055, %v7055
        %v7059 = vunpack.c.l.s4 1966171168
        %v7060 = vunpack.c.0.s8 %v7059
        %v7061 = vlaneseq
        %v7062 = vshrl.u32 %v7061, 7
        %v7063 = vsub.s32 %v7060, %v7062
        %v7064 = vrot.slane %v6951, %v7063
        %v7065 = vcombine.high %v7064, %v7064
        %v7067 = vunpack.c.l.s4 1966171168
        %v7068 = vunpack.c.0.s8 %v7067
        %v7069 = vlaneseq
        %v7070 = vshrl.u32 %v7069, 7
        %v7071 = vsub.s32 %v7068, %v7070
        %v7072 = vrot.slane %v7064, %v7071
        %v7074 = vunpack.c.l.s4 1966171168
        %v7075 = vunpack.c.0.s8 %v7074
        %v7076 = vlaneseq
        %v7077 = vshrl.u32 %v7076, 7
        %v7078 = vsub.s32 %v7075, %v7077
        %v7079 = vrot.slane %v7065, %v7078
        %v7081 = vunpack.c.l.s4 1966171168
        %v7082 = vunpack.c.0.s8 %v7081
        %v7083 = vlaneseq
        %v7084 = vshrl.u32 %v7083, 7
        %v7085 = vsub.s32 %v7082, %v7084
        %v7086 = vrot.slane %v6952, %v7085
        %v7087 = vcombine.high %v7086, %v7086
        %v7089 = vunpack.c.l.s4 1966171168
        %v7090 = vunpack.c.0.s8 %v7089
        %v7091 = vlaneseq
        %v7092 = vshrl.u32 %v7091, 7
        %v7093 = vsub.s32 %v7090, %v7092
        %v7094 = vrot.slane %v7086, %v7093
        %v7096 = vunpack.c.l.s4 1966171168
        %v7097 = vunpack.c.0.s8 %v7096
        %v7098 = vlaneseq
        %v7099 = vshrl.u32 %v7098, 7
        %v7100 = vsub.s32 %v7097, %v7099
        %v7101 = vrot.slane %v7087, %v7100
        %v7102 = vcombine.high %v7094, %v7094
        %v7103 = vcombine.high %v7101, %v7101
        %v7105 = vunpack.c.l.s4 1966171168
        %v7106 = vunpack.c.0.s8 %v7105
        %v7107 = vlaneseq
        %v7108 = vshrl.u32 %v7107, 7
        %v7109 = vsub.s32 %v7106, %v7108
        %v7110 = vrot.slane %v6953, %v7109
        %v7111 = vcombine.high %v7110, %v7110
        %v7113 = vunpack.c.l.s4 1966171168
        %v7114 = vunpack.c.0.s8 %v7113
        %v7115 = vlaneseq
        %v7116 = vshrl.u32 %v7115, 7
        %v7117 = vsub.s32 %v7114, %v7116
        %v7118 = vrot.slane %v7110, %v7117
        %v7120 = vunpack.c.l.s4 1966171168
        %v7121 = vunpack.c.0.s8 %v7120
        %v7122 = vlaneseq
        %v7123 = vshrl.u32 %v7122, 7
        %v7124 = vsub.s32 %v7121, %v7123
        %v7125 = vrot.slane %v7111, %v7124
        %v7127 = vunpack.c.l.s4 1966171168
        %v7128 = vunpack.c.0.s8 %v7127
        %v7129 = vlaneseq
        %v7130 = vshrl.u32 %v7129, 7
        %v7131 = vsub.s32 %v7128, %v7130
        %v7132 = vrot.slane %v6954, %v7131
        %v7133 = vcombine.high %v7132, %v7132
        %v7135 = vunpack.c.l.s4 1966171168
        %v7136 = vunpack.c.0.s8 %v7135
        %v7137 = vlaneseq
        %v7138 = vshrl.u32 %v7137, 7
        %v7139 = vsub.s32 %v7136, %v7138
        %v7140 = vrot.slane %v7132, %v7139
        %v7142 = vunpack.c.l.s4 1966171168
        %v7143 = vunpack.c.0.s8 %v7142
        %v7144 = vlaneseq
        %v7145 = vshrl.u32 %v7144, 7
        %v7146 = vsub.s32 %v7143, %v7145
        %v7147 = vrot.slane %v7133, %v7146
        %v7148 = vcombine.high %v7140, %v7140
        %v7149 = vcombine.high %v7147, %v7147
        %v7151 = vunpack.c.l.s4 1966171168
        %v7152 = vunpack.c.0.s8 %v7151
        %v7153 = vlaneseq
        %v7154 = vshrl.u32 %v7153, 7
        %v7155 = vsub.s32 %v7152, %v7154
        %v7156 = vrot.slane %v6955, %v7155
        %v7157 = vcombine.high %v7156, %v7156
        %v7159 = vunpack.c.l.s4 1966171168
        %v7160 = vunpack.c.0.s8 %v7159
        %v7161 = vlaneseq
        %v7162 = vshrl.u32 %v7161, 7
        %v7163 = vsub.s32 %v7160, %v7162
        %v7164 = vrot.slane %v7156, %v7163
        %v7166 = vunpack.c.l.s4 1966171168
        %v7167 = vunpack.c.0.s8 %v7166
        %v7168 = vlaneseq
        %v7169 = vshrl.u32 %v7168, 7
        %v7170 = vsub.s32 %v7167, %v7169
        %v7171 = vrot.slane %v7157, %v7170
        %v7173 = vunpack.c.l.s4 1966171168
        %v7174 = vunpack.c.0.s8 %v7173
        %v7175 = vlaneseq
        %v7176 = vshrl.u32 %v7175, 7
        %v7177 = vsub.s32 %v7174, %v7176
        %v7178 = vrot.slane %v6956, %v7177
        %v7179 = vcombine.high %v7178, %v7178
        %v7181 = vunpack.c.l.s4 1966171168
        %v7182 = vunpack.c.0.s8 %v7181
        %v7183 = vlaneseq
        %v7184 = vshrl.u32 %v7183, 7
        %v7185 = vsub.s32 %v7182, %v7184
        %v7186 = vrot.slane %v7178, %v7185
        %v7188 = vunpack.c.l.s4 1966171168
        %v7189 = vunpack.c.0.s8 %v7188
        %v7190 = vlaneseq
        %v7191 = vshrl.u32 %v7190, 7
        %v7192 = vsub.s32 %v7189, %v7191
        %v7193 = vrot.slane %v7179, %v7192
        %v7194 = vcombine.high %v7186, %v7186
        %v7195 = vcombine.high %v7193, %v7193
        %v7197 = vunpack.c.l.s4 1966171168
        %v7198 = vunpack.c.0.s8 %v7197
        %v7199 = vlaneseq
        %v7200 = vshrl.u32 %v7199, 7
        %v7201 = vsub.s32 %v7198, %v7200
        %v7202 = vrot.slane %v6957, %v7201
        %v7203 = vcombine.high %v7202, %v7202
        %v7205 = vunpack.c.l.s4 1966171168
        %v7206 = vunpack.c.0.s8 %v7205
        %v7207 = vlaneseq
        %v7208 = vshrl.u32 %v7207, 7
        %v7209 = vsub.s32 %v7206, %v7208
        %v7210 = vrot.slane %v7202, %v7209
        %v7212 = vunpack.c.l.s4 1966171168
        %v7213 = vunpack.c.0.s8 %v7212
        %v7214 = vlaneseq
        %v7215 = vshrl.u32 %v7214, 7
        %v7216 = vsub.s32 %v7213, %v7215
        %v7217 = vrot.slane %v7203, %v7216
        %v7219 = vunpack.c.l.s4 1966171168
        %v7220 = vunpack.c.0.s8 %v7219
        %v7221 = vlaneseq
        %v7222 = vshrl.u32 %v7221, 7
        %v7223 = vsub.s32 %v7220, %v7222
        %v7224 = vrot.slane %v6958, %v7223
        %v7225 = vcombine.high %v7224, %v7224
        %v7227 = vunpack.c.l.s4 1966171168
        %v7228 = vunpack.c.0.s8 %v7227
        %v7229 = vlaneseq
        %v7230 = vshrl.u32 %v7229, 7
        %v7231 = vsub.s32 %v7228, %v7230
        %v7232 = vrot.slane %v7224, %v7231
        %v7234 = vunpack.c.l.s4 1966171168
        %v7235 = vunpack.c.0.s8 %v7234
        %v7236 = vlaneseq
        %v7237 = vshrl.u32 %v7236, 7
        %v7238 = vsub.s32 %v7235, %v7237
        %v7239 = vrot.slane %v7225, %v7238
        %v7240 = vcombine.high %v7232, %v7232
        %v7241 = vcombine.high %v7239, %v7239
        %v7243 = vunpack.c.l.s4 1966171168
        %v7244 = vunpack.c.0.s8 %v7243
        %v7245 = vlaneseq
        %v7246 = vshrl.u32 %v7245, 7
        %v7247 = vsub.s32 %v7244, %v7246
        %v7248 = vrot.slane %v6959, %v7247
        %v7249 = vcombine.high %v7248, %v7248
        %v7251 = vunpack.c.l.s4 1966171168
        %v7252 = vunpack.c.0.s8 %v7251
        %v7253 = vlaneseq
        %v7254 = vshrl.u32 %v7253, 7
        %v7255 = vsub.s32 %v7252, %v7254
        %v7256 = vrot.slane %v7248, %v7255
        %v7258 = vunpack.c.l.s4 1966171168
        %v7259 = vunpack.c.0.s8 %v7258
        %v7260 = vlaneseq
        %v7261 = vshrl.u32 %v7260, 7
        %v7262 = vsub.s32 %v7259, %v7261
        %v7263 = vrot.slane %v7249, %v7262
        %v7265 = vunpack.c.l.s4 1966171168
        %v7266 = vunpack.c.0.s8 %v7265
        %v7267 = vlaneseq
        %v7268 = vshrl.u32 %v7267, 7
        %v7269 = vsub.s32 %v7266, %v7268
        %v7270 = vrot.slane %v6960, %v7269
        %v7271 = vcombine.high %v7270, %v7270
        %v7273 = vunpack.c.l.s4 1966171168
        %v7274 = vunpack.c.0.s8 %v7273
        %v7275 = vlaneseq
        %v7276 = vshrl.u32 %v7275, 7
        %v7277 = vsub.s32 %v7274, %v7276
        %v7278 = vrot.slane %v7270, %v7277
        %v7280 = vunpack.c.l.s4 1966171168
        %v7281 = vunpack.c.0.s8 %v7280
        %v7282 = vlaneseq
        %v7283 = vshrl.u32 %v7282, 7
        %v7284 = vsub.s32 %v7281, %v7283
        %v7285 = vrot.slane %v7271, %v7284
        %v7286 = vcombine.high %v7278, %v7278
        %v7287 = vcombine.high %v7285, %v7285
        %v7289 = vunpack.c.l.s4 1966171168
        %v7290 = vunpack.c.0.s8 %v7289
        %v7291 = vlaneseq
        %v7292 = vshrl.u32 %v7291, 7
        %v7293 = vsub.s32 %v7290, %v7292
        %v7294 = vrot.slane %v6961, %v7293
        %v7295 = vcombine.high %v7294, %v7294
        %v7297 = vunpack.c.l.s4 1966171168
        %v7298 = vunpack.c.0.s8 %v7297
        %v7299 = vlaneseq
        %v7300 = vshrl.u32 %v7299, 7
        %v7301 = vsub.s32 %v7298, %v7300
        %v7302 = vrot.slane %v7294, %v7301
        %v7304 = vunpack.c.l.s4 1966171168
        %v7305 = vunpack.c.0.s8 %v7304
        %v7306 = vlaneseq
        %v7307 = vshrl.u32 %v7306, 7
        %v7308 = vsub.s32 %v7305, %v7307
        %v7309 = vrot.slane %v7295, %v7308
        %v7311 = vunpack.c.l.s4 1966171168
        %v7312 = vunpack.c.0.s8 %v7311
        %v7313 = vlaneseq
        %v7314 = vshrl.u32 %v7313, 7
        %v7315 = vsub.s32 %v7312, %v7314
        %v7316 = vrot.slane %v6962, %v7315
        %v7317 = vcombine.high %v7316, %v7316
        %v7319 = vunpack.c.l.s4 1966171168
        %v7320 = vunpack.c.0.s8 %v7319
        %v7321 = vlaneseq
        %v7322 = vshrl.u32 %v7321, 7
        %v7323 = vsub.s32 %v7320, %v7322
        %v7324 = vrot.slane %v7316, %v7323
        %v7326 = vunpack.c.l.s4 1966171168
        %v7327 = vunpack.c.0.s8 %v7326
        %v7328 = vlaneseq
        %v7329 = vshrl.u32 %v7328, 7
        %v7330 = vsub.s32 %v7327, %v7329
        %v7331 = vrot.slane %v7317, %v7330
        %v7332 = vcombine.high %v7324, %v7324
        %v7333 = vcombine.high %v7331, %v7331
        %v7335 = vunpack.c.l.s4 1966171168
        %v7336 = vunpack.c.0.s8 %v7335
        %v7337 = vlaneseq
        %v7338 = vshrl.u32 %v7337, 7
        %v7339 = vsub.s32 %v7336, %v7338
        %v7340 = vrot.slane %v6963, %v7339
        %v7341 = vcombine.high %v7340, %v7340
        %v7343 = vunpack.c.l.s4 1966171168
        %v7344 = vunpack.c.0.s8 %v7343
        %v7345 = vlaneseq
        %v7346 = vshrl.u32 %v7345, 7
        %v7347 = vsub.s32 %v7344, %v7346
        %v7348 = vrot.slane %v7340, %v7347
        %v7350 = vunpack.c.l.s4 1966171168
        %v7351 = vunpack.c.0.s8 %v7350
        %v7352 = vlaneseq
        %v7353 = vshrl.u32 %v7352, 7
        %v7354 = vsub.s32 %v7351, %v7353
        %v7355 = vrot.slane %v7341, %v7354
        %v7357 = vunpack.c.l.s4 1966171168
        %v7358 = vunpack.c.0.s8 %v7357
        %v7359 = vlaneseq
        %v7360 = vshrl.u32 %v7359, 7
        %v7361 = vsub.s32 %v7358, %v7360
        %v7362 = vrot.slane %v6964, %v7361
        %v7363 = vcombine.high %v7362, %v7362
        %v7365 = vunpack.c.l.s4 1966171168
        %v7366 = vunpack.c.0.s8 %v7365
        %v7367 = vlaneseq
        %v7368 = vshrl.u32 %v7367, 7
        %v7369 = vsub.s32 %v7366, %v7368
        %v7370 = vrot.slane %v7362, %v7369
        %v7372 = vunpack.c.l.s4 1966171168
        %v7373 = vunpack.c.0.s8 %v7372
        %v7374 = vlaneseq
        %v7375 = vshrl.u32 %v7374, 7
        %v7376 = vsub.s32 %v7373, %v7375
        %v7377 = vrot.slane %v7363, %v7376
        %v7378 = vcombine.high %v7370, %v7370
        %v7379 = vcombine.high %v7377, %v7377
        %v7381 = vunpack.c.l.s4 1966171168
        %v7382 = vunpack.c.0.s8 %v7381
        %v7383 = vlaneseq
        %v7384 = vshrl.u32 %v7383, 7
        %v7385 = vsub.s32 %v7382, %v7384
        %v7386 = vrot.slane %v6965, %v7385
        %v7387 = vcombine.high %v7386, %v7386
        %v7389 = vunpack.c.l.s4 1966171168
        %v7390 = vunpack.c.0.s8 %v7389
        %v7391 = vlaneseq
        %v7392 = vshrl.u32 %v7391, 7
        %v7393 = vsub.s32 %v7390, %v7392
        %v7394 = vrot.slane %v7386, %v7393
        %v7396 = vunpack.c.l.s4 1966171168
        %v7397 = vunpack.c.0.s8 %v7396
        %v7398 = vlaneseq
        %v7399 = vshrl.u32 %v7398, 7
        %v7400 = vsub.s32 %v7397, %v7399
        %v7401 = vrot.slane %v7387, %v7400
        %v7403 = vunpack.c.l.s4 1966171168
        %v7404 = vunpack.c.0.s8 %v7403
        %v7405 = vlaneseq
        %v7406 = vshrl.u32 %v7405, 7
        %v7407 = vsub.s32 %v7404, %v7406
        %v7408 = vrot.slane %v6966, %v7407
        %v7409 = vcombine.high %v7408, %v7408
        %v7411 = vunpack.c.l.s4 1966171168
        %v7412 = vunpack.c.0.s8 %v7411
        %v7413 = vlaneseq
        %v7414 = vshrl.u32 %v7413, 7
        %v7415 = vsub.s32 %v7412, %v7414
        %v7416 = vrot.slane %v7408, %v7415
        %v7418 = vunpack.c.l.s4 1966171168
        %v7419 = vunpack.c.0.s8 %v7418
        %v7420 = vlaneseq
        %v7421 = vshrl.u32 %v7420, 7
        %v7422 = vsub.s32 %v7419, %v7421
        %v7423 = vrot.slane %v7409, %v7422
        %v7424 = vcombine.high %v7416, %v7416
        %v7425 = vcombine.high %v7423, %v7423
        %v7427 = vunpack.c.l.s4 1966171168
        %v7428 = vunpack.c.0.s8 %v7427
        %v7429 = vlaneseq
        %v7430 = vshrl.u32 %v7429, 7
        %v7431 = vsub.s32 %v7428, %v7430
        %v7432 = vrot.slane %v6967, %v7431
        %v7433 = vcombine.high %v7432, %v7432
        %v7435 = vunpack.c.l.s4 1966171168
        %v7436 = vunpack.c.0.s8 %v7435
        %v7437 = vlaneseq
        %v7438 = vshrl.u32 %v7437, 7
        %v7439 = vsub.s32 %v7436, %v7438
        %v7440 = vrot.slane %v7432, %v7439
        %v7442 = vunpack.c.l.s4 1966171168
        %v7443 = vunpack.c.0.s8 %v7442
        %v7444 = vlaneseq
        %v7445 = vshrl.u32 %v7444, 7
        %v7446 = vsub.s32 %v7443, %v7445
        %v7447 = vrot.slane %v7433, %v7446
        %v7449 = vshrl.u32 %v7002, 16
        %v7451 = vrot.slane %v7449, 7
        %v7452 = vrot.slane %v7451, 1
        %v7454 = vshll.u32 %v7009, 16
        %v7456 = vsel %vm1769, %v7452, %v7454
        %v7457 = vshrl.u32 %v7009, 16
        %v7459 = vrot.slane %v7457, 7
        %v7460 = vrot.slane %v7459, 1
        %v7462 = vshll.u32 %v7010, 16
        %v7464 = vsel %vm1769, %v7460, %v7462
        %v7465 = vshrl.u32 %v7010, 16
        %v7467 = vrot.slane %v7465, 7
        %v7468 = vrot.slane %v7467, 1
        %v7470 = vshll.u32 %v7011, 16
        %v7472 = vsel %vm1769, %v7468, %v7470
        %v7473 = vshrl.u32 %v7011, 16
        %v7475 = vrot.slane %v7473, 7
        %v7476 = vrot.slane %v7475, 1
        %v7478 = vshll.u32 %v7026, 16
        %v7480 = vsel %vm1769, %v7476, %v7478
        %v7481 = vshrl.u32 %v7026, 16
        %v7483 = vrot.slane %v7481, 7
        %v7484 = vrot.slane %v7483, 1
        %v7486 = vshll.u32 %v7033, 16
        %v7488 = vsel %vm1769, %v7484, %v7486
        %v7490 = vshrl.u32 %v7048, 16
        %v7492 = vrot.slane %v7490, 7
        %v7493 = vrot.slane %v7492, 1
        %v7495 = vshll.u32 %v7055, 16
        %v7497 = vsel %vm1769, %v7493, %v7495
        %v7498 = vshrl.u32 %v7055, 16
        %v7500 = vrot.slane %v7498, 7
        %v7501 = vrot.slane %v7500, 1
        %v7503 = vshll.u32 %v7056, 16
        %v7505 = vsel %vm1769, %v7501, %v7503
        %v7506 = vshrl.u32 %v7056, 16
        %v7508 = vrot.slane %v7506, 7
        %v7509 = vrot.slane %v7508, 1
        %v7511 = vshll.u32 %v7057, 16
        %v7513 = vsel %vm1769, %v7509, %v7511
        %v7514 = vshrl.u32 %v7057, 16
        %v7516 = vrot.slane %v7514, 7
        %v7517 = vrot.slane %v7516, 1
        %v7519 = vshll.u32 %v7072, 16
        %v7521 = vsel %vm1769, %v7517, %v7519
        %v7522 = vshrl.u32 %v7072, 16
        %v7524 = vrot.slane %v7522, 7
        %v7525 = vrot.slane %v7524, 1
        %v7527 = vshll.u32 %v7079, 16
        %v7529 = vsel %vm1769, %v7525, %v7527
        %v7531 = vshrl.u32 %v7094, 16
        %v7533 = vrot.slane %v7531, 7
        %v7534 = vrot.slane %v7533, 1
        %v7536 = vshll.u32 %v7101, 16
        %v7538 = vsel %vm1769, %v7534, %v7536
        %v7539 = vshrl.u32 %v7101, 16
        %v7541 = vrot.slane %v7539, 7
        %v7542 = vrot.slane %v7541, 1
        %v7544 = vshll.u32 %v7102, 16
        %v7546 = vsel %vm1769, %v7542, %v7544
        %v7547 = vshrl.u32 %v7102, 16
        %v7549 = vrot.slane %v7547, 7
        %v7550 = vrot.slane %v7549, 1
        %v7552 = vshll.u32 %v7103, 16
        %v7554 = vsel %vm1769, %v7550, %v7552
        %v7555 = vshrl.u32 %v7103, 16
        %v7557 = vrot.slane %v7555, 7
        %v7558 = vrot.slane %v7557, 1
        %v7560 = vshll.u32 %v7118, 16
        %v7562 = vsel %vm1769, %v7558, %v7560
        %v7563 = vshrl.u32 %v7118, 16
        %v7565 = vrot.slane %v7563, 7
        %v7566 = vrot.slane %v7565, 1
        %v7568 = vshll.u32 %v7125, 16
        %v7570 = vsel %vm1769, %v7566, %v7568
        %v7572 = vshrl.u32 %v7140, 16
        %v7574 = vrot.slane %v7572, 7
        %v7575 = vrot.slane %v7574, 1
        %v7577 = vshll.u32 %v7147, 16
        %v7579 = vsel %vm1769, %v7575, %v7577
        %v7580 = vshrl.u32 %v7147, 16
        %v7582 = vrot.slane %v7580, 7
        %v7583 = vrot.slane %v7582, 1
        %v7585 = vshll.u32 %v7148, 16
        %v7587 = vsel %vm1769, %v7583, %v7585
        %v7588 = vshrl.u32 %v7148, 16
        %v7590 = vrot.slane %v7588, 7
        %v7591 = vrot.slane %v7590, 1
        %v7593 = vshll.u32 %v7149, 16
        %v7595 = vsel %vm1769, %v7591, %v7593
        %v7596 = vshrl.u32 %v7149, 16
        %v7598 = vrot.slane %v7596, 7
        %v7599 = vrot.slane %v7598, 1
        %v7601 = vshll.u32 %v7164, 16
        %v7603 = vsel %vm1769, %v7599, %v7601
        %v7604 = vshrl.u32 %v7164, 16
        %v7606 = vrot.slane %v7604, 7
        %v7607 = vrot.slane %v7606, 1
        %v7609 = vshll.u32 %v7171, 16
        %v7611 = vsel %vm1769, %v7607, %v7609
        %v7613 = vshrl.u32 %v7186, 16
        %v7615 = vrot.slane %v7613, 7
        %v7616 = vrot.slane %v7615, 1
        %v7618 = vshll.u32 %v7193, 16
        %v7620 = vsel %vm1769, %v7616, %v7618
        %v7621 = vshrl.u32 %v7193, 16
        %v7623 = vrot.slane %v7621, 7
        %v7624 = vrot.slane %v7623, 1
        %v7626 = vshll.u32 %v7194, 16
        %v7628 = vsel %vm1769, %v7624, %v7626
        %v7629 = vshrl.u32 %v7194, 16
        %v7631 = vrot.slane %v7629, 7
        %v7632 = vrot.slane %v7631, 1
        %v7634 = vshll.u32 %v7195, 16
        %v7636 = vsel %vm1769, %v7632, %v7634
        %v7637 = vshrl.u32 %v7195, 16
        %v7639 = vrot.slane %v7637, 7
        %v7640 = vrot.slane %v7639, 1
        %v7642 = vshll.u32 %v7210, 16
        %v7644 = vsel %vm1769, %v7640, %v7642
        %v7645 = vshrl.u32 %v7210, 16
        %v7647 = vrot.slane %v7645, 7
        %v7648 = vrot.slane %v7647, 1
        %v7650 = vshll.u32 %v7217, 16
        %v7652 = vsel %vm1769, %v7648, %v7650
        %v7654 = vshrl.u32 %v7232, 16
        %v7656 = vrot.slane %v7654, 7
        %v7657 = vrot.slane %v7656, 1
        %v7659 = vshll.u32 %v7239, 16
        %v7661 = vsel %vm1769, %v7657, %v7659
        %v7662 = vshrl.u32 %v7239, 16
        %v7664 = vrot.slane %v7662, 7
        %v7665 = vrot.slane %v7664, 1
        %v7667 = vshll.u32 %v7240, 16
        %v7669 = vsel %vm1769, %v7665, %v7667
        %v7670 = vshrl.u32 %v7240, 16
        %v7672 = vrot.slane %v7670, 7
        %v7673 = vrot.slane %v7672, 1
        %v7675 = vshll.u32 %v7241, 16
        %v7677 = vsel %vm1769, %v7673, %v7675
        %v7678 = vshrl.u32 %v7241, 16
        %v7680 = vrot.slane %v7678, 7
        %v7681 = vrot.slane %v7680, 1
        %v7683 = vshll.u32 %v7256, 16
        %v7685 = vsel %vm1769, %v7681, %v7683
        %v7686 = vshrl.u32 %v7256, 16
        %v7688 = vrot.slane %v7686, 7
        %v7689 = vrot.slane %v7688, 1
        %v7691 = vshll.u32 %v7263, 16
        %v7693 = vsel %vm1769, %v7689, %v7691
        %v7695 = vshrl.u32 %v7278, 16
        %v7697 = vrot.slane %v7695, 7
        %v7698 = vrot.slane %v7697, 1
        %v7700 = vshll.u32 %v7285, 16
        %v7702 = vsel %vm1769, %v7698, %v7700
        %v7703 = vshrl.u32 %v7285, 16
        %v7705 = vrot.slane %v7703, 7
        %v7706 = vrot.slane %v7705, 1
        %v7708 = vshll.u32 %v7286, 16
        %v7710 = vsel %vm1769, %v7706, %v7708
        %v7711 = vshrl.u32 %v7286, 16
        %v7713 = vrot.slane %v7711, 7
        %v7714 = vrot.slane %v7713, 1
        %v7716 = vshll.u32 %v7287, 16
        %v7718 = vsel %vm1769, %v7714, %v7716
        %v7719 = vshrl.u32 %v7287, 16
        %v7721 = vrot.slane %v7719, 7
        %v7722 = vrot.slane %v7721, 1
        %v7724 = vshll.u32 %v7302, 16
        %v7726 = vsel %vm1769, %v7722, %v7724
        %v7727 = vshrl.u32 %v7302, 16
        %v7729 = vrot.slane %v7727, 7
        %v7730 = vrot.slane %v7729, 1
        %v7732 = vshll.u32 %v7309, 16
        %v7734 = vsel %vm1769, %v7730, %v7732
        %v7736 = vshrl.u32 %v7324, 16
        %v7738 = vrot.slane %v7736, 7
        %v7739 = vrot.slane %v7738, 1
        %v7741 = vshll.u32 %v7331, 16
        %v7743 = vsel %vm1769, %v7739, %v7741
        %v7744 = vshrl.u32 %v7331, 16
        %v7746 = vrot.slane %v7744, 7
        %v7747 = vrot.slane %v7746, 1
        %v7749 = vshll.u32 %v7332, 16
        %v7751 = vsel %vm1769, %v7747, %v7749
        %v7752 = vshrl.u32 %v7332, 16
        %v7754 = vrot.slane %v7752, 7
        %v7755 = vrot.slane %v7754, 1
        %v7757 = vshll.u32 %v7333, 16
        %v7759 = vsel %vm1769, %v7755, %v7757
        %v7760 = vshrl.u32 %v7333, 16
        %v7762 = vrot.slane %v7760, 7
        %v7763 = vrot.slane %v7762, 1
        %v7765 = vshll.u32 %v7348, 16
        %v7767 = vsel %vm1769, %v7763, %v7765
        %v7768 = vshrl.u32 %v7348, 16
        %v7770 = vrot.slane %v7768, 7
        %v7771 = vrot.slane %v7770, 1
        %v7773 = vshll.u32 %v7355, 16
        %v7775 = vsel %vm1769, %v7771, %v7773
        %v7777 = vshrl.u32 %v7370, 16
        %v7779 = vrot.slane %v7777, 7
        %v7780 = vrot.slane %v7779, 1
        %v7782 = vshll.u32 %v7377, 16
        %v7784 = vsel %vm1769, %v7780, %v7782
        %v7785 = vshrl.u32 %v7377, 16
        %v7787 = vrot.slane %v7785, 7
        %v7788 = vrot.slane %v7787, 1
        %v7790 = vshll.u32 %v7378, 16
        %v7792 = vsel %vm1769, %v7788, %v7790
        %v7793 = vshrl.u32 %v7378, 16
        %v7795 = vrot.slane %v7793, 7
        %v7796 = vrot.slane %v7795, 1
        %v7798 = vshll.u32 %v7379, 16
        %v7800 = vsel %vm1769, %v7796, %v7798
        %v7801 = vshrl.u32 %v7379, 16
        %v7803 = vrot.slane %v7801, 7
        %v7804 = vrot.slane %v7803, 1
        %v7806 = vshll.u32 %v7394, 16
        %v7808 = vsel %vm1769, %v7804, %v7806
        %v7809 = vshrl.u32 %v7394, 16
        %v7811 = vrot.slane %v7809, 7
        %v7812 = vrot.slane %v7811, 1
        %v7814 = vshll.u32 %v7401, 16
        %v7816 = vsel %vm1769, %v7812, %v7814
        %v7818 = vshrl.u32 %v7416, 16
        %v7820 = vrot.slane %v7818, 7
        %v7821 = vrot.slane %v7820, 1
        %v7823 = vshll.u32 %v7423, 16
        %v7825 = vsel %vm1769, %v7821, %v7823
        %v7826 = vshrl.u32 %v7423, 16
        %v7828 = vrot.slane %v7826, 7
        %v7829 = vrot.slane %v7828, 1
        %v7831 = vshll.u32 %v7424, 16
        %v7833 = vsel %vm1769, %v7829, %v7831
        %v7834 = vshrl.u32 %v7424, 16
        %v7836 = vrot.slane %v7834, 7
        %v7837 = vrot.slane %v7836, 1
        %v7839 = vshll.u32 %v7425, 16
        %v7841 = vsel %vm1769, %v7837, %v7839
        %v7842 = vshrl.u32 %v7425, 16
        %v7844 = vrot.slane %v7842, 7
        %v7845 = vrot.slane %v7844, 1
        %v7847 = vshll.u32 %v7440, 16
        %v7849 = vsel %vm1769, %v7845, %v7847
        %v7850 = vshrl.u32 %v7440, 16
        %v7852 = vrot.slane %v7850, 7
        %v7853 = vrot.slane %v7852, 1
        %v7855 = vshll.u32 %v7447, 16
        %v7857 = vsel %vm1769, %v7853, %v7855
        %v7858 = vcombine.low %v7456, %v7472
        %v7859 = vcombine.low %v7464, %v7480
        %v7861 = vunpack.c.l.s4 1935823168
        %v7862 = vunpack.c.0.s8 %v7861
        %v7863 = vlaneseq
        %v7864 = vshrl.u32 %v7863, 7
        %v7865 = vsub.s32 %v7862, %v7864
        %v7866 = vrot.slane %v7858, %v7865
        %v7868 = vunpack.c.l.s4 1935823168
        %v7869 = vunpack.c.0.s8 %v7868
        %v7870 = vlaneseq
        %v7871 = vshrl.u32 %v7870, 7
        %v7872 = vsub.s32 %v7869, %v7871
        %v7873 = vrot.slane %v7859, %v7872
        %v7874 = vcombine.low %v7866, %v7873
        %v7876 = vunpack.c.l.s4 1935823168
        %v7877 = vunpack.c.0.s8 %v7876
        %v7878 = vlaneseq
        %v7879 = vshrl.u32 %v7878, 7
        %v7880 = vsub.s32 %v7877, %v7879
        %v7881 = vrot.slane %v7874, %v7880
        %v7882 = vcombine.low %v7488, %v7505
        %v7883 = vcombine.low %v7497, %v7513
        %v7885 = vunpack.c.l.s4 1935823168
        %v7886 = vunpack.c.0.s8 %v7885
        %v7887 = vlaneseq
        %v7888 = vshrl.u32 %v7887, 7
        %v7889 = vsub.s32 %v7886, %v7888
        %v7890 = vrot.slane %v7882, %v7889
        %v7892 = vunpack.c.l.s4 1935823168
        %v7893 = vunpack.c.0.s8 %v7892
        %v7894 = vlaneseq
        %v7895 = vshrl.u32 %v7894, 7
        %v7896 = vsub.s32 %v7893, %v7895
        %v7897 = vrot.slane %v7883, %v7896
        %v7898 = vcombine.low %v7890, %v7897
        %v7900 = vunpack.c.l.s4 1935823168
        %v7901 = vunpack.c.0.s8 %v7900
        %v7902 = vlaneseq
        %v7903 = vshrl.u32 %v7902, 7
        %v7904 = vsub.s32 %v7901, %v7903
        %v7905 = vrot.slane %v7898, %v7904
        %v7906 = vcombine.low %v7521, %v7538
        %v7907 = vcombine.low %v7529, %v7546
        %v7909 = vunpack.c.l.s4 1935823168
        %v7910 = vunpack.c.0.s8 %v7909
        %v7911 = vlaneseq
        %v7912 = vshrl.u32 %v7911, 7
        %v7913 = vsub.s32 %v7910, %v7912
        %v7914 = vrot.slane %v7906, %v7913
        %v7916 = vunpack.c.l.s4 1935823168
        %v7917 = vunpack.c.0.s8 %v7916
        %v7918 = vlaneseq
        %v7919 = vshrl.u32 %v7918, 7
        %v7920 = vsub.s32 %v7917, %v7919
        %v7921 = vrot.slane %v7907, %v7920
        %v7922 = vcombine.low %v7914, %v7921
        %v7924 = vunpack.c.l.s4 1935823168
        %v7925 = vunpack.c.0.s8 %v7924
        %v7926 = vlaneseq
        %v7927 = vshrl.u32 %v7926, 7
        %v7928 = vsub.s32 %v7925, %v7927
        %v7929 = vrot.slane %v7922, %v7928
        %v7930 = vcombine.low %v7554, %v7570
        %v7931 = vcombine.low %v7562, %v7579
        %v7933 = vunpack.c.l.s4 1935823168
        %v7934 = vunpack.c.0.s8 %v7933
        %v7935 = vlaneseq
        %v7936 = vshrl.u32 %v7935, 7
        %v7937 = vsub.s32 %v7934, %v7936
        %v7938 = vrot.slane %v7930, %v7937
        %v7940 = vunpack.c.l.s4 1935823168
        %v7941 = vunpack.c.0.s8 %v7940
        %v7942 = vlaneseq
        %v7943 = vshrl.u32 %v7942, 7
        %v7944 = vsub.s32 %v7941, %v7943
        %v7945 = vrot.slane %v7931, %v7944
        %v7946 = vcombine.low %v7938, %v7945
        %v7948 = vunpack.c.l.s4 1935823168
        %v7949 = vunpack.c.0.s8 %v7948
        %v7950 = vlaneseq
        %v7951 = vshrl.u32 %v7950, 7
        %v7952 = vsub.s32 %v7949, %v7951
        %v7953 = vrot.slane %v7946, %v7952
        %v7954 = vcombine.low %v7587, %v7603
        %v7955 = vcombine.low %v7595, %v7611
        %v7957 = vunpack.c.l.s4 1935823168
        %v7958 = vunpack.c.0.s8 %v7957
        %v7959 = vlaneseq
        %v7960 = vshrl.u32 %v7959, 7
        %v7961 = vsub.s32 %v7958, %v7960
        %v7962 = vrot.slane %v7954, %v7961
        %v7964 = vunpack.c.l.s4 1935823168
        %v7965 = vunpack.c.0.s8 %v7964
        %v7966 = vlaneseq
        %v7967 = vshrl.u32 %v7966, 7
        %v7968 = vsub.s32 %v7965, %v7967
        %v7969 = vrot.slane %v7955, %v7968
        %v7970 = vcombine.low %v7962, %v7969
        %v7972 = vunpack.c.l.s4 1935823168
        %v7973 = vunpack.c.0.s8 %v7972
        %v7974 = vlaneseq
        %v7975 = vshrl.u32 %v7974, 7
        %v7976 = vsub.s32 %v7973, %v7975
        %v7977 = vrot.slane %v7970, %v7976
        %v7978 = vcombine.low %v7620, %v7636
        %v7979 = vcombine.low %v7628, %v7644
        %v7981 = vunpack.c.l.s4 1935823168
        %v7982 = vunpack.c.0.s8 %v7981
        %v7983 = vlaneseq
        %v7984 = vshrl.u32 %v7983, 7
        %v7985 = vsub.s32 %v7982, %v7984
        %v7986 = vrot.slane %v7978, %v7985
        %v7988 = vunpack.c.l.s4 1935823168
        %v7989 = vunpack.c.0.s8 %v7988
        %v7990 = vlaneseq
        %v7991 = vshrl.u32 %v7990, 7
        %v7992 = vsub.s32 %v7989, %v7991
        %v7993 = vrot.slane %v7979, %v7992
        %v7994 = vcombine.low %v7986, %v7993
        %v7996 = vunpack.c.l.s4 1935823168
        %v7997 = vunpack.c.0.s8 %v7996
        %v7998 = vlaneseq
        %v7999 = vshrl.u32 %v7998, 7
        %v8000 = vsub.s32 %v7997, %v7999
        %v8001 = vrot.slane %v7994, %v8000
        %v8002 = vcombine.low %v7652, %v7669
        %v8003 = vcombine.low %v7661, %v7677
        %v8005 = vunpack.c.l.s4 1935823168
        %v8006 = vunpack.c.0.s8 %v8005
        %v8007 = vlaneseq
        %v8008 = vshrl.u32 %v8007, 7
        %v8009 = vsub.s32 %v8006, %v8008
        %v8010 = vrot.slane %v8002, %v8009
        %v8012 = vunpack.c.l.s4 1935823168
        %v8013 = vunpack.c.0.s8 %v8012
        %v8014 = vlaneseq
        %v8015 = vshrl.u32 %v8014, 7
        %v8016 = vsub.s32 %v8013, %v8015
        %v8017 = vrot.slane %v8003, %v8016
        %v8018 = vcombine.low %v8010, %v8017
        %v8020 = vunpack.c.l.s4 1935823168
        %v8021 = vunpack.c.0.s8 %v8020
        %v8022 = vlaneseq
        %v8023 = vshrl.u32 %v8022, 7
        %v8024 = vsub.s32 %v8021, %v8023
        %v8025 = vrot.slane %v8018, %v8024
        %v8026 = vcombine.low %v7685, %v7702
        %v8027 = vcombine.low %v7693, %v7710
        %v8029 = vunpack.c.l.s4 1935823168
        %v8030 = vunpack.c.0.s8 %v8029
        %v8031 = vlaneseq
        %v8032 = vshrl.u32 %v8031, 7
        %v8033 = vsub.s32 %v8030, %v8032
        %v8034 = vrot.slane %v8026, %v8033
        %v8036 = vunpack.c.l.s4 1935823168
        %v8037 = vunpack.c.0.s8 %v8036
        %v8038 = vlaneseq
        %v8039 = vshrl.u32 %v8038, 7
        %v8040 = vsub.s32 %v8037, %v8039
        %v8041 = vrot.slane %v8027, %v8040
        %v8042 = vcombine.low %v8034, %v8041
        %v8044 = vunpack.c.l.s4 1935823168
        %v8045 = vunpack.c.0.s8 %v8044
        %v8046 = vlaneseq
        %v8047 = vshrl.u32 %v8046, 7
        %v8048 = vsub.s32 %v8045, %v8047
        %v8049 = vrot.slane %v8042, %v8048
        %v8050 = vcombine.low %v7718, %v7734
        %v8051 = vcombine.low %v7726, %v7743
        %v8053 = vunpack.c.l.s4 1935823168
        %v8054 = vunpack.c.0.s8 %v8053
        %v8055 = vlaneseq
        %v8056 = vshrl.u32 %v8055, 7
        %v8057 = vsub.s32 %v8054, %v8056
        %v8058 = vrot.slane %v8050, %v8057
        %v8060 = vunpack.c.l.s4 1935823168
        %v8061 = vunpack.c.0.s8 %v8060
        %v8062 = vlaneseq
        %v8063 = vshrl.u32 %v8062, 7
        %v8064 = vsub.s32 %v8061, %v8063
        %v8065 = vrot.slane %v8051, %v8064
        %v8066 = vcombine.low %v8058, %v8065
        %v8068 = vunpack.c.l.s4 1935823168
        %v8069 = vunpack.c.0.s8 %v8068
        %v8070 = vlaneseq
        %v8071 = vshrl.u32 %v8070, 7
        %v8072 = vsub.s32 %v8069, %v8071
        %v8073 = vrot.slane %v8066, %v8072
        %v8074 = vcombine.low %v7751, %v7767
        %v8075 = vcombine.low %v7759, %v7775
        %v8077 = vunpack.c.l.s4 1935823168
        %v8078 = vunpack.c.0.s8 %v8077
        %v8079 = vlaneseq
        %v8080 = vshrl.u32 %v8079, 7
        %v8081 = vsub.s32 %v8078, %v8080
        %v8082 = vrot.slane %v8074, %v8081
        %v8084 = vunpack.c.l.s4 1935823168
        %v8085 = vunpack.c.0.s8 %v8084
        %v8086 = vlaneseq
        %v8087 = vshrl.u32 %v8086, 7
        %v8088 = vsub.s32 %v8085, %v8087
        %v8089 = vrot.slane %v8075, %v8088
        %v8090 = vcombine.low %v8082, %v8089
        %v8092 = vunpack.c.l.s4 1935823168
        %v8093 = vunpack.c.0.s8 %v8092
        %v8094 = vlaneseq
        %v8095 = vshrl.u32 %v8094, 7
        %v8096 = vsub.s32 %v8093, %v8095
        %v8097 = vrot.slane %v8090, %v8096
        %v8098 = vcombine.low %v7784, %v7800
        %v8099 = vcombine.low %v7792, %v7808
        %v8101 = vunpack.c.l.s4 1935823168
        %v8102 = vunpack.c.0.s8 %v8101
        %v8103 = vlaneseq
        %v8104 = vshrl.u32 %v8103, 7
        %v8105 = vsub.s32 %v8102, %v8104
        %v8106 = vrot.slane %v8098, %v8105
        %v8108 = vunpack.c.l.s4 1935823168
        %v8109 = vunpack.c.0.s8 %v8108
        %v8110 = vlaneseq
        %v8111 = vshrl.u32 %v8110, 7
        %v8112 = vsub.s32 %v8109, %v8111
        %v8113 = vrot.slane %v8099, %v8112
        %v8114 = vcombine.low %v8106, %v8113
        %v8116 = vunpack.c.l.s4 1935823168
        %v8117 = vunpack.c.0.s8 %v8116
        %v8118 = vlaneseq
        %v8119 = vshrl.u32 %v8118, 7
        %v8120 = vsub.s32 %v8117, %v8119
        %v8121 = vrot.slane %v8114, %v8120
        %v8122 = vcombine.low %v7816, %v7833
        %v8123 = vcombine.low %v7825, %v7841
        %v8125 = vunpack.c.l.s4 1935823168
        %v8126 = vunpack.c.0.s8 %v8125
        %v8127 = vlaneseq
        %v8128 = vshrl.u32 %v8127, 7
        %v8129 = vsub.s32 %v8126, %v8128
        %v8130 = vrot.slane %v8122, %v8129
        %v8132 = vunpack.c.l.s4 1935823168
        %v8133 = vunpack.c.0.s8 %v8132
        %v8134 = vlaneseq
        %v8135 = vshrl.u32 %v8134, 7
        %v8136 = vsub.s32 %v8133, %v8135
        %v8137 = vrot.slane %v8123, %v8136
        %v8138 = vcombine.low %v8130, %v8137
        %v8140 = vunpack.c.l.s4 1935823168
        %v8141 = vunpack.c.0.s8 %v8140
        %v8142 = vlaneseq
        %v8143 = vshrl.u32 %v8142, 7
        %v8144 = vsub.s32 %v8141, %v8143
        %v8145 = vrot.slane %v8138, %v8144
        %v8147 = vunpack.c.l.s4 1935823168
        %v8148 = vunpack.c.0.s8 %v8147
        %v8149 = vlaneseq
        %v8150 = vshrl.u32 %v8149, 7
        %v8151 = vsub.s32 %v8148, %v8150
        %v8152 = vrot.slane %v7849, %v8151
        %v8154 = vunpack.c.l.s4 1935823168
        %v8155 = vunpack.c.0.s8 %v8154
        %v8156 = vlaneseq
        %v8157 = vshrl.u32 %v8156, 7
        %v8158 = vsub.s32 %v8155, %v8157
        %v8159 = vrot.slane %v7857, %v8158
        %v8160 = vcombine.low %v8152, %v8159
        %v8162 = vunpack.c.l.s4 1935823168
        %v8163 = vunpack.c.0.s8 %v8162
        %v8164 = vlaneseq
        %v8165 = vshrl.u32 %v8164, 7
        %v8166 = vsub.s32 %v8163, %v8165
        %v8167 = vrot.slane %v8160, %v8166
        %8181 = vst [vmem:[#allocation4 + $0x1c] sm:$0xf] %v7881
        %8182 = vst [vmem:[#allocation4 + $0x40] sm:$0xf] %v7905
        %8183 = vst [vmem:[#allocation4 + $0x64] sm:$0xf] %v7929
        %8184 = vst [vmem:[#allocation4 + $0x88] sm:$0xf] %v7953
        %8185 = vst [vmem:[#allocation4 + $0xac] sm:$0xf] %v7977
        %8186 = vst [vmem:[#allocation4 + $0xd0] sm:$0xf] %v8001
        %8187 = vst [vmem:[#allocation4 + $0xf4] sm:$0xf] %v8025
        %8188 = vst [vmem:[#allocation4 + $0x118] sm:$0xf] %v8049
        %8189 = vst [vmem:[#allocation4 + $0x13c] sm:$0xf] %v8073
        %8190 = vst [vmem:[#allocation4 + $0x160] sm:$0xf] %v8097
        %8191 = vst [vmem:[#allocation4 + $0x184] sm:$0xf] %v8121
        %8192 = vst [vmem:[#allocation4 + $0x1a8] sm:$0xf] %v8145
        %8193 = vst [vmem:[#allocation4 + $0x1cc] sm:$0x3] %v8167
        %v8194 = vld [vmem:[%s6191] sm:$0xe]
        %v8195 = vld [vmem:[%s6191 + $0x4] sm:$0x3]
        %v8196 = vld [vmem:[%s6191 + $0x8] sm:$0xe]
        %v8197 = vld [vmem:[%s6191 + $0xc] sm:$0x3]
        %v8198 = vld [vmem:[%s6191 + $0x10] sm:$0xe]
        %v8199 = vld [vmem:[%s6191 + $0x14] sm:$0x3]
        %v8200 = vld [vmem:[%s6191 + $0x18] sm:$0xe]
        %v8201 = vld [vmem:[%s6191 + $0x1c] sm:$0x3]
        %v8202 = vld [vmem:[%s6191 + $0x20] sm:$0xe]
        %v8203 = vld [vmem:[%s6191 + $0x24] sm:$0x3]
        %v8204 = vld [vmem:[%s6191 + $0x28] sm:$0xe]
        %v8205 = vld [vmem:[%s6191 + $0x2c] sm:$0x3]
        %v8206 = vld [vmem:[%s6191 + $0x30] sm:$0xe]
        %v8207 = vld [vmem:[%s6191 + $0x34] sm:$0x3]
        %v8208 = vld [vmem:[%s6191 + $0x38] sm:$0xe]
        %v8209 = vld [vmem:[%s6191 + $0x3c] sm:$0x3]
        %v8210 = vld [vmem:[%s6191 + $0x40] sm:$0xe]
        %v8211 = vld [vmem:[%s6191 + $0x44] sm:$0x3]
        %v8212 = vld [vmem:[%s6191 + $0x48] sm:$0xe]
        %v8213 = vld [vmem:[%s6191 + $0x4c] sm:$0x3]
        %v8235 = vunpack.c.l.s4 1966171168
        %v8236 = vunpack.c.0.s8 %v8235
        %v8237 = vlaneseq
        %v8238 = vshrl.u32 %v8237, 7
        %v8239 = vsub.s32 %v8236, %v8238
        %v8240 = vrot.slane %v8194, %v8239
        %v8241 = vcombine.high %v8240, %v8240
        %v8243 = vunpack.c.l.s4 1966171168
        %v8244 = vunpack.c.0.s8 %v8243
        %v8245 = vlaneseq
        %v8246 = vshrl.u32 %v8245, 7
        %v8247 = vsub.s32 %v8244, %v8246
        %v8248 = vrot.slane %v8240, %v8247
        %v8250 = vunpack.c.l.s4 1966171168
        %v8251 = vunpack.c.0.s8 %v8250
        %v8252 = vlaneseq
        %v8253 = vshrl.u32 %v8252, 7
        %v8254 = vsub.s32 %v8251, %v8253
        %v8255 = vrot.slane %v8241, %v8254
        %v8256 = vcombine.high %v8248, %v8248
        %v8257 = vcombine.high %v8255, %v8255
        %v8259 = vunpack.c.l.s4 1966171168
        %v8260 = vunpack.c.0.s8 %v8259
        %v8261 = vlaneseq
        %v8262 = vshrl.u32 %v8261, 7
        %v8263 = vsub.s32 %v8260, %v8262
        %v8264 = vrot.slane %v8195, %v8263
        %v8265 = vcombine.high %v8264, %v8264
        %v8267 = vunpack.c.l.s4 1966171168
        %v8268 = vunpack.c.0.s8 %v8267
        %v8269 = vlaneseq
        %v8270 = vshrl.u32 %v8269, 7
        %v8271 = vsub.s32 %v8268, %v8270
        %v8272 = vrot.slane %v8264, %v8271
        %v8274 = vunpack.c.l.s4 1966171168
        %v8275 = vunpack.c.0.s8 %v8274
        %v8276 = vlaneseq
        %v8277 = vshrl.u32 %v8276, 7
        %v8278 = vsub.s32 %v8275, %v8277
        %v8279 = vrot.slane %v8265, %v8278
        %v8281 = vunpack.c.l.s4 1966171168
        %v8282 = vunpack.c.0.s8 %v8281
        %v8283 = vlaneseq
        %v8284 = vshrl.u32 %v8283, 7
        %v8285 = vsub.s32 %v8282, %v8284
        %v8286 = vrot.slane %v8196, %v8285
        %v8287 = vcombine.high %v8286, %v8286
        %v8289 = vunpack.c.l.s4 1966171168
        %v8290 = vunpack.c.0.s8 %v8289
        %v8291 = vlaneseq
        %v8292 = vshrl.u32 %v8291, 7
        %v8293 = vsub.s32 %v8290, %v8292
        %v8294 = vrot.slane %v8286, %v8293
        %v8296 = vunpack.c.l.s4 1966171168
        %v8297 = vunpack.c.0.s8 %v8296
        %v8298 = vlaneseq
        %v8299 = vshrl.u32 %v8298, 7
        %v8300 = vsub.s32 %v8297, %v8299
        %v8301 = vrot.slane %v8287, %v8300
        %v8302 = vcombine.high %v8294, %v8294
        %v8303 = vcombine.high %v8301, %v8301
        %v8305 = vunpack.c.l.s4 1966171168
        %v8306 = vunpack.c.0.s8 %v8305
        %v8307 = vlaneseq
        %v8308 = vshrl.u32 %v8307, 7
        %v8309 = vsub.s32 %v8306, %v8308
        %v8310 = vrot.slane %v8197, %v8309
        %v8311 = vcombine.high %v8310, %v8310
        %v8313 = vunpack.c.l.s4 1966171168
        %v8314 = vunpack.c.0.s8 %v8313
        %v8315 = vlaneseq
        %v8316 = vshrl.u32 %v8315, 7
        %v8317 = vsub.s32 %v8314, %v8316
        %v8318 = vrot.slane %v8310, %v8317
        %v8320 = vunpack.c.l.s4 1966171168
        %v8321 = vunpack.c.0.s8 %v8320
        %v8322 = vlaneseq
        %v8323 = vshrl.u32 %v8322, 7
        %v8324 = vsub.s32 %v8321, %v8323
        %v8325 = vrot.slane %v8311, %v8324
        %v8327 = vunpack.c.l.s4 1966171168
        %v8328 = vunpack.c.0.s8 %v8327
        %v8329 = vlaneseq
        %v8330 = vshrl.u32 %v8329, 7
        %v8331 = vsub.s32 %v8328, %v8330
        %v8332 = vrot.slane %v8198, %v8331
        %v8333 = vcombine.high %v8332, %v8332
        %v8335 = vunpack.c.l.s4 1966171168
        %v8336 = vunpack.c.0.s8 %v8335
        %v8337 = vlaneseq
        %v8338 = vshrl.u32 %v8337, 7
        %v8339 = vsub.s32 %v8336, %v8338
        %v8340 = vrot.slane %v8332, %v8339
        %v8342 = vunpack.c.l.s4 1966171168
        %v8343 = vunpack.c.0.s8 %v8342
        %v8344 = vlaneseq
        %v8345 = vshrl.u32 %v8344, 7
        %v8346 = vsub.s32 %v8343, %v8345
        %v8347 = vrot.slane %v8333, %v8346
        %v8348 = vcombine.high %v8340, %v8340
        %v8349 = vcombine.high %v8347, %v8347
        %v8351 = vunpack.c.l.s4 1966171168
        %v8352 = vunpack.c.0.s8 %v8351
        %v8353 = vlaneseq
        %v8354 = vshrl.u32 %v8353, 7
        %v8355 = vsub.s32 %v8352, %v8354
        %v8356 = vrot.slane %v8199, %v8355
        %v8357 = vcombine.high %v8356, %v8356
        %v8359 = vunpack.c.l.s4 1966171168
        %v8360 = vunpack.c.0.s8 %v8359
        %v8361 = vlaneseq
        %v8362 = vshrl.u32 %v8361, 7
        %v8363 = vsub.s32 %v8360, %v8362
        %v8364 = vrot.slane %v8356, %v8363
        %v8366 = vunpack.c.l.s4 1966171168
        %v8367 = vunpack.c.0.s8 %v8366
        %v8368 = vlaneseq
        %v8369 = vshrl.u32 %v8368, 7
        %v8370 = vsub.s32 %v8367, %v8369
        %v8371 = vrot.slane %v8357, %v8370
        %v8373 = vunpack.c.l.s4 1966171168
        %v8374 = vunpack.c.0.s8 %v8373
        %v8375 = vlaneseq
        %v8376 = vshrl.u32 %v8375, 7
        %v8377 = vsub.s32 %v8374, %v8376
        %v8378 = vrot.slane %v8200, %v8377
        %v8379 = vcombine.high %v8378, %v8378
        %v8381 = vunpack.c.l.s4 1966171168
        %v8382 = vunpack.c.0.s8 %v8381
        %v8383 = vlaneseq
        %v8384 = vshrl.u32 %v8383, 7
        %v8385 = vsub.s32 %v8382, %v8384
        %v8386 = vrot.slane %v8378, %v8385
        %v8388 = vunpack.c.l.s4 1966171168
        %v8389 = vunpack.c.0.s8 %v8388
        %v8390 = vlaneseq
        %v8391 = vshrl.u32 %v8390, 7
        %v8392 = vsub.s32 %v8389, %v8391
        %v8393 = vrot.slane %v8379, %v8392
        %v8394 = vcombine.high %v8386, %v8386
        %v8395 = vcombine.high %v8393, %v8393
        %v8397 = vunpack.c.l.s4 1966171168
        %v8398 = vunpack.c.0.s8 %v8397
        %v8399 = vlaneseq
        %v8400 = vshrl.u32 %v8399, 7
        %v8401 = vsub.s32 %v8398, %v8400
        %v8402 = vrot.slane %v8201, %v8401
        %v8403 = vcombine.high %v8402, %v8402
        %v8405 = vunpack.c.l.s4 1966171168
        %v8406 = vunpack.c.0.s8 %v8405
        %v8407 = vlaneseq
        %v8408 = vshrl.u32 %v8407, 7
        %v8409 = vsub.s32 %v8406, %v8408
        %v8410 = vrot.slane %v8402, %v8409
        %v8412 = vunpack.c.l.s4 1966171168
        %v8413 = vunpack.c.0.s8 %v8412
        %v8414 = vlaneseq
        %v8415 = vshrl.u32 %v8414, 7
        %v8416 = vsub.s32 %v8413, %v8415
        %v8417 = vrot.slane %v8403, %v8416
        %v8419 = vunpack.c.l.s4 1966171168
        %v8420 = vunpack.c.0.s8 %v8419
        %v8421 = vlaneseq
        %v8422 = vshrl.u32 %v8421, 7
        %v8423 = vsub.s32 %v8420, %v8422
        %v8424 = vrot.slane %v8202, %v8423
        %v8425 = vcombine.high %v8424, %v8424
        %v8427 = vunpack.c.l.s4 1966171168
        %v8428 = vunpack.c.0.s8 %v8427
        %v8429 = vlaneseq
        %v8430 = vshrl.u32 %v8429, 7
        %v8431 = vsub.s32 %v8428, %v8430
        %v8432 = vrot.slane %v8424, %v8431
        %v8434 = vunpack.c.l.s4 1966171168
        %v8435 = vunpack.c.0.s8 %v8434
        %v8436 = vlaneseq
        %v8437 = vshrl.u32 %v8436, 7
        %v8438 = vsub.s32 %v8435, %v8437
        %v8439 = vrot.slane %v8425, %v8438
        %v8440 = vcombine.high %v8432, %v8432
        %v8441 = vcombine.high %v8439, %v8439
        %v8443 = vunpack.c.l.s4 1966171168
        %v8444 = vunpack.c.0.s8 %v8443
        %v8445 = vlaneseq
        %v8446 = vshrl.u32 %v8445, 7
        %v8447 = vsub.s32 %v8444, %v8446
        %v8448 = vrot.slane %v8203, %v8447
        %v8449 = vcombine.high %v8448, %v8448
        %v8451 = vunpack.c.l.s4 1966171168
        %v8452 = vunpack.c.0.s8 %v8451
        %v8453 = vlaneseq
        %v8454 = vshrl.u32 %v8453, 7
        %v8455 = vsub.s32 %v8452, %v8454
        %v8456 = vrot.slane %v8448, %v8455
        %v8458 = vunpack.c.l.s4 1966171168
        %v8459 = vunpack.c.0.s8 %v8458
        %v8460 = vlaneseq
        %v8461 = vshrl.u32 %v8460, 7
        %v8462 = vsub.s32 %v8459, %v8461
        %v8463 = vrot.slane %v8449, %v8462
        %v8465 = vunpack.c.l.s4 1966171168
        %v8466 = vunpack.c.0.s8 %v8465
        %v8467 = vlaneseq
        %v8468 = vshrl.u32 %v8467, 7
        %v8469 = vsub.s32 %v8466, %v8468
        %v8470 = vrot.slane %v8204, %v8469
        %v8471 = vcombine.high %v8470, %v8470
        %v8473 = vunpack.c.l.s4 1966171168
        %v8474 = vunpack.c.0.s8 %v8473
        %v8475 = vlaneseq
        %v8476 = vshrl.u32 %v8475, 7
        %v8477 = vsub.s32 %v8474, %v8476
        %v8478 = vrot.slane %v8470, %v8477
        %v8480 = vunpack.c.l.s4 1966171168
        %v8481 = vunpack.c.0.s8 %v8480
        %v8482 = vlaneseq
        %v8483 = vshrl.u32 %v8482, 7
        %v8484 = vsub.s32 %v8481, %v8483
        %v8485 = vrot.slane %v8471, %v8484
        %v8486 = vcombine.high %v8478, %v8478
        %v8487 = vcombine.high %v8485, %v8485
        %v8489 = vunpack.c.l.s4 1966171168
        %v8490 = vunpack.c.0.s8 %v8489
        %v8491 = vlaneseq
        %v8492 = vshrl.u32 %v8491, 7
        %v8493 = vsub.s32 %v8490, %v8492
        %v8494 = vrot.slane %v8205, %v8493
        %v8495 = vcombine.high %v8494, %v8494
        %v8497 = vunpack.c.l.s4 1966171168
        %v8498 = vunpack.c.0.s8 %v8497
        %v8499 = vlaneseq
        %v8500 = vshrl.u32 %v8499, 7
        %v8501 = vsub.s32 %v8498, %v8500
        %v8502 = vrot.slane %v8494, %v8501
        %v8504 = vunpack.c.l.s4 1966171168
        %v8505 = vunpack.c.0.s8 %v8504
        %v8506 = vlaneseq
        %v8507 = vshrl.u32 %v8506, 7
        %v8508 = vsub.s32 %v8505, %v8507
        %v8509 = vrot.slane %v8495, %v8508
        %v8511 = vunpack.c.l.s4 1966171168
        %v8512 = vunpack.c.0.s8 %v8511
        %v8513 = vlaneseq
        %v8514 = vshrl.u32 %v8513, 7
        %v8515 = vsub.s32 %v8512, %v8514
        %v8516 = vrot.slane %v8206, %v8515
        %v8517 = vcombine.high %v8516, %v8516
        %v8519 = vunpack.c.l.s4 1966171168
        %v8520 = vunpack.c.0.s8 %v8519
        %v8521 = vlaneseq
        %v8522 = vshrl.u32 %v8521, 7
        %v8523 = vsub.s32 %v8520, %v8522
        %v8524 = vrot.slane %v8516, %v8523
        %v8526 = vunpack.c.l.s4 1966171168
        %v8527 = vunpack.c.0.s8 %v8526
        %v8528 = vlaneseq
        %v8529 = vshrl.u32 %v8528, 7
        %v8530 = vsub.s32 %v8527, %v8529
        %v8531 = vrot.slane %v8517, %v8530
        %v8532 = vcombine.high %v8524, %v8524
        %v8533 = vcombine.high %v8531, %v8531
        %v8535 = vunpack.c.l.s4 1966171168
        %v8536 = vunpack.c.0.s8 %v8535
        %v8537 = vlaneseq
        %v8538 = vshrl.u32 %v8537, 7
        %v8539 = vsub.s32 %v8536, %v8538
        %v8540 = vrot.slane %v8207, %v8539
        %v8541 = vcombine.high %v8540, %v8540
        %v8543 = vunpack.c.l.s4 1966171168
        %v8544 = vunpack.c.0.s8 %v8543
        %v8545 = vlaneseq
        %v8546 = vshrl.u32 %v8545, 7
        %v8547 = vsub.s32 %v8544, %v8546
        %v8548 = vrot.slane %v8540, %v8547
        %v8550 = vunpack.c.l.s4 1966171168
        %v8551 = vunpack.c.0.s8 %v8550
        %v8552 = vlaneseq
        %v8553 = vshrl.u32 %v8552, 7
        %v8554 = vsub.s32 %v8551, %v8553
        %v8555 = vrot.slane %v8541, %v8554
        %v8557 = vunpack.c.l.s4 1966171168
        %v8558 = vunpack.c.0.s8 %v8557
        %v8559 = vlaneseq
        %v8560 = vshrl.u32 %v8559, 7
        %v8561 = vsub.s32 %v8558, %v8560
        %v8562 = vrot.slane %v8208, %v8561
        %v8563 = vcombine.high %v8562, %v8562
        %v8565 = vunpack.c.l.s4 1966171168
        %v8566 = vunpack.c.0.s8 %v8565
        %v8567 = vlaneseq
        %v8568 = vshrl.u32 %v8567, 7
        %v8569 = vsub.s32 %v8566, %v8568
        %v8570 = vrot.slane %v8562, %v8569
        %v8572 = vunpack.c.l.s4 1966171168
        %v8573 = vunpack.c.0.s8 %v8572
        %v8574 = vlaneseq
        %v8575 = vshrl.u32 %v8574, 7
        %v8576 = vsub.s32 %v8573, %v8575
        %v8577 = vrot.slane %v8563, %v8576
        %v8578 = vcombine.high %v8570, %v8570
        %v8579 = vcombine.high %v8577, %v8577
        %v8581 = vunpack.c.l.s4 1966171168
        %v8582 = vunpack.c.0.s8 %v8581
        %v8583 = vlaneseq
        %v8584 = vshrl.u32 %v8583, 7
        %v8585 = vsub.s32 %v8582, %v8584
        %v8586 = vrot.slane %v8209, %v8585
        %v8587 = vcombine.high %v8586, %v8586
        %v8589 = vunpack.c.l.s4 1966171168
        %v8590 = vunpack.c.0.s8 %v8589
        %v8591 = vlaneseq
        %v8592 = vshrl.u32 %v8591, 7
        %v8593 = vsub.s32 %v8590, %v8592
        %v8594 = vrot.slane %v8586, %v8593
        %v8596 = vunpack.c.l.s4 1966171168
        %v8597 = vunpack.c.0.s8 %v8596
        %v8598 = vlaneseq
        %v8599 = vshrl.u32 %v8598, 7
        %v8600 = vsub.s32 %v8597, %v8599
        %v8601 = vrot.slane %v8587, %v8600
        %v8603 = vunpack.c.l.s4 1966171168
        %v8604 = vunpack.c.0.s8 %v8603
        %v8605 = vlaneseq
        %v8606 = vshrl.u32 %v8605, 7
        %v8607 = vsub.s32 %v8604, %v8606
        %v8608 = vrot.slane %v8210, %v8607
        %v8609 = vcombine.high %v8608, %v8608
        %v8611 = vunpack.c.l.s4 1966171168
        %v8612 = vunpack.c.0.s8 %v8611
        %v8613 = vlaneseq
        %v8614 = vshrl.u32 %v8613, 7
        %v8615 = vsub.s32 %v8612, %v8614
        %v8616 = vrot.slane %v8608, %v8615
        %v8618 = vunpack.c.l.s4 1966171168
        %v8619 = vunpack.c.0.s8 %v8618
        %v8620 = vlaneseq
        %v8621 = vshrl.u32 %v8620, 7
        %v8622 = vsub.s32 %v8619, %v8621
        %v8623 = vrot.slane %v8609, %v8622
        %v8624 = vcombine.high %v8616, %v8616
        %v8625 = vcombine.high %v8623, %v8623
        %v8627 = vunpack.c.l.s4 1966171168
        %v8628 = vunpack.c.0.s8 %v8627
        %v8629 = vlaneseq
        %v8630 = vshrl.u32 %v8629, 7
        %v8631 = vsub.s32 %v8628, %v8630
        %v8632 = vrot.slane %v8211, %v8631
        %v8633 = vcombine.high %v8632, %v8632
        %v8635 = vunpack.c.l.s4 1966171168
        %v8636 = vunpack.c.0.s8 %v8635
        %v8637 = vlaneseq
        %v8638 = vshrl.u32 %v8637, 7
        %v8639 = vsub.s32 %v8636, %v8638
        %v8640 = vrot.slane %v8632, %v8639
        %v8642 = vunpack.c.l.s4 1966171168
        %v8643 = vunpack.c.0.s8 %v8642
        %v8644 = vlaneseq
        %v8645 = vshrl.u32 %v8644, 7
        %v8646 = vsub.s32 %v8643, %v8645
        %v8647 = vrot.slane %v8633, %v8646
        %v8649 = vunpack.c.l.s4 1966171168
        %v8650 = vunpack.c.0.s8 %v8649
        %v8651 = vlaneseq
        %v8652 = vshrl.u32 %v8651, 7
        %v8653 = vsub.s32 %v8650, %v8652
        %v8654 = vrot.slane %v8212, %v8653
        %v8655 = vcombine.high %v8654, %v8654
        %v8657 = vunpack.c.l.s4 1966171168
        %v8658 = vunpack.c.0.s8 %v8657
        %v8659 = vlaneseq
        %v8660 = vshrl.u32 %v8659, 7
        %v8661 = vsub.s32 %v8658, %v8660
        %v8662 = vrot.slane %v8654, %v8661
        %v8664 = vunpack.c.l.s4 1966171168
        %v8665 = vunpack.c.0.s8 %v8664
        %v8666 = vlaneseq
        %v8667 = vshrl.u32 %v8666, 7
        %v8668 = vsub.s32 %v8665, %v8667
        %v8669 = vrot.slane %v8655, %v8668
        %v8670 = vcombine.high %v8662, %v8662
        %v8671 = vcombine.high %v8669, %v8669
        %v8673 = vunpack.c.l.s4 1966171168
        %v8674 = vunpack.c.0.s8 %v8673
        %v8675 = vlaneseq
        %v8676 = vshrl.u32 %v8675, 7
        %v8677 = vsub.s32 %v8674, %v8676
        %v8678 = vrot.slane %v8213, %v8677
        %v8679 = vcombine.high %v8678, %v8678
        %v8681 = vunpack.c.l.s4 1966171168
        %v8682 = vunpack.c.0.s8 %v8681
        %v8683 = vlaneseq
        %v8684 = vshrl.u32 %v8683, 7
        %v8685 = vsub.s32 %v8682, %v8684
        %v8686 = vrot.slane %v8678, %v8685
        %v8688 = vunpack.c.l.s4 1966171168
        %v8689 = vunpack.c.0.s8 %v8688
        %v8690 = vlaneseq
        %v8691 = vshrl.u32 %v8690, 7
        %v8692 = vsub.s32 %v8689, %v8691
        %v8693 = vrot.slane %v8679, %v8692
        %v8694 = vcombine.low %v8255, %v8257
        %v8695 = vcombine.low %v8256, %v8272
        %v8697 = vunpack.c.l.s4 1935823168
        %v8698 = vunpack.c.0.s8 %v8697
        %v8699 = vlaneseq
        %v8700 = vshrl.u32 %v8699, 7
        %v8701 = vsub.s32 %v8698, %v8700
        %v8702 = vrot.slane %v8694, %v8701
        %v8704 = vunpack.c.l.s4 1935823168
        %v8705 = vunpack.c.0.s8 %v8704
        %v8706 = vlaneseq
        %v8707 = vshrl.u32 %v8706, 7
        %v8708 = vsub.s32 %v8705, %v8707
        %v8709 = vrot.slane %v8695, %v8708
        %v8710 = vcombine.low %v8702, %v8709
        %v8712 = vunpack.c.l.s4 1935823168
        %v8713 = vunpack.c.0.s8 %v8712
        %v8714 = vlaneseq
        %v8715 = vshrl.u32 %v8714, 7
        %v8716 = vsub.s32 %v8713, %v8715
        %v8717 = vrot.slane %v8710, %v8716
        %v8718 = vcombine.low %v8279, %v8302
        %v8719 = vcombine.low %v8301, %v8303
        %v8721 = vunpack.c.l.s4 1935823168
        %v8722 = vunpack.c.0.s8 %v8721
        %v8723 = vlaneseq
        %v8724 = vshrl.u32 %v8723, 7
        %v8725 = vsub.s32 %v8722, %v8724
        %v8726 = vrot.slane %v8718, %v8725
        %v8728 = vunpack.c.l.s4 1935823168
        %v8729 = vunpack.c.0.s8 %v8728
        %v8730 = vlaneseq
        %v8731 = vshrl.u32 %v8730, 7
        %v8732 = vsub.s32 %v8729, %v8731
        %v8733 = vrot.slane %v8719, %v8732
        %v8734 = vcombine.low %v8726, %v8733
        %v8736 = vunpack.c.l.s4 1935823168
        %v8737 = vunpack.c.0.s8 %v8736
        %v8738 = vlaneseq
        %v8739 = vshrl.u32 %v8738, 7
        %v8740 = vsub.s32 %v8737, %v8739
        %v8741 = vrot.slane %v8734, %v8740
        %v8742 = vcombine.low %v8318, %v8347
        %v8743 = vcombine.low %v8325, %v8348
        %v8745 = vunpack.c.l.s4 1935823168
        %v8746 = vunpack.c.0.s8 %v8745
        %v8747 = vlaneseq
        %v8748 = vshrl.u32 %v8747, 7
        %v8749 = vsub.s32 %v8746, %v8748
        %v8750 = vrot.slane %v8742, %v8749
        %v8752 = vunpack.c.l.s4 1935823168
        %v8753 = vunpack.c.0.s8 %v8752
        %v8754 = vlaneseq
        %v8755 = vshrl.u32 %v8754, 7
        %v8756 = vsub.s32 %v8753, %v8755
        %v8757 = vrot.slane %v8743, %v8756
        %v8758 = vcombine.low %v8750, %v8757
        %v8760 = vunpack.c.l.s4 1935823168
        %v8761 = vunpack.c.0.s8 %v8760
        %v8762 = vlaneseq
        %v8763 = vshrl.u32 %v8762, 7
        %v8764 = vsub.s32 %v8761, %v8763
        %v8765 = vrot.slane %v8758, %v8764
        %v8766 = vcombine.low %v8349, %v8371
        %v8767 = vcombine.low %v8364, %v8393
        %v8769 = vunpack.c.l.s4 1935823168
        %v8770 = vunpack.c.0.s8 %v8769
        %v8771 = vlaneseq
        %v8772 = vshrl.u32 %v8771, 7
        %v8773 = vsub.s32 %v8770, %v8772
        %v8774 = vrot.slane %v8766, %v8773
        %v8776 = vunpack.c.l.s4 1935823168
        %v8777 = vunpack.c.0.s8 %v8776
        %v8778 = vlaneseq
        %v8779 = vshrl.u32 %v8778, 7
        %v8780 = vsub.s32 %v8777, %v8779
        %v8781 = vrot.slane %v8767, %v8780
        %v8782 = vcombine.low %v8774, %v8781
        %v8784 = vunpack.c.l.s4 1935823168
        %v8785 = vunpack.c.0.s8 %v8784
        %v8786 = vlaneseq
        %v8787 = vshrl.u32 %v8786, 7
        %v8788 = vsub.s32 %v8785, %v8787
        %v8789 = vrot.slane %v8782, %v8788
        %v8790 = vcombine.low %v8394, %v8410
        %v8791 = vcombine.low %v8395, %v8417
        %v8793 = vunpack.c.l.s4 1935823168
        %v8794 = vunpack.c.0.s8 %v8793
        %v8795 = vlaneseq
        %v8796 = vshrl.u32 %v8795, 7
        %v8797 = vsub.s32 %v8794, %v8796
        %v8798 = vrot.slane %v8790, %v8797
        %v8800 = vunpack.c.l.s4 1935823168
        %v8801 = vunpack.c.0.s8 %v8800
        %v8802 = vlaneseq
        %v8803 = vshrl.u32 %v8802, 7
        %v8804 = vsub.s32 %v8801, %v8803
        %v8805 = vrot.slane %v8791, %v8804
        %v8806 = vcombine.low %v8798, %v8805
        %v8808 = vunpack.c.l.s4 1935823168
        %v8809 = vunpack.c.0.s8 %v8808
        %v8810 = vlaneseq
        %v8811 = vshrl.u32 %v8810, 7
        %v8812 = vsub.s32 %v8809, %v8811
        %v8813 = vrot.slane %v8806, %v8812
        %v8814 = vcombine.low %v8439, %v8441
        %v8815 = vcombine.low %v8440, %v8456
        %v8817 = vunpack.c.l.s4 1935823168
        %v8818 = vunpack.c.0.s8 %v8817
        %v8819 = vlaneseq
        %v8820 = vshrl.u32 %v8819, 7
        %v8821 = vsub.s32 %v8818, %v8820
        %v8822 = vrot.slane %v8814, %v8821
        %v8824 = vunpack.c.l.s4 1935823168
        %v8825 = vunpack.c.0.s8 %v8824
        %v8826 = vlaneseq
        %v8827 = vshrl.u32 %v8826, 7
        %v8828 = vsub.s32 %v8825, %v8827
        %v8829 = vrot.slane %v8815, %v8828
        %v8830 = vcombine.low %v8822, %v8829
        %v8832 = vunpack.c.l.s4 1935823168
        %v8833 = vunpack.c.0.s8 %v8832
        %v8834 = vlaneseq
        %v8835 = vshrl.u32 %v8834, 7
        %v8836 = vsub.s32 %v8833, %v8835
        %v8837 = vrot.slane %v8830, %v8836
        %v8838 = vcombine.low %v8463, %v8486
        %v8839 = vcombine.low %v8485, %v8487
        %v8841 = vunpack.c.l.s4 1935823168
        %v8842 = vunpack.c.0.s8 %v8841
        %v8843 = vlaneseq
        %v8844 = vshrl.u32 %v8843, 7
        %v8845 = vsub.s32 %v8842, %v8844
        %v8846 = vrot.slane %v8838, %v8845
        %v8848 = vunpack.c.l.s4 1935823168
        %v8849 = vunpack.c.0.s8 %v8848
        %v8850 = vlaneseq
        %v8851 = vshrl.u32 %v8850, 7
        %v8852 = vsub.s32 %v8849, %v8851
        %v8853 = vrot.slane %v8839, %v8852
        %v8854 = vcombine.low %v8846, %v8853
        %v8856 = vunpack.c.l.s4 1935823168
        %v8857 = vunpack.c.0.s8 %v8856
        %v8858 = vlaneseq
        %v8859 = vshrl.u32 %v8858, 7
        %v8860 = vsub.s32 %v8857, %v8859
        %v8861 = vrot.slane %v8854, %v8860
        %v8862 = vcombine.low %v8502, %v8531
        %v8863 = vcombine.low %v8509, %v8532
        %v8865 = vunpack.c.l.s4 1935823168
        %v8866 = vunpack.c.0.s8 %v8865
        %v8867 = vlaneseq
        %v8868 = vshrl.u32 %v8867, 7
        %v8869 = vsub.s32 %v8866, %v8868
        %v8870 = vrot.slane %v8862, %v8869
        %v8872 = vunpack.c.l.s4 1935823168
        %v8873 = vunpack.c.0.s8 %v8872
        %v8874 = vlaneseq
        %v8875 = vshrl.u32 %v8874, 7
        %v8876 = vsub.s32 %v8873, %v8875
        %v8877 = vrot.slane %v8863, %v8876
        %v8878 = vcombine.low %v8870, %v8877
        %v8880 = vunpack.c.l.s4 1935823168
        %v8881 = vunpack.c.0.s8 %v8880
        %v8882 = vlaneseq
        %v8883 = vshrl.u32 %v8882, 7
        %v8884 = vsub.s32 %v8881, %v8883
        %v8885 = vrot.slane %v8878, %v8884
        %v8886 = vcombine.low %v8533, %v8555
        %v8887 = vcombine.low %v8548, %v8577
        %v8889 = vunpack.c.l.s4 1935823168
        %v8890 = vunpack.c.0.s8 %v8889
        %v8891 = vlaneseq
        %v8892 = vshrl.u32 %v8891, 7
        %v8893 = vsub.s32 %v8890, %v8892
        %v8894 = vrot.slane %v8886, %v8893
        %v8896 = vunpack.c.l.s4 1935823168
        %v8897 = vunpack.c.0.s8 %v8896
        %v8898 = vlaneseq
        %v8899 = vshrl.u32 %v8898, 7
        %v8900 = vsub.s32 %v8897, %v8899
        %v8901 = vrot.slane %v8887, %v8900
        %v8902 = vcombine.low %v8894, %v8901
        %v8904 = vunpack.c.l.s4 1935823168
        %v8905 = vunpack.c.0.s8 %v8904
        %v8906 = vlaneseq
        %v8907 = vshrl.u32 %v8906, 7
        %v8908 = vsub.s32 %v8905, %v8907
        %v8909 = vrot.slane %v8902, %v8908
        %v8910 = vcombine.low %v8578, %v8594
        %v8911 = vcombine.low %v8579, %v8601
        %v8913 = vunpack.c.l.s4 1935823168
        %v8914 = vunpack.c.0.s8 %v8913
        %v8915 = vlaneseq
        %v8916 = vshrl.u32 %v8915, 7
        %v8917 = vsub.s32 %v8914, %v8916
        %v8918 = vrot.slane %v8910, %v8917
        %v8920 = vunpack.c.l.s4 1935823168
        %v8921 = vunpack.c.0.s8 %v8920
        %v8922 = vlaneseq
        %v8923 = vshrl.u32 %v8922, 7
        %v8924 = vsub.s32 %v8921, %v8923
        %v8925 = vrot.slane %v8911, %v8924
        %v8926 = vcombine.low %v8918, %v8925
        %v8928 = vunpack.c.l.s4 1935823168
        %v8929 = vunpack.c.0.s8 %v8928
        %v8930 = vlaneseq
        %v8931 = vshrl.u32 %v8930, 7
        %v8932 = vsub.s32 %v8929, %v8931
        %v8933 = vrot.slane %v8926, %v8932
        %v8934 = vcombine.low %v8623, %v8625
        %v8935 = vcombine.low %v8624, %v8640
        %v8937 = vunpack.c.l.s4 1935823168
        %v8938 = vunpack.c.0.s8 %v8937
        %v8939 = vlaneseq
        %v8940 = vshrl.u32 %v8939, 7
        %v8941 = vsub.s32 %v8938, %v8940
        %v8942 = vrot.slane %v8934, %v8941
        %v8944 = vunpack.c.l.s4 1935823168
        %v8945 = vunpack.c.0.s8 %v8944
        %v8946 = vlaneseq
        %v8947 = vshrl.u32 %v8946, 7
        %v8948 = vsub.s32 %v8945, %v8947
        %v8949 = vrot.slane %v8935, %v8948
        %v8950 = vcombine.low %v8942, %v8949
        %v8952 = vunpack.c.l.s4 1935823168
        %v8953 = vunpack.c.0.s8 %v8952
        %v8954 = vlaneseq
        %v8955 = vshrl.u32 %v8954, 7
        %v8956 = vsub.s32 %v8953, %v8955
        %v8957 = vrot.slane %v8950, %v8956
        %v8958 = vcombine.low %v8647, %v8670
        %v8959 = vcombine.low %v8669, %v8671
        %v8961 = vunpack.c.l.s4 1935823168
        %v8962 = vunpack.c.0.s8 %v8961
        %v8963 = vlaneseq
        %v8964 = vshrl.u32 %v8963, 7
        %v8965 = vsub.s32 %v8962, %v8964
        %v8966 = vrot.slane %v8958, %v8965
        %v8968 = vunpack.c.l.s4 1935823168
        %v8969 = vunpack.c.0.s8 %v8968
        %v8970 = vlaneseq
        %v8971 = vshrl.u32 %v8970, 7
        %v8972 = vsub.s32 %v8969, %v8971
        %v8973 = vrot.slane %v8959, %v8972
        %v8974 = vcombine.low %v8966, %v8973
        %v8976 = vunpack.c.l.s4 1935823168
        %v8977 = vunpack.c.0.s8 %v8976
        %v8978 = vlaneseq
        %v8979 = vshrl.u32 %v8978, 7
        %v8980 = vsub.s32 %v8977, %v8979
        %v8981 = vrot.slane %v8974, %v8980
        %v8983 = vunpack.c.l.s4 1935823168
        %v8984 = vunpack.c.0.s8 %v8983
        %v8985 = vlaneseq
        %v8986 = vshrl.u32 %v8985, 7
        %v8987 = vsub.s32 %v8984, %v8986
        %v8988 = vrot.slane %v8686, %v8987
        %v8990 = vunpack.c.l.s4 1935823168
        %v8991 = vunpack.c.0.s8 %v8990
        %v8992 = vlaneseq
        %v8993 = vshrl.u32 %v8992, 7
        %v8994 = vsub.s32 %v8991, %v8993
        %v8995 = vrot.slane %v8693, %v8994
        %v8996 = vcombine.low %v8988, %v8995
        %v8998 = vunpack.c.l.s4 1935823168
        %v8999 = vunpack.c.0.s8 %v8998
        %v9000 = vlaneseq
        %v9001 = vshrl.u32 %v9000, 7
        %v9002 = vsub.s32 %v8999, %v9001
        %v9003 = vrot.slane %v8996, %v9002
        %9017 = vst [vmem:[#allocation4 + $0x20] sm:$0xf] %v8717
        %9018 = vst [vmem:[#allocation4 + $0x44] sm:$0xf] %v8741
        %9019 = vst [vmem:[#allocation4 + $0x68] sm:$0xf] %v8765
        %9020 = vst [vmem:[#allocation4 + $0x8c] sm:$0xf] %v8789
        %9021 = vst [vmem:[#allocation4 + $0xb0] sm:$0xf] %v8813
        %9022 = vst [vmem:[#allocation4 + $0xd4] sm:$0xf] %v8837
        %9023 = vst [vmem:[#allocation4 + $0xf8] sm:$0xf] %v8861
        %9024 = vst [vmem:[#allocation4 + $0x11c] sm:$0xf] %v8885
        %9025 = vst [vmem:[#allocation4 + $0x140] sm:$0xf] %v8909
        %9026 = vst [vmem:[#allocation4 + $0x164] sm:$0xf] %v8933
        %9027 = vst [vmem:[#allocation4 + $0x188] sm:$0xf] %v8957
        %9028 = vst [vmem:[#allocation4 + $0x1ac] sm:$0xf] %v8981
        %9029 = vst [vmem:[#allocation4 + $0x1d0] sm:$0x3] %v9003
        %v9030 = vld [vmem:[#allocation4] sm:$0xff]
        %v9031 = vld [vmem:[#allocation4 + $0x8] sm:$0xff]
        %v9032 = vld [vmem:[#allocation4 + $0x10] sm:$0xff]
        %v9033 = vld [vmem:[#allocation4 + $0x18] sm:$0xff]
        %v9034 = vld [vmem:[#allocation4 + $0x20] sm:$0xf]
        %v9035 = vld [vmem:[#allocation4 + $0x24] sm:$0xff]
        %v9036 = vld [vmem:[#allocation4 + $0x2c] sm:$0xff]
        %v9037 = vld [vmem:[#allocation4 + $0x34] sm:$0xff]
        %v9038 = vld [vmem:[#allocation4 + $0x3c] sm:$0xff]
        %v9039 = vld [vmem:[#allocation4 + $0x44] sm:$0xf]
        %v9040 = vld [vmem:[#allocation4 + $0x48] sm:$0xff]
        %v9041 = vld [vmem:[#allocation4 + $0x50] sm:$0xff]
        %v9042 = vld [vmem:[#allocation4 + $0x58] sm:$0xff]
        %v9043 = vld [vmem:[#allocation4 + $0x60] sm:$0xff]
        %v9044 = vld [vmem:[#allocation4 + $0x68] sm:$0xf]
        %v9045 = vld [vmem:[#allocation4 + $0x6c] sm:$0xff]
        %v9046 = vld [vmem:[#allocation4 + $0x74] sm:$0xff]
        %v9047 = vld [vmem:[#allocation4 + $0x7c] sm:$0xff]
        %v9048 = vld [vmem:[#allocation4 + $0x84] sm:$0xff]
        %v9049 = vld [vmem:[#allocation4 + $0x8c] sm:$0xf]
        %v9050 = vld [vmem:[#allocation4 + $0x90] sm:$0xff]
        %v9051 = vld [vmem:[#allocation4 + $0x98] sm:$0xff]
        %v9052 = vld [vmem:[#allocation4 + $0xa0] sm:$0xff]
        %v9053 = vld [vmem:[#allocation4 + $0xa8] sm:$0xff]
        %v9054 = vld [vmem:[#allocation4 + $0xb0] sm:$0xf]
        %v9055 = vld [vmem:[#allocation4 + $0xb4] sm:$0xff]
        %v9056 = vld [vmem:[#allocation4 + $0xbc] sm:$0xff]
        %v9057 = vld [vmem:[#allocation4 + $0xc4] sm:$0xff]
        %v9058 = vld [vmem:[#allocation4 + $0xcc] sm:$0xff]
        %v9059 = vld [vmem:[#allocation4 + $0xd4] sm:$0xf]
        %v9060 = vld [vmem:[#allocation4 + $0xd8] sm:$0xff]
        %v9061 = vld [vmem:[#allocation4 + $0xe0] sm:$0xff]
        %v9062 = vld [vmem:[#allocation4 + $0xe8] sm:$0xff]
        %v9063 = vld [vmem:[#allocation4 + $0xf0] sm:$0xff]
        %v9064 = vld [vmem:[#allocation4 + $0xf8] sm:$0xf]
        %v9065 = vld [vmem:[#allocation4 + $0xfc] sm:$0xff]
        %v9066 = vld [vmem:[#allocation4 + $0x104] sm:$0xff]
        %v9067 = vld [vmem:[#allocation4 + $0x10c] sm:$0xff]
        %v9068 = vld [vmem:[#allocation4 + $0x114] sm:$0xff]
        %v9069 = vld [vmem:[#allocation4 + $0x11c] sm:$0xf]
        %v9070 = vld [vmem:[#allocation4 + $0x120] sm:$0xff]
        %v9071 = vld [vmem:[#allocation4 + $0x128] sm:$0xff]
        %v9072 = vld [vmem:[#allocation4 + $0x130] sm:$0xff]
        %v9073 = vld [vmem:[#allocation4 + $0x138] sm:$0xff]
        %v9074 = vld [vmem:[#allocation4 + $0x140] sm:$0xf]
        %v9075 = vld [vmem:[#allocation4 + $0x144] sm:$0xff]
        %v9076 = vld [vmem:[#allocation4 + $0x14c] sm:$0xff]
        %v9077 = vld [vmem:[#allocation4 + $0x154] sm:$0xff]
        %v9078 = vld [vmem:[#allocation4 + $0x15c] sm:$0xff]
        %v9079 = vld [vmem:[#allocation4 + $0x164] sm:$0xf]
        %v9080 = vld [vmem:[#allocation4 + $0x168] sm:$0xff]
        %v9081 = vld [vmem:[#allocation4 + $0x170] sm:$0xff]
        %v9082 = vld [vmem:[#allocation4 + $0x178] sm:$0xff]
        %v9083 = vld [vmem:[#allocation4 + $0x180] sm:$0xff]
        %v9084 = vld [vmem:[#allocation4 + $0x188] sm:$0xf]
        %v9085 = vld [vmem:[#allocation4 + $0x18c] sm:$0xff]
        %v9086 = vld [vmem:[#allocation4 + $0x194] sm:$0xff]
        %v9087 = vld [vmem:[#allocation4 + $0x19c] sm:$0xff]
        %v9088 = vld [vmem:[#allocation4 + $0x1a4] sm:$0xff]
        %v9089 = vld [vmem:[#allocation4 + $0x1ac] sm:$0xf]
        %v9090 = vld [vmem:[#allocation4 + $0x1b0] sm:$0x33]
        %v9091 = vld [vmem:[#allocation4 + $0x1b8] sm:$0x33]
        %v9092 = vld [vmem:[#allocation4 + $0x1c0] sm:$0x33]
        %v9093 = vld [vmem:[#allocation4 + $0x1c8] sm:$0x33]
        %v9094 = vld [vmem:[#allocation4 + $0x1d0] sm:$0x3]
        %v9095 = vld [vmem:[%s1] sm:$0xf]
        %v9096 = vld [vmem:[%s1 + $0x4] sm:$0xf]
        %v9097 = vld [vmem:[%s1 + $0x8] sm:$0xf]
        %v9098 = vld [vmem:[%s1 + $0xc] sm:$0xf]
        %v9099 = vld [vmem:[%s1 + $0x10] sm:$0xf]
        %v9100 = vld [vmem:[%s1 + $0x14] sm:$0xf]
        %v9101 = vld [vmem:[%s1 + $0x18] sm:$0xf]
        %v9102 = vld [vmem:[%s1 + $0x1c] sm:$0xf]
        %v9103 = vld [vmem:[%s1 + $0x20] sm:$0xf]
        %v9104 = vld [vmem:[%s1 + $0x24] sm:$0xf]
        %v9105 = vld [vmem:[%s1 + $0x28] sm:$0xf]
        %v9106 = vld [vmem:[%s1 + $0x2c] sm:$0xf]
        %v9107 = vld [vmem:[%s1 + $0x30] sm:$0xf]
        %v9108 = vld [vmem:[%s1 + $0x34] sm:$0xf]
        %v9109 = vld [vmem:[%s1 + $0x38] sm:$0xf]
        %v9110 = vld [vmem:[%s1 + $0x3c] sm:$0xf]
        %v9111 = vld [vmem:[%s1 + $0x40] sm:$0xf]
        %v9112 = vld [vmem:[%s1 + $0x44] sm:$0xf]
        %v9113 = vld [vmem:[%s1 + $0x48] sm:$0xf]
        %v9114 = vld [vmem:[%s1 + $0x4c] sm:$0xf]
        %v9115 = vld [vmem:[%s1 + $0x50] sm:$0xf]
        %v9116 = vld [vmem:[%s1 + $0x54] sm:$0xf]
        %v9117 = vld [vmem:[%s1 + $0x58] sm:$0xf]
        %v9118 = vld [vmem:[%s1 + $0x5c] sm:$0xf]
        %v9119 = vld [vmem:[%s1 + $0x60] sm:$0xf]
        %v9120 = vld [vmem:[%s1 + $0x64] sm:$0xf]
        %v9121 = vld [vmem:[%s1 + $0x68] sm:$0xf]
        %v9122 = vld [vmem:[%s1 + $0x6c] sm:$0xf]
        %v9123 = vld [vmem:[%s1 + $0x70] sm:$0xf]
        %v9124 = vld [vmem:[%s1 + $0x74] sm:$0xf]
        %v9125 = vld [vmem:[%s1 + $0x78] sm:$0xf]
        %v9126 = vld [vmem:[%s1 + $0x7c] sm:$0xf]
        %v9127 = vld [vmem:[%s1 + $0x80] sm:$0xf]
        %v9128 = vld [vmem:[%s1 + $0x84] sm:$0xf]
        %v9129 = vld [vmem:[%s1 + $0x88] sm:$0xf]
        %v9130 = vld [vmem:[%s1 + $0x8c] sm:$0xf]
        %v9131 = vld [vmem:[%s1 + $0x90] sm:$0xf]
        %v9132 = vld [vmem:[%s1 + $0x94] sm:$0xf]
        %v9133 = vld [vmem:[%s1 + $0x98] sm:$0xf]
        %v9134 = vld [vmem:[%s1 + $0x9c] sm:$0xf]
        %v9135 = vld [vmem:[%s1 + $0xa0] sm:$0xf]
        %v9136 = vld [vmem:[%s1 + $0xa4] sm:$0xf]
        %v9137 = vld [vmem:[%s1 + $0xa8] sm:$0xf]
        %v9138 = vld [vmem:[%s1 + $0xac] sm:$0xf]
        %v9139 = vld [vmem:[%s1 + $0xb0] sm:$0xf]
        %v9140 = vld [vmem:[%s1 + $0xb4] sm:$0xf]
        %v9141 = vld [vmem:[%s1 + $0xb8] sm:$0xf]
        %v9142 = vld [vmem:[%s1 + $0xbc] sm:$0xf]
        %v9143 = vld [vmem:[%s1 + $0xc0] sm:$0xf]
        %v9144 = vld [vmem:[%s1 + $0xc4] sm:$0xf]
        %v9145 = vld [vmem:[%s1 + $0xc8] sm:$0xf]
        %v9146 = vld [vmem:[%s1 + $0xcc] sm:$0xf]
        %v9147 = vld [vmem:[%s1 + $0xd0] sm:$0xf]
        %v9148 = vld [vmem:[%s1 + $0xd4] sm:$0xf]
        %v9149 = vld [vmem:[%s1 + $0xd8] sm:$0xf]
        %v9150 = vld [vmem:[%s1 + $0xdc] sm:$0xf]
        %v9151 = vld [vmem:[%s1 + $0xe0] sm:$0xf]
        %v9152 = vld [vmem:[%s1 + $0xe4] sm:$0xf]
        %v9153 = vld [vmem:[%s1 + $0xe8] sm:$0xf]
        %v9154 = vld [vmem:[%s1 + $0xec] sm:$0xf]
        %v9155 = vld [vmem:[%s1 + $0xf0] sm:$0xf]
        %v9156 = vld [vmem:[%s1 + $0xf4] sm:$0xf]
        %v9157 = vld [vmem:[%s1 + $0xf8] sm:$0xf]
        %v9158 = vld [vmem:[%s1 + $0xfc] sm:$0xf]
        %v9159 = vld [vmem:[%s1 + $0x100] sm:$0xf]
        %v9160 = vld [vmem:[%s1 + $0x104] sm:$0xf]
        %v9161 = vld [vmem:[%s1 + $0x108] sm:$0xf]
        %v9162 = vld [vmem:[%s1 + $0x10c] sm:$0xf]
        %v9163 = vld [vmem:[%s1 + $0x110] sm:$0xf]
        %v9164 = vld [vmem:[%s1 + $0x114] sm:$0xf]
        %v9165 = vld [vmem:[%s1 + $0x118] sm:$0xf]
        %v9166 = vld [vmem:[%s1 + $0x11c] sm:$0xf]
        %v9167 = vld [vmem:[%s1 + $0x120] sm:$0xf]
        %v9168 = vld [vmem:[%s1 + $0x124] sm:$0xf]
        %v9169 = vld [vmem:[%s1 + $0x128] sm:$0xf]
        %v9170 = vld [vmem:[%s1 + $0x12c] sm:$0xf]
        %v9171 = vld [vmem:[%s1 + $0x130] sm:$0xf]
        %v9172 = vld [vmem:[%s1 + $0x134] sm:$0xf]
        %v9173 = vld [vmem:[%s1 + $0x138] sm:$0xf]
        %v9174 = vld [vmem:[%s1 + $0x13c] sm:$0xf]
        %v9175 = vld [vmem:[%s1 + $0x140] sm:$0xf]
        %v9176 = vld [vmem:[%s1 + $0x144] sm:$0xf]
        %v9177 = vld [vmem:[%s1 + $0x148] sm:$0xf]
        %v9178 = vld [vmem:[%s1 + $0x14c] sm:$0xf]
        %v9179 = vld [vmem:[%s1 + $0x150] sm:$0xf]
        %v9180 = vld [vmem:[%s1 + $0x154] sm:$0xf]
        %v9181 = vld [vmem:[%s1 + $0x158] sm:$0xf]
        %v9182 = vld [vmem:[%s1 + $0x15c] sm:$0xf]
        %v9183 = vld [vmem:[%s1 + $0x160] sm:$0xf]
        %v9184 = vld [vmem:[%s1 + $0x164] sm:$0xf]
        %v9185 = vld [vmem:[%s1 + $0x168] sm:$0xf]
        %v9186 = vld [vmem:[%s1 + $0x16c] sm:$0xf]
        %v9187 = vld [vmem:[%s1 + $0x170] sm:$0xf]
        %v9188 = vld [vmem:[%s1 + $0x174] sm:$0xf]
        %v9189 = vld [vmem:[%s1 + $0x178] sm:$0xf]
        %v9190 = vld [vmem:[%s1 + $0x17c] sm:$0xf]
        %v9191 = vld [vmem:[%s1 + $0x180] sm:$0xf]
        %v9192 = vld [vmem:[%s1 + $0x184] sm:$0xf]
        %v9193 = vld [vmem:[%s1 + $0x188] sm:$0xf]
        %v9194 = vld [vmem:[%s1 + $0x18c] sm:$0xf]
        %v9195 = vld [vmem:[%s1 + $0x190] sm:$0xf]
        %v9196 = vld [vmem:[%s1 + $0x194] sm:$0xf]
        %v9197 = vld [vmem:[%s1 + $0x198] sm:$0xf]
        %v9198 = vld [vmem:[%s1 + $0x19c] sm:$0xf]
        %v9199 = vld [vmem:[%s1 + $0x1a0] sm:$0xf]
        %v9200 = vld [vmem:[%s1 + $0x1a4] sm:$0xf]
        %v9201 = vld [vmem:[%s1 + $0x1a8] sm:$0xf]
        %v9202 = vld [vmem:[%s1 + $0x1ac] sm:$0xf]
        %v9203 = vld [vmem:[%s1 + $0x1b0] sm:$0xf]
        %v9204 = vld [vmem:[%s1 + $0x1b4] sm:$0xf]
        %v9205 = vld [vmem:[%s1 + $0x1b8] sm:$0xf]
        %v9206 = vld [vmem:[%s1 + $0x1bc] sm:$0xf]
        %v9207 = vld [vmem:[%s1 + $0x1c0] sm:$0xf]
        %v9208 = vld [vmem:[%s1 + $0x1c4] sm:$0xf]
        %v9209 = vld [vmem:[%s1 + $0x1c8] sm:$0xf]
        %v9210 = vld [vmem:[%s1 + $0x1cc] sm:$0xf]
        %v9211 = vld [vmem:[%s1 + $0x1d0] sm:$0xf]
        %v9212 = vld [vmem:[%s1 + $0x1d4] sm:$0xf]
        %v9213 = vld [vmem:[%s1 + $0x1d8] sm:$0xf]
        %v9214 = vld [vmem:[%s1 + $0x1dc] sm:$0xf]
        %v9215 = vld [vmem:[%s1 + $0x1e0] sm:$0xf]
        %v9216 = vld [vmem:[%s1 + $0x1e4] sm:$0xf]
        %v9217 = vld [vmem:[%s1 + $0x1e8] sm:$0xf]
        %v9218 = vld [vmem:[%s1 + $0x1ec] sm:$0xf]
        %v9219 = vld [vmem:[%s1 + $0x1f0] sm:$0xf]
        %v9220 = vld [vmem:[%s1 + $0x1f4] sm:$0xf]
        %v9221 = vld [vmem:[%s1 + $0x1f8] sm:$0xf]
        %v9222 = vld [vmem:[%s1 + $0x1fc] sm:$0xf]
        %v9223 = vld [vmem:[%s1 + $0x200] sm:$0xf]
        %v9224 = vld [vmem:[%s1 + $0x204] sm:$0xf]
        %v9225 = vld [vmem:[%s1 + $0x208] sm:$0xf]
        %v9226 = vld [vmem:[%s1 + $0x20c] sm:$0xf]
        %v9227 = vld [vmem:[%s1 + $0x210] sm:$0xf]
        %v9228 = vld [vmem:[%s1 + $0x214] sm:$0xf]
        %v9229 = vld [vmem:[%s1 + $0x218] sm:$0xf]
        %v9230 = vld [vmem:[%s1 + $0x21c] sm:$0xf]
        %v9231 = vld [vmem:[%s1 + $0x220] sm:$0xf]
        %v9232 = vld [vmem:[%s1 + $0x224] sm:$0xf]
        %v9233 = vld [vmem:[%s1 + $0x228] sm:$0xf]
        %v9234 = vld [vmem:[%s1 + $0x22c] sm:$0xf]
        %v9235 = vld [vmem:[%s1 + $0x230] sm:$0xf]
        %v9236 = vld [vmem:[%s1 + $0x234] sm:$0xf]
        %v9237 = vld [vmem:[%s1 + $0x238] sm:$0xf]
        %v9238 = vld [vmem:[%s1 + $0x23c] sm:$0xf]
        %v9304 = vunpack.c.l.b16 %v9030
        %v9305 = vunpack.c.h.b16 %v9030
        %v9306 = vunpack.c.l.b16 %v9031
        %v9307 = vunpack.c.h.b16 %v9031
        %v9308 = vunpack.c.l.b16 %v9032
        %v9309 = vunpack.c.h.b16 %v9032
        %v9310 = vunpack.c.l.b16 %v9033
        %v9311 = vunpack.c.h.b16 %v9033
        %v9312 = vunpack.c.l.b16 %v9034
        %v9313 = vunpack.c.l.b16 %v9035
        %v9314 = vunpack.c.h.b16 %v9035
        %v9315 = vunpack.c.l.b16 %v9036
        %v9316 = vunpack.c.h.b16 %v9036
        %v9317 = vunpack.c.l.b16 %v9037
        %v9318 = vunpack.c.h.b16 %v9037
        %v9319 = vunpack.c.l.b16 %v9038
        %v9320 = vunpack.c.h.b16 %v9038
        %v9321 = vunpack.c.l.b16 %v9039
        %v9322 = vunpack.c.l.b16 %v9040
        %v9323 = vunpack.c.h.b16 %v9040
        %v9324 = vunpack.c.l.b16 %v9041
        %v9325 = vunpack.c.h.b16 %v9041
        %v9326 = vunpack.c.l.b16 %v9042
        %v9327 = vunpack.c.h.b16 %v9042
        %v9328 = vunpack.c.l.b16 %v9043
        %v9329 = vunpack.c.h.b16 %v9043
        %v9330 = vunpack.c.l.b16 %v9044
        %v9331 = vunpack.c.l.b16 %v9045
        %v9332 = vunpack.c.h.b16 %v9045
        %v9333 = vunpack.c.l.b16 %v9046
        %v9334 = vunpack.c.h.b16 %v9046
        %v9335 = vunpack.c.l.b16 %v9047
        %v9336 = vunpack.c.h.b16 %v9047
        %v9337 = vunpack.c.l.b16 %v9048
        %v9338 = vunpack.c.h.b16 %v9048
        %v9339 = vunpack.c.l.b16 %v9049
        %v9340 = vunpack.c.l.b16 %v9050
        %v9341 = vunpack.c.h.b16 %v9050
        %v9342 = vunpack.c.l.b16 %v9051
        %v9343 = vunpack.c.h.b16 %v9051
        %v9344 = vunpack.c.l.b16 %v9052
        %v9345 = vunpack.c.h.b16 %v9052
        %v9346 = vunpack.c.l.b16 %v9053
        %v9347 = vunpack.c.h.b16 %v9053
        %v9348 = vunpack.c.l.b16 %v9054
        %v9349 = vunpack.c.l.b16 %v9055
        %v9350 = vunpack.c.h.b16 %v9055
        %v9351 = vunpack.c.l.b16 %v9056
        %v9352 = vunpack.c.h.b16 %v9056
        %v9353 = vunpack.c.l.b16 %v9057
        %v9354 = vunpack.c.h.b16 %v9057
        %v9355 = vunpack.c.l.b16 %v9058
        %v9356 = vunpack.c.h.b16 %v9058
        %v9357 = vunpack.c.l.b16 %v9059
        %v9358 = vunpack.c.l.b16 %v9060
        %v9359 = vunpack.c.h.b16 %v9060
        %v9360 = vunpack.c.l.b16 %v9061
        %v9361 = vunpack.c.h.b16 %v9061
        %v9362 = vunpack.c.l.b16 %v9062
        %v9363 = vunpack.c.h.b16 %v9062
        %v9364 = vunpack.c.l.b16 %v9063
        %v9365 = vunpack.c.h.b16 %v9063
        %v9366 = vunpack.c.l.b16 %v9064
        %v9367 = vunpack.c.l.b16 %v9065
        %v9368 = vunpack.c.h.b16 %v9065
        %v9369 = vunpack.c.l.b16 %v9066
        %v9370 = vunpack.c.h.b16 %v9066
        %v9371 = vunpack.c.l.b16 %v9067
        %v9372 = vunpack.c.h.b16 %v9067
        %v9373 = vunpack.c.l.b16 %v9068
        %v9374 = vunpack.c.h.b16 %v9068
        %v9375 = vunpack.c.l.b16 %v9069
        %v9376 = vunpack.c.l.b16 %v9070
        %v9377 = vunpack.c.h.b16 %v9070
        %v9378 = vunpack.c.l.b16 %v9071
        %v9379 = vunpack.c.h.b16 %v9071
        %v9380 = vunpack.c.l.b16 %v9072
        %v9381 = vunpack.c.h.b16 %v9072
        %v9382 = vunpack.c.l.b16 %v9073
        %v9383 = vunpack.c.h.b16 %v9073
        %v9384 = vunpack.c.l.b16 %v9074
        %v9385 = vunpack.c.l.b16 %v9075
        %v9386 = vunpack.c.h.b16 %v9075
        %v9387 = vunpack.c.l.b16 %v9076
        %v9388 = vunpack.c.h.b16 %v9076
        %v9389 = vunpack.c.l.b16 %v9077
        %v9390 = vunpack.c.h.b16 %v9077
        %v9391 = vunpack.c.l.b16 %v9078
        %v9392 = vunpack.c.h.b16 %v9078
        %v9393 = vunpack.c.l.b16 %v9079
        %v9394 = vunpack.c.l.b16 %v9080
        %v9395 = vunpack.c.h.b16 %v9080
        %v9396 = vunpack.c.l.b16 %v9081
        %v9397 = vunpack.c.h.b16 %v9081
        %v9398 = vunpack.c.l.b16 %v9082
        %v9399 = vunpack.c.h.b16 %v9082
        %v9400 = vunpack.c.l.b16 %v9083
        %v9401 = vunpack.c.h.b16 %v9083
        %v9402 = vunpack.c.l.b16 %v9084
        %v9403 = vunpack.c.l.b16 %v9085
        %v9404 = vunpack.c.h.b16 %v9085
        %v9405 = vunpack.c.l.b16 %v9086
        %v9406 = vunpack.c.h.b16 %v9086
        %v9407 = vunpack.c.l.b16 %v9087
        %v9408 = vunpack.c.h.b16 %v9087
        %v9409 = vunpack.c.l.b16 %v9088
        %v9410 = vunpack.c.h.b16 %v9088
        %v9411 = vunpack.c.l.b16 %v9089
        %v9412 = vunpack.c.l.b16 %v9090
        %v9413 = vunpack.c.h.b16 %v9090
        %v9414 = vunpack.c.l.b16 %v9091
        %v9415 = vunpack.c.h.b16 %v9091
        %v9416 = vunpack.c.l.b16 %v9092
        %v9417 = vunpack.c.h.b16 %v9092
        %v9418 = vunpack.c.l.b16 %v9093
        %v9419 = vunpack.c.h.b16 %v9093
        %v9420 = vunpack.c.l.b16 %v9094
        %v9421 = vpack.c.b16 %v9313, %v9304
        %v9422 = vpack.c.b16 %v9314, %v9305
        %v9423 = vpack.c.b16 %v9315, %v9306
        %v9424 = vpack.c.b16 %v9316, %v9307
        %v9425 = vpack.c.b16 %v9317, %v9308
        %v9426 = vpack.c.b16 %v9318, %v9309
        %v9427 = vpack.c.b16 %v9319, %v9310
        %v9428 = vpack.c.b16 %v9320, %v9311
        %v9429 = vpack.c.b16 %v9321, %v9312
        %v9430 = vpack.c.b16 %v9331, %v9322
        %v9431 = vpack.c.b16 %v9332, %v9323
        %v9432 = vpack.c.b16 %v9333, %v9324
        %v9433 = vpack.c.b16 %v9334, %v9325
        %v9434 = vpack.c.b16 %v9335, %v9326
        %v9435 = vpack.c.b16 %v9336, %v9327
        %v9436 = vpack.c.b16 %v9337, %v9328
        %v9437 = vpack.c.b16 %v9338, %v9329
        %v9438 = vpack.c.b16 %v9339, %v9330
        %v9439 = vpack.c.b16 %v9349, %v9340
        %v9440 = vpack.c.b16 %v9350, %v9341
        %v9441 = vpack.c.b16 %v9351, %v9342
        %v9442 = vpack.c.b16 %v9352, %v9343
        %v9443 = vpack.c.b16 %v9353, %v9344
        %v9444 = vpack.c.b16 %v9354, %v9345
        %v9445 = vpack.c.b16 %v9355, %v9346
        %v9446 = vpack.c.b16 %v9356, %v9347
        %v9447 = vpack.c.b16 %v9357, %v9348
        %v9448 = vpack.c.b16 %v9367, %v9358
        %v9449 = vpack.c.b16 %v9368, %v9359
        %v9450 = vpack.c.b16 %v9369, %v9360
        %v9451 = vpack.c.b16 %v9370, %v9361
        %v9452 = vpack.c.b16 %v9371, %v9362
        %v9453 = vpack.c.b16 %v9372, %v9363
        %v9454 = vpack.c.b16 %v9373, %v9364
        %v9455 = vpack.c.b16 %v9374, %v9365
        %v9456 = vpack.c.b16 %v9375, %v9366
        %v9457 = vpack.c.b16 %v9385, %v9376
        %v9458 = vpack.c.b16 %v9386, %v9377
        %v9459 = vpack.c.b16 %v9387, %v9378
        %v9460 = vpack.c.b16 %v9388, %v9379
        %v9461 = vpack.c.b16 %v9389, %v9380
        %v9462 = vpack.c.b16 %v9390, %v9381
        %v9463 = vpack.c.b16 %v9391, %v9382
        %v9464 = vpack.c.b16 %v9392, %v9383
        %v9465 = vpack.c.b16 %v9393, %v9384
        %v9466 = vpack.c.b16 %v9403, %v9394
        %v9467 = vpack.c.b16 %v9404, %v9395
        %v9468 = vpack.c.b16 %v9405, %v9396
        %v9469 = vpack.c.b16 %v9406, %v9397
        %v9470 = vpack.c.b16 %v9407, %v9398
        %v9471 = vpack.c.b16 %v9408, %v9399
        %v9472 = vpack.c.b16 %v9409, %v9400
        %v9473 = vpack.c.b16 %v9410, %v9401
        %v9474 = vpack.c.b16 %v9411, %v9402
        %v9475 = vpack.c.b16 %v9412, %v9412
        %v9476 = vpack.c.b16 %v9413, %v9413
        %v9477 = vpack.c.b16 %v9414, %v9414
        %v9478 = vpack.c.b16 %v9415, %v9415
        %v9479 = vpack.c.b16 %v9416, %v9416
        %v9480 = vpack.c.b16 %v9417, %v9417
        %v9481 = vpack.c.b16 %v9418, %v9418
        %v9482 = vpack.c.b16 %v9419, %v9419
        %v9483 = vpack.c.b16 %v9420, %v9420
        %v9691 = vunpack.c.l.b16 %v9095
        %v9692 = vunpack.c.l.b16 %v9096
        %v9693 = vunpack.c.l.b16 %v9097
        %v9694 = vunpack.c.l.b16 %v9098
        %v9695 = vunpack.c.l.b16 %v9099
        %v9696 = vunpack.c.l.b16 %v9100
        %v9697 = vunpack.c.l.b16 %v9101
        %v9698 = vunpack.c.l.b16 %v9102
        %v9699 = vunpack.c.l.b16 %v9103
        %v9700 = vunpack.c.l.b16 %v9104
        %v9701 = vunpack.c.l.b16 %v9105
        %v9702 = vunpack.c.l.b16 %v9106
        %v9703 = vunpack.c.l.b16 %v9107
        %v9704 = vunpack.c.l.b16 %v9108
        %v9705 = vunpack.c.l.b16 %v9109
        %v9706 = vunpack.c.l.b16 %v9110
        %v9707 = vunpack.c.l.b16 %v9111
        %v9708 = vunpack.c.l.b16 %v9112
        %v9709 = vunpack.c.l.b16 %v9113
        %v9710 = vunpack.c.l.b16 %v9114
        %v9711 = vunpack.c.l.b16 %v9115
        %v9712 = vunpack.c.l.b16 %v9116
        %v9713 = vunpack.c.l.b16 %v9117
        %v9714 = vunpack.c.l.b16 %v9118
        %v9715 = vunpack.c.l.b16 %v9119
        %v9716 = vunpack.c.l.b16 %v9120
        %v9717 = vunpack.c.l.b16 %v9121
        %v9718 = vunpack.c.l.b16 %v9122
        %v9719 = vunpack.c.l.b16 %v9123
        %v9720 = vunpack.c.l.b16 %v9124
        %v9721 = vunpack.c.l.b16 %v9125
        %v9722 = vunpack.c.l.b16 %v9126
        %v9723 = vunpack.c.l.b16 %v9127
        %v9724 = vunpack.c.l.b16 %v9128
        %v9725 = vunpack.c.l.b16 %v9129
        %v9726 = vunpack.c.l.b16 %v9130
        %v9727 = vunpack.c.l.b16 %v9131
        %v9728 = vunpack.c.l.b16 %v9132
        %v9729 = vunpack.c.l.b16 %v9133
        %v9730 = vunpack.c.l.b16 %v9134
        %v9731 = vunpack.c.l.b16 %v9135
        %v9732 = vunpack.c.l.b16 %v9136
        %v9733 = vunpack.c.l.b16 %v9137
        %v9734 = vunpack.c.l.b16 %v9138
        %v9735 = vunpack.c.l.b16 %v9139
        %v9736 = vunpack.c.l.b16 %v9140
        %v9737 = vunpack.c.l.b16 %v9141
        %v9738 = vunpack.c.l.b16 %v9142
        %v9739 = vunpack.c.l.b16 %v9143
        %v9740 = vunpack.c.l.b16 %v9144
        %v9741 = vunpack.c.l.b16 %v9145
        %v9742 = vunpack.c.l.b16 %v9146
        %v9743 = vunpack.c.l.b16 %v9147
        %v9744 = vunpack.c.l.b16 %v9148
        %v9745 = vunpack.c.l.b16 %v9149
        %v9746 = vunpack.c.l.b16 %v9150
        %v9747 = vunpack.c.l.b16 %v9151
        %v9748 = vunpack.c.l.b16 %v9152
        %v9749 = vunpack.c.l.b16 %v9153
        %v9750 = vunpack.c.l.b16 %v9154
        %v9751 = vunpack.c.l.b16 %v9155
        %v9752 = vunpack.c.l.b16 %v9156
        %v9753 = vunpack.c.l.b16 %v9157
        %v9754 = vunpack.c.l.b16 %v9158
        %v9755 = vunpack.c.l.b16 %v9159
        %v9756 = vunpack.c.l.b16 %v9160
        %v9757 = vunpack.c.l.b16 %v9161
        %v9758 = vunpack.c.l.b16 %v9162
        %v9759 = vunpack.c.l.b16 %v9163
        %v9760 = vunpack.c.l.b16 %v9164
        %v9761 = vunpack.c.l.b16 %v9165
        %v9762 = vunpack.c.l.b16 %v9166
        %v9763 = vunpack.c.l.b16 %v9167
        %v9764 = vunpack.c.l.b16 %v9168
        %v9765 = vunpack.c.l.b16 %v9169
        %v9766 = vunpack.c.l.b16 %v9170
        %v9767 = vunpack.c.l.b16 %v9171
        %v9768 = vunpack.c.l.b16 %v9172
        %v9769 = vunpack.c.l.b16 %v9173
        %v9770 = vunpack.c.l.b16 %v9174
        %v9771 = vunpack.c.l.b16 %v9175
        %v9772 = vunpack.c.l.b16 %v9176
        %v9773 = vunpack.c.l.b16 %v9177
        %v9774 = vunpack.c.l.b16 %v9178
        %v9775 = vunpack.c.l.b16 %v9179
        %v9776 = vunpack.c.l.b16 %v9180
        %v9777 = vunpack.c.l.b16 %v9181
        %v9778 = vunpack.c.l.b16 %v9182
        %v9779 = vunpack.c.l.b16 %v9183
        %v9780 = vunpack.c.l.b16 %v9184
        %v9781 = vunpack.c.l.b16 %v9185
        %v9782 = vunpack.c.l.b16 %v9186
        %v9783 = vunpack.c.l.b16 %v9187
        %v9784 = vunpack.c.l.b16 %v9188
        %v9785 = vunpack.c.l.b16 %v9189
        %v9786 = vunpack.c.l.b16 %v9190
        %v9787 = vunpack.c.l.b16 %v9191
        %v9788 = vunpack.c.l.b16 %v9192
        %v9789 = vunpack.c.l.b16 %v9193
        %v9790 = vunpack.c.l.b16 %v9194
        %v9791 = vunpack.c.l.b16 %v9195
        %v9792 = vunpack.c.l.b16 %v9196
        %v9793 = vunpack.c.l.b16 %v9197
        %v9794 = vunpack.c.l.b16 %v9198
        %v9795 = vunpack.c.l.b16 %v9199
        %v9796 = vunpack.c.l.b16 %v9200
        %v9797 = vunpack.c.l.b16 %v9201
        %v9798 = vunpack.c.l.b16 %v9202
        %v9799 = vunpack.c.l.b16 %v9203
        %v9800 = vunpack.c.l.b16 %v9204
        %v9801 = vunpack.c.l.b16 %v9205
        %v9802 = vunpack.c.l.b16 %v9206
        %v9803 = vunpack.c.l.b16 %v9207
        %v9804 = vunpack.c.l.b16 %v9208
        %v9805 = vunpack.c.l.b16 %v9209
        %v9806 = vunpack.c.l.b16 %v9210
        %v9807 = vunpack.c.l.b16 %v9211
        %v9808 = vunpack.c.l.b16 %v9212
        %v9809 = vunpack.c.l.b16 %v9213
        %v9810 = vunpack.c.l.b16 %v9214
        %v9811 = vunpack.c.l.b16 %v9215
        %v9812 = vunpack.c.l.b16 %v9216
        %v9813 = vunpack.c.l.b16 %v9217
        %v9814 = vunpack.c.l.b16 %v9218
        %v9815 = vunpack.c.l.b16 %v9219
        %v9816 = vunpack.c.l.b16 %v9220
        %v9817 = vunpack.c.l.b16 %v9221
        %v9818 = vunpack.c.l.b16 %v9222
        %v9819 = vunpack.c.l.b16 %v9223
        %v9820 = vunpack.c.l.b16 %v9224
        %v9821 = vunpack.c.l.b16 %v9225
        %v9822 = vunpack.c.l.b16 %v9226
        %v9823 = vunpack.c.l.b16 %v9227
        %v9824 = vunpack.c.l.b16 %v9228
        %v9825 = vunpack.c.l.b16 %v9229
        %v9826 = vunpack.c.l.b16 %v9230
        %v9827 = vunpack.c.l.b16 %v9231
        %v9828 = vunpack.c.l.b16 %v9232
        %v9829 = vunpack.c.l.b16 %v9233
        %v9830 = vunpack.c.l.b16 %v9234
        %v9831 = vunpack.c.l.b16 %v9235
        %v9832 = vunpack.c.l.b16 %v9236
        %v9833 = vunpack.c.l.b16 %v9237
        %v9834 = vunpack.c.l.b16 %v9238
        %v9835 = vpack.c.b16 %v9692, %v9691
        %v9836 = vpack.c.b16 %v9694, %v9693
        %v9837 = vpack.c.b16 %v9696, %v9695
        %v9838 = vpack.c.b16 %v9698, %v9697
        %v9839 = vpack.c.b16 %v9700, %v9699
        %v9840 = vpack.c.b16 %v9702, %v9701
        %v9841 = vpack.c.b16 %v9704, %v9703
        %v9842 = vpack.c.b16 %v9706, %v9705
        %v9843 = vpack.c.b16 %v9708, %v9707
        %v9844 = vpack.c.b16 %v9710, %v9709
        %v9845 = vpack.c.b16 %v9712, %v9711
        %v9846 = vpack.c.b16 %v9714, %v9713
        %v9847 = vpack.c.b16 %v9716, %v9715
        %v9848 = vpack.c.b16 %v9718, %v9717
        %v9849 = vpack.c.b16 %v9720, %v9719
        %v9850 = vpack.c.b16 %v9722, %v9721
        %v9851 = vpack.c.b16 %v9724, %v9723
        %v9852 = vpack.c.b16 %v9726, %v9725
        %v9853 = vpack.c.b16 %v9728, %v9727
        %v9854 = vpack.c.b16 %v9730, %v9729
        %v9855 = vpack.c.b16 %v9732, %v9731
        %v9856 = vpack.c.b16 %v9734, %v9733
        %v9857 = vpack.c.b16 %v9736, %v9735
        %v9858 = vpack.c.b16 %v9738, %v9737
        %v9859 = vpack.c.b16 %v9740, %v9739
        %v9860 = vpack.c.b16 %v9742, %v9741
        %v9861 = vpack.c.b16 %v9744, %v9743
        %v9862 = vpack.c.b16 %v9746, %v9745
        %v9863 = vpack.c.b16 %v9748, %v9747
        %v9864 = vpack.c.b16 %v9750, %v9749
        %v9865 = vpack.c.b16 %v9752, %v9751
        %v9866 = vpack.c.b16 %v9754, %v9753
        %v9867 = vpack.c.b16 %v9756, %v9755
        %v9868 = vpack.c.b16 %v9758, %v9757
        %v9869 = vpack.c.b16 %v9760, %v9759
        %v9870 = vpack.c.b16 %v9762, %v9761
        %v9871 = vpack.c.b16 %v9764, %v9763
        %v9872 = vpack.c.b16 %v9766, %v9765
        %v9873 = vpack.c.b16 %v9768, %v9767
        %v9874 = vpack.c.b16 %v9770, %v9769
        %v9875 = vpack.c.b16 %v9772, %v9771
        %v9876 = vpack.c.b16 %v9774, %v9773
        %v9877 = vpack.c.b16 %v9776, %v9775
        %v9878 = vpack.c.b16 %v9778, %v9777
        %v9879 = vpack.c.b16 %v9780, %v9779
        %v9880 = vpack.c.b16 %v9782, %v9781
        %v9881 = vpack.c.b16 %v9784, %v9783
        %v9882 = vpack.c.b16 %v9786, %v9785
        %v9883 = vpack.c.b16 %v9788, %v9787
        %v9884 = vpack.c.b16 %v9790, %v9789
        %v9885 = vpack.c.b16 %v9792, %v9791
        %v9886 = vpack.c.b16 %v9794, %v9793
        %v9887 = vpack.c.b16 %v9796, %v9795
        %v9888 = vpack.c.b16 %v9798, %v9797
        %v9889 = vpack.c.b16 %v9800, %v9799
        %v9890 = vpack.c.b16 %v9802, %v9801
        %v9891 = vpack.c.b16 %v9804, %v9803
        %v9892 = vpack.c.b16 %v9806, %v9805
        %v9893 = vpack.c.b16 %v9808, %v9807
        %v9894 = vpack.c.b16 %v9810, %v9809
        %v9895 = vpack.c.b16 %v9812, %v9811
        %v9896 = vpack.c.b16 %v9814, %v9813
        %v9897 = vpack.c.b16 %v9816, %v9815
        %v9898 = vpack.c.b16 %v9818, %v9817
        %v9899 = vpack.c.b16 %v9820, %v9819
        %v9900 = vpack.c.b16 %v9822, %v9821
        %v9901 = vpack.c.b16 %v9824, %v9823
        %v9902 = vpack.c.b16 %v9826, %v9825
        %v9903 = vpack.c.b16 %v9828, %v9827
        %v9904 = vpack.c.b16 %v9830, %v9829
        %v9905 = vpack.c.b16 %v9832, %v9831
        %v9906 = vpack.c.b16 %v9834, %v9833
        %9979 = vmatprep.subr.bf16.mxu0 0
        %9980 = vmatpush1.bf16.msra.mxu0 %v9835
        %9981 = vmatprep.subr.bf16.mxu0 0
        %9982 = vmatpush1.bf16.msra.mxu0 %v9836
        %9983 = vmatprep.subr.bf16.mxu0 0
        %9984 = vmatpush1.bf16.msra.mxu0 %v9837
        %9985 = vmatprep.subr.bf16.mxu0 0
        %9986 = vmatpush1.bf16.msra.mxu0 %v9838
        %9987 = vmatprep.subr.bf16.mxu0 0
        %9988 = vmatpush1.bf16.msra.mxu0 %v9839
        %9989 = vmatprep.subr.bf16.mxu0 0
        %9990 = vmatpush1.bf16.msra.mxu0 %v9840
        %9991 = vmatprep.subr.bf16.mxu0 0
        %9992 = vmatpush1.bf16.msra.mxu0 %v9841
        %9993 = vmatprep.subr.bf16.mxu0 0
        %9994 = vmatpush1.bf16.msra.mxu0 %v9842
        %9995 = vmatprep.subr.bf16.mxu0 0
        %9996 = vmatpush1.bf16.msra.mxu0 %v9843
        %9997 = vmatprep.subr.bf16.mxu0 0
        %9998 = vmatpush1.bf16.msra.mxu0 %v9844
        %9999 = vmatprep.subr.bf16.mxu0 0
        %10000 = vmatpush1.bf16.msra.mxu0 %v9845
        %10001 = vmatprep.subr.bf16.mxu0 0
        %10002 = vmatpush1.bf16.msra.mxu0 %v9846
        %10003 = vmatprep.subr.bf16.mxu0 0
        %10004 = vmatpush1.bf16.msra.mxu0 %v9847
        %10005 = vmatprep.subr.bf16.mxu0 0
        %10006 = vmatpush1.bf16.msra.mxu0 %v9848
        %10007 = vmatprep.subr.bf16.mxu0 0
        %10008 = vmatpush1.bf16.msra.mxu0 %v9849
        %10009 = vmatprep.subr.bf16.mxu0 0
        %10010 = vmatpush1.bf16.msra.mxu0 %v9850
        %10011 = vmatprep.mubr.bf16.mxu0 %v9422
        %10012 = vmatmul.mubr.bf16.gmra.mrb[0].mxu0 %v9421
        %v10013 = vpop.f32.mrb[0].mxu0
        %v10014 = vadd.f32 0.0, %v10013
        %v10015 = vpop.f32.mrb[0].mxu0
        %v10016 = vpop.f32.mrb[0].mxu0
        %v10017 = vadd.f32 0.0, %v10016
        %v10018 = vpop.f32.mrb[0].mxu0
        %10019 = vmatprep.mubr.bf16.mxu0 %v9431
        %10020 = vmatmul.mubr.bf16.gmra.mrb[0].mxu0 %v9430
        %v10021 = vpop.f32.mrb[0].mxu0
        %v10022 = vadd.f32 0.0, %v10021
        %v10023 = vpop.f32.mrb[0].mxu0
        %v10024 = vpop.f32.mrb[0].mxu0
        %v10025 = vadd.f32 0.0, %v10024
        %v10026 = vpop.f32.mrb[0].mxu0
        %10027 = vmatprep.mubr.bf16.mxu0 %v9440
        %10028 = vmatmul.mubr.bf16.gmra.mrb[0].mxu0 %v9439
        %v10029 = vpop.f32.mrb[0].mxu0
        %v10030 = vadd.f32 0.0, %v10029
        %v10031 = vpop.f32.mrb[0].mxu0
        %v10032 = vpop.f32.mrb[0].mxu0
        %v10033 = vadd.f32 0.0, %v10032
        %v10034 = vpop.f32.mrb[0].mxu0
        %10035 = vmatprep.mubr.bf16.mxu0 %v9449
        %10036 = vmatmul.mubr.bf16.gmra.mrb[0].mxu0 %v9448
        %v10037 = vpop.f32.mrb[0].mxu0
        %v10038 = vadd.f32 0.0, %v10037
        %v10039 = vpop.f32.mrb[0].mxu0
        %v10040 = vpop.f32.mrb[0].mxu0
        %v10041 = vadd.f32 0.0, %v10040
        %v10042 = vpop.f32.mrb[0].mxu0
        %10043 = vmatprep.mubr.bf16.mxu0 %v9458
        %10044 = vmatmul.mubr.bf16.gmra.mrb[0].mxu0 %v9457
        %v10045 = vpop.f32.mrb[0].mxu0
        %v10046 = vadd.f32 0.0, %v10045
        %v10047 = vpop.f32.mrb[0].mxu0
        %v10048 = vpop.f32.mrb[0].mxu0
        %v10049 = vadd.f32 0.0, %v10048
        %v10050 = vpop.f32.mrb[0].mxu0
        %10051 = vmatprep.mubr.bf16.mxu0 %v9467
        %10052 = vmatmul.mubr.bf16.gmra.mrb[0].mxu0 %v9466
        %v10053 = vpop.f32.mrb[0].mxu0
        %v10054 = vadd.f32 0.0, %v10053
        %v10055 = vpop.f32.mrb[0].mxu0
        %v10056 = vpop.f32.mrb[0].mxu0
        %v10057 = vadd.f32 0.0, %v10056
        %v10058 = vpop.f32.mrb[0].mxu0
        %10059 = vmatprep.mubr.bf16.mxu0 %v9476
        %10060 = vmatmul.mubr.bf16.gmra.mrb[0].mxu0 %v9475
        %v10061 = vpop.f32.mrb[0].mxu0
        %v10062 = vadd.f32 0.0, %v10061
        %v10063 = vpop.f32.mrb[0].mxu0
        %v10064 = vpop.f32.mrb[0].mxu0
        %v10065 = vpop.f32.mrb[0].mxu0
        %10066 = vdwg.mxu0
        %10067 = vmatprep.subr.bf16.mxu0 0
        %10068 = vmatpush1.bf16.msra.mxu0 %v9851
        %10069 = vmatprep.subr.bf16.mxu0 0
        %10070 = vmatpush1.bf16.msra.mxu0 %v9852
        %10071 = vmatprep.subr.bf16.mxu0 0
        %10072 = vmatpush1.bf16.msra.mxu0 %v9853
        %10073 = vmatprep.subr.bf16.mxu0 0
        %10074 = vmatpush1.bf16.msra.mxu0 %v9854
        %10075 = vmatprep.subr.bf16.mxu0 0
        %10076 = vmatpush1.bf16.msra.mxu0 %v9855
        %10077 = vmatprep.subr.bf16.mxu0 0
        %10078 = vmatpush1.bf16.msra.mxu0 %v9856
        %10079 = vmatprep.subr.bf16.mxu0 0
        %10080 = vmatpush1.bf16.msra.mxu0 %v9857
        %10081 = vmatprep.subr.bf16.mxu0 0
        %10082 = vmatpush1.bf16.msra.mxu0 %v9858
        %10083 = vmatprep.subr.bf16.mxu0 0
        %10084 = vmatpush1.bf16.msra.mxu0 %v9859
        %10085 = vmatprep.subr.bf16.mxu0 0
        %10086 = vmatpush1.bf16.msra.mxu0 %v9860
        %10087 = vmatprep.subr.bf16.mxu0 0
        %10088 = vmatpush1.bf16.msra.mxu0 %v9861
        %10089 = vmatprep.subr.bf16.mxu0 0
        %10090 = vmatpush1.bf16.msra.mxu0 %v9862
        %10091 = vmatprep.subr.bf16.mxu0 0
        %10092 = vmatpush1.bf16.msra.mxu0 %v9863
        %10093 = vmatprep.subr.bf16.mxu0 0
        %10094 = vmatpush1.bf16.msra.mxu0 %v9864
        %10095 = vmatprep.subr.bf16.mxu0 0
        %10096 = vmatpush1.bf16.msra.mxu0 %v9865
        %10097 = vmatprep.subr.bf16.mxu0 0
        %10098 = vmatpush1.bf16.msra.mxu0 %v9866
        %10099 = vmatprep.mubr.bf16.mxu0 %v9424
        %10100 = vmatmul.mubr.bf16.gmra.mrb[0].mxu0 %v9423
        %v10101 = vpop.f32.mrb[0].mxu0
        %v10102 = vadd.f32 %v10014, %v10101
        %v10103 = vpop.f32.mrb[0].mxu0
        %v10104 = vpop.f32.mrb[0].mxu0
        %v10105 = vadd.f32 %v10017, %v10104
        %v10106 = vpop.f32.mrb[0].mxu0
        %10107 = vmatprep.mubr.bf16.mxu0 %v9433
        %10108 = vmatmul.mubr.bf16.gmra.mrb[0].mxu0 %v9432
        %v10109 = vpop.f32.mrb[0].mxu0
        %v10110 = vadd.f32 %v10022, %v10109
        %v10111 = vpop.f32.mrb[0].mxu0
        %v10112 = vpop.f32.mrb[0].mxu0
        %v10113 = vadd.f32 %v10025, %v10112
        %v10114 = vpop.f32.mrb[0].mxu0
        %10115 = vmatprep.mubr.bf16.mxu0 %v9442
        %10116 = vmatmul.mubr.bf16.gmra.mrb[0].mxu0 %v9441
        %v10117 = vpop.f32.mrb[0].mxu0
        %v10118 = vadd.f32 %v10030, %v10117
        %v10119 = vpop.f32.mrb[0].mxu0
        %v10120 = vpop.f32.mrb[0].mxu0
        %v10121 = vadd.f32 %v10033, %v10120
        %v10122 = vpop.f32.mrb[0].mxu0
        %10123 = vmatprep.mubr.bf16.mxu0 %v9451
        %10124 = vmatmul.mubr.bf16.gmra.mrb[0].mxu0 %v9450
        %v10125 = vpop.f32.mrb[0].mxu0
        %v10126 = vadd.f32 %v10038, %v10125
        %v10127 = vpop.f32.mrb[0].mxu0
        %v10128 = vpop.f32.mrb[0].mxu0
        %v10129 = vadd.f32 %v10041, %v10128
        %v10130 = vpop.f32.mrb[0].mxu0
        %10131 = vmatprep.mubr.bf16.mxu0 %v9460
        %10132 = vmatmul.mubr.bf16.gmra.mrb[0].mxu0 %v9459
        %v10133 = vpop.f32.mrb[0].mxu0
        %v10134 = vadd.f32 %v10046, %v10133
        %v10135 = vpop.f32.mrb[0].mxu0
        %v10136 = vpop.f32.mrb[0].mxu0
        %v10137 = vadd.f32 %v10049, %v10136
        %v10138 = vpop.f32.mrb[0].mxu0
        %10139 = vmatprep.mubr.bf16.mxu0 %v9469
        %10140 = vmatmul.mubr.bf16.gmra.mrb[0].mxu0 %v9468
        %v10141 = vpop.f32.mrb[0].mxu0
        %v10142 = vadd.f32 %v10054, %v10141
        %v10143 = vpop.f32.mrb[0].mxu0
        %v10144 = vpop.f32.mrb[0].mxu0
        %v10145 = vadd.f32 %v10057, %v10144
        %v10146 = vpop.f32.mrb[0].mxu0
        %10147 = vmatprep.mubr.bf16.mxu0 %v9478
        %10148 = vmatmul.mubr.bf16.gmra.mrb[0].mxu0 %v9477
        %v10149 = vpop.f32.mrb[0].mxu0
        %v10150 = vadd.f32 %v10062, %v10149
        %v10151 = vpop.f32.mrb[0].mxu0
        %v10152 = vpop.f32.mrb[0].mxu0
        %v10153 = vpop.f32.mrb[0].mxu0
        %10154 = vdwg.mxu0
        %10155 = vmatprep.subr.bf16.mxu0 0
        %10156 = vmatpush1.bf16.msra.mxu0 %v9867
        %10157 = vmatprep.subr.bf16.mxu0 0
        %10158 = vmatpush1.bf16.msra.mxu0 %v9868
        %10159 = vmatprep.subr.bf16.mxu0 0
        %10160 = vmatpush1.bf16.msra.mxu0 %v9869
        %10161 = vmatprep.subr.bf16.mxu0 0
        %10162 = vmatpush1.bf16.msra.mxu0 %v9870
        %10163 = vmatprep.subr.bf16.mxu0 0
        %10164 = vmatpush1.bf16.msra.mxu0 %v9871
        %10165 = vmatprep.subr.bf16.mxu0 0
        %10166 = vmatpush1.bf16.msra.mxu0 %v9872
        %10167 = vmatprep.subr.bf16.mxu0 0
        %10168 = vmatpush1.bf16.msra.mxu0 %v9873
        %10169 = vmatprep.subr.bf16.mxu0 0
        %10170 = vmatpush1.bf16.msra.mxu0 %v9874
        %10171 = vmatprep.subr.bf16.mxu0 0
        %10172 = vmatpush1.bf16.msra.mxu0 %v9875
        %10173 = vmatprep.subr.bf16.mxu0 0
        %10174 = vmatpush1.bf16.msra.mxu0 %v9876
        %10175 = vmatprep.subr.bf16.mxu0 0
        %10176 = vmatpush1.bf16.msra.mxu0 %v9877
        %10177 = vmatprep.subr.bf16.mxu0 0
        %10178 = vmatpush1.bf16.msra.mxu0 %v9878
        %10179 = vmatprep.subr.bf16.mxu0 0
        %10180 = vmatpush1.bf16.msra.mxu0 %v9879
        %10181 = vmatprep.subr.bf16.mxu0 0
        %10182 = vmatpush1.bf16.msra.mxu0 %v9880
        %10183 = vmatprep.subr.bf16.mxu0 0
        %10184 = vmatpush1.bf16.msra.mxu0 %v9881
        %10185 = vmatprep.subr.bf16.mxu0 0
        %10186 = vmatpush1.bf16.msra.mxu0 %v9882
        %10187 = vmatprep.mubr.bf16.mxu0 %v9426
        %10188 = vmatmul.mubr.bf16.gmra.mrb[0].mxu0 %v9425
        %v10189 = vpop.f32.mrb[0].mxu0
        %v10190 = vadd.f32 %v10102, %v10189
        %v10191 = vpop.f32.mrb[0].mxu0
        %v10192 = vpop.f32.mrb[0].mxu0
        %v10193 = vadd.f32 %v10105, %v10192
        %v10194 = vpop.f32.mrb[0].mxu0
        %10195 = vmatprep.mubr.bf16.mxu0 %v9435
        %10196 = vmatmul.mubr.bf16.gmra.mrb[0].mxu0 %v9434
        %v10197 = vpop.f32.mrb[0].mxu0
        %v10198 = vadd.f32 %v10110, %v10197
        %v10199 = vpop.f32.mrb[0].mxu0
        %v10200 = vpop.f32.mrb[0].mxu0
        %v10201 = vadd.f32 %v10113, %v10200
        %v10202 = vpop.f32.mrb[0].mxu0
        %10203 = vmatprep.mubr.bf16.mxu0 %v9444
        %10204 = vmatmul.mubr.bf16.gmra.mrb[0].mxu0 %v9443
        %v10205 = vpop.f32.mrb[0].mxu0
        %v10206 = vadd.f32 %v10118, %v10205
        %v10207 = vpop.f32.mrb[0].mxu0
        %v10208 = vpop.f32.mrb[0].mxu0
        %v10209 = vadd.f32 %v10121, %v10208
        %v10210 = vpop.f32.mrb[0].mxu0
        %10211 = vmatprep.mubr.bf16.mxu0 %v9453
        %10212 = vmatmul.mubr.bf16.gmra.mrb[0].mxu0 %v9452
        %v10213 = vpop.f32.mrb[0].mxu0
        %v10214 = vadd.f32 %v10126, %v10213
        %v10215 = vpop.f32.mrb[0].mxu0
        %v10216 = vpop.f32.mrb[0].mxu0
        %v10217 = vadd.f32 %v10129, %v10216
        %v10218 = vpop.f32.mrb[0].mxu0
        %10219 = vmatprep.mubr.bf16.mxu0 %v9462
        %10220 = vmatmul.mubr.bf16.gmra.mrb[0].mxu0 %v9461
        %v10221 = vpop.f32.mrb[0].mxu0
        %v10222 = vadd.f32 %v10134, %v10221
        %v10223 = vpop.f32.mrb[0].mxu0
        %v10224 = vpop.f32.mrb[0].mxu0
        %v10225 = vadd.f32 %v10137, %v10224
        %v10226 = vpop.f32.mrb[0].mxu0
        %10227 = vmatprep.mubr.bf16.mxu0 %v9471
        %10228 = vmatmul.mubr.bf16.gmra.mrb[0].mxu0 %v9470
        %v10229 = vpop.f32.mrb[0].mxu0
        %v10230 = vadd.f32 %v10142, %v10229
        %v10231 = vpop.f32.mrb[0].mxu0
        %v10232 = vpop.f32.mrb[0].mxu0
        %v10233 = vadd.f32 %v10145, %v10232
        %v10234 = vpop.f32.mrb[0].mxu0
        %10235 = vmatprep.mubr.bf16.mxu0 %v9480
        %10236 = vmatmul.mubr.bf16.gmra.mrb[0].mxu0 %v9479
        %v10237 = vpop.f32.mrb[0].mxu0
        %v10238 = vadd.f32 %v10150, %v10237
        %v10239 = vpop.f32.mrb[0].mxu0
        %v10240 = vpop.f32.mrb[0].mxu0
        %v10241 = vpop.f32.mrb[0].mxu0
        %10242 = vdwg.mxu0
        %10243 = vmatprep.subr.bf16.mxu0 0
        %10244 = vmatpush1.bf16.msra.mxu0 %v9883
        %10245 = vmatprep.subr.bf16.mxu0 0
        %10246 = vmatpush1.bf16.msra.mxu0 %v9884
        %10247 = vmatprep.subr.bf16.mxu0 0
        %10248 = vmatpush1.bf16.msra.mxu0 %v9885
        %10249 = vmatprep.subr.bf16.mxu0 0
        %10250 = vmatpush1.bf16.msra.mxu0 %v9886
        %10251 = vmatprep.subr.bf16.mxu0 0
        %10252 = vmatpush1.bf16.msra.mxu0 %v9887
        %10253 = vmatprep.subr.bf16.mxu0 0
        %10254 = vmatpush1.bf16.msra.mxu0 %v9888
        %10255 = vmatprep.subr.bf16.mxu0 0
        %10256 = vmatpush1.bf16.msra.mxu0 %v9889
        %10257 = vmatprep.subr.bf16.mxu0 0
        %10258 = vmatpush1.bf16.msra.mxu0 %v9890
        %10259 = vmatprep.subr.bf16.mxu0 0
        %10260 = vmatpush1.bf16.msra.mxu0 %v9891
        %10261 = vmatprep.subr.bf16.mxu0 0
        %10262 = vmatpush1.bf16.msra.mxu0 %v9892
        %10263 = vmatprep.subr.bf16.mxu0 0
        %10264 = vmatpush1.bf16.msra.mxu0 %v9893
        %10265 = vmatprep.subr.bf16.mxu0 0
        %10266 = vmatpush1.bf16.msra.mxu0 %v9894
        %10267 = vmatprep.subr.bf16.mxu0 0
        %10268 = vmatpush1.bf16.msra.mxu0 %v9895
        %10269 = vmatprep.subr.bf16.mxu0 0
        %10270 = vmatpush1.bf16.msra.mxu0 %v9896
        %10271 = vmatprep.subr.bf16.mxu0 0
        %10272 = vmatpush1.bf16.msra.mxu0 %v9897
        %10273 = vmatprep.subr.bf16.mxu0 0
        %10274 = vmatpush1.bf16.msra.mxu0 %v9898
        %10275 = vmatprep.mubr.bf16.mxu0 %v9428
        %10276 = vmatmul.mubr.bf16.gmra.mrb[0].mxu0 %v9427
        %v10277 = vpop.f32.mrb[0].mxu0
        %v10278 = vadd.f32 %v10190, %v10277
        %v10279 = vpop.f32.mrb[0].mxu0
        %v10280 = vpop.f32.mrb[0].mxu0
        %v10281 = vadd.f32 %v10193, %v10280
        %v10282 = vpop.f32.mrb[0].mxu0
        %10283 = vmatprep.mubr.bf16.mxu0 %v9437
        %10284 = vmatmul.mubr.bf16.gmra.mrb[0].mxu0 %v9436
        %v10285 = vpop.f32.mrb[0].mxu0
        %v10286 = vadd.f32 %v10198, %v10285
        %v10287 = vpop.f32.mrb[0].mxu0
        %v10288 = vpop.f32.mrb[0].mxu0
        %v10289 = vadd.f32 %v10201, %v10288
        %v10290 = vpop.f32.mrb[0].mxu0
        %10291 = vmatprep.mubr.bf16.mxu0 %v9446
        %10292 = vmatmul.mubr.bf16.gmra.mrb[0].mxu0 %v9445
        %v10293 = vpop.f32.mrb[0].mxu0
        %v10294 = vadd.f32 %v10206, %v10293
        %v10295 = vpop.f32.mrb[0].mxu0
        %v10296 = vpop.f32.mrb[0].mxu0
        %v10297 = vadd.f32 %v10209, %v10296
        %v10298 = vpop.f32.mrb[0].mxu0
        %10299 = vmatprep.mubr.bf16.mxu0 %v9455
        %10300 = vmatmul.mubr.bf16.gmra.mrb[0].mxu0 %v9454
        %v10301 = vpop.f32.mrb[0].mxu0
        %v10302 = vadd.f32 %v10214, %v10301
        %v10303 = vpop.f32.mrb[0].mxu0
        %v10304 = vpop.f32.mrb[0].mxu0
        %v10305 = vadd.f32 %v10217, %v10304
        %v10306 = vpop.f32.mrb[0].mxu0
        %10307 = vmatprep.mubr.bf16.mxu0 %v9464
        %10308 = vmatmul.mubr.bf16.gmra.mrb[0].mxu0 %v9463
        %v10309 = vpop.f32.mrb[0].mxu0
        %v10310 = vadd.f32 %v10222, %v10309
        %v10311 = vpop.f32.mrb[0].mxu0
        %v10312 = vpop.f32.mrb[0].mxu0
        %v10313 = vadd.f32 %v10225, %v10312
        %v10314 = vpop.f32.mrb[0].mxu0
        %10315 = vmatprep.mubr.bf16.mxu0 %v9473
        %10316 = vmatmul.mubr.bf16.gmra.mrb[0].mxu0 %v9472
        %v10317 = vpop.f32.mrb[0].mxu0
        %v10318 = vadd.f32 %v10230, %v10317
        %v10319 = vpop.f32.mrb[0].mxu0
        %v10320 = vpop.f32.mrb[0].mxu0
        %v10321 = vadd.f32 %v10233, %v10320
        %v10322 = vpop.f32.mrb[0].mxu0
        %10323 = vmatprep.mubr.bf16.mxu0 %v9482
        %10324 = vmatmul.mubr.bf16.gmra.mrb[0].mxu0 %v9481
        %v10325 = vpop.f32.mrb[0].mxu0
        %v10326 = vadd.f32 %v10238, %v10325
        %v10327 = vpop.f32.mrb[0].mxu0
        %v10328 = vpop.f32.mrb[0].mxu0
        %v10329 = vpop.f32.mrb[0].mxu0
        %10330 = vdwg.mxu0
        %10331 = vmatprep.subr.bf16.mxu0 0
        %10332 = vmatpush1.bf16.msra.mxu0 %v9899
        %10333 = vmatprep.subr.bf16.mxu0 0
        %10334 = vmatpush1.bf16.msra.mxu0 %v9900
        %10335 = vmatprep.subr.bf16.mxu0 0
        %10336 = vmatpush1.bf16.msra.mxu0 %v9901
        %10337 = vmatprep.subr.bf16.mxu0 0
        %10338 = vmatpush1.bf16.msra.mxu0 %v9902
        %10339 = vmatprep.subr.bf16.mxu0 0
        %10340 = vmatpush1.bf16.msra.mxu0 %v9903
        %10341 = vmatprep.subr.bf16.mxu0 0
        %10342 = vmatpush1.bf16.msra.mxu0 %v9904
        %10343 = vmatprep.subr.bf16.mxu0 0
        %10344 = vmatpush1.bf16.msra.mxu0 %v9905
        %10345 = vmatprep.subr.bf16.mxu0 0
        %10346 = vmatpush1.bf16.msra.mxu0 %v9906
        %10347 = vmatprep.subr.bf16.mxu0 0
        %10348 = vmatpush1.bf16.msra.mxu0 0
        %10349 = vmatprep.subr.bf16.mxu0 0
        %10350 = vmatpush1.bf16.msra.mxu0 0
        %10351 = vmatprep.subr.bf16.mxu0 0
        %10352 = vmatpush1.bf16.msra.mxu0 0
        %10353 = vmatprep.subr.bf16.mxu0 0
        %10354 = vmatpush1.bf16.msra.mxu0 0
        %10355 = vmatprep.subr.bf16.mxu0 0
        %10356 = vmatpush1.bf16.msra.mxu0 0
        %10357 = vmatprep.subr.bf16.mxu0 0
        %10358 = vmatpush1.bf16.msra.mxu0 0
        %10359 = vmatprep.subr.bf16.mxu0 0
        %10360 = vmatpush1.bf16.msra.mxu0 0
        %10361 = vmatprep.subr.bf16.mxu0 0
        %10362 = vmatpush1.bf16.msra.mxu0 0
        %10363 = vmatprep.mubr.bf16.mxu0 0
        %10364 = vmatmul.mubr.bf16.gmra.mrb[0].mxu0 %v9429
        %v10365 = vpop.f32.mrb[0].mxu0
        %v10366 = vadd.f32 %v10278, %v10365
        %v10367 = vpop.f32.mrb[0].mxu0
        %v10368 = vpop.f32.mrb[0].mxu0
        %v10369 = vadd.f32 %v10281, %v10368
        %v10370 = vpop.f32.mrb[0].mxu0
        %10371 = vmatprep.mubr.bf16.mxu0 0
        %10372 = vmatmul.mubr.bf16.gmra.mrb[0].mxu0 %v9438
        %v10373 = vpop.f32.mrb[0].mxu0
        %v10374 = vadd.f32 %v10286, %v10373
        %v10375 = vpop.f32.mrb[0].mxu0
        %v10376 = vpop.f32.mrb[0].mxu0
        %v10377 = vadd.f32 %v10289, %v10376
        %v10378 = vpop.f32.mrb[0].mxu0
        %10379 = vmatprep.mubr.bf16.mxu0 0
        %10380 = vmatmul.mubr.bf16.gmra.mrb[0].mxu0 %v9447
        %v10381 = vpop.f32.mrb[0].mxu0
        %v10382 = vadd.f32 %v10294, %v10381
        %v10383 = vpop.f32.mrb[0].mxu0
        %v10384 = vpop.f32.mrb[0].mxu0
        %v10385 = vadd.f32 %v10297, %v10384
        %v10386 = vpop.f32.mrb[0].mxu0
        %10387 = vmatprep.mubr.bf16.mxu0 0
        %10388 = vmatmul.mubr.bf16.gmra.mrb[0].mxu0 %v9456
        %v10389 = vpop.f32.mrb[0].mxu0
        %v10390 = vadd.f32 %v10302, %v10389
        %v10391 = vpop.f32.mrb[0].mxu0
        %v10392 = vpop.f32.mrb[0].mxu0
        %v10393 = vadd.f32 %v10305, %v10392
        %v10394 = vpop.f32.mrb[0].mxu0
        %10395 = vmatprep.mubr.bf16.mxu0 0
        %10396 = vmatmul.mubr.bf16.gmra.mrb[0].mxu0 %v9465
        %v10397 = vpop.f32.mrb[0].mxu0
        %v10398 = vadd.f32 %v10310, %v10397
        %v10399 = vpop.f32.mrb[0].mxu0
        %v10400 = vpop.f32.mrb[0].mxu0
        %v10401 = vadd.f32 %v10313, %v10400
        %v10402 = vpop.f32.mrb[0].mxu0
        %10403 = vmatprep.mubr.bf16.mxu0 0
        %10404 = vmatmul.mubr.bf16.gmra.mrb[0].mxu0 %v9474
        %v10405 = vpop.f32.mrb[0].mxu0
        %v10406 = vadd.f32 %v10318, %v10405
        %v10407 = vpop.f32.mrb[0].mxu0
        %v10408 = vpop.f32.mrb[0].mxu0
        %v10409 = vadd.f32 %v10321, %v10408
        %v10410 = vpop.f32.mrb[0].mxu0
        %10411 = vmatprep.mubr.bf16.mxu0 0
        %10412 = vmatmul.mubr.bf16.gmra.mrb[0].mxu0 %v9483
        %v10413 = vpop.f32.mrb[0].mxu0
        %v10414 = vadd.f32 %v10326, %v10413
        %v10415 = vpop.f32.mrb[0].mxu0
        %v10416 = vpop.f32.mrb[0].mxu0
        %v10417 = vpop.f32.mrb[0].mxu0
        %10418 = vdwg.mxu0
        %v10419 = vld [vmem:[%s2] sm:$0x1]
        %v10421 = vlaneseq
        %v10422 = vshrl.u32 %v10421, 7
        %v10423 = vsub.s32 0, %v10422
        %v10424 = vrot.slane %v10419, %v10423
        %v10426 = vmul.f32 %v10366, %v10424
        %v10427 = vmul.f32 %v10369, %v10424
        %v10428 = vmul.f32 %v10374, %v10424
        %v10429 = vmul.f32 %v10377, %v10424
        %v10430 = vmul.f32 %v10382, %v10424
        %v10431 = vmul.f32 %v10385, %v10424
        %v10432 = vmul.f32 %v10390, %v10424
        %v10433 = vmul.f32 %v10393, %v10424
        %v10434 = vmul.f32 %v10398, %v10424
        %v10435 = vmul.f32 %v10401, %v10424
        %v10436 = vmul.f32 %v10406, %v10424
        %v10437 = vmul.f32 %v10409, %v10424
        %v10438 = vmul.f32 %v10414, %v10424
        %v10439 = vld [vmem:[%s3] sm:$0x1]
        %v10441 = vlaneseq
        %v10442 = vshrl.u32 %v10441, 7
        %v10443 = vsub.s32 0, %v10442
        %v10444 = vrot.slane %v10439, %v10443
        %v10446 = vadd.f32 %v10426, %v10444
        %v10447 = vadd.f32 %v10427, %v10444
        %v10448 = vadd.f32 %v10428, %v10444
        %v10449 = vadd.f32 %v10429, %v10444
        %v10450 = vadd.f32 %v10430, %v10444
        %v10451 = vadd.f32 %v10431, %v10444
        %v10452 = vadd.f32 %v10432, %v10444
        %v10453 = vadd.f32 %v10433, %v10444
        %v10454 = vadd.f32 %v10434, %v10444
        %v10455 = vadd.f32 %v10435, %v10444
        %v10456 = vadd.f32 %v10436, %v10444
        %v10457 = vadd.f32 %v10437, %v10444
        %v10458 = vadd.f32 %v10438, %v10444
        %v10459 = vmax.f32 %v10446, 0.0
        %v10460 = vmax.f32 %v10447, 0.0
        %v10461 = vmax.f32 %v10448, 0.0
        %v10462 = vmax.f32 %v10449, 0.0
        %v10463 = vmax.f32 %v10450, 0.0
        %v10464 = vmax.f32 %v10451, 0.0
        %v10465 = vmax.f32 %v10452, 0.0
        %v10466 = vmax.f32 %v10453, 0.0
        %v10467 = vmax.f32 %v10454, 0.0
        %v10468 = vmax.f32 %v10455, 0.0
        %v10469 = vmax.f32 %v10456, 0.0
        %v10470 = vmax.f32 %v10457, 0.0
        %v10471 = vmax.f32 %v10458, 0.0
        %v10485 = vcombine.high %v10459, %v10459
        %v10487 = vunpack.c.l.s4 1983009808
        %v10488 = vunpack.c.0.s8 %v10487
        %v10489 = vlaneseq
        %v10490 = vshrl.u32 %v10489, 7
        %v10491 = vsub.s32 %v10488, %v10490
        %v10492 = vrot.slane %v10459, %v10491
        %v10494 = vunpack.c.l.s4 1983009808
        %v10495 = vunpack.c.0.s8 %v10494
        %v10496 = vlaneseq
        %v10497 = vshrl.u32 %v10496, 7
        %v10498 = vsub.s32 %v10495, %v10497
        %v10499 = vrot.slane %v10485, %v10498
        %v10500 = vcombine.high %v10492, %v10492
        %v10501 = vcombine.high %v10499, %v10499
        %v10502 = vcombine.high %v10460, %v10460
        %v10504 = vunpack.c.l.s4 1983009808
        %v10505 = vunpack.c.0.s8 %v10504
        %v10506 = vlaneseq
        %v10507 = vshrl.u32 %v10506, 7
        %v10508 = vsub.s32 %v10505, %v10507
        %v10509 = vrot.slane %v10460, %v10508
        %v10511 = vunpack.c.l.s4 1983009808
        %v10512 = vunpack.c.0.s8 %v10511
        %v10513 = vlaneseq
        %v10514 = vshrl.u32 %v10513, 7
        %v10515 = vsub.s32 %v10512, %v10514
        %v10516 = vrot.slane %v10502, %v10515
        %v10517 = vcombine.high %v10509, %v10509
        %v10518 = vcombine.high %v10516, %v10516
        %v10519 = vcombine.high %v10461, %v10461
        %v10521 = vunpack.c.l.s4 1983009808
        %v10522 = vunpack.c.0.s8 %v10521
        %v10523 = vlaneseq
        %v10524 = vshrl.u32 %v10523, 7
        %v10525 = vsub.s32 %v10522, %v10524
        %v10526 = vrot.slane %v10461, %v10525
        %v10528 = vunpack.c.l.s4 1983009808
        %v10529 = vunpack.c.0.s8 %v10528
        %v10530 = vlaneseq
        %v10531 = vshrl.u32 %v10530, 7
        %v10532 = vsub.s32 %v10529, %v10531
        %v10533 = vrot.slane %v10519, %v10532
        %v10534 = vcombine.high %v10526, %v10526
        %v10535 = vcombine.high %v10533, %v10533
        %v10536 = vcombine.high %v10462, %v10462
        %v10538 = vunpack.c.l.s4 1983009808
        %v10539 = vunpack.c.0.s8 %v10538
        %v10540 = vlaneseq
        %v10541 = vshrl.u32 %v10540, 7
        %v10542 = vsub.s32 %v10539, %v10541
        %v10543 = vrot.slane %v10462, %v10542
        %v10545 = vunpack.c.l.s4 1983009808
        %v10546 = vunpack.c.0.s8 %v10545
        %v10547 = vlaneseq
        %v10548 = vshrl.u32 %v10547, 7
        %v10549 = vsub.s32 %v10546, %v10548
        %v10550 = vrot.slane %v10536, %v10549
        %v10551 = vcombine.high %v10543, %v10543
        %v10552 = vcombine.high %v10550, %v10550
        %v10553 = vcombine.high %v10463, %v10463
        %v10555 = vunpack.c.l.s4 1983009808
        %v10556 = vunpack.c.0.s8 %v10555
        %v10557 = vlaneseq
        %v10558 = vshrl.u32 %v10557, 7
        %v10559 = vsub.s32 %v10556, %v10558
        %v10560 = vrot.slane %v10463, %v10559
        %v10562 = vunpack.c.l.s4 1983009808
        %v10563 = vunpack.c.0.s8 %v10562
        %v10564 = vlaneseq
        %v10565 = vshrl.u32 %v10564, 7
        %v10566 = vsub.s32 %v10563, %v10565
        %v10567 = vrot.slane %v10553, %v10566
        %v10568 = vcombine.high %v10560, %v10560
        %v10569 = vcombine.high %v10567, %v10567
        %v10570 = vcombine.high %v10464, %v10464
        %v10572 = vunpack.c.l.s4 1983009808
        %v10573 = vunpack.c.0.s8 %v10572
        %v10574 = vlaneseq
        %v10575 = vshrl.u32 %v10574, 7
        %v10576 = vsub.s32 %v10573, %v10575
        %v10577 = vrot.slane %v10464, %v10576
        %v10579 = vunpack.c.l.s4 1983009808
        %v10580 = vunpack.c.0.s8 %v10579
        %v10581 = vlaneseq
        %v10582 = vshrl.u32 %v10581, 7
        %v10583 = vsub.s32 %v10580, %v10582
        %v10584 = vrot.slane %v10570, %v10583
        %v10585 = vcombine.high %v10577, %v10577
        %v10586 = vcombine.high %v10584, %v10584
        %v10587 = vcombine.high %v10465, %v10465
        %v10589 = vunpack.c.l.s4 1983009808
        %v10590 = vunpack.c.0.s8 %v10589
        %v10591 = vlaneseq
        %v10592 = vshrl.u32 %v10591, 7
        %v10593 = vsub.s32 %v10590, %v10592
        %v10594 = vrot.slane %v10465, %v10593
        %v10596 = vunpack.c.l.s4 1983009808
        %v10597 = vunpack.c.0.s8 %v10596
        %v10598 = vlaneseq
        %v10599 = vshrl.u32 %v10598, 7
        %v10600 = vsub.s32 %v10597, %v10599
        %v10601 = vrot.slane %v10587, %v10600
        %v10602 = vcombine.high %v10594, %v10594
        %v10603 = vcombine.high %v10601, %v10601
        %v10604 = vcombine.high %v10466, %v10466
        %v10606 = vunpack.c.l.s4 1983009808
        %v10607 = vunpack.c.0.s8 %v10606
        %v10608 = vlaneseq
        %v10609 = vshrl.u32 %v10608, 7
        %v10610 = vsub.s32 %v10607, %v10609
        %v10611 = vrot.slane %v10466, %v10610
        %v10613 = vunpack.c.l.s4 1983009808
        %v10614 = vunpack.c.0.s8 %v10613
        %v10615 = vlaneseq
        %v10616 = vshrl.u32 %v10615, 7
        %v10617 = vsub.s32 %v10614, %v10616
        %v10618 = vrot.slane %v10604, %v10617
        %v10619 = vcombine.high %v10611, %v10611
        %v10620 = vcombine.high %v10618, %v10618
        %v10621 = vcombine.high %v10467, %v10467
        %v10623 = vunpack.c.l.s4 1983009808
        %v10624 = vunpack.c.0.s8 %v10623
        %v10625 = vlaneseq
        %v10626 = vshrl.u32 %v10625, 7
        %v10627 = vsub.s32 %v10624, %v10626
        %v10628 = vrot.slane %v10467, %v10627
        %v10630 = vunpack.c.l.s4 1983009808
        %v10631 = vunpack.c.0.s8 %v10630
        %v10632 = vlaneseq
        %v10633 = vshrl.u32 %v10632, 7
        %v10634 = vsub.s32 %v10631, %v10633
        %v10635 = vrot.slane %v10621, %v10634
        %v10636 = vcombine.high %v10628, %v10628
        %v10637 = vcombine.high %v10635, %v10635
        %v10638 = vcombine.high %v10468, %v10468
        %v10640 = vunpack.c.l.s4 1983009808
        %v10641 = vunpack.c.0.s8 %v10640
        %v10642 = vlaneseq
        %v10643 = vshrl.u32 %v10642, 7
        %v10644 = vsub.s32 %v10641, %v10643
        %v10645 = vrot.slane %v10468, %v10644
        %v10647 = vunpack.c.l.s4 1983009808
        %v10648 = vunpack.c.0.s8 %v10647
        %v10649 = vlaneseq
        %v10650 = vshrl.u32 %v10649, 7
        %v10651 = vsub.s32 %v10648, %v10650
        %v10652 = vrot.slane %v10638, %v10651
        %v10653 = vcombine.high %v10645, %v10645
        %v10654 = vcombine.high %v10652, %v10652
        %v10655 = vcombine.high %v10469, %v10469
        %v10657 = vunpack.c.l.s4 1983009808
        %v10658 = vunpack.c.0.s8 %v10657
        %v10659 = vlaneseq
        %v10660 = vshrl.u32 %v10659, 7
        %v10661 = vsub.s32 %v10658, %v10660
        %v10662 = vrot.slane %v10469, %v10661
        %v10664 = vunpack.c.l.s4 1983009808
        %v10665 = vunpack.c.0.s8 %v10664
        %v10666 = vlaneseq
        %v10667 = vshrl.u32 %v10666, 7
        %v10668 = vsub.s32 %v10665, %v10667
        %v10669 = vrot.slane %v10655, %v10668
        %v10670 = vcombine.high %v10662, %v10662
        %v10671 = vcombine.high %v10669, %v10669
        %v10672 = vcombine.high %v10470, %v10470
        %v10674 = vunpack.c.l.s4 1983009808
        %v10675 = vunpack.c.0.s8 %v10674
        %v10676 = vlaneseq
        %v10677 = vshrl.u32 %v10676, 7
        %v10678 = vsub.s32 %v10675, %v10677
        %v10679 = vrot.slane %v10470, %v10678
        %v10681 = vunpack.c.l.s4 1983009808
        %v10682 = vunpack.c.0.s8 %v10681
        %v10683 = vlaneseq
        %v10684 = vshrl.u32 %v10683, 7
        %v10685 = vsub.s32 %v10682, %v10684
        %v10686 = vrot.slane %v10672, %v10685
        %v10687 = vcombine.high %v10679, %v10679
        %v10688 = vcombine.high %v10686, %v10686
        %v10690 = vunpack.c.l.s4 1983009808
        %v10691 = vunpack.c.0.s8 %v10690
        %v10692 = vlaneseq
        %v10693 = vshrl.u32 %v10692, 7
        %v10694 = vsub.s32 %v10691, %v10693
        %v10695 = vrot.slane %v10471, %v10694
        %v10696 = vcombine.high %v10695, %v10695
        %s10697 = smul.u32 %s26, 8
        %s10698 = ssub.s32 %s10697, 1
        %v10699 = vstv %s10698
        %v10700 = vadd.s32 %v10699, 1
        %v10701 = vadd.s32 %v10699, 2
        %v10702 = vadd.s32 %v10699, 3
        %v10703 = vadd.s32 %v10699, 4
        %v10704 = vadd.s32 %v10699, 5
        %v10705 = vadd.s32 %v10699, 6
        %v10706 = vadd.s32 %v10699, 7
        %v10707 = vadd.s32 %v10699, 8
        %v10708 = vadd.s32 %v10699, 9
        %v10709 = vlaneseq
        %v10710 = vshrl.u32 %v10709, 7
        %v10711 = vadd.s32 %v10710, 8
        %v10712 = vadd.s32 %v10710, 4294967295
        %v10713 = vadd.s32 %v10711, 4294967295
        %vm10714 = vcmp.ge.s32.totalorder %v10699, 0
        %vm10715 = vcmp.ge.s32.totalorder %v10700, 0
        %vm10716 = vcmp.ge.s32.totalorder %v10701, 0
        %vm10717 = vcmp.ge.s32.totalorder %v10702, 0
        %vm10718 = vcmp.ge.s32.totalorder %v10703, 0
        %vm10719 = vcmp.ge.s32.totalorder %v10704, 0
        %vm10720 = vcmp.ge.s32.totalorder %v10705, 0
        %vm10721 = vcmp.ge.s32.totalorder %v10706, 0
        %vm10722 = vcmp.ge.s32.totalorder %v10707, 0
        %vm10723 = vcmp.ge.s32.totalorder %v10708, 0
        %vm10724 = vcmp.lt.s32.totalorder %v10699, 8
        %vm10725 = vcmp.lt.s32.totalorder %v10700, 8
        %vm10726 = vcmp.lt.s32.totalorder %v10701, 8
        %vm10727 = vcmp.lt.s32.totalorder %v10702, 8
        %vm10728 = vcmp.lt.s32.totalorder %v10703, 8
        %vm10729 = vcmp.lt.s32.totalorder %v10704, 8
        %vm10730 = vcmp.lt.s32.totalorder %v10705, 8
        %vm10731 = vcmp.lt.s32.totalorder %v10706, 8
        %vm10732 = vcmp.lt.s32.totalorder %v10707, 8
        %vm10733 = vcmp.lt.s32.totalorder %v10708, 8
        %vm10734 = vmand %vm10714, %vm10724
        %vm10735 = vmand %vm10715, %vm10725
        %vm10736 = vmand %vm10716, %vm10726
        %vm10737 = vmand %vm10717, %vm10727
        %vm10738 = vmand %vm10718, %vm10728
        %vm10739 = vmand %vm10719, %vm10729
        %vm10740 = vmand %vm10720, %vm10730
        %vm10741 = vmand %vm10721, %vm10731
        %vm10742 = vmand %vm10722, %vm10732
        %vm10743 = vmand %vm10723, %vm10733
        %vm10744 = vcmp.ge.s32.totalorder %v10712, 0
        %vm10745 = vcmp.ge.s32.totalorder %v10713, 0
        %v10746 = vsel %vm10734, 1, 0
        %v10747 = vsel %vm10735, 1, 0
        %v10748 = vsel %vm10736, 1, 0
        %v10749 = vsel %vm10737, 1, 0
        %v10750 = vsel %vm10738, 1, 0
        %v10751 = vsel %vm10739, 1, 0
        %v10752 = vsel %vm10740, 1, 0
        %v10753 = vsel %vm10741, 1, 0
        %v10754 = vsel %vm10742, 1, 0
        %v10755 = vsel %vm10743, 1, 0
        %vm10756 = vcmp.eq.s32.totalorder %v10746, 1
        %vm10757 = vcmp.eq.s32.totalorder %v10747, 1
        %vm10758 = vcmp.eq.s32.totalorder %v10748, 1
        %vm10759 = vcmp.eq.s32.totalorder %v10749, 1
        %vm10760 = vcmp.eq.s32.totalorder %v10750, 1
        %vm10761 = vcmp.eq.s32.totalorder %v10751, 1
        %vm10762 = vcmp.eq.s32.totalorder %v10752, 1
        %vm10763 = vcmp.eq.s32.totalorder %v10753, 1
        %vm10764 = vcmp.eq.s32.totalorder %v10754, 1
        %vm10765 = vcmp.eq.s32.totalorder %v10755, 1
        %v10766 = vsel %vm10744, 1, 0
        %v10767 = vsel %vm10745, 1, 0
        %vm10768 = vcmp.eq.s32.totalorder %v10766, 1
        %vm10769 = vcmp.eq.s32.totalorder %v10767, 1
        %vm10770 = vmand %vm10756, %vm10768
        %vm10771 = vmand %vm10756, %vm10769
        %vm10772 = vmand %vm10757, %vm10768
        %vm10773 = vmand %vm10757, %vm10769
        %vm10774 = vmand %vm10758, %vm10768
        %vm10775 = vmand %vm10758, %vm10769
        %vm10776 = vmand %vm10759, %vm10768
        %vm10777 = vmand %vm10759, %vm10769
        %vm10778 = vmand %vm10760, %vm10768
        %vm10779 = vmand %vm10760, %vm10769
        %vm10780 = vmand %vm10761, %vm10768
        %vm10781 = vmand %vm10761, %vm10769
        %vm10782 = vmand %vm10762, %vm10768
        %vm10783 = vmand %vm10762, %vm10769
        %vm10784 = vmand %vm10763, %vm10768
        %vm10785 = vmand %vm10763, %vm10769
        %vm10786 = vmand %vm10764, %vm10768
        %vm10787 = vmand %vm10764, %vm10769
        %vm10788 = vmand %vm10765, %vm10768
        %vm10789 = vmand %vm10765, %vm10769
        %vm10790 = vcmp.lt.s32.totalorder %v10712, 8
        %vm10791 = vcmp.lt.s32.totalorder %v10713, 8
        %v10792 = vsel %vm10790, 1, 0
        %v10793 = vsel %vm10791, 1, 0
        %vm10794 = vcmp.eq.s32.totalorder %v10792, 1
        %vm10795 = vcmp.eq.s32.totalorder %v10793, 1
        %vm10796 = vmand %vm10770, %vm10794
        %vm10797 = vmand %vm10771, %vm10795
        %vm10798 = vmand %vm10772, %vm10794
        %vm10799 = vmand %vm10773, %vm10795
        %vm10800 = vmand %vm10774, %vm10794
        %vm10801 = vmand %vm10775, %vm10795
        %vm10802 = vmand %vm10776, %vm10794
        %vm10803 = vmand %vm10777, %vm10795
        %vm10804 = vmand %vm10778, %vm10794
        %vm10805 = vmand %vm10779, %vm10795
        %vm10806 = vmand %vm10780, %vm10794
        %vm10807 = vmand %vm10781, %vm10795
        %vm10808 = vmand %vm10782, %vm10794
        %vm10809 = vmand %vm10783, %vm10795
        %vm10810 = vmand %vm10784, %vm10794
        %vm10811 = vmand %vm10785, %vm10795
        %vm10812 = vmand %vm10786, %vm10794
        %vm10813 = vmand %vm10787, %vm10795
        %vm10814 = vmand %vm10788, %vm10794
        %vm10815 = vmand %vm10789, %vm10795
        %v10816 = vsel %vm10796, 1, 0
        %v10817 = vsel %vm10797, 1, 0
        %v10818 = vsel %vm10798, 1, 0
        %v10819 = vsel %vm10799, 1, 0
        %v10820 = vsel %vm10800, 1, 0
        %v10821 = vsel %vm10801, 1, 0
        %v10822 = vsel %vm10802, 1, 0
        %v10823 = vsel %vm10803, 1, 0
        %v10824 = vsel %vm10804, 1, 0
        %v10825 = vsel %vm10805, 1, 0
        %v10826 = vsel %vm10806, 1, 0
        %v10827 = vsel %vm10807, 1, 0
        %v10828 = vsel %vm10808, 1, 0
        %v10829 = vsel %vm10809, 1, 0
        %v10830 = vsel %vm10810, 1, 0
        %v10831 = vsel %vm10811, 1, 0
        %v10832 = vsel %vm10812, 1, 0
        %v10833 = vsel %vm10813, 1, 0
        %v10834 = vsel %vm10814, 1, 0
        %v10835 = vsel %vm10815, 1, 0
        %vm10836 = vcmp.eq.s32.totalorder %v10816, 1
        %vm10837 = vcmp.eq.s32.totalorder %v10817, 1
        %vm10838 = vcmp.eq.s32.totalorder %v10818, 1
        %vm10839 = vcmp.eq.s32.totalorder %v10819, 1
        %vm10840 = vcmp.eq.s32.totalorder %v10820, 1
        %vm10841 = vcmp.eq.s32.totalorder %v10821, 1
        %vm10842 = vcmp.eq.s32.totalorder %v10822, 1
        %vm10843 = vcmp.eq.s32.totalorder %v10823, 1
        %vm10844 = vcmp.eq.s32.totalorder %v10824, 1
        %vm10845 = vcmp.eq.s32.totalorder %v10825, 1
        %vm10846 = vcmp.eq.s32.totalorder %v10826, 1
        %vm10847 = vcmp.eq.s32.totalorder %v10827, 1
        %vm10848 = vcmp.eq.s32.totalorder %v10828, 1
        %vm10849 = vcmp.eq.s32.totalorder %v10829, 1
        %vm10850 = vcmp.eq.s32.totalorder %v10830, 1
        %vm10851 = vcmp.eq.s32.totalorder %v10831, 1
        %vm10852 = vcmp.eq.s32.totalorder %v10832, 1
        %vm10853 = vcmp.eq.s32.totalorder %v10833, 1
        %vm10854 = vcmp.eq.s32.totalorder %v10834, 1
        %vm10855 = vcmp.eq.s32.totalorder %v10835, 1
        %v10856 = vcombine.low %v10492, %v10500
        %v10857 = vcombine.low %v10499, %v10501
        %v10859 = vunpack.c.l.s4 1983009808
        %v10860 = vunpack.c.0.s8 %v10859
        %v10861 = vlaneseq
        %v10862 = vshrl.u32 %v10861, 7
        %v10863 = vsub.s32 %v10860, %v10862
        %v10864 = vrot.slane %v10856, %v10863
        %v10866 = vunpack.c.l.s4 1983009808
        %v10867 = vunpack.c.0.s8 %v10866
        %v10868 = vlaneseq
        %v10869 = vshrl.u32 %v10868, 7
        %v10870 = vsub.s32 %v10867, %v10869
        %v10871 = vrot.slane %v10857, %v10870
        %v10872 = vcombine.low %v10864, %v10871
        %v10874 = vunpack.c.l.s4 1983009808
        %v10875 = vunpack.c.0.s8 %v10874
        %v10876 = vlaneseq
        %v10877 = vshrl.u32 %v10876, 7
        %v10878 = vsub.s32 %v10875, %v10877
        %v10879 = vrot.slane %v10509, %v10878
        %v10880 = vcombine.low %v10517, %v10516
        %v10881 = vcombine.low %v10518, %v10526
        %v10883 = vunpack.c.l.s4 1983009808
        %v10884 = vunpack.c.0.s8 %v10883
        %v10885 = vlaneseq
        %v10886 = vshrl.u32 %v10885, 7
        %v10887 = vsub.s32 %v10884, %v10886
        %v10888 = vrot.slane %v10880, %v10887
        %v10890 = vunpack.c.l.s4 1983009808
        %v10891 = vunpack.c.0.s8 %v10890
        %v10892 = vlaneseq
        %v10893 = vshrl.u32 %v10892, 7
        %v10894 = vsub.s32 %v10891, %v10893
        %v10895 = vrot.slane %v10881, %v10894
        %v10896 = vcombine.low %v10888, %v10895
        %v10898 = vunpack.c.l.s4 1983009808
        %v10899 = vunpack.c.0.s8 %v10898
        %v10900 = vlaneseq
        %v10901 = vshrl.u32 %v10900, 7
        %v10902 = vsub.s32 %v10899, %v10901
        %v10903 = vrot.slane %v10534, %v10902
        %v10904 = vcombine.low %v10533, %v10535
        %v10905 = vcombine.low %v10543, %v10551
        %v10907 = vunpack.c.l.s4 1983009808
        %v10908 = vunpack.c.0.s8 %v10907
        %v10909 = vlaneseq
        %v10910 = vshrl.u32 %v10909, 7
        %v10911 = vsub.s32 %v10908, %v10910
        %v10912 = vrot.slane %v10904, %v10911
        %v10914 = vunpack.c.l.s4 1983009808
        %v10915 = vunpack.c.0.s8 %v10914
        %v10916 = vlaneseq
        %v10917 = vshrl.u32 %v10916, 7
        %v10918 = vsub.s32 %v10915, %v10917
        %v10919 = vrot.slane %v10905, %v10918
        %v10920 = vcombine.low %v10912, %v10919
        %v10922 = vunpack.c.l.s4 1983009808
        %v10923 = vunpack.c.0.s8 %v10922
        %v10924 = vlaneseq
        %v10925 = vshrl.u32 %v10924, 7
        %v10926 = vsub.s32 %v10923, %v10925
        %v10927 = vrot.slane %v10550, %v10926
        %v10928 = vcombine.low %v10552, %v10560
        %v10929 = vcombine.low %v10568, %v10567
        %v10931 = vunpack.c.l.s4 1983009808
        %v10932 = vunpack.c.0.s8 %v10931
        %v10933 = vlaneseq
        %v10934 = vshrl.u32 %v10933, 7
        %v10935 = vsub.s32 %v10932, %v10934
        %v10936 = vrot.slane %v10928, %v10935
        %v10938 = vunpack.c.l.s4 1983009808
        %v10939 = vunpack.c.0.s8 %v10938
        %v10940 = vlaneseq
        %v10941 = vshrl.u32 %v10940, 7
        %v10942 = vsub.s32 %v10939, %v10941
        %v10943 = vrot.slane %v10929, %v10942
        %v10944 = vcombine.low %v10936, %v10943
        %v10946 = vunpack.c.l.s4 1983009808
        %v10947 = vunpack.c.0.s8 %v10946
        %v10948 = vlaneseq
        %v10949 = vshrl.u32 %v10948, 7
        %v10950 = vsub.s32 %v10947, %v10949
        %v10951 = vrot.slane %v10569, %v10950
        %v10952 = vcombine.low %v10577, %v10585
        %v10953 = vcombine.low %v10584, %v10586
        %v10955 = vunpack.c.l.s4 1983009808
        %v10956 = vunpack.c.0.s8 %v10955
        %v10957 = vlaneseq
        %v10958 = vshrl.u32 %v10957, 7
        %v10959 = vsub.s32 %v10956, %v10958
        %v10960 = vrot.slane %v10952, %v10959
        %v10962 = vunpack.c.l.s4 1983009808
        %v10963 = vunpack.c.0.s8 %v10962
        %v10964 = vlaneseq
        %v10965 = vshrl.u32 %v10964, 7
        %v10966 = vsub.s32 %v10963, %v10965
        %v10967 = vrot.slane %v10953, %v10966
        %v10968 = vcombine.low %v10960, %v10967
        %v10970 = vunpack.c.l.s4 1983009808
        %v10971 = vunpack.c.0.s8 %v10970
        %v10972 = vlaneseq
        %v10973 = vshrl.u32 %v10972, 7
        %v10974 = vsub.s32 %v10971, %v10973
        %v10975 = vrot.slane %v10594, %v10974
        %v10976 = vcombine.low %v10602, %v10601
        %v10977 = vcombine.low %v10603, %v10611
        %v10979 = vunpack.c.l.s4 1983009808
        %v10980 = vunpack.c.0.s8 %v10979
        %v10981 = vlaneseq
        %v10982 = vshrl.u32 %v10981, 7
        %v10983 = vsub.s32 %v10980, %v10982
        %v10984 = vrot.slane %v10976, %v10983
        %v10986 = vunpack.c.l.s4 1983009808
        %v10987 = vunpack.c.0.s8 %v10986
        %v10988 = vlaneseq
        %v10989 = vshrl.u32 %v10988, 7
        %v10990 = vsub.s32 %v10987, %v10989
        %v10991 = vrot.slane %v10977, %v10990
        %v10992 = vcombine.low %v10984, %v10991
        %v10994 = vunpack.c.l.s4 1983009808
        %v10995 = vunpack.c.0.s8 %v10994
        %v10996 = vlaneseq
        %v10997 = vshrl.u32 %v10996, 7
        %v10998 = vsub.s32 %v10995, %v10997
        %v10999 = vrot.slane %v10619, %v10998
        %v11000 = vcombine.low %v10618, %v10620
        %v11001 = vcombine.low %v10628, %v10636
        %v11003 = vunpack.c.l.s4 1983009808
        %v11004 = vunpack.c.0.s8 %v11003
        %v11005 = vlaneseq
        %v11006 = vshrl.u32 %v11005, 7
        %v11007 = vsub.s32 %v11004, %v11006
        %v11008 = vrot.slane %v11000, %v11007
        %v11010 = vunpack.c.l.s4 1983009808
        %v11011 = vunpack.c.0.s8 %v11010
        %v11012 = vlaneseq
        %v11013 = vshrl.u32 %v11012, 7
        %v11014 = vsub.s32 %v11011, %v11013
        %v11015 = vrot.slane %v11001, %v11014
        %v11016 = vcombine.low %v11008, %v11015
        %v11018 = vunpack.c.l.s4 1983009808
        %v11019 = vunpack.c.0.s8 %v11018
        %v11020 = vlaneseq
        %v11021 = vshrl.u32 %v11020, 7
        %v11022 = vsub.s32 %v11019, %v11021
        %v11023 = vrot.slane %v10635, %v11022
        %v11024 = vcombine.low %v10637, %v10645
        %v11025 = vcombine.low %v10653, %v10652
        %v11027 = vunpack.c.l.s4 1983009808
        %v11028 = vunpack.c.0.s8 %v11027
        %v11029 = vlaneseq
        %v11030 = vshrl.u32 %v11029, 7
        %v11031 = vsub.s32 %v11028, %v11030
        %v11032 = vrot.slane %v11024, %v11031
        %v11034 = vunpack.c.l.s4 1983009808
        %v11035 = vunpack.c.0.s8 %v11034
        %v11036 = vlaneseq
        %v11037 = vshrl.u32 %v11036, 7
        %v11038 = vsub.s32 %v11035, %v11037
        %v11039 = vrot.slane %v11025, %v11038
        %v11040 = vcombine.low %v11032, %v11039
        %v11042 = vunpack.c.l.s4 1983009808
        %v11043 = vunpack.c.0.s8 %v11042
        %v11044 = vlaneseq
        %v11045 = vshrl.u32 %v11044, 7
        %v11046 = vsub.s32 %v11043, %v11045
        %v11047 = vrot.slane %v10654, %v11046
        %v11048 = vcombine.low %v10662, %v10670
        %v11049 = vcombine.low %v10669, %v10671
        %v11051 = vunpack.c.l.s4 1983009808
        %v11052 = vunpack.c.0.s8 %v11051
        %v11053 = vlaneseq
        %v11054 = vshrl.u32 %v11053, 7
        %v11055 = vsub.s32 %v11052, %v11054
        %v11056 = vrot.slane %v11048, %v11055
        %v11058 = vunpack.c.l.s4 1983009808
        %v11059 = vunpack.c.0.s8 %v11058
        %v11060 = vlaneseq
        %v11061 = vshrl.u32 %v11060, 7
        %v11062 = vsub.s32 %v11059, %v11061
        %v11063 = vrot.slane %v11049, %v11062
        %v11064 = vcombine.low %v11056, %v11063
        %v11066 = vunpack.c.l.s4 1983009808
        %v11067 = vunpack.c.0.s8 %v11066
        %v11068 = vlaneseq
        %v11069 = vshrl.u32 %v11068, 7
        %v11070 = vsub.s32 %v11067, %v11069
        %v11071 = vrot.slane %v10679, %v11070
        %v11072 = vcombine.low %v10687, %v10686
        %v11073 = vcombine.low %v10688, %v10695
        %v11075 = vunpack.c.l.s4 1983009808
        %v11076 = vunpack.c.0.s8 %v11075
        %v11077 = vlaneseq
        %v11078 = vshrl.u32 %v11077, 7
        %v11079 = vsub.s32 %v11076, %v11078
        %v11080 = vrot.slane %v11072, %v11079
        %v11082 = vunpack.c.l.s4 1983009808
        %v11083 = vunpack.c.0.s8 %v11082
        %v11084 = vlaneseq
        %v11085 = vshrl.u32 %v11084, 7
        %v11086 = vsub.s32 %v11083, %v11085
        %v11087 = vrot.slane %v11073, %v11086
        %v11088 = vcombine.low %v11080, %v11087
        %v11090 = vunpack.c.l.s4 1983009808
        %v11091 = vunpack.c.0.s8 %v11090
        %v11092 = vlaneseq
        %v11093 = vshrl.u32 %v11092, 7
        %v11094 = vsub.s32 %v11091, %v11093
        %v11095 = vrot.slane %v10696, %v11094
        %v11116 = vsel %vm10836, %v10872, 0.0
        %v11117 = vsel %vm10837, %v10879, 0.0
        %v11118 = vsel %vm10838, %v10896, 0.0
        %v11119 = vsel %vm10839, %v10903, 0.0
        %v11120 = vsel %vm10840, %v10920, 0.0
        %v11121 = vsel %vm10841, %v10927, 0.0
        %v11122 = vsel %vm10842, %v10944, 0.0
        %v11123 = vsel %vm10843, %v10951, 0.0
        %v11124 = vsel %vm10844, %v10968, 0.0
        %v11125 = vsel %vm10845, %v10975, 0.0
        %v11126 = vsel %vm10846, %v10992, 0.0
        %v11127 = vsel %vm10847, %v10999, 0.0
        %v11128 = vsel %vm10848, %v11016, 0.0
        %v11129 = vsel %vm10849, %v11023, 0.0
        %v11130 = vsel %vm10850, %v11040, 0.0
        %v11131 = vsel %vm10851, %v11047, 0.0
        %v11132 = vsel %vm10852, %v11064, 0.0
        %v11133 = vsel %vm10853, %v11071, 0.0
        %v11134 = vsel %vm10854, %v11088, 0.0
        %v11135 = vsel %vm10855, %v11095, 0.0
        %v11136 = vpack.c.bf16 %v11117, %v11116
        %v11137 = vpack.c.bf16 %v11119, %v11118
        %v11138 = vpack.c.bf16 %v11121, %v11120
        %v11139 = vpack.c.bf16 %v11123, %v11122
        %v11140 = vpack.c.bf16 %v11125, %v11124
        %v11141 = vpack.c.bf16 %v11127, %v11126
        %v11142 = vpack.c.bf16 %v11129, %v11128
        %v11143 = vpack.c.bf16 %v11131, %v11130
        %v11144 = vpack.c.bf16 %v11133, %v11132
        %v11145 = vpack.c.bf16 %v11135, %v11134
        %v11156 = vunpack.c.l.b16 %v11136
        %v11157 = vunpack.c.h.b16 %v11136
        %v11158 = vunpack.c.l.b16 %v11137
        %v11159 = vunpack.c.h.b16 %v11137
        %v11160 = vunpack.c.l.b16 %v11138
        %v11161 = vunpack.c.h.b16 %v11138
        %v11162 = vunpack.c.l.b16 %v11139
        %v11163 = vunpack.c.h.b16 %v11139
        %v11164 = vunpack.c.l.b16 %v11140
        %v11165 = vunpack.c.h.b16 %v11140
        %v11166 = vunpack.c.l.b16 %v11141
        %v11167 = vunpack.c.h.b16 %v11141
        %v11168 = vunpack.c.l.b16 %v11142
        %v11169 = vunpack.c.h.b16 %v11142
        %v11170 = vunpack.c.l.b16 %v11143
        %v11171 = vunpack.c.h.b16 %v11143
        %v11172 = vunpack.c.l.b16 %v11144
        %v11173 = vunpack.c.h.b16 %v11144
        %v11174 = vunpack.c.l.b16 %v11145
        %v11175 = vunpack.c.h.b16 %v11145
        %v11176 = vpack.c.b16 %v11156, %v11156
        %v11177 = vpack.c.b16 %v11157, %v11157
        %v11178 = vpack.c.b16 %v11158, %v11158
        %v11179 = vpack.c.b16 %v11159, %v11159
        %v11180 = vpack.c.b16 %v11160, %v11160
        %v11181 = vpack.c.b16 %v11161, %v11161
        %v11182 = vpack.c.b16 %v11162, %v11162
        %v11183 = vpack.c.b16 %v11163, %v11163
        %v11184 = vpack.c.b16 %v11164, %v11164
        %v11185 = vpack.c.b16 %v11165, %v11165
        %v11186 = vpack.c.b16 %v11166, %v11166
        %v11187 = vpack.c.b16 %v11167, %v11167
        %v11188 = vpack.c.b16 %v11168, %v11168
        %v11189 = vpack.c.b16 %v11169, %v11169
        %v11190 = vpack.c.b16 %v11170, %v11170
        %v11191 = vpack.c.b16 %v11171, %v11171
        %v11192 = vpack.c.b16 %v11172, %v11172
        %v11193 = vpack.c.b16 %v11173, %v11173
        %v11194 = vpack.c.b16 %v11174, %v11174
        %v11195 = vpack.c.b16 %v11175, %v11175
        %11216 = vst [vmem:[#allocation3] sm:$0xf] %v11176
        %11217 = vst [vmem:[#allocation3 + $0x4] sm:$0x1] %v11177
        %11218 = vst [vmem:[#allocation3 + $0x8] sm:$0xf] %v11178
        %11219 = vst [vmem:[#allocation3 + $0xc] sm:$0x1] %v11179
        %11220 = vst [vmem:[#allocation3 + $0x10] sm:$0xf] %v11180
        %11221 = vst [vmem:[#allocation3 + $0x14] sm:$0x1] %v11181
        %11222 = vst [vmem:[#allocation3 + $0x18] sm:$0xf] %v11182
        %11223 = vst [vmem:[#allocation3 + $0x1c] sm:$0x1] %v11183
        %11224 = vst [vmem:[#allocation3 + $0x20] sm:$0xf] %v11184
        %11225 = vst [vmem:[#allocation3 + $0x24] sm:$0x1] %v11185
        %11226 = vst [vmem:[#allocation3 + $0x28] sm:$0xf] %v11186
        %11227 = vst [vmem:[#allocation3 + $0x2c] sm:$0x1] %v11187
        %11228 = vst [vmem:[#allocation3 + $0x30] sm:$0xf] %v11188
        %11229 = vst [vmem:[#allocation3 + $0x34] sm:$0x1] %v11189
        %11230 = vst [vmem:[#allocation3 + $0x38] sm:$0xf] %v11190
        %11231 = vst [vmem:[#allocation3 + $0x3c] sm:$0x1] %v11191
        %11232 = vst [vmem:[#allocation3 + $0x40] sm:$0xf] %v11192
        %11233 = vst [vmem:[#allocation3 + $0x44] sm:$0x1] %v11193
        %11234 = vst [vmem:[#allocation3 + $0x48] sm:$0xf] %v11194
        %11235 = vst [vmem:[#allocation3 + $0x4c] sm:$0x1] %v11195
        %v11236 = vld [vmem:[#allocation3] sm:$0xf]
        %v11237 = vld [vmem:[#allocation3 + $0x8] sm:$0xf]
        %v11238 = vld [vmem:[#allocation3 + $0x10] sm:$0xf]
        %v11239 = vld [vmem:[#allocation3 + $0x18] sm:$0xf]
        %v11240 = vld [vmem:[#allocation3 + $0x20] sm:$0xf]
        %v11241 = vld [vmem:[#allocation3 + $0x28] sm:$0xf]
        %v11242 = vld [vmem:[#allocation3 + $0x30] sm:$0xf]
        %v11243 = vld [vmem:[#allocation3 + $0x38] sm:$0xf]
        %v11252 = vunpack.c.l.b16 %v11236
        %v11253 = vunpack.c.l.b16 %v11237
        %v11254 = vunpack.c.l.b16 %v11238
        %v11255 = vunpack.c.l.b16 %v11239
        %v11256 = vunpack.c.l.b16 %v11240
        %v11257 = vunpack.c.l.b16 %v11241
        %v11258 = vunpack.c.l.b16 %v11242
        %v11259 = vunpack.c.l.b16 %v11243
        %v11260 = vpack.c.b16 %v11253, %v11252
        %v11261 = vpack.c.b16 %v11255, %v11254
        %v11262 = vpack.c.b16 %v11257, %v11256
        %v11263 = vpack.c.b16 %v11259, %v11258
        %11268 = vst [vmem:[#allocation5] sm:$0xff] %v11260
        %11269 = vst [vmem:[#allocation5 + $0x48] sm:$0xff] %v11261
        %11270 = vst [vmem:[#allocation5 + $0x90] sm:$0xff] %v11262
        %11271 = vst [vmem:[#allocation5 + $0xd8] sm:$0xff] %v11263
        %v11272 = vld [vmem:[#allocation3] sm:$0xf]
        %v11273 = vld [vmem:[#allocation3 + $0x4] sm:$0x1]
        %v11274 = vld [vmem:[#allocation3 + $0x8] sm:$0xf]
        %v11275 = vld [vmem:[#allocation3 + $0xc] sm:$0x1]
        %v11276 = vld [vmem:[#allocation3 + $0x10] sm:$0xf]
        %v11277 = vld [vmem:[#allocation3 + $0x14] sm:$0x1]
        %v11278 = vld [vmem:[#allocation3 + $0x18] sm:$0xf]
        %v11279 = vld [vmem:[#allocation3 + $0x1c] sm:$0x1]
        %v11280 = vld [vmem:[#allocation3 + $0x20] sm:$0xf]
        %v11281 = vld [vmem:[#allocation3 + $0x24] sm:$0x1]
        %v11282 = vld [vmem:[#allocation3 + $0x28] sm:$0xf]
        %v11283 = vld [vmem:[#allocation3 + $0x2c] sm:$0x1]
        %v11284 = vld [vmem:[#allocation3 + $0x30] sm:$0xf]
        %v11285 = vld [vmem:[#allocation3 + $0x34] sm:$0x1]
        %v11286 = vld [vmem:[#allocation3 + $0x38] sm:$0xf]
        %v11287 = vld [vmem:[#allocation3 + $0x3c] sm:$0x1]
        %vm11288 = vsmask.f32 3328
        %vm11289 = vsmask.f32 7440
        %vm11290 = vmor %vm11288, %vm11289
        %v11292 = vshrl.u32 %v11272, 16
        %v11294 = vrot.slane %v11292, 4
        %v11295 = vshll.u32 %v11272, 16
        %v11297 = vrot.slane %v11295, 5
        %v11298 = vor.u32 %v11294, %v11297
        %v11299 = vrot.slane %v11298, 4
        %v11301 = vshll.u32 %v11273, 16
        %v11303 = vrot.slane %v11301, 5
        %v11304 = vsel %vm11290, %v11299, %v11303
        %v11306 = vshrl.u32 %v11274, 16
        %v11308 = vrot.slane %v11306, 4
        %v11309 = vshll.u32 %v11274, 16
        %v11311 = vrot.slane %v11309, 5
        %v11312 = vor.u32 %v11308, %v11311
        %v11313 = vrot.slane %v11312, 4
        %v11315 = vshll.u32 %v11275, 16
        %v11317 = vrot.slane %v11315, 5
        %v11318 = vsel %vm11290, %v11313, %v11317
        %v11320 = vshrl.u32 %v11276, 16
        %v11322 = vrot.slane %v11320, 4
        %v11323 = vshll.u32 %v11276, 16
        %v11325 = vrot.slane %v11323, 5
        %v11326 = vor.u32 %v11322, %v11325
        %v11327 = vrot.slane %v11326, 4
        %v11329 = vshll.u32 %v11277, 16
        %v11331 = vrot.slane %v11329, 5
        %v11332 = vsel %vm11290, %v11327, %v11331
        %v11334 = vshrl.u32 %v11278, 16
        %v11336 = vrot.slane %v11334, 4
        %v11337 = vshll.u32 %v11278, 16
        %v11339 = vrot.slane %v11337, 5
        %v11340 = vor.u32 %v11336, %v11339
        %v11341 = vrot.slane %v11340, 4
        %v11343 = vshll.u32 %v11279, 16
        %v11345 = vrot.slane %v11343, 5
        %v11346 = vsel %vm11290, %v11341, %v11345
        %v11348 = vshrl.u32 %v11280, 16
        %v11350 = vrot.slane %v11348, 4
        %v11351 = vshll.u32 %v11280, 16
        %v11353 = vrot.slane %v11351, 5
        %v11354 = vor.u32 %v11350, %v11353
        %v11355 = vrot.slane %v11354, 4
        %v11357 = vshll.u32 %v11281, 16
        %v11359 = vrot.slane %v11357, 5
        %v11360 = vsel %vm11290, %v11355, %v11359
        %v11362 = vshrl.u32 %v11282, 16
        %v11364 = vrot.slane %v11362, 4
        %v11365 = vshll.u32 %v11282, 16
        %v11367 = vrot.slane %v11365, 5
        %v11368 = vor.u32 %v11364, %v11367
        %v11369 = vrot.slane %v11368, 4
        %v11371 = vshll.u32 %v11283, 16
        %v11373 = vrot.slane %v11371, 5
        %v11374 = vsel %vm11290, %v11369, %v11373
        %v11376 = vshrl.u32 %v11284, 16
        %v11378 = vrot.slane %v11376, 4
        %v11379 = vshll.u32 %v11284, 16
        %v11381 = vrot.slane %v11379, 5
        %v11382 = vor.u32 %v11378, %v11381
        %v11383 = vrot.slane %v11382, 4
        %v11385 = vshll.u32 %v11285, 16
        %v11387 = vrot.slane %v11385, 5
        %v11388 = vsel %vm11290, %v11383, %v11387
        %v11390 = vshrl.u32 %v11286, 16
        %v11392 = vrot.slane %v11390, 4
        %v11393 = vshll.u32 %v11286, 16
        %v11395 = vrot.slane %v11393, 5
        %v11396 = vor.u32 %v11392, %v11395
        %v11397 = vrot.slane %v11396, 4
        %v11399 = vshll.u32 %v11287, 16
        %v11401 = vrot.slane %v11399, 5
        %v11402 = vsel %vm11290, %v11397, %v11401
        %v11403 = vunpack.c.l.b16 %v11304
        %v11404 = vunpack.c.l.b16 %v11318
        %v11405 = vunpack.c.l.b16 %v11332
        %v11406 = vunpack.c.l.b16 %v11346
        %v11407 = vunpack.c.l.b16 %v11360
        %v11408 = vunpack.c.l.b16 %v11374
        %v11409 = vunpack.c.l.b16 %v11388
        %v11410 = vunpack.c.l.b16 %v11402
        %v11411 = vpack.c.b16 %v11404, %v11403
        %v11412 = vpack.c.b16 %v11406, %v11405
        %v11413 = vpack.c.b16 %v11408, %v11407
        %v11414 = vpack.c.b16 %v11410, %v11409
        %11419 = vst [vmem:[#allocation5 + $0x8] sm:$0xff] %v11411
        %11420 = vst [vmem:[#allocation5 + $0x50] sm:$0xff] %v11412
        %11421 = vst [vmem:[#allocation5 + $0x98] sm:$0xff] %v11413
        %11422 = vst [vmem:[#allocation5 + $0xe0] sm:$0xff] %v11414
        %v11423 = vld [vmem:[#allocation3] sm:$0xe]
        %v11424 = vld [vmem:[#allocation3 + $0x4] sm:$0x1]
        %v11425 = vld [vmem:[#allocation3 + $0x8] sm:$0xe]
        %v11426 = vld [vmem:[#allocation3 + $0xc] sm:$0x1]
        %v11427 = vld [vmem:[#allocation3 + $0x10] sm:$0xe]
        %v11428 = vld [vmem:[#allocation3 + $0x14] sm:$0x1]
        %v11429 = vld [vmem:[#allocation3 + $0x18] sm:$0xe]
        %v11430 = vld [vmem:[#allocation3 + $0x1c] sm:$0x1]
        %v11431 = vld [vmem:[#allocation3 + $0x20] sm:$0xe]
        %v11432 = vld [vmem:[#allocation3 + $0x24] sm:$0x1]
        %v11433 = vld [vmem:[#allocation3 + $0x28] sm:$0xe]
        %v11434 = vld [vmem:[#allocation3 + $0x2c] sm:$0x1]
        %v11435 = vld [vmem:[#allocation3 + $0x30] sm:$0xe]
        %v11436 = vld [vmem:[#allocation3 + $0x34] sm:$0x1]
        %v11437 = vld [vmem:[#allocation3 + $0x38] sm:$0xe]
        %v11438 = vld [vmem:[#allocation3 + $0x3c] sm:$0x1]
        %vm11455 = vcmask 1042432
        %vm11456 = vcmask 1046532
        %vm11457 = vmor %vm11455, %vm11456
        %v11458 = vrot.slane %v11423, 5
        %v11459 = vrot.slane %v11458, 4
        %v11460 = vrot.slane %v11424, 5
        %v11461 = vsel %vm11457, %v11459, %v11460
        %v11462 = vrot.slane %v11425, 5
        %v11463 = vrot.slane %v11462, 4
        %v11464 = vrot.slane %v11426, 5
        %v11465 = vsel %vm11457, %v11463, %v11464
        %v11466 = vrot.slane %v11427, 5
        %v11467 = vrot.slane %v11466, 4
        %v11468 = vrot.slane %v11428, 5
        %v11469 = vsel %vm11457, %v11467, %v11468
        %v11470 = vrot.slane %v11429, 5
        %v11471 = vrot.slane %v11470, 4
        %v11472 = vrot.slane %v11430, 5
        %v11473 = vsel %vm11457, %v11471, %v11472
        %v11474 = vrot.slane %v11431, 5
        %v11475 = vrot.slane %v11474, 4
        %v11476 = vrot.slane %v11432, 5
        %v11477 = vsel %vm11457, %v11475, %v11476
        %v11478 = vrot.slane %v11433, 5
        %v11479 = vrot.slane %v11478, 4
        %v11480 = vrot.slane %v11434, 5
        %v11481 = vsel %vm11457, %v11479, %v11480
        %v11482 = vrot.slane %v11435, 5
        %v11483 = vrot.slane %v11482, 4
        %v11484 = vrot.slane %v11436, 5
        %v11485 = vsel %vm11457, %v11483, %v11484
        %v11486 = vrot.slane %v11437, 5
        %v11487 = vrot.slane %v11486, 4
        %v11488 = vrot.slane %v11438, 5
        %v11489 = vsel %vm11457, %v11487, %v11488
        %v11490 = vunpack.c.l.b16 %v11461
        %v11491 = vunpack.c.l.b16 %v11465
        %v11492 = vunpack.c.l.b16 %v11469
        %v11493 = vunpack.c.l.b16 %v11473
        %v11494 = vunpack.c.l.b16 %v11477
        %v11495 = vunpack.c.l.b16 %v11481
        %v11496 = vunpack.c.l.b16 %v11485
        %v11497 = vunpack.c.l.b16 %v11489
        %v11498 = vpack.c.b16 %v11491, %v11490
        %v11499 = vpack.c.b16 %v11493, %v11492
        %v11500 = vpack.c.b16 %v11495, %v11494
        %v11501 = vpack.c.b16 %v11497, %v11496
        %11506 = vst [vmem:[#allocation5 + $0x10] sm:$0xff] %v11498
        %11507 = vst [vmem:[#allocation5 + $0x58] sm:$0xff] %v11499
        %11508 = vst [vmem:[#allocation5 + $0xa0] sm:$0xff] %v11500
        %11509 = vst [vmem:[#allocation5 + $0xe8] sm:$0xff] %v11501
        %s11510 = scalar_lea.vmem [#allocation3], 8
        %v11511 = vld [vmem:[%s11510] sm:$0xf]
        %v11512 = vld [vmem:[%s11510 + $0x8] sm:$0xf]
        %v11513 = vld [vmem:[%s11510 + $0x10] sm:$0xf]
        %v11514 = vld [vmem:[%s11510 + $0x18] sm:$0xf]
        %v11515 = vld [vmem:[%s11510 + $0x20] sm:$0xf]
        %v11516 = vld [vmem:[%s11510 + $0x28] sm:$0xf]
        %v11517 = vld [vmem:[%s11510 + $0x30] sm:$0xf]
        %v11518 = vld [vmem:[%s11510 + $0x38] sm:$0xf]
        %v11527 = vunpack.c.l.b16 %v11511
        %v11528 = vunpack.c.l.b16 %v11512
        %v11529 = vunpack.c.l.b16 %v11513
        %v11530 = vunpack.c.l.b16 %v11514
        %v11531 = vunpack.c.l.b16 %v11515
        %v11532 = vunpack.c.l.b16 %v11516
        %v11533 = vunpack.c.l.b16 %v11517
        %v11534 = vunpack.c.l.b16 %v11518
        %v11535 = vpack.c.b16 %v11528, %v11527
        %v11536 = vpack.c.b16 %v11530, %v11529
        %v11537 = vpack.c.b16 %v11532, %v11531
        %v11538 = vpack.c.b16 %v11534, %v11533
        %11543 = vst [vmem:[#allocation5 + $0x18] sm:$0xff] %v11535
        %11544 = vst [vmem:[#allocation5 + $0x60] sm:$0xff] %v11536
        %11545 = vst [vmem:[#allocation5 + $0xa8] sm:$0xff] %v11537
        %11546 = vst [vmem:[#allocation5 + $0xf0] sm:$0xff] %v11538
        %v11547 = vld [vmem:[%s11510] sm:$0xf]
        %v11548 = vld [vmem:[%s11510 + $0x4] sm:$0x1]
        %v11549 = vld [vmem:[%s11510 + $0x8] sm:$0xf]
        %v11550 = vld [vmem:[%s11510 + $0xc] sm:$0x1]
        %v11551 = vld [vmem:[%s11510 + $0x10] sm:$0xf]
        %v11552 = vld [vmem:[%s11510 + $0x14] sm:$0x1]
        %v11553 = vld [vmem:[%s11510 + $0x18] sm:$0xf]
        %v11554 = vld [vmem:[%s11510 + $0x1c] sm:$0x1]
        %v11555 = vld [vmem:[%s11510 + $0x20] sm:$0xf]
        %v11556 = vld [vmem:[%s11510 + $0x24] sm:$0x1]
        %v11557 = vld [vmem:[%s11510 + $0x28] sm:$0xf]
        %v11558 = vld [vmem:[%s11510 + $0x2c] sm:$0x1]
        %v11559 = vld [vmem:[%s11510 + $0x30] sm:$0xf]
        %v11560 = vld [vmem:[%s11510 + $0x34] sm:$0x1]
        %v11561 = vld [vmem:[%s11510 + $0x38] sm:$0xf]
        %v11562 = vld [vmem:[%s11510 + $0x3c] sm:$0x1]
        %v11564 = vshrl.u32 %v11547, 16
        %v11566 = vrot.slane %v11564, 4
        %v11567 = vshll.u32 %v11547, 16
        %v11569 = vrot.slane %v11567, 5
        %v11570 = vor.u32 %v11566, %v11569
        %v11571 = vrot.slane %v11570, 4
        %v11573 = vshll.u32 %v11548, 16
        %v11575 = vrot.slane %v11573, 5
        %v11576 = vsel %vm11290, %v11571, %v11575
        %v11578 = vshrl.u32 %v11549, 16
        %v11580 = vrot.slane %v11578, 4
        %v11581 = vshll.u32 %v11549, 16
        %v11583 = vrot.slane %v11581, 5
        %v11584 = vor.u32 %v11580, %v11583
        %v11585 = vrot.slane %v11584, 4
        %v11587 = vshll.u32 %v11550, 16
        %v11589 = vrot.slane %v11587, 5
        %v11590 = vsel %vm11290, %v11585, %v11589
        %v11592 = vshrl.u32 %v11551, 16
        %v11594 = vrot.slane %v11592, 4
        %v11595 = vshll.u32 %v11551, 16
        %v11597 = vrot.slane %v11595, 5
        %v11598 = vor.u32 %v11594, %v11597
        %v11599 = vrot.slane %v11598, 4
        %v11601 = vshll.u32 %v11552, 16
        %v11603 = vrot.slane %v11601, 5
        %v11604 = vsel %vm11290, %v11599, %v11603
        %v11606 = vshrl.u32 %v11553, 16
        %v11608 = vrot.slane %v11606, 4
        %v11609 = vshll.u32 %v11553, 16
        %v11611 = vrot.slane %v11609, 5
        %v11612 = vor.u32 %v11608, %v11611
        %v11613 = vrot.slane %v11612, 4
        %v11615 = vshll.u32 %v11554, 16
        %v11617 = vrot.slane %v11615, 5
        %v11618 = vsel %vm11290, %v11613, %v11617
        %v11620 = vshrl.u32 %v11555, 16
        %v11622 = vrot.slane %v11620, 4
        %v11623 = vshll.u32 %v11555, 16
        %v11625 = vrot.slane %v11623, 5
        %v11626 = vor.u32 %v11622, %v11625
        %v11627 = vrot.slane %v11626, 4
        %v11629 = vshll.u32 %v11556, 16
        %v11631 = vrot.slane %v11629, 5
        %v11632 = vsel %vm11290, %v11627, %v11631
        %v11634 = vshrl.u32 %v11557, 16
        %v11636 = vrot.slane %v11634, 4
        %v11637 = vshll.u32 %v11557, 16
        %v11639 = vrot.slane %v11637, 5
        %v11640 = vor.u32 %v11636, %v11639
        %v11641 = vrot.slane %v11640, 4
        %v11643 = vshll.u32 %v11558, 16
        %v11645 = vrot.slane %v11643, 5
        %v11646 = vsel %vm11290, %v11641, %v11645
        %v11648 = vshrl.u32 %v11559, 16
        %v11650 = vrot.slane %v11648, 4
        %v11651 = vshll.u32 %v11559, 16
        %v11653 = vrot.slane %v11651, 5
        %v11654 = vor.u32 %v11650, %v11653
        %v11655 = vrot.slane %v11654, 4
        %v11657 = vshll.u32 %v11560, 16
        %v11659 = vrot.slane %v11657, 5
        %v11660 = vsel %vm11290, %v11655, %v11659
        %v11662 = vshrl.u32 %v11561, 16
        %v11664 = vrot.slane %v11662, 4
        %v11665 = vshll.u32 %v11561, 16
        %v11667 = vrot.slane %v11665, 5
        %v11668 = vor.u32 %v11664, %v11667
        %v11669 = vrot.slane %v11668, 4
        %v11671 = vshll.u32 %v11562, 16
        %v11673 = vrot.slane %v11671, 5
        %v11674 = vsel %vm11290, %v11669, %v11673
        %v11675 = vunpack.c.l.b16 %v11576
        %v11676 = vunpack.c.l.b16 %v11590
        %v11677 = vunpack.c.l.b16 %v11604
        %v11678 = vunpack.c.l.b16 %v11618
        %v11679 = vunpack.c.l.b16 %v11632
        %v11680 = vunpack.c.l.b16 %v11646
        %v11681 = vunpack.c.l.b16 %v11660
        %v11682 = vunpack.c.l.b16 %v11674
        %v11683 = vpack.c.b16 %v11676, %v11675
        %v11684 = vpack.c.b16 %v11678, %v11677
        %v11685 = vpack.c.b16 %v11680, %v11679
        %v11686 = vpack.c.b16 %v11682, %v11681
        %11691 = vst [vmem:[#allocation5 + $0x20] sm:$0xff] %v11683
        %11692 = vst [vmem:[#allocation5 + $0x68] sm:$0xff] %v11684
        %11693 = vst [vmem:[#allocation5 + $0xb0] sm:$0xff] %v11685
        %11694 = vst [vmem:[#allocation5 + $0xf8] sm:$0xff] %v11686
        %v11695 = vld [vmem:[%s11510] sm:$0xe]
        %v11696 = vld [vmem:[%s11510 + $0x4] sm:$0x1]
        %v11697 = vld [vmem:[%s11510 + $0x8] sm:$0xe]
        %v11698 = vld [vmem:[%s11510 + $0xc] sm:$0x1]
        %v11699 = vld [vmem:[%s11510 + $0x10] sm:$0xe]
        %v11700 = vld [vmem:[%s11510 + $0x14] sm:$0x1]
        %v11701 = vld [vmem:[%s11510 + $0x18] sm:$0xe]
        %v11702 = vld [vmem:[%s11510 + $0x1c] sm:$0x1]
        %v11703 = vld [vmem:[%s11510 + $0x20] sm:$0xe]
        %v11704 = vld [vmem:[%s11510 + $0x24] sm:$0x1]
        %v11705 = vld [vmem:[%s11510 + $0x28] sm:$0xe]
        %v11706 = vld [vmem:[%s11510 + $0x2c] sm:$0x1]
        %v11707 = vld [vmem:[%s11510 + $0x30] sm:$0xe]
        %v11708 = vld [vmem:[%s11510 + $0x34] sm:$0x1]
        %v11709 = vld [vmem:[%s11510 + $0x38] sm:$0xe]
        %v11710 = vld [vmem:[%s11510 + $0x3c] sm:$0x1]
        %v11727 = vrot.slane %v11695, 5
        %v11728 = vrot.slane %v11727, 4
        %v11729 = vrot.slane %v11696, 5
        %v11730 = vsel %vm11457, %v11728, %v11729
        %v11731 = vrot.slane %v11697, 5
        %v11732 = vrot.slane %v11731, 4
        %v11733 = vrot.slane %v11698, 5
        %v11734 = vsel %vm11457, %v11732, %v11733
        %v11735 = vrot.slane %v11699, 5
        %v11736 = vrot.slane %v11735, 4
        %v11737 = vrot.slane %v11700, 5
        %v11738 = vsel %vm11457, %v11736, %v11737
        %v11739 = vrot.slane %v11701, 5
        %v11740 = vrot.slane %v11739, 4
        %v11741 = vrot.slane %v11702, 5
        %v11742 = vsel %vm11457, %v11740, %v11741
        %v11743 = vrot.slane %v11703, 5
        %v11744 = vrot.slane %v11743, 4
        %v11745 = vrot.slane %v11704, 5
        %v11746 = vsel %vm11457, %v11744, %v11745
        %v11747 = vrot.slane %v11705, 5
        %v11748 = vrot.slane %v11747, 4
        %v11749 = vrot.slane %v11706, 5
        %v11750 = vsel %vm11457, %v11748, %v11749
        %v11751 = vrot.slane %v11707, 5
        %v11752 = vrot.slane %v11751, 4
        %v11753 = vrot.slane %v11708, 5
        %v11754 = vsel %vm11457, %v11752, %v11753
        %v11755 = vrot.slane %v11709, 5
        %v11756 = vrot.slane %v11755, 4
        %v11757 = vrot.slane %v11710, 5
        %v11758 = vsel %vm11457, %v11756, %v11757
        %v11759 = vunpack.c.l.b16 %v11730
        %v11760 = vunpack.c.l.b16 %v11734
        %v11761 = vunpack.c.l.b16 %v11738
        %v11762 = vunpack.c.l.b16 %v11742
        %v11763 = vunpack.c.l.b16 %v11746
        %v11764 = vunpack.c.l.b16 %v11750
        %v11765 = vunpack.c.l.b16 %v11754
        %v11766 = vunpack.c.l.b16 %v11758
        %v11767 = vpack.c.b16 %v11760, %v11759
        %v11768 = vpack.c.b16 %v11762, %v11761
        %v11769 = vpack.c.b16 %v11764, %v11763
        %v11770 = vpack.c.b16 %v11766, %v11765
        %11775 = vst [vmem:[#allocation5 + $0x28] sm:$0xff] %v11767
        %11776 = vst [vmem:[#allocation5 + $0x70] sm:$0xff] %v11768
        %11777 = vst [vmem:[#allocation5 + $0xb8] sm:$0xff] %v11769
        %11778 = vst [vmem:[#allocation5 + $0x100] sm:$0xff] %v11770
        %s11779 = scalar_lea.vmem [#allocation3], 16
        %v11780 = vld [vmem:[%s11779] sm:$0xf]
        %v11781 = vld [vmem:[%s11779 + $0x8] sm:$0xf]
        %v11782 = vld [vmem:[%s11779 + $0x10] sm:$0xf]
        %v11783 = vld [vmem:[%s11779 + $0x18] sm:$0xf]
        %v11784 = vld [vmem:[%s11779 + $0x20] sm:$0xf]
        %v11785 = vld [vmem:[%s11779 + $0x28] sm:$0xf]
        %v11786 = vld [vmem:[%s11779 + $0x30] sm:$0xf]
        %v11787 = vld [vmem:[%s11779 + $0x38] sm:$0xf]
        %v11796 = vunpack.c.l.b16 %v11780
        %v11797 = vunpack.c.l.b16 %v11781
        %v11798 = vunpack.c.l.b16 %v11782
        %v11799 = vunpack.c.l.b16 %v11783
        %v11800 = vunpack.c.l.b16 %v11784
        %v11801 = vunpack.c.l.b16 %v11785
        %v11802 = vunpack.c.l.b16 %v11786
        %v11803 = vunpack.c.l.b16 %v11787
        %v11804 = vpack.c.b16 %v11797, %v11796
        %v11805 = vpack.c.b16 %v11799, %v11798
        %v11806 = vpack.c.b16 %v11801, %v11800
        %v11807 = vpack.c.b16 %v11803, %v11802
        %11812 = vst [vmem:[#allocation5 + $0x30] sm:$0xff] %v11804
        %11813 = vst [vmem:[#allocation5 + $0x78] sm:$0xff] %v11805
        %11814 = vst [vmem:[#allocation5 + $0xc0] sm:$0xff] %v11806
        %11815 = vst [vmem:[#allocation5 + $0x108] sm:$0xff] %v11807
        %v11816 = vld [vmem:[%s11779] sm:$0xf]
        %v11817 = vld [vmem:[%s11779 + $0x4] sm:$0x1]
        %v11818 = vld [vmem:[%s11779 + $0x8] sm:$0xf]
        %v11819 = vld [vmem:[%s11779 + $0xc] sm:$0x1]
        %v11820 = vld [vmem:[%s11779 + $0x10] sm:$0xf]
        %v11821 = vld [vmem:[%s11779 + $0x14] sm:$0x1]
        %v11822 = vld [vmem:[%s11779 + $0x18] sm:$0xf]
        %v11823 = vld [vmem:[%s11779 + $0x1c] sm:$0x1]
        %v11824 = vld [vmem:[%s11779 + $0x20] sm:$0xf]
        %v11825 = vld [vmem:[%s11779 + $0x24] sm:$0x1]
        %v11826 = vld [vmem:[%s11779 + $0x28] sm:$0xf]
        %v11827 = vld [vmem:[%s11779 + $0x2c] sm:$0x1]
        %v11828 = vld [vmem:[%s11779 + $0x30] sm:$0xf]
        %v11829 = vld [vmem:[%s11779 + $0x34] sm:$0x1]
        %v11830 = vld [vmem:[%s11779 + $0x38] sm:$0xf]
        %v11831 = vld [vmem:[%s11779 + $0x3c] sm:$0x1]
        %v11833 = vshrl.u32 %v11816, 16
        %v11835 = vrot.slane %v11833, 4
        %v11836 = vshll.u32 %v11816, 16
        %v11838 = vrot.slane %v11836, 5
        %v11839 = vor.u32 %v11835, %v11838
        %v11840 = vrot.slane %v11839, 4
        %v11842 = vshll.u32 %v11817, 16
        %v11844 = vrot.slane %v11842, 5
        %v11845 = vsel %vm11290, %v11840, %v11844
        %v11847 = vshrl.u32 %v11818, 16
        %v11849 = vrot.slane %v11847, 4
        %v11850 = vshll.u32 %v11818, 16
        %v11852 = vrot.slane %v11850, 5
        %v11853 = vor.u32 %v11849, %v11852
        %v11854 = vrot.slane %v11853, 4
        %v11856 = vshll.u32 %v11819, 16
        %v11858 = vrot.slane %v11856, 5
        %v11859 = vsel %vm11290, %v11854, %v11858
        %v11861 = vshrl.u32 %v11820, 16
        %v11863 = vrot.slane %v11861, 4
        %v11864 = vshll.u32 %v11820, 16
        %v11866 = vrot.slane %v11864, 5
        %v11867 = vor.u32 %v11863, %v11866
        %v11868 = vrot.slane %v11867, 4
        %v11870 = vshll.u32 %v11821, 16
        %v11872 = vrot.slane %v11870, 5
        %v11873 = vsel %vm11290, %v11868, %v11872
        %v11875 = vshrl.u32 %v11822, 16
        %v11877 = vrot.slane %v11875, 4
        %v11878 = vshll.u32 %v11822, 16
        %v11880 = vrot.slane %v11878, 5
        %v11881 = vor.u32 %v11877, %v11880
        %v11882 = vrot.slane %v11881, 4
        %v11884 = vshll.u32 %v11823, 16
        %v11886 = vrot.slane %v11884, 5
        %v11887 = vsel %vm11290, %v11882, %v11886
        %v11889 = vshrl.u32 %v11824, 16
        %v11891 = vrot.slane %v11889, 4
        %v11892 = vshll.u32 %v11824, 16
        %v11894 = vrot.slane %v11892, 5
        %v11895 = vor.u32 %v11891, %v11894
        %v11896 = vrot.slane %v11895, 4
        %v11898 = vshll.u32 %v11825, 16
        %v11900 = vrot.slane %v11898, 5
        %v11901 = vsel %vm11290, %v11896, %v11900
        %v11903 = vshrl.u32 %v11826, 16
        %v11905 = vrot.slane %v11903, 4
        %v11906 = vshll.u32 %v11826, 16
        %v11908 = vrot.slane %v11906, 5
        %v11909 = vor.u32 %v11905, %v11908
        %v11910 = vrot.slane %v11909, 4
        %v11912 = vshll.u32 %v11827, 16
        %v11914 = vrot.slane %v11912, 5
        %v11915 = vsel %vm11290, %v11910, %v11914
        %v11917 = vshrl.u32 %v11828, 16
        %v11919 = vrot.slane %v11917, 4
        %v11920 = vshll.u32 %v11828, 16
        %v11922 = vrot.slane %v11920, 5
        %v11923 = vor.u32 %v11919, %v11922
        %v11924 = vrot.slane %v11923, 4
        %v11926 = vshll.u32 %v11829, 16
        %v11928 = vrot.slane %v11926, 5
        %v11929 = vsel %vm11290, %v11924, %v11928
        %v11931 = vshrl.u32 %v11830, 16
        %v11933 = vrot.slane %v11931, 4
        %v11934 = vshll.u32 %v11830, 16
        %v11936 = vrot.slane %v11934, 5
        %v11937 = vor.u32 %v11933, %v11936
        %v11938 = vrot.slane %v11937, 4
        %v11940 = vshll.u32 %v11831, 16
        %v11942 = vrot.slane %v11940, 5
        %v11943 = vsel %vm11290, %v11938, %v11942
        %v11944 = vunpack.c.l.b16 %v11845
        %v11945 = vunpack.c.l.b16 %v11859
        %v11946 = vunpack.c.l.b16 %v11873
        %v11947 = vunpack.c.l.b16 %v11887
        %v11948 = vunpack.c.l.b16 %v11901
        %v11949 = vunpack.c.l.b16 %v11915
        %v11950 = vunpack.c.l.b16 %v11929
        %v11951 = vunpack.c.l.b16 %v11943
        %v11952 = vpack.c.b16 %v11945, %v11944
        %v11953 = vpack.c.b16 %v11947, %v11946
        %v11954 = vpack.c.b16 %v11949, %v11948
        %v11955 = vpack.c.b16 %v11951, %v11950
        %11960 = vst [vmem:[#allocation5 + $0x38] sm:$0xff] %v11952
        %11961 = vst [vmem:[#allocation5 + $0x80] sm:$0xff] %v11953
        %11962 = vst [vmem:[#allocation5 + $0xc8] sm:$0xff] %v11954
        %11963 = vst [vmem:[#allocation5 + $0x110] sm:$0xff] %v11955
        %v11964 = vld [vmem:[%s11779] sm:$0xe]
        %v11965 = vld [vmem:[%s11779 + $0x4] sm:$0x1]
        %v11966 = vld [vmem:[%s11779 + $0x8] sm:$0xe]
        %v11967 = vld [vmem:[%s11779 + $0xc] sm:$0x1]
        %v11968 = vld [vmem:[%s11779 + $0x10] sm:$0xe]
        %v11969 = vld [vmem:[%s11779 + $0x14] sm:$0x1]
        %v11970 = vld [vmem:[%s11779 + $0x18] sm:$0xe]
        %v11971 = vld [vmem:[%s11779 + $0x1c] sm:$0x1]
        %v11972 = vld [vmem:[%s11779 + $0x20] sm:$0xe]
        %v11973 = vld [vmem:[%s11779 + $0x24] sm:$0x1]
        %v11974 = vld [vmem:[%s11779 + $0x28] sm:$0xe]
        %v11975 = vld [vmem:[%s11779 + $0x2c] sm:$0x1]
        %v11976 = vld [vmem:[%s11779 + $0x30] sm:$0xe]
        %v11977 = vld [vmem:[%s11779 + $0x34] sm:$0x1]
        %v11978 = vld [vmem:[%s11779 + $0x38] sm:$0xe]
        %v11979 = vld [vmem:[%s11779 + $0x3c] sm:$0x1]
        %v11996 = vrot.slane %v11964, 5
        %v11997 = vrot.slane %v11996, 4
        %v11998 = vrot.slane %v11965, 5
        %v11999 = vsel %vm11457, %v11997, %v11998
        %v12000 = vrot.slane %v11966, 5
        %v12001 = vrot.slane %v12000, 4
        %v12002 = vrot.slane %v11967, 5
        %v12003 = vsel %vm11457, %v12001, %v12002
        %v12004 = vrot.slane %v11968, 5
        %v12005 = vrot.slane %v12004, 4
        %v12006 = vrot.slane %v11969, 5
        %v12007 = vsel %vm11457, %v12005, %v12006
        %v12008 = vrot.slane %v11970, 5
        %v12009 = vrot.slane %v12008, 4
        %v12010 = vrot.slane %v11971, 5
        %v12011 = vsel %vm11457, %v12009, %v12010
        %v12012 = vrot.slane %v11972, 5
        %v12013 = vrot.slane %v12012, 4
        %v12014 = vrot.slane %v11973, 5
        %v12015 = vsel %vm11457, %v12013, %v12014
        %v12016 = vrot.slane %v11974, 5
        %v12017 = vrot.slane %v12016, 4
        %v12018 = vrot.slane %v11975, 5
        %v12019 = vsel %vm11457, %v12017, %v12018
        %v12020 = vrot.slane %v11976, 5
        %v12021 = vrot.slane %v12020, 4
        %v12022 = vrot.slane %v11977, 5
        %v12023 = vsel %vm11457, %v12021, %v12022
        %v12024 = vrot.slane %v11978, 5
        %v12025 = vrot.slane %v12024, 4
        %v12026 = vrot.slane %v11979, 5
        %v12027 = vsel %vm11457, %v12025, %v12026
        %v12028 = vunpack.c.l.b16 %v11999
        %v12029 = vunpack.c.l.b16 %v12003
        %v12030 = vunpack.c.l.b16 %v12007
        %v12031 = vunpack.c.l.b16 %v12011
        %v12032 = vunpack.c.l.b16 %v12015
        %v12033 = vunpack.c.l.b16 %v12019
        %v12034 = vunpack.c.l.b16 %v12023
        %v12035 = vunpack.c.l.b16 %v12027
        %v12036 = vpack.c.b16 %v12029, %v12028
        %v12037 = vpack.c.b16 %v12031, %v12030
        %v12038 = vpack.c.b16 %v12033, %v12032
        %v12039 = vpack.c.b16 %v12035, %v12034
        %12044 = vst [vmem:[#allocation5 + $0x40] sm:$0xff] %v12036
        %12045 = vst [vmem:[#allocation5 + $0x88] sm:$0xff] %v12037
        %12046 = vst [vmem:[#allocation5 + $0xd0] sm:$0xff] %v12038
        %12047 = vst [vmem:[#allocation5 + $0x118] sm:$0xff] %v12039
        %v12048 = vld [vmem:[#allocation5] sm:$0xff]
        %v12049 = vld [vmem:[#allocation5 + $0x8] sm:$0xff]
        %v12050 = vld [vmem:[#allocation5 + $0x10] sm:$0xff]
        %v12051 = vld [vmem:[#allocation5 + $0x18] sm:$0xff]
        %v12052 = vld [vmem:[#allocation5 + $0x20] sm:$0xff]
        %v12053 = vld [vmem:[#allocation5 + $0x28] sm:$0xff]
        %v12054 = vld [vmem:[#allocation5 + $0x30] sm:$0xff]
        %v12055 = vld [vmem:[#allocation5 + $0x38] sm:$0xff]
        %v12056 = vld [vmem:[#allocation5 + $0x40] sm:$0xff]
        %v12057 = vld [vmem:[#allocation5 + $0x48] sm:$0xff]
        %v12058 = vld [vmem:[#allocation5 + $0x50] sm:$0xff]
        %v12059 = vld [vmem:[#allocation5 + $0x58] sm:$0xff]
        %v12060 = vld [vmem:[#allocation5 + $0x60] sm:$0xff]
        %v12061 = vld [vmem:[#allocation5 + $0x68] sm:$0xff]
        %v12062 = vld [vmem:[#allocation5 + $0x70] sm:$0xff]
        %v12063 = vld [vmem:[#allocation5 + $0x78] sm:$0xff]
        %v12064 = vld [vmem:[#allocation5 + $0x80] sm:$0xff]
        %v12065 = vld [vmem:[#allocation5 + $0x88] sm:$0xff]
        %v12066 = vld [vmem:[#allocation5 + $0x90] sm:$0xff]
        %v12067 = vld [vmem:[#allocation5 + $0x98] sm:$0xff]
        %v12068 = vld [vmem:[#allocation5 + $0xa0] sm:$0xff]
        %v12069 = vld [vmem:[#allocation5 + $0xa8] sm:$0xff]
        %v12070 = vld [vmem:[#allocation5 + $0xb0] sm:$0xff]
        %v12071 = vld [vmem:[#allocation5 + $0xb8] sm:$0xff]
        %v12072 = vld [vmem:[#allocation5 + $0xc0] sm:$0xff]
        %v12073 = vld [vmem:[#allocation5 + $0xc8] sm:$0xff]
        %v12074 = vld [vmem:[#allocation5 + $0xd0] sm:$0xff]
        %v12075 = vld [vmem:[#allocation5 + $0xd8] sm:$0xff]
        %v12076 = vld [vmem:[#allocation5 + $0xe0] sm:$0xff]
        %v12077 = vld [vmem:[#allocation5 + $0xe8] sm:$0xff]
        %v12078 = vld [vmem:[#allocation5 + $0xf0] sm:$0xff]
        %v12079 = vld [vmem:[#allocation5 + $0xf8] sm:$0xff]
        %v12080 = vld [vmem:[#allocation5 + $0x100] sm:$0xff]
        %v12081 = vld [vmem:[#allocation5 + $0x108] sm:$0xff]
        %v12082 = vld [vmem:[#allocation5 + $0x110] sm:$0xff]
        %v12083 = vld [vmem:[#allocation5 + $0x118] sm:$0xff]
        %v12084 = vld [vmem:[%s4] sm:$0xf]
        %v12085 = vld [vmem:[%s4 + $0x4] sm:$0xf]
        %v12086 = vld [vmem:[%s4 + $0x8] sm:$0xf]
        %v12087 = vld [vmem:[%s4 + $0xc] sm:$0xf]
        %v12088 = vld [vmem:[%s4 + $0x10] sm:$0xf]
        %v12089 = vld [vmem:[%s4 + $0x14] sm:$0xf]
        %v12090 = vld [vmem:[%s4 + $0x18] sm:$0xf]
        %v12091 = vld [vmem:[%s4 + $0x1c] sm:$0xf]
        %v12092 = vld [vmem:[%s4 + $0x20] sm:$0xf]
        %v12093 = vld [vmem:[%s4 + $0x24] sm:$0xf]
        %v12094 = vld [vmem:[%s4 + $0x28] sm:$0xf]
        %v12095 = vld [vmem:[%s4 + $0x2c] sm:$0xf]
        %v12096 = vld [vmem:[%s4 + $0x30] sm:$0xf]
        %v12097 = vld [vmem:[%s4 + $0x34] sm:$0xf]
        %v12098 = vld [vmem:[%s4 + $0x38] sm:$0xf]
        %v12099 = vld [vmem:[%s4 + $0x3c] sm:$0xf]
        %v12100 = vld [vmem:[%s4 + $0x40] sm:$0xf]
        %v12101 = vld [vmem:[%s4 + $0x44] sm:$0xf]
        %v12102 = vld [vmem:[%s4 + $0x48] sm:$0xf]
        %v12103 = vld [vmem:[%s4 + $0x4c] sm:$0xf]
        %v12104 = vld [vmem:[%s4 + $0x50] sm:$0xf]
        %v12105 = vld [vmem:[%s4 + $0x54] sm:$0xf]
        %v12106 = vld [vmem:[%s4 + $0x58] sm:$0xf]
        %v12107 = vld [vmem:[%s4 + $0x5c] sm:$0xf]
        %v12108 = vld [vmem:[%s4 + $0x60] sm:$0xf]
        %v12109 = vld [vmem:[%s4 + $0x64] sm:$0xf]
        %v12110 = vld [vmem:[%s4 + $0x68] sm:$0xf]
        %v12111 = vld [vmem:[%s4 + $0x6c] sm:$0xf]
        %v12112 = vld [vmem:[%s4 + $0x70] sm:$0xf]
        %v12113 = vld [vmem:[%s4 + $0x74] sm:$0xf]
        %v12114 = vld [vmem:[%s4 + $0x78] sm:$0xf]
        %v12115 = vld [vmem:[%s4 + $0x7c] sm:$0xf]
        %v12116 = vld [vmem:[%s4 + $0x80] sm:$0xf]
        %v12117 = vld [vmem:[%s4 + $0x84] sm:$0xf]
        %v12118 = vld [vmem:[%s4 + $0x88] sm:$0xf]
        %v12119 = vld [vmem:[%s4 + $0x8c] sm:$0xf]
        %v12120 = vld [vmem:[%s4 + $0x90] sm:$0xf]
        %v12121 = vld [vmem:[%s4 + $0x94] sm:$0xf]
        %v12122 = vld [vmem:[%s4 + $0x98] sm:$0xf]
        %v12123 = vld [vmem:[%s4 + $0x9c] sm:$0xf]
        %v12124 = vld [vmem:[%s4 + $0xa0] sm:$0xf]
        %v12125 = vld [vmem:[%s4 + $0xa4] sm:$0xf]
        %v12126 = vld [vmem:[%s4 + $0xa8] sm:$0xf]
        %v12127 = vld [vmem:[%s4 + $0xac] sm:$0xf]
        %v12128 = vld [vmem:[%s4 + $0xb0] sm:$0xf]
        %v12129 = vld [vmem:[%s4 + $0xb4] sm:$0xf]
        %v12130 = vld [vmem:[%s4 + $0xb8] sm:$0xf]
        %v12131 = vld [vmem:[%s4 + $0xbc] sm:$0xf]
        %v12132 = vld [vmem:[%s4 + $0xc0] sm:$0xf]
        %v12133 = vld [vmem:[%s4 + $0xc4] sm:$0xf]
        %v12134 = vld [vmem:[%s4 + $0xc8] sm:$0xf]
        %v12135 = vld [vmem:[%s4 + $0xcc] sm:$0xf]
        %v12136 = vld [vmem:[%s4 + $0xd0] sm:$0xf]
        %v12137 = vld [vmem:[%s4 + $0xd4] sm:$0xf]
        %v12138 = vld [vmem:[%s4 + $0xd8] sm:$0xf]
        %v12139 = vld [vmem:[%s4 + $0xdc] sm:$0xf]
        %v12140 = vld [vmem:[%s4 + $0xe0] sm:$0xf]
        %v12141 = vld [vmem:[%s4 + $0xe4] sm:$0xf]
        %v12142 = vld [vmem:[%s4 + $0xe8] sm:$0xf]
        %v12143 = vld [vmem:[%s4 + $0xec] sm:$0xf]
        %v12144 = vld [vmem:[%s4 + $0xf0] sm:$0xf]
        %v12145 = vld [vmem:[%s4 + $0xf4] sm:$0xf]
        %v12146 = vld [vmem:[%s4 + $0xf8] sm:$0xf]
        %v12147 = vld [vmem:[%s4 + $0xfc] sm:$0xf]
        %v12148 = vld [vmem:[%s4 + $0x100] sm:$0xf]
        %v12149 = vld [vmem:[%s4 + $0x104] sm:$0xf]
        %v12150 = vld [vmem:[%s4 + $0x108] sm:$0xf]
        %v12151 = vld [vmem:[%s4 + $0x10c] sm:$0xf]
        %v12152 = vld [vmem:[%s4 + $0x110] sm:$0xf]
        %v12153 = vld [vmem:[%s4 + $0x114] sm:$0xf]
        %v12154 = vld [vmem:[%s4 + $0x118] sm:$0xf]
        %v12155 = vld [vmem:[%s4 + $0x11c] sm:$0xf]
        %v12156 = vld [vmem:[%s4 + $0x120] sm:$0xf]
        %v12157 = vld [vmem:[%s4 + $0x124] sm:$0xf]
        %v12158 = vld [vmem:[%s4 + $0x128] sm:$0xf]
        %v12159 = vld [vmem:[%s4 + $0x12c] sm:$0xf]
        %v12160 = vld [vmem:[%s4 + $0x130] sm:$0xf]
        %v12161 = vld [vmem:[%s4 + $0x134] sm:$0xf]
        %v12162 = vld [vmem:[%s4 + $0x138] sm:$0xf]
        %v12163 = vld [vmem:[%s4 + $0x13c] sm:$0xf]
        %v12164 = vld [vmem:[%s4 + $0x140] sm:$0xf]
        %v12165 = vld [vmem:[%s4 + $0x144] sm:$0xf]
        %v12166 = vld [vmem:[%s4 + $0x148] sm:$0xf]
        %v12167 = vld [vmem:[%s4 + $0x14c] sm:$0xf]
        %v12168 = vld [vmem:[%s4 + $0x150] sm:$0xf]
        %v12169 = vld [vmem:[%s4 + $0x154] sm:$0xf]
        %v12170 = vld [vmem:[%s4 + $0x158] sm:$0xf]
        %v12171 = vld [vmem:[%s4 + $0x15c] sm:$0xf]
        %v12172 = vld [vmem:[%s4 + $0x160] sm:$0xf]
        %v12173 = vld [vmem:[%s4 + $0x164] sm:$0xf]
        %v12174 = vld [vmem:[%s4 + $0x168] sm:$0xf]
        %v12175 = vld [vmem:[%s4 + $0x16c] sm:$0xf]
        %v12176 = vld [vmem:[%s4 + $0x170] sm:$0xf]
        %v12177 = vld [vmem:[%s4 + $0x174] sm:$0xf]
        %v12178 = vld [vmem:[%s4 + $0x178] sm:$0xf]
        %v12179 = vld [vmem:[%s4 + $0x17c] sm:$0xf]
        %v12180 = vld [vmem:[%s4 + $0x180] sm:$0xf]
        %v12181 = vld [vmem:[%s4 + $0x184] sm:$0xf]
        %v12182 = vld [vmem:[%s4 + $0x188] sm:$0xf]
        %v12183 = vld [vmem:[%s4 + $0x18c] sm:$0xf]
        %v12184 = vld [vmem:[%s4 + $0x190] sm:$0xf]
        %v12185 = vld [vmem:[%s4 + $0x194] sm:$0xf]
        %v12186 = vld [vmem:[%s4 + $0x198] sm:$0xf]
        %v12187 = vld [vmem:[%s4 + $0x19c] sm:$0xf]
        %v12188 = vld [vmem:[%s4 + $0x1a0] sm:$0xf]
        %v12189 = vld [vmem:[%s4 + $0x1a4] sm:$0xf]
        %v12190 = vld [vmem:[%s4 + $0x1a8] sm:$0xf]
        %v12191 = vld [vmem:[%s4 + $0x1ac] sm:$0xf]
        %v12192 = vld [vmem:[%s4 + $0x1b0] sm:$0xf]
        %v12193 = vld [vmem:[%s4 + $0x1b4] sm:$0xf]
        %v12194 = vld [vmem:[%s4 + $0x1b8] sm:$0xf]
        %v12195 = vld [vmem:[%s4 + $0x1bc] sm:$0xf]
        %v12196 = vld [vmem:[%s4 + $0x1c0] sm:$0xf]
        %v12197 = vld [vmem:[%s4 + $0x1c4] sm:$0xf]
        %v12198 = vld [vmem:[%s4 + $0x1c8] sm:$0xf]
        %v12199 = vld [vmem:[%s4 + $0x1cc] sm:$0xf]
        %v12200 = vld [vmem:[%s4 + $0x1d0] sm:$0xf]
        %v12201 = vld [vmem:[%s4 + $0x1d4] sm:$0xf]
        %v12202 = vld [vmem:[%s4 + $0x1d8] sm:$0xf]
        %v12203 = vld [vmem:[%s4 + $0x1dc] sm:$0xf]
        %v12204 = vld [vmem:[%s4 + $0x1e0] sm:$0xf]
        %v12205 = vld [vmem:[%s4 + $0x1e4] sm:$0xf]
        %v12206 = vld [vmem:[%s4 + $0x1e8] sm:$0xf]
        %v12207 = vld [vmem:[%s4 + $0x1ec] sm:$0xf]
        %v12208 = vld [vmem:[%s4 + $0x1f0] sm:$0xf]
        %v12209 = vld [vmem:[%s4 + $0x1f4] sm:$0xf]
        %v12210 = vld [vmem:[%s4 + $0x1f8] sm:$0xf]
        %v12211 = vld [vmem:[%s4 + $0x1fc] sm:$0xf]
        %v12212 = vld [vmem:[%s4 + $0x200] sm:$0xf]
        %v12213 = vld [vmem:[%s4 + $0x204] sm:$0xf]
        %v12214 = vld [vmem:[%s4 + $0x208] sm:$0xf]
        %v12215 = vld [vmem:[%s4 + $0x20c] sm:$0xf]
        %v12216 = vld [vmem:[%s4 + $0x210] sm:$0xf]
        %v12217 = vld [vmem:[%s4 + $0x214] sm:$0xf]
        %v12218 = vld [vmem:[%s4 + $0x218] sm:$0xf]
        %v12219 = vld [vmem:[%s4 + $0x21c] sm:$0xf]
        %v12220 = vld [vmem:[%s4 + $0x220] sm:$0xf]
        %v12221 = vld [vmem:[%s4 + $0x224] sm:$0xf]
        %v12222 = vld [vmem:[%s4 + $0x228] sm:$0xf]
        %v12223 = vld [vmem:[%s4 + $0x22c] sm:$0xf]
        %v12224 = vld [vmem:[%s4 + $0x230] sm:$0xf]
        %v12225 = vld [vmem:[%s4 + $0x234] sm:$0xf]
        %v12226 = vld [vmem:[%s4 + $0x238] sm:$0xf]
        %v12227 = vld [vmem:[%s4 + $0x23c] sm:$0xf]
        %v12372 = vunpack.c.l.b16 %v12084
        %v12373 = vunpack.c.l.b16 %v12085
        %v12374 = vunpack.c.l.b16 %v12086
        %v12375 = vunpack.c.l.b16 %v12087
        %v12376 = vunpack.c.l.b16 %v12088
        %v12377 = vunpack.c.l.b16 %v12089
        %v12378 = vunpack.c.l.b16 %v12090
        %v12379 = vunpack.c.l.b16 %v12091
        %v12380 = vunpack.c.l.b16 %v12092
        %v12381 = vunpack.c.l.b16 %v12093
        %v12382 = vunpack.c.l.b16 %v12094
        %v12383 = vunpack.c.l.b16 %v12095
        %v12384 = vunpack.c.l.b16 %v12096
        %v12385 = vunpack.c.l.b16 %v12097
        %v12386 = vunpack.c.l.b16 %v12098
        %v12387 = vunpack.c.l.b16 %v12099
        %v12388 = vunpack.c.l.b16 %v12100
        %v12389 = vunpack.c.l.b16 %v12101
        %v12390 = vunpack.c.l.b16 %v12102
        %v12391 = vunpack.c.l.b16 %v12103
        %v12392 = vunpack.c.l.b16 %v12104
        %v12393 = vunpack.c.l.b16 %v12105
        %v12394 = vunpack.c.l.b16 %v12106
        %v12395 = vunpack.c.l.b16 %v12107
        %v12396 = vunpack.c.l.b16 %v12108
        %v12397 = vunpack.c.l.b16 %v12109
        %v12398 = vunpack.c.l.b16 %v12110
        %v12399 = vunpack.c.l.b16 %v12111
        %v12400 = vunpack.c.l.b16 %v12112
        %v12401 = vunpack.c.l.b16 %v12113
        %v12402 = vunpack.c.l.b16 %v12114
        %v12403 = vunpack.c.l.b16 %v12115
        %v12404 = vunpack.c.l.b16 %v12116
        %v12405 = vunpack.c.l.b16 %v12117
        %v12406 = vunpack.c.l.b16 %v12118
        %v12407 = vunpack.c.l.b16 %v12119
        %v12408 = vunpack.c.l.b16 %v12120
        %v12409 = vunpack.c.l.b16 %v12121
        %v12410 = vunpack.c.l.b16 %v12122
        %v12411 = vunpack.c.l.b16 %v12123
        %v12412 = vunpack.c.l.b16 %v12124
        %v12413 = vunpack.c.l.b16 %v12125
        %v12414 = vunpack.c.l.b16 %v12126
        %v12415 = vunpack.c.l.b16 %v12127
        %v12416 = vunpack.c.l.b16 %v12128
        %v12417 = vunpack.c.l.b16 %v12129
        %v12418 = vunpack.c.l.b16 %v12130
        %v12419 = vunpack.c.l.b16 %v12131
        %v12420 = vunpack.c.l.b16 %v12132
        %v12421 = vunpack.c.l.b16 %v12133
        %v12422 = vunpack.c.l.b16 %v12134
        %v12423 = vunpack.c.l.b16 %v12135
        %v12424 = vunpack.c.l.b16 %v12136
        %v12425 = vunpack.c.l.b16 %v12137
        %v12426 = vunpack.c.l.b16 %v12138
        %v12427 = vunpack.c.l.b16 %v12139
        %v12428 = vunpack.c.l.b16 %v12140
        %v12429 = vunpack.c.l.b16 %v12141
        %v12430 = vunpack.c.l.b16 %v12142
        %v12431 = vunpack.c.l.b16 %v12143
        %v12432 = vunpack.c.l.b16 %v12144
        %v12433 = vunpack.c.l.b16 %v12145
        %v12434 = vunpack.c.l.b16 %v12146
        %v12435 = vunpack.c.l.b16 %v12147
        %v12436 = vunpack.c.l.b16 %v12148
        %v12437 = vunpack.c.l.b16 %v12149
        %v12438 = vunpack.c.l.b16 %v12150
        %v12439 = vunpack.c.l.b16 %v12151
        %v12440 = vunpack.c.l.b16 %v12152
        %v12441 = vunpack.c.l.b16 %v12153
        %v12442 = vunpack.c.l.b16 %v12154
        %v12443 = vunpack.c.l.b16 %v12155
        %v12444 = vunpack.c.l.b16 %v12156
        %v12445 = vunpack.c.l.b16 %v12157
        %v12446 = vunpack.c.l.b16 %v12158
        %v12447 = vunpack.c.l.b16 %v12159
        %v12448 = vunpack.c.l.b16 %v12160
        %v12449 = vunpack.c.l.b16 %v12161
        %v12450 = vunpack.c.l.b16 %v12162
        %v12451 = vunpack.c.l.b16 %v12163
        %v12452 = vunpack.c.l.b16 %v12164
        %v12453 = vunpack.c.l.b16 %v12165
        %v12454 = vunpack.c.l.b16 %v12166
        %v12455 = vunpack.c.l.b16 %v12167
        %v12456 = vunpack.c.l.b16 %v12168
        %v12457 = vunpack.c.l.b16 %v12169
        %v12458 = vunpack.c.l.b16 %v12170
        %v12459 = vunpack.c.l.b16 %v12171
        %v12460 = vunpack.c.l.b16 %v12172
        %v12461 = vunpack.c.l.b16 %v12173
        %v12462 = vunpack.c.l.b16 %v12174
        %v12463 = vunpack.c.l.b16 %v12175
        %v12464 = vunpack.c.l.b16 %v12176
        %v12465 = vunpack.c.l.b16 %v12177
        %v12466 = vunpack.c.l.b16 %v12178
        %v12467 = vunpack.c.l.b16 %v12179
        %v12468 = vunpack.c.l.b16 %v12180
        %v12469 = vunpack.c.l.b16 %v12181
        %v12470 = vunpack.c.l.b16 %v12182
        %v12471 = vunpack.c.l.b16 %v12183
        %v12472 = vunpack.c.l.b16 %v12184
        %v12473 = vunpack.c.l.b16 %v12185
        %v12474 = vunpack.c.l.b16 %v12186
        %v12475 = vunpack.c.l.b16 %v12187
        %v12476 = vunpack.c.l.b16 %v12188
        %v12477 = vunpack.c.l.b16 %v12189
        %v12478 = vunpack.c.l.b16 %v12190
        %v12479 = vunpack.c.l.b16 %v12191
        %v12480 = vunpack.c.l.b16 %v12192
        %v12481 = vunpack.c.l.b16 %v12193
        %v12482 = vunpack.c.l.b16 %v12194
        %v12483 = vunpack.c.l.b16 %v12195
        %v12484 = vunpack.c.l.b16 %v12196
        %v12485 = vunpack.c.l.b16 %v12197
        %v12486 = vunpack.c.l.b16 %v12198
        %v12487 = vunpack.c.l.b16 %v12199
        %v12488 = vunpack.c.l.b16 %v12200
        %v12489 = vunpack.c.l.b16 %v12201
        %v12490 = vunpack.c.l.b16 %v12202
        %v12491 = vunpack.c.l.b16 %v12203
        %v12492 = vunpack.c.l.b16 %v12204
        %v12493 = vunpack.c.l.b16 %v12205
        %v12494 = vunpack.c.l.b16 %v12206
        %v12495 = vunpack.c.l.b16 %v12207
        %v12496 = vunpack.c.l.b16 %v12208
        %v12497 = vunpack.c.l.b16 %v12209
        %v12498 = vunpack.c.l.b16 %v12210
        %v12499 = vunpack.c.l.b16 %v12211
        %v12500 = vunpack.c.l.b16 %v12212
        %v12501 = vunpack.c.l.b16 %v12213
        %v12502 = vunpack.c.l.b16 %v12214
        %v12503 = vunpack.c.l.b16 %v12215
        %v12504 = vunpack.c.l.b16 %v12216
        %v12505 = vunpack.c.l.b16 %v12217
        %v12506 = vunpack.c.l.b16 %v12218
        %v12507 = vunpack.c.l.b16 %v12219
        %v12508 = vunpack.c.l.b16 %v12220
        %v12509 = vunpack.c.l.b16 %v12221
        %v12510 = vunpack.c.l.b16 %v12222
        %v12511 = vunpack.c.l.b16 %v12223
        %v12512 = vunpack.c.l.b16 %v12224
        %v12513 = vunpack.c.l.b16 %v12225
        %v12514 = vunpack.c.l.b16 %v12226
        %v12515 = vunpack.c.l.b16 %v12227
        %v12516 = vpack.c.b16 %v12373, %v12372
        %v12517 = vpack.c.b16 %v12375, %v12374
        %v12518 = vpack.c.b16 %v12377, %v12376
        %v12519 = vpack.c.b16 %v12379, %v12378
        %v12520 = vpack.c.b16 %v12381, %v12380
        %v12521 = vpack.c.b16 %v12383, %v12382
        %v12522 = vpack.c.b16 %v12385, %v12384
        %v12523 = vpack.c.b16 %v12387, %v12386
        %v12524 = vpack.c.b16 %v12389, %v12388
        %v12525 = vpack.c.b16 %v12391, %v12390
        %v12526 = vpack.c.b16 %v12393, %v12392
        %v12527 = vpack.c.b16 %v12395, %v12394
        %v12528 = vpack.c.b16 %v12397, %v12396
        %v12529 = vpack.c.b16 %v12399, %v12398
        %v12530 = vpack.c.b16 %v12401, %v12400
        %v12531 = vpack.c.b16 %v12403, %v12402
        %v12532 = vpack.c.b16 %v12405, %v12404
        %v12533 = vpack.c.b16 %v12407, %v12406
        %v12534 = vpack.c.b16 %v12409, %v12408
        %v12535 = vpack.c.b16 %v12411, %v12410
        %v12536 = vpack.c.b16 %v12413, %v12412
        %v12537 = vpack.c.b16 %v12415, %v12414
        %v12538 = vpack.c.b16 %v12417, %v12416
        %v12539 = vpack.c.b16 %v12419, %v12418
        %v12540 = vpack.c.b16 %v12421, %v12420
        %v12541 = vpack.c.b16 %v12423, %v12422
        %v12542 = vpack.c.b16 %v12425, %v12424
        %v12543 = vpack.c.b16 %v12427, %v12426
        %v12544 = vpack.c.b16 %v12429, %v12428
        %v12545 = vpack.c.b16 %v12431, %v12430
        %v12546 = vpack.c.b16 %v12433, %v12432
        %v12547 = vpack.c.b16 %v12435, %v12434
        %v12548 = vpack.c.b16 %v12437, %v12436
        %v12549 = vpack.c.b16 %v12439, %v12438
        %v12550 = vpack.c.b16 %v12441, %v12440
        %v12551 = vpack.c.b16 %v12443, %v12442
        %v12552 = vpack.c.b16 %v12445, %v12444
        %v12553 = vpack.c.b16 %v12447, %v12446
        %v12554 = vpack.c.b16 %v12449, %v12448
        %v12555 = vpack.c.b16 %v12451, %v12450
        %v12556 = vpack.c.b16 %v12453, %v12452
        %v12557 = vpack.c.b16 %v12455, %v12454
        %v12558 = vpack.c.b16 %v12457, %v12456
        %v12559 = vpack.c.b16 %v12459, %v12458
        %v12560 = vpack.c.b16 %v12461, %v12460
        %v12561 = vpack.c.b16 %v12463, %v12462
        %v12562 = vpack.c.b16 %v12465, %v12464
        %v12563 = vpack.c.b16 %v12467, %v12466
        %v12564 = vpack.c.b16 %v12469, %v12468
        %v12565 = vpack.c.b16 %v12471, %v12470
        %v12566 = vpack.c.b16 %v12473, %v12472
        %v12567 = vpack.c.b16 %v12475, %v12474
        %v12568 = vpack.c.b16 %v12477, %v12476
        %v12569 = vpack.c.b16 %v12479, %v12478
        %v12570 = vpack.c.b16 %v12481, %v12480
        %v12571 = vpack.c.b16 %v12483, %v12482
        %v12572 = vpack.c.b16 %v12485, %v12484
        %v12573 = vpack.c.b16 %v12487, %v12486
        %v12574 = vpack.c.b16 %v12489, %v12488
        %v12575 = vpack.c.b16 %v12491, %v12490
        %v12576 = vpack.c.b16 %v12493, %v12492
        %v12577 = vpack.c.b16 %v12495, %v12494
        %v12578 = vpack.c.b16 %v12497, %v12496
        %v12579 = vpack.c.b16 %v12499, %v12498
        %v12580 = vpack.c.b16 %v12501, %v12500
        %v12581 = vpack.c.b16 %v12503, %v12502
        %v12582 = vpack.c.b16 %v12505, %v12504
        %v12583 = vpack.c.b16 %v12507, %v12506
        %v12584 = vpack.c.b16 %v12509, %v12508
        %v12585 = vpack.c.b16 %v12511, %v12510
        %v12586 = vpack.c.b16 %v12513, %v12512
        %v12587 = vpack.c.b16 %v12515, %v12514
        %12660 = vmatprep.subr.bf16.mxu0 0
        %12661 = vmatpush1.bf16.msra.mxu0 %v12516
        %12662 = vmatprep.subr.bf16.mxu0 0
        %12663 = vmatpush1.bf16.msra.mxu0 %v12517
        %12664 = vmatprep.subr.bf16.mxu0 0
        %12665 = vmatpush1.bf16.msra.mxu0 %v12518
        %12666 = vmatprep.subr.bf16.mxu0 0
        %12667 = vmatpush1.bf16.msra.mxu0 %v12519
        %12668 = vmatprep.subr.bf16.mxu0 0
        %12669 = vmatpush1.bf16.msra.mxu0 %v12520
        %12670 = vmatprep.subr.bf16.mxu0 0
        %12671 = vmatpush1.bf16.msra.mxu0 %v12521
        %12672 = vmatprep.subr.bf16.mxu0 0
        %12673 = vmatpush1.bf16.msra.mxu0 %v12522
        %12674 = vmatprep.subr.bf16.mxu0 0
        %12675 = vmatpush1.bf16.msra.mxu0 %v12523
        %12676 = vmatprep.subr.bf16.mxu0 0
        %12677 = vmatpush1.bf16.msra.mxu0 %v12524
        %12678 = vmatprep.subr.bf16.mxu0 0
        %12679 = vmatpush1.bf16.msra.mxu0 %v12525
        %12680 = vmatprep.subr.bf16.mxu0 0
        %12681 = vmatpush1.bf16.msra.mxu0 %v12526
        %12682 = vmatprep.subr.bf16.mxu0 0
        %12683 = vmatpush1.bf16.msra.mxu0 %v12527
        %12684 = vmatprep.subr.bf16.mxu0 0
        %12685 = vmatpush1.bf16.msra.mxu0 %v12528
        %12686 = vmatprep.subr.bf16.mxu0 0
        %12687 = vmatpush1.bf16.msra.mxu0 %v12529
        %12688 = vmatprep.subr.bf16.mxu0 0
        %12689 = vmatpush1.bf16.msra.mxu0 %v12530
        %12690 = vmatprep.subr.bf16.mxu0 0
        %12691 = vmatpush1.bf16.msra.mxu0 %v12531
        %12692 = vmatprep.mubr.bf16.mxu0 %v12049
        %12693 = vmatmul.mubr.bf16.gmra.mrb[0].mxu0 %v12048
        %v12694 = vpop.f32.mrb[0].mxu0
        %v12695 = vadd.f32 0.0, %v12694
        %v12696 = vpop.f32.mrb[0].mxu0
        %v12697 = vpop.f32.mrb[0].mxu0
        %v12698 = vadd.f32 0.0, %v12697
        %v12699 = vpop.f32.mrb[0].mxu0
        %12700 = vmatprep.mubr.bf16.mxu0 %v12058
        %12701 = vmatmul.mubr.bf16.gmra.mrb[0].mxu0 %v12057
        %v12702 = vpop.f32.mrb[0].mxu0
        %v12703 = vadd.f32 0.0, %v12702
        %v12704 = vpop.f32.mrb[0].mxu0
        %v12705 = vpop.f32.mrb[0].mxu0
        %v12706 = vadd.f32 0.0, %v12705
        %v12707 = vpop.f32.mrb[0].mxu0
        %12708 = vmatprep.mubr.bf16.mxu0 %v12067
        %12709 = vmatmul.mubr.bf16.gmra.mrb[0].mxu0 %v12066
        %v12710 = vpop.f32.mrb[0].mxu0
        %v12711 = vadd.f32 0.0, %v12710
        %v12712 = vpop.f32.mrb[0].mxu0
        %v12713 = vpop.f32.mrb[0].mxu0
        %v12714 = vadd.f32 0.0, %v12713
        %v12715 = vpop.f32.mrb[0].mxu0
        %12716 = vmatprep.mubr.bf16.mxu0 %v12076
        %12717 = vmatmul.mubr.bf16.gmra.mrb[0].mxu0 %v12075
        %v12718 = vpop.f32.mrb[0].mxu0
        %v12719 = vadd.f32 0.0, %v12718
        %v12720 = vpop.f32.mrb[0].mxu0
        %v12721 = vpop.f32.mrb[0].mxu0
        %v12722 = vadd.f32 0.0, %v12721
        %v12723 = vpop.f32.mrb[0].mxu0
        %12724 = vdwg.mxu0
        %12725 = vmatprep.subr.bf16.mxu0 0
        %12726 = vmatpush1.bf16.msra.mxu0 %v12532
        %12727 = vmatprep.subr.bf16.mxu0 0
        %12728 = vmatpush1.bf16.msra.mxu0 %v12533
        %12729 = vmatprep.subr.bf16.mxu0 0
        %12730 = vmatpush1.bf16.msra.mxu0 %v12534
        %12731 = vmatprep.subr.bf16.mxu0 0
        %12732 = vmatpush1.bf16.msra.mxu0 %v12535
        %12733 = vmatprep.subr.bf16.mxu0 0
        %12734 = vmatpush1.bf16.msra.mxu0 %v12536
        %12735 = vmatprep.subr.bf16.mxu0 0
        %12736 = vmatpush1.bf16.msra.mxu0 %v12537
        %12737 = vmatprep.subr.bf16.mxu0 0
        %12738 = vmatpush1.bf16.msra.mxu0 %v12538
        %12739 = vmatprep.subr.bf16.mxu0 0
        %12740 = vmatpush1.bf16.msra.mxu0 %v12539
        %12741 = vmatprep.subr.bf16.mxu0 0
        %12742 = vmatpush1.bf16.msra.mxu0 %v12540
        %12743 = vmatprep.subr.bf16.mxu0 0
        %12744 = vmatpush1.bf16.msra.mxu0 %v12541
        %12745 = vmatprep.subr.bf16.mxu0 0
        %12746 = vmatpush1.bf16.msra.mxu0 %v12542
        %12747 = vmatprep.subr.bf16.mxu0 0
        %12748 = vmatpush1.bf16.msra.mxu0 %v12543
        %12749 = vmatprep.subr.bf16.mxu0 0
        %12750 = vmatpush1.bf16.msra.mxu0 %v12544
        %12751 = vmatprep.subr.bf16.mxu0 0
        %12752 = vmatpush1.bf16.msra.mxu0 %v12545
        %12753 = vmatprep.subr.bf16.mxu0 0
        %12754 = vmatpush1.bf16.msra.mxu0 %v12546
        %12755 = vmatprep.subr.bf16.mxu0 0
        %12756 = vmatpush1.bf16.msra.mxu0 %v12547
        %12757 = vmatprep.mubr.bf16.mxu0 %v12051
        %12758 = vmatmul.mubr.bf16.gmra.mrb[0].mxu0 %v12050
        %v12759 = vpop.f32.mrb[0].mxu0
        %v12760 = vadd.f32 %v12695, %v12759
        %v12761 = vpop.f32.mrb[0].mxu0
        %v12762 = vpop.f32.mrb[0].mxu0
        %v12763 = vadd.f32 %v12698, %v12762
        %v12764 = vpop.f32.mrb[0].mxu0
        %12765 = vmatprep.mubr.bf16.mxu0 %v12060
        %12766 = vmatmul.mubr.bf16.gmra.mrb[0].mxu0 %v12059
        %v12767 = vpop.f32.mrb[0].mxu0
        %v12768 = vadd.f32 %v12703, %v12767
        %v12769 = vpop.f32.mrb[0].mxu0
        %v12770 = vpop.f32.mrb[0].mxu0
        %v12771 = vadd.f32 %v12706, %v12770
        %v12772 = vpop.f32.mrb[0].mxu0
        %12773 = vmatprep.mubr.bf16.mxu0 %v12069
        %12774 = vmatmul.mubr.bf16.gmra.mrb[0].mxu0 %v12068
        %v12775 = vpop.f32.mrb[0].mxu0
        %v12776 = vadd.f32 %v12711, %v12775
        %v12777 = vpop.f32.mrb[0].mxu0
        %v12778 = vpop.f32.mrb[0].mxu0
        %v12779 = vadd.f32 %v12714, %v12778
        %v12780 = vpop.f32.mrb[0].mxu0
        %12781 = vmatprep.mubr.bf16.mxu0 %v12078
        %12782 = vmatmul.mubr.bf16.gmra.mrb[0].mxu0 %v12077
        %v12783 = vpop.f32.mrb[0].mxu0
        %v12784 = vadd.f32 %v12719, %v12783
        %v12785 = vpop.f32.mrb[0].mxu0
        %v12786 = vpop.f32.mrb[0].mxu0
        %v12787 = vadd.f32 %v12722, %v12786
        %v12788 = vpop.f32.mrb[0].mxu0
        %12789 = vdwg.mxu0
        %12790 = vmatprep.subr.bf16.mxu0 0
        %12791 = vmatpush1.bf16.msra.mxu0 %v12548
        %12792 = vmatprep.subr.bf16.mxu0 0
        %12793 = vmatpush1.bf16.msra.mxu0 %v12549
        %12794 = vmatprep.subr.bf16.mxu0 0
        %12795 = vmatpush1.bf16.msra.mxu0 %v12550
        %12796 = vmatprep.subr.bf16.mxu0 0
        %12797 = vmatpush1.bf16.msra.mxu0 %v12551
        %12798 = vmatprep.subr.bf16.mxu0 0
        %12799 = vmatpush1.bf16.msra.mxu0 %v12552
        %12800 = vmatprep.subr.bf16.mxu0 0
        %12801 = vmatpush1.bf16.msra.mxu0 %v12553
        %12802 = vmatprep.subr.bf16.mxu0 0
        %12803 = vmatpush1.bf16.msra.mxu0 %v12554
        %12804 = vmatprep.subr.bf16.mxu0 0
        %12805 = vmatpush1.bf16.msra.mxu0 %v12555
        %12806 = vmatprep.subr.bf16.mxu0 0
        %12807 = vmatpush1.bf16.msra.mxu0 %v12556
        %12808 = vmatprep.subr.bf16.mxu0 0
        %12809 = vmatpush1.bf16.msra.mxu0 %v12557
        %12810 = vmatprep.subr.bf16.mxu0 0
        %12811 = vmatpush1.bf16.msra.mxu0 %v12558
        %12812 = vmatprep.subr.bf16.mxu0 0
        %12813 = vmatpush1.bf16.msra.mxu0 %v12559
        %12814 = vmatprep.subr.bf16.mxu0 0
        %12815 = vmatpush1.bf16.msra.mxu0 %v12560
        %12816 = vmatprep.subr.bf16.mxu0 0
        %12817 = vmatpush1.bf16.msra.mxu0 %v12561
        %12818 = vmatprep.subr.bf16.mxu0 0
        %12819 = vmatpush1.bf16.msra.mxu0 %v12562
        %12820 = vmatprep.subr.bf16.mxu0 0
        %12821 = vmatpush1.bf16.msra.mxu0 %v12563
        %12822 = vmatprep.mubr.bf16.mxu0 %v12053
        %12823 = vmatmul.mubr.bf16.gmra.mrb[0].mxu0 %v12052
        %v12824 = vpop.f32.mrb[0].mxu0
        %v12825 = vadd.f32 %v12760, %v12824
        %v12826 = vpop.f32.mrb[0].mxu0
        %v12827 = vpop.f32.mrb[0].mxu0
        %v12828 = vadd.f32 %v12763, %v12827
        %v12829 = vpop.f32.mrb[0].mxu0
        %12830 = vmatprep.mubr.bf16.mxu0 %v12062
        %12831 = vmatmul.mubr.bf16.gmra.mrb[0].mxu0 %v12061
        %v12832 = vpop.f32.mrb[0].mxu0
        %v12833 = vadd.f32 %v12768, %v12832
        %v12834 = vpop.f32.mrb[0].mxu0
        %v12835 = vpop.f32.mrb[0].mxu0
        %v12836 = vadd.f32 %v12771, %v12835
        %v12837 = vpop.f32.mrb[0].mxu0
        %12838 = vmatprep.mubr.bf16.mxu0 %v12071
        %12839 = vmatmul.mubr.bf16.gmra.mrb[0].mxu0 %v12070
        %v12840 = vpop.f32.mrb[0].mxu0
        %v12841 = vadd.f32 %v12776, %v12840
        %v12842 = vpop.f32.mrb[0].mxu0
        %v12843 = vpop.f32.mrb[0].mxu0
        %v12844 = vadd.f32 %v12779, %v12843
        %v12845 = vpop.f32.mrb[0].mxu0
        %12846 = vmatprep.mubr.bf16.mxu0 %v12080
        %12847 = vmatmul.mubr.bf16.gmra.mrb[0].mxu0 %v12079
        %v12848 = vpop.f32.mrb[0].mxu0
        %v12849 = vadd.f32 %v12784, %v12848
        %v12850 = vpop.f32.mrb[0].mxu0
        %v12851 = vpop.f32.mrb[0].mxu0
        %v12852 = vadd.f32 %v12787, %v12851
        %v12853 = vpop.f32.mrb[0].mxu0
        %12854 = vdwg.mxu0
        %12855 = vmatprep.subr.bf16.mxu0 0
        %12856 = vmatpush1.bf16.msra.mxu0 %v12564
        %12857 = vmatprep.subr.bf16.mxu0 0
        %12858 = vmatpush1.bf16.msra.mxu0 %v12565
        %12859 = vmatprep.subr.bf16.mxu0 0
        %12860 = vmatpush1.bf16.msra.mxu0 %v12566
        %12861 = vmatprep.subr.bf16.mxu0 0
        %12862 = vmatpush1.bf16.msra.mxu0 %v12567
        %12863 = vmatprep.subr.bf16.mxu0 0
        %12864 = vmatpush1.bf16.msra.mxu0 %v12568
        %12865 = vmatprep.subr.bf16.mxu0 0
        %12866 = vmatpush1.bf16.msra.mxu0 %v12569
        %12867 = vmatprep.subr.bf16.mxu0 0
        %12868 = vmatpush1.bf16.msra.mxu0 %v12570
        %12869 = vmatprep.subr.bf16.mxu0 0
        %12870 = vmatpush1.bf16.msra.mxu0 %v12571
        %12871 = vmatprep.subr.bf16.mxu0 0
        %12872 = vmatpush1.bf16.msra.mxu0 %v12572
        %12873 = vmatprep.subr.bf16.mxu0 0
        %12874 = vmatpush1.bf16.msra.mxu0 %v12573
        %12875 = vmatprep.subr.bf16.mxu0 0
        %12876 = vmatpush1.bf16.msra.mxu0 %v12574
        %12877 = vmatprep.subr.bf16.mxu0 0
        %12878 = vmatpush1.bf16.msra.mxu0 %v12575
        %12879 = vmatprep.subr.bf16.mxu0 0
        %12880 = vmatpush1.bf16.msra.mxu0 %v12576
        %12881 = vmatprep.subr.bf16.mxu0 0
        %12882 = vmatpush1.bf16.msra.mxu0 %v12577
        %12883 = vmatprep.subr.bf16.mxu0 0
        %12884 = vmatpush1.bf16.msra.mxu0 %v12578
        %12885 = vmatprep.subr.bf16.mxu0 0
        %12886 = vmatpush1.bf16.msra.mxu0 %v12579
        %12887 = vmatprep.mubr.bf16.mxu0 %v12055
        %12888 = vmatmul.mubr.bf16.gmra.mrb[0].mxu0 %v12054
        %v12889 = vpop.f32.mrb[0].mxu0
        %v12890 = vadd.f32 %v12825, %v12889
        %v12891 = vpop.f32.mrb[0].mxu0
        %v12892 = vpop.f32.mrb[0].mxu0
        %v12893 = vadd.f32 %v12828, %v12892
        %v12894 = vpop.f32.mrb[0].mxu0
        %12895 = vmatprep.mubr.bf16.mxu0 %v12064
        %12896 = vmatmul.mubr.bf16.gmra.mrb[0].mxu0 %v12063
        %v12897 = vpop.f32.mrb[0].mxu0
        %v12898 = vadd.f32 %v12833, %v12897
        %v12899 = vpop.f32.mrb[0].mxu0
        %v12900 = vpop.f32.mrb[0].mxu0
        %v12901 = vadd.f32 %v12836, %v12900
        %v12902 = vpop.f32.mrb[0].mxu0
        %12903 = vmatprep.mubr.bf16.mxu0 %v12073
        %12904 = vmatmul.mubr.bf16.gmra.mrb[0].mxu0 %v12072
        %v12905 = vpop.f32.mrb[0].mxu0
        %v12906 = vadd.f32 %v12841, %v12905
        %v12907 = vpop.f32.mrb[0].mxu0
        %v12908 = vpop.f32.mrb[0].mxu0
        %v12909 = vadd.f32 %v12844, %v12908
        %v12910 = vpop.f32.mrb[0].mxu0
        %12911 = vmatprep.mubr.bf16.mxu0 %v12082
        %12912 = vmatmul.mubr.bf16.gmra.mrb[0].mxu0 %v12081
        %v12913 = vpop.f32.mrb[0].mxu0
        %v12914 = vadd.f32 %v12849, %v12913
        %v12915 = vpop.f32.mrb[0].mxu0
        %v12916 = vpop.f32.mrb[0].mxu0
        %v12917 = vadd.f32 %v12852, %v12916
        %v12918 = vpop.f32.mrb[0].mxu0
        %12919 = vdwg.mxu0
        %12920 = vmatprep.subr.bf16.mxu0 0
        %12921 = vmatpush1.bf16.msra.mxu0 %v12580
        %12922 = vmatprep.subr.bf16.mxu0 0
        %12923 = vmatpush1.bf16.msra.mxu0 %v12581
        %12924 = vmatprep.subr.bf16.mxu0 0
        %12925 = vmatpush1.bf16.msra.mxu0 %v12582
        %12926 = vmatprep.subr.bf16.mxu0 0
        %12927 = vmatpush1.bf16.msra.mxu0 %v12583
        %12928 = vmatprep.subr.bf16.mxu0 0
        %12929 = vmatpush1.bf16.msra.mxu0 %v12584
        %12930 = vmatprep.subr.bf16.mxu0 0
        %12931 = vmatpush1.bf16.msra.mxu0 %v12585
        %12932 = vmatprep.subr.bf16.mxu0 0
        %12933 = vmatpush1.bf16.msra.mxu0 %v12586
        %12934 = vmatprep.subr.bf16.mxu0 0
        %12935 = vmatpush1.bf16.msra.mxu0 %v12587
        %12936 = vmatprep.subr.bf16.mxu0 0
        %12937 = vmatpush1.bf16.msra.mxu0 0
        %12938 = vmatprep.subr.bf16.mxu0 0
        %12939 = vmatpush1.bf16.msra.mxu0 0
        %12940 = vmatprep.subr.bf16.mxu0 0
        %12941 = vmatpush1.bf16.msra.mxu0 0
        %12942 = vmatprep.subr.bf16.mxu0 0
        %12943 = vmatpush1.bf16.msra.mxu0 0
        %12944 = vmatprep.subr.bf16.mxu0 0
        %12945 = vmatpush1.bf16.msra.mxu0 0
        %12946 = vmatprep.subr.bf16.mxu0 0
        %12947 = vmatpush1.bf16.msra.mxu0 0
        %12948 = vmatprep.subr.bf16.mxu0 0
        %12949 = vmatpush1.bf16.msra.mxu0 0
        %12950 = vmatprep.subr.bf16.mxu0 0
        %12951 = vmatpush1.bf16.msra.mxu0 0
        %12952 = vmatprep.mubr.bf16.mxu0 0
        %12953 = vmatmul.mubr.bf16.gmra.mrb[0].mxu0 %v12056
        %v12954 = vpop.f32.mrb[0].mxu0
        %v12955 = vadd.f32 %v12890, %v12954
        %v12956 = vpop.f32.mrb[0].mxu0
        %v12957 = vpop.f32.mrb[0].mxu0
        %v12958 = vadd.f32 %v12893, %v12957
        %v12959 = vpop.f32.mrb[0].mxu0
        %12960 = vmatprep.mubr.bf16.mxu0 0
        %12961 = vmatmul.mubr.bf16.gmra.mrb[0].mxu0 %v12065
        %v12962 = vpop.f32.mrb[0].mxu0
        %v12963 = vadd.f32 %v12898, %v12962
        %v12964 = vpop.f32.mrb[0].mxu0
        %v12965 = vpop.f32.mrb[0].mxu0
        %v12966 = vadd.f32 %v12901, %v12965
        %v12967 = vpop.f32.mrb[0].mxu0
        %12968 = vmatprep.mubr.bf16.mxu0 0
        %12969 = vmatmul.mubr.bf16.gmra.mrb[0].mxu0 %v12074
        %v12970 = vpop.f32.mrb[0].mxu0
        %v12971 = vadd.f32 %v12906, %v12970
        %v12972 = vpop.f32.mrb[0].mxu0
        %v12973 = vpop.f32.mrb[0].mxu0
        %v12974 = vadd.f32 %v12909, %v12973
        %v12975 = vpop.f32.mrb[0].mxu0
        %12976 = vmatprep.mubr.bf16.mxu0 0
        %12977 = vmatmul.mubr.bf16.gmra.mrb[0].mxu0 %v12083
        %v12978 = vpop.f32.mrb[0].mxu0
        %v12979 = vadd.f32 %v12914, %v12978
        %v12980 = vpop.f32.mrb[0].mxu0
        %v12981 = vpop.f32.mrb[0].mxu0
        %v12982 = vadd.f32 %v12917, %v12981
        %v12983 = vpop.f32.mrb[0].mxu0
        %12984 = vdwg.mxu0
        %v12985 = vld [vmem:[%s5] sm:$0x1]
        %v12987 = vlaneseq
        %v12988 = vshrl.u32 %v12987, 7
        %v12989 = vsub.s32 0, %v12988
        %v12990 = vrot.slane %v12985, %v12989
        %v12992 = vmul.f32 %v12955, %v12990
        %v12993 = vmul.f32 %v12958, %v12990
        %v12994 = vmul.f32 %v12963, %v12990
        %v12995 = vmul.f32 %v12966, %v12990
        %v12996 = vmul.f32 %v12971, %v12990
        %v12997 = vmul.f32 %v12974, %v12990
        %v12998 = vmul.f32 %v12979, %v12990
        %v12999 = vmul.f32 %v12982, %v12990
        %v13000 = vld [vmem:[%s6] sm:$0x1]
        %v13002 = vlaneseq
        %v13003 = vshrl.u32 %v13002, 7
        %v13004 = vsub.s32 0, %v13003
        %v13005 = vrot.slane %v13000, %v13004
        %v13007 = vadd.f32 %v12992, %v13005
        %v13008 = vadd.f32 %v12993, %v13005
        %v13009 = vadd.f32 %v12994, %v13005
        %v13010 = vadd.f32 %v12995, %v13005
        %v13011 = vadd.f32 %v12996, %v13005
        %v13012 = vadd.f32 %v12997, %v13005
        %v13013 = vadd.f32 %v12998, %v13005
        %v13014 = vadd.f32 %v12999, %v13005
        %v13015 = vmax.f32 %v13007, 0.0
        %v13016 = vmax.f32 %v13008, 0.0
        %v13017 = vmax.f32 %v13009, 0.0
        %v13018 = vmax.f32 %v13010, 0.0
        %v13019 = vmax.f32 %v13011, 0.0
        %v13020 = vmax.f32 %v13012, 0.0
        %v13021 = vmax.f32 %v13013, 0.0
        %v13022 = vmax.f32 %v13014, 0.0
        %13023 = vst [vmem:[%s295] sm:$0xff] %v13015
        %13024 = vst [vmem:[%s295 + $0x8] sm:$0xff] %v13016
        %13025 = vst [vmem:[%s295 + $0x10] sm:$0xff] %v13017
        %13026 = vst [vmem:[%s295 + $0x18] sm:$0xff] %v13018
        %13027 = vst [vmem:[%s295 + $0x20] sm:$0xff] %v13019
        %13028 = vst [vmem:[%s295 + $0x28] sm:$0xff] %v13020
        %13029 = vst [vmem:[%s295 + $0x30] sm:$0xff] %v13021
        %13030 = vst [vmem:[%s295 + $0x38] sm:$0xff] %v13022
        %s13031 = sand.u32 %s197, 1
        %s13032 = scalar_lea.sflag [#allocation7], %s13031
        %s13033 = sand.u32 %s197, 1
        %s13034 = smul.addr %s13033, 64
        %s13035 = scalar_lea.vmem [#allocation6], %s13034
        // Predicated region
        $region49: #{tpu_custom_call.1} parent=47 // pred_check
          %p13036 = pneg %p207
        $region50: #{tpu_custom_call.1} parent=47 // pred_check_branch
          %13038 = sbr.rel (%p13036) target = $region52
        $region51: #{tpu_custom_call.1} parent=47 // pred_region
          %s13039 = smul.u32 8, %s26
          %s13041 = ssub.s32 1024, 1024
          %13042 = vsyncadd %s13032, %s13041
          %s13043 = smul.addr %s25, 8
          %s13044 = sadd.s32 %s13039, %s13043
          %s13045 = smul.addr %s13044, 128
          %s13046 = scalar_lea.hbm %s7, %s13045
          %s13047 = sshll.u32 %s13035, 4
          %s13048 = int_to_ptr.vmem [resolvable:$true] %s13047
          %13053 = dma.vmem_to_hbm [thread:$0]  %s13048, 1024, %s13046, %s13032, 128, 128, 8
        $region52: #{tpu_custom_call.1} parent=47 // pred_fallthru
          _
      $region48: #{tpu_custom_call.1} parent=5 // pred_fallthru
        _
      %p13054 = scmp.le.s32.totalorder 2, %s16
      // Predicated region
      $region53: #{tpu_custom_call.1} parent=5 // pred_check
        %p13055 = pneg %p13054
      $region54: #{tpu_custom_call.1} parent=5 // pred_check_branch
        %13057 = sbr.rel (%p13055) target = $region56
      $region55: #{tpu_custom_call.1} parent=5 // pred_region
        %s13058 = ssub.s32 %s16, 2
        // Predicated region
        $region57: #{tpu_custom_call.1} parent=55 // pred_check
          %p13059 = pneg %p213
        $region58: #{tpu_custom_call.1} parent=55 // pred_check_branch
          %13061 = sbr.rel (%p13059) target = $region60
        $region59: #{tpu_custom_call.1} parent=55 // pred_region
          %s13062 = sand.u32 %s198, 1
          %s13063 = scalar_lea.sflag [#allocation7], %s13062
          %s13064 = sand.u32 %s198, 1
          %s13065 = smul.addr %s13064, 64
          %s13066 = scalar_lea.vmem [#allocation6], %s13065
          %13067 = dma.done %s13063, 1024
        $region60: #{tpu_custom_call.1} parent=55 // pred_fallthru
          _
      $region56: #{tpu_custom_call.1} parent=5 // pred_fallthru
        _
    $region6: #{tpu_custom_call.1} parent=1 // loop_footer
      %s20 = sadd.s32 1, %s16
    $region7: #{tpu_custom_call.1} parent=1 // loop_footer_branch
      %15 = sbr.rel target = $region3
    $region8: #{tpu_custom_call.1} parent=1 // loop_exit
      _
    %13068 = vsyncpa [#allocation7], 1
    %s13069 = scalar_lea.sflag [#allocation7], 1
    %13070 = vsyncpa %s13069, 1

</llo_original>
